<compile_context>
chip_gen: v6e
topology: v6e:2x2x1
jax: 0.10.0
libtpu: 0.0.40
codegen_flags: <defaults>
</compile_context>

<pallas_src>
import numpy as np

import jax
import jax.numpy as jnp
from jax import lax
from jax.experimental import pallas as pl
from jax.experimental.pallas import tpu as pltpu

EPS = 1e-5
C = 16          # channels after conv1 (and through the depthwise convs)
S1, S2, S3 = 14, 7, 4   # spatial side after conv1 / conv2 / conv3 (28x28 input)


# --------------------------- fused Pallas kernel -----------------------------

def _compactnet_kernel(p1_ref, src2_ref, dst2_ref, src3_ref, dst3_ref,
                       w1_ref, b1_ref, g1_ref, be1_ref,
                       w2_ref, b2_ref, g2_ref, be2_ref,
                       w3_ref, b3_ref, g3_ref, be3_ref,
                       wfc_ref, bsel_ref, bfc_ref,
                       out_ref, a3_ref):
    f32 = jnp.float32

    def bn(y, g_ref, be_ref):
        # training-mode batch norm over all N*H*W positions (= lanes), with the
        # affine folded into a single per-channel scale and shift.
        mu = jnp.mean(y, axis=1, keepdims=True)
        var = jnp.mean((y - mu) * (y - mu), axis=1, keepdims=True)
        scale = g_ref[...] * lax.rsqrt(var + EPS)
        shift = be_ref[...] - scale * mu
        return y * scale + shift

    def depthwise(a_prev, src_ref, dst_ref, w_ref, b_ref):
        # 3x3 / stride-2 / pad-1 depthwise conv in (C, M) layout.
        # tap t = one-hot selection matmul (gather along M, zero for padding)
        # followed by a per-channel broadcast MAC.
        sb, si, sj = src_ref[0], src_ref[1], src_ref[2]        # (M_in, 1) i32
        db, di0, dj0 = dst_ref[0], dst_ref[1], dst_ref[2]      # (1, M_out) i32
        same = sb == db
        acc = None
        for t in range(9):
            di, dj = t // 3, t % 3
            sel = same & (si == di0 + di) & (sj == dj0 + dj)
            q = jnp.where(sel, f32(1.0), f32(0.0))             # (M_in, M_out)
            tap = jnp.dot(a_prev, q, preferred_element_type=f32)   # (C, M_out)
            term = tap * w_ref[t]                              # (C, 1) broadcast
            acc = term if acc is None else acc + term
        return acc + b_ref[...]

    # ---- conv1 (1 -> 16, 3x3, s2, p1): 9 VPU broadcast-MACs, then bn1 ----
    y1 = None
    for t in range(9):
        term = w1_ref[t] * p1_ref[t]                # (16,1) * (1,M1) -> (16,M1)
        y1 = term if y1 is None else y1 + term
    a1 = bn(y1 + b1_ref[...], g1_ref, be1_ref)                       # (16, M1)

    # ---- conv2 (depthwise) + bn2 ----
    a2 = bn(depthwise(a1, src2_ref, dst2_ref, w2_ref, b2_ref),
            g2_ref, be2_ref)                                         # (16, M2)

    # ---- conv3 (depthwise) + bn3 + relu ----
    a3 = bn(depthwise(a2, src3_ref, dst3_ref, w3_ref, b3_ref),
            g3_ref, be3_ref)
    a3_ref[...] = jnp.maximum(a3, f32(0.0))                          # (16, M3)

    # ---- fc on the VMEM-resident a3 in PyTorch NCHW-flatten order ----
    # z[k, m3] = sum_c Wfc[k, 16c + s(m3)] * a3[c, m3]
    z = None
    for c in range(C):
        term = wfc_ref[c] * a3_ref[c:c + 1, :]      # (K, M3) * (1, M3)
        z = term if z is None else z + term
    # group lanes by batch sample:  out[k, b] = sum_{m3 of sample b} z[k, m3]
    out_ref[...] = (jnp.dot(z, bsel_ref[...], preferred_element_type=f32)
                    + bfc_ref[...])


# --------------------------- pallas_call wrapper ------------------------------

def _full_spec(shape):
    nd = len(shape)

    def idx(i, _nd=nd):
        return (0,) * _nd

    return pl.BlockSpec(shape, idx)


def _coord_tables(n):
    """Static (b, i, j) coordinate tables for the flattened M indices."""
    def coords(side):
        m = np.arange(n * side * side)
        return ((m // (side * side)).astype(np.int32),
                ((m // side) % side).astype(np.int32),
                (m % side).astype(np.int32))

    b1, i1, j1 = coords(S1)
    b2, i2, j2 = coords(S2)
    b3, i3, j3 = coords(S3)
    src2 = np.stack([b1, i1, j1])[:, :, None]                  # (3, M1, 1)
    dst2 = np.stack([b2, 2 * i2 - 1, 2 * j2 - 1])[:, None, :]  # (3, 1, M2)
    src3 = np.stack([b2, i2, j2])[:, :, None]                  # (3, M2, 1)
    dst3 = np.stack([b3, 2 * i3 - 1, 2 * j3 - 1])[:, None, :]  # (3, 1, M3)
    return (jnp.asarray(src2), jnp.asarray(dst2),
            jnp.asarray(src3), jnp.asarray(dst3))


@jax.jit
def compact_net_forward(x_nchw, p):
    n = x_nchw.shape[0]
    k = p['wfc'].shape[0]
    m1, m3 = n * S1 * S1, n * S3 * S3

    # conv1 im2col on the (tiny) raw network input -- layout glue only.
    x2d = x_nchw[:, 0].astype(jnp.float32)                      # (N, 28, 28)
    xp = jnp.pad(x2d, ((0, 0), (1, 1), (1, 1)))
    taps = [xp[:, di:di + 2 * S1:2, dj:dj + 2 * S1:2]
            for di in range(3) for dj in range(3)]
    p1 = jnp.stack(taps, 0).reshape(9, 1, m1)                   # (9, 1, M1)

    src2, dst2, src3, dst3 = _coord_tables(n)

    def dw_w(w):                       # (16,1,3,3) -> (9, 16, 1), t = di*3+dj
        return w.reshape(C, 9).T[:, :, None]

    def colv(v):                       # (16,) -> (16, 1)
        return v.reshape(C, 1)

    # wfc rearranged so the kernel can contract channels row-by-row:
    #   wfc3[c, k, m3] = Wfc[k, 16*c + (m3 % 16)]
    wfc3 = jnp.transpose(jnp.tile(p['wfc'].reshape(k, C, S3 * S3), (1, 1, n)),
                         (1, 0, 2))                             # (C, K, M3)
    # one-hot batch-grouping matrix: bsel[m3, b] = 1 iff m3 belongs to sample b
    bsel = jnp.asarray(
        (np.arange(m3)[:, None] // (S3 * S3) == np.arange(n)[None, :])
        .astype(np.float32))                                    # (M3, N)

    args = (p1, src2, dst2, src3, dst3,
            dw_w(p['w1']), colv(p['b1']), colv(p['g1']), colv(p['be1']),
            dw_w(p['w2']), colv(p['b2']), colv(p['g2']), colv(p['be2']),
            dw_w(p['w3']), colv(p['b3']), colv(p['g3']), colv(p['be3']),
            wfc3, bsel, p['bfc'].reshape(k, 1))

    out_t = pl.pallas_call(
        _compactnet_kernel,
        out_shape=jax.ShapeDtypeStruct((k, n), jnp.float32),
        grid=(1,),
        in_specs=[_full_spec(a.shape) for a in args],
        out_specs=_full_spec((k, n)),
        scratch_shapes=[pltpu.VMEM((C, m3), jnp.float32)],
    )(*args)
    return out_t.T                                              # (N, num_classes)


# --------------------------- reference (pure JAX, NCHW like PyTorch) ---------

def reference_forward(x, p):
    def bn(y, g, b):
        mu = y.mean(axis=(0, 2, 3), keepdims=True)
        var = ((y - mu) ** 2).mean(axis=(0, 2, 3), keepdims=True)
        return g[None, :, None, None] * (y - mu) / jnp.sqrt(var + EPS) + b[None, :, None, None]

    dn = ('NCHW', 'OIHW', 'NCHW')
    y = lax.conv_general_dilated(x, p['w1'], (2, 2), ((1, 1), (1, 1)), dimension_numbers=dn)
    y = bn(y + p['b1'][None, :, None, None], p['g1'], p['be1'])
    y = lax.conv_general_dilated(y, p['w2'], (2, 2), ((1, 1), (1, 1)),
                                 dimension_numbers=dn, feature_group_count=16)
    y = bn(y + p['b2'][None, :, None, None], p['g2'], p['be2'])
    y = lax.conv_general_dilated(y, p['w3'], (2, 2), ((1, 1), (1, 1)),
                                 dimension_numbers=dn, feature_group_count=16)
    y = bn(y + p['b3'][None, :, None, None], p['g3'], p['be3'])
    y = jnp.maximum(y, 0.0)
    y = y.reshape(y.shape[0], -1)
    return y @ p['wfc'].T + p['bfc'][None, :]


# --------------------------- params ------------------------------------------

def init_params(key, num_classes=10):
    ks = jax.random.split(key, 16)

    def nrm(k, shape, scale):
        return (scale * jax.random.normal(k, shape)).astype(jnp.float32)

    return {
        'w1': nrm(ks[0], (16, 1, 3, 3), 0.3),  'b1': nrm(ks[1], (16,), 0.1),
        'w2': nrm(ks[2], (16, 1, 3, 3), 0.3),  'b2': nrm(ks[3], (16,), 0.1),
        'w3': nrm(ks[4], (16, 1, 3, 3), 0.3),  'b3': nrm(ks[5], (16,), 0.1),
        'wfc': nrm(ks[6], (num_classes, 16 * 4 * 4), 0.05),
        'bfc': nrm(ks[7], (num_classes,), 0.05),
        'g1': 1.0 + nrm(ks[8], (16,), 0.1),  'be1': nrm(ks[9], (16,), 0.1),
        'g2': 1.0 + nrm(ks[10], (16,), 0.1), 'be2': nrm(ks[11], (16,), 0.1),
        'g3': 1.0 + nrm(ks[12], (16,), 0.1), 'be3': nrm(ks[13], (16,), 0.1),
    }


# --------------------------- main --------------------------------------------

if __name__ == "__main__":
    key = jax.random.PRNGKey(0)
    kx, kp = jax.random.split(key)

    # The fc layer (16*4*4) implies a 28x28 input with three stride-2 convs.
    x = jax.random.normal(kx, (2, 1, 28, 28), dtype=jnp.float32)
    params = init_params(kp, num_classes=10)

    out = jax.block_until_ready(compact_net_forward(x, params))
    ref = jax.block_until_ready(reference_forward(x, params))

    assert out.shape == (2, 10)
    assert jnp.allclose(out, ref, rtol=2e-3, atol=2e-3), (
        f"mismatch: max abs err {jnp.max(jnp.abs(out - ref))}")

    print("KERNEL_OK")
</pallas_src>

<mosaic_0001>
module attributes {stable_mosaic.version = 11 : i64} {
  func.func @_compactnet_kernel(%arg0: i32, %arg1: memref<9x1x392xf32, #tpu.memory_space<vmem>>, %arg2: memref<3x392x1xi32, #tpu.memory_space<vmem>>, %arg3: memref<3x1x98xi32, #tpu.memory_space<vmem>>, %arg4: memref<3x98x1xi32, #tpu.memory_space<vmem>>, %arg5: memref<3x1x32xi32, #tpu.memory_space<vmem>>, %arg6: memref<9x16x1xf32, #tpu.memory_space<vmem>>, %arg7: memref<16x1xf32, #tpu.memory_space<vmem>>, %arg8: memref<16x1xf32, #tpu.memory_space<vmem>>, %arg9: memref<16x1xf32, #tpu.memory_space<vmem>>, %arg10: memref<9x16x1xf32, #tpu.memory_space<vmem>>, %arg11: memref<16x1xf32, #tpu.memory_space<vmem>>, %arg12: memref<16x1xf32, #tpu.memory_space<vmem>>, %arg13: memref<16x1xf32, #tpu.memory_space<vmem>>, %arg14: memref<9x16x1xf32, #tpu.memory_space<vmem>>, %arg15: memref<16x1xf32, #tpu.memory_space<vmem>>, %arg16: memref<16x1xf32, #tpu.memory_space<vmem>>, %arg17: memref<16x1xf32, #tpu.memory_space<vmem>>, %arg18: memref<16x10x32xf32, #tpu.memory_space<vmem>>, %arg19: memref<32x2xf32, #tpu.memory_space<vmem>>, %arg20: memref<10x1xf32, #tpu.memory_space<vmem>>, %arg21: memref<10x2xf32, #tpu.memory_space<vmem>>, %arg22: memref<16x32xf32, #tpu.memory_space<vmem>>) attributes {dimension_semantics = [#tpu.dimension_semantics<arbitrary>], iteration_bounds = array<i64: 1>, scalar_prefetch = 0 : i64, scratch_operands = 1 : i64, tpu.core_type = #tpu.core_type<tc>, window_params = [{pipeline_mode = #tpu.pipeline_mode<synchronous>, transform_indices = @transform_0, window_bounds = array<i64: 9, 1, 392>}, {pipeline_mode = #tpu.pipeline_mode<synchronous>, transform_indices = @transform_1, window_bounds = array<i64: 3, 392, 1>}, {pipeline_mode = #tpu.pipeline_mode<synchronous>, transform_indices = @transform_2, window_bounds = array<i64: 3, 1, 98>}, {pipeline_mode = #tpu.pipeline_mode<synchronous>, transform_indices = @transform_3, window_bounds = array<i64: 3, 98, 1>}, {pipeline_mode = #tpu.pipeline_mode<synchronous>, transform_indices = @transform_4, window_bounds = array<i64: 3, 1, 32>}, {pipeline_mode = #tpu.pipeline_mode<synchronous>, transform_indices = @transform_5, window_bounds = array<i64: 9, 16, 1>}, {pipeline_mode = #tpu.pipeline_mode<synchronous>, transform_indices = @transform_6, window_bounds = array<i64: 16, 1>}, {pipeline_mode = #tpu.pipeline_mode<synchronous>, transform_indices = @transform_7, window_bounds = array<i64: 16, 1>}, {pipeline_mode = #tpu.pipeline_mode<synchronous>, transform_indices = @transform_8, window_bounds = array<i64: 16, 1>}, {pipeline_mode = #tpu.pipeline_mode<synchronous>, transform_indices = @transform_9, window_bounds = array<i64: 9, 16, 1>}, {pipeline_mode = #tpu.pipeline_mode<synchronous>, transform_indices = @transform_10, window_bounds = array<i64: 16, 1>}, {pipeline_mode = #tpu.pipeline_mode<synchronous>, transform_indices = @transform_11, window_bounds = array<i64: 16, 1>}, {pipeline_mode = #tpu.pipeline_mode<synchronous>, transform_indices = @transform_12, window_bounds = array<i64: 16, 1>}, {pipeline_mode = #tpu.pipeline_mode<synchronous>, transform_indices = @transform_13, window_bounds = array<i64: 9, 16, 1>}, {pipeline_mode = #tpu.pipeline_mode<synchronous>, transform_indices = @transform_14, window_bounds = array<i64: 16, 1>}, {pipeline_mode = #tpu.pipeline_mode<synchronous>, transform_indices = @transform_15, window_bounds = array<i64: 16, 1>}, {pipeline_mode = #tpu.pipeline_mode<synchronous>, transform_indices = @transform_16, window_bounds = array<i64: 16, 1>}, {pipeline_mode = #tpu.pipeline_mode<synchronous>, transform_indices = @transform_17, window_bounds = array<i64: 16, 10, 32>}, {pipeline_mode = #tpu.pipeline_mode<synchronous>, transform_indices = @transform_18, window_bounds = array<i64: 32, 2>}, {pipeline_mode = #tpu.pipeline_mode<synchronous>, transform_indices = @transform_19, window_bounds = array<i64: 10, 1>}, {pipeline_mode = #tpu.pipeline_mode<synchronous>, transform_indices = @transform_20, window_bounds = array<i64: 10, 2>}]} {
    %c0 = arith.constant 0 : index
    %c0_0 = arith.constant 0 : index
    %c0_1 = arith.constant 0 : index
    %0 = vector.load %arg6[%c0, %c0_0, %c0_1] : memref<9x16x1xf32, #tpu.memory_space<vmem>>, vector<1x16x1xf32>
    %1 = vector.shape_cast %0 : vector<1x16x1xf32> to vector<16x1xf32>
    %c0_2 = arith.constant 0 : index
    %c0_3 = arith.constant 0 : index
    %c0_4 = arith.constant 0 : index
    %2 = vector.load %arg1[%c0_2, %c0_3, %c0_4] : memref<9x1x392xf32, #tpu.memory_space<vmem>>, vector<1x1x392xf32>
    %3 = vector.shape_cast %2 : vector<1x1x392xf32> to vector<1x392xf32>
    %4 = vector.broadcast %1 : vector<16x1xf32> to vector<16x392xf32>
    %5 = vector.broadcast %3 : vector<1x392xf32> to vector<16x392xf32>
    %6 = arith.mulf %4, %5 : vector<16x392xf32>
    %c1 = arith.constant 1 : index
    %c0_5 = arith.constant 0 : index
    %c0_6 = arith.constant 0 : index
    %7 = vector.load %arg6[%c1, %c0_5, %c0_6] : memref<9x16x1xf32, #tpu.memory_space<vmem>>, vector<1x16x1xf32>
    %8 = vector.shape_cast %7 : vector<1x16x1xf32> to vector<16x1xf32>
    %c1_7 = arith.constant 1 : index
    %c0_8 = arith.constant 0 : index
    %c0_9 = arith.constant 0 : index
    %9 = vector.load %arg1[%c1_7, %c0_8, %c0_9] : memref<9x1x392xf32, #tpu.memory_space<vmem>>, vector<1x1x392xf32>
    %10 = vector.shape_cast %9 : vector<1x1x392xf32> to vector<1x392xf32>
    %11 = vector.broadcast %8 : vector<16x1xf32> to vector<16x392xf32>
    %12 = vector.broadcast %10 : vector<1x392xf32> to vector<16x392xf32>
    %13 = arith.mulf %11, %12 : vector<16x392xf32>
    %14 = arith.addf %6, %13 : vector<16x392xf32>
    %c2 = arith.constant 2 : index
    %c0_10 = arith.constant 0 : index
    %c0_11 = arith.constant 0 : index
    %15 = vector.load %arg6[%c2, %c0_10, %c0_11] : memref<9x16x1xf32, #tpu.memory_space<vmem>>, vector<1x16x1xf32>
    %16 = vector.shape_cast %15 : vector<1x16x1xf32> to vector<16x1xf32>
    %c2_12 = arith.constant 2 : index
    %c0_13 = arith.constant 0 : index
    %c0_14 = arith.constant 0 : index
    %17 = vector.load %arg1[%c2_12, %c0_13, %c0_14] : memref<9x1x392xf32, #tpu.memory_space<vmem>>, vector<1x1x392xf32>
    %18 = vector.shape_cast %17 : vector<1x1x392xf32> to vector<1x392xf32>
    %19 = vector.broadcast %16 : vector<16x1xf32> to vector<16x392xf32>
    %20 = vector.broadcast %18 : vector<1x392xf32> to vector<16x392xf32>
    %21 = arith.mulf %19, %20 : vector<16x392xf32>
    %22 = arith.addf %14, %21 : vector<16x392xf32>
    %c3 = arith.constant 3 : index
    %c0_15 = arith.constant 0 : index
    %c0_16 = arith.constant 0 : index
    %23 = vector.load %arg6[%c3, %c0_15, %c0_16] : memref<9x16x1xf32, #tpu.memory_space<vmem>>, vector<1x16x1xf32>
    %24 = vector.shape_cast %23 : vector<1x16x1xf32> to vector<16x1xf32>
    %c3_17 = arith.constant 3 : index
    %c0_18 = arith.constant 0 : index
    %c0_19 = arith.constant 0 : index
    %25 = vector.load %arg1[%c3_17, %c0_18, %c0_19] : memref<9x1x392xf32, #tpu.memory_space<vmem>>, vector<1x1x392xf32>
    %26 = vector.shape_cast %25 : vector<1x1x392xf32> to vector<1x392xf32>
    %27 = vector.broadcast %24 : vector<16x1xf32> to vector<16x392xf32>
    %28 = vector.broadcast %26 : vector<1x392xf32> to vector<16x392xf32>
    %29 = arith.mulf %27, %28 : vector<16x392xf32>
    %30 = arith.addf %22, %29 : vector<16x392xf32>
    %c4 = arith.constant 4 : index
    %c0_20 = arith.constant 0 : index
    %c0_21 = arith.constant 0 : index
    %31 = vector.load %arg6[%c4, %c0_20, %c0_21] : memref<9x16x1xf32, #tpu.memory_space<vmem>>, vector<1x16x1xf32>
    %32 = vector.shape_cast %31 : vector<1x16x1xf32> to vector<16x1xf32>
    %c4_22 = arith.constant 4 : index
    %c0_23 = arith.constant 0 : index
    %c0_24 = arith.constant 0 : index
    %33 = vector.load %arg1[%c4_22, %c0_23, %c0_24] : memref<9x1x392xf32, #tpu.memory_space<vmem>>, vector<1x1x392xf32>
    %34 = vector.shape_cast %33 : vector<1x1x392xf32> to vector<1x392xf32>
    %35 = vector.broadcast %32 : vector<16x1xf32> to vector<16x392xf32>
    %36 = vector.broadcast %34 : vector<1x392xf32> to vector<16x392xf32>
    %37 = arith.mulf %35, %36 : vector<16x392xf32>
    %38 = arith.addf %30, %37 : vector<16x392xf32>
    %c5 = arith.constant 5 : index
    %c0_25 = arith.constant 0 : index
    %c0_26 = arith.constant 0 : index
    %39 = vector.load %arg6[%c5, %c0_25, %c0_26] : memref<9x16x1xf32, #tpu.memory_space<vmem>>, vector<1x16x1xf32>
    %40 = vector.shape_cast %39 : vector<1x16x1xf32> to vector<16x1xf32>
    %c5_27 = arith.constant 5 : index
    %c0_28 = arith.constant 0 : index
    %c0_29 = arith.constant 0 : index
    %41 = vector.load %arg1[%c5_27, %c0_28, %c0_29] : memref<9x1x392xf32, #tpu.memory_space<vmem>>, vector<1x1x392xf32>
    %42 = vector.shape_cast %41 : vector<1x1x392xf32> to vector<1x392xf32>
    %43 = vector.broadcast %40 : vector<16x1xf32> to vector<16x392xf32>
    %44 = vector.broadcast %42 : vector<1x392xf32> to vector<16x392xf32>
    %45 = arith.mulf %43, %44 : vector<16x392xf32>
    %46 = arith.addf %38, %45 : vector<16x392xf32>
    %c6 = arith.constant 6 : index
    %c0_30 = arith.constant 0 : index
    %c0_31 = arith.constant 0 : index
    %47 = vector.load %arg6[%c6, %c0_30, %c0_31] : memref<9x16x1xf32, #tpu.memory_space<vmem>>, vector<1x16x1xf32>
    %48 = vector.shape_cast %47 : vector<1x16x1xf32> to vector<16x1xf32>
    %c6_32 = arith.constant 6 : index
    %c0_33 = arith.constant 0 : index
    %c0_34 = arith.constant 0 : index
    %49 = vector.load %arg1[%c6_32, %c0_33, %c0_34] : memref<9x1x392xf32, #tpu.memory_space<vmem>>, vector<1x1x392xf32>
    %50 = vector.shape_cast %49 : vector<1x1x392xf32> to vector<1x392xf32>
    %51 = vector.broadcast %48 : vector<16x1xf32> to vector<16x392xf32>
    %52 = vector.broadcast %50 : vector<1x392xf32> to vector<16x392xf32>
    %53 = arith.mulf %51, %52 : vector<16x392xf32>
    %54 = arith.addf %46, %53 : vector<16x392xf32>
    %c7 = arith.constant 7 : index
    %c0_35 = arith.constant 0 : index
    %c0_36 = arith.constant 0 : index
    %55 = vector.load %arg6[%c7, %c0_35, %c0_36] : memref<9x16x1xf32, #tpu.memory_space<vmem>>, vector<1x16x1xf32>
    %56 = vector.shape_cast %55 : vector<1x16x1xf32> to vector<16x1xf32>
    %c7_37 = arith.constant 7 : index
    %c0_38 = arith.constant 0 : index
    %c0_39 = arith.constant 0 : index
    %57 = vector.load %arg1[%c7_37, %c0_38, %c0_39] : memref<9x1x392xf32, #tpu.memory_space<vmem>>, vector<1x1x392xf32>
    %58 = vector.shape_cast %57 : vector<1x1x392xf32> to vector<1x392xf32>
    %59 = vector.broadcast %56 : vector<16x1xf32> to vector<16x392xf32>
    %60 = vector.broadcast %58 : vector<1x392xf32> to vector<16x392xf32>
    %61 = arith.mulf %59, %60 : vector<16x392xf32>
    %62 = arith.addf %54, %61 : vector<16x392xf32>
    %c8 = arith.constant 8 : index
    %c0_40 = arith.constant 0 : index
    %c0_41 = arith.constant 0 : index
    %63 = vector.load %arg6[%c8, %c0_40, %c0_41] : memref<9x16x1xf32, #tpu.memory_space<vmem>>, vector<1x16x1xf32>
    %64 = vector.shape_cast %63 : vector<1x16x1xf32> to vector<16x1xf32>
    %c8_42 = arith.constant 8 : index
    %c0_43 = arith.constant 0 : index
    %c0_44 = arith.constant 0 : index
    %65 = vector.load %arg1[%c8_42, %c0_43, %c0_44] : memref<9x1x392xf32, #tpu.memory_space<vmem>>, vector<1x1x392xf32>
    %66 = vector.shape_cast %65 : vector<1x1x392xf32> to vector<1x392xf32>
    %67 = vector.broadcast %64 : vector<16x1xf32> to vector<16x392xf32>
    %68 = vector.broadcast %66 : vector<1x392xf32> to vector<16x392xf32>
    %69 = arith.mulf %67, %68 : vector<16x392xf32>
    %70 = arith.addf %62, %69 : vector<16x392xf32>
    %c0_45 = arith.constant 0 : index
    %c0_46 = arith.constant 0 : index
    %71 = vector.load %arg7[%c0_45, %c0_46] : memref<16x1xf32, #tpu.memory_space<vmem>>, vector<16x1xf32>
    %72 = vector.broadcast %71 : vector<16x1xf32> to vector<16x392xf32>
    %73 = arith.addf %70, %72 : vector<16x392xf32>
    %cst = arith.constant dense<0.000000e+00> : vector<16xf32>
    %74 = vector.multi_reduction <add>, %73, %cst [1] : vector<16x392xf32> to vector<16xf32>
    %75 = vector.shape_cast %74 : vector<16xf32> to vector<16x1xf32>
    %cst_47 = arith.constant 3.920000e+02 : f32
    %76 = vector.broadcast %cst_47 : f32 to vector<16x1xf32>
    %77 = arith.divf %75, %76 : vector<16x1xf32>
    %78 = vector.broadcast %77 : vector<16x1xf32> to vector<16x392xf32>
    %79 = arith.subf %73, %78 : vector<16x392xf32>
    %80 = vector.broadcast %77 : vector<16x1xf32> to vector<16x392xf32>
    %81 = arith.subf %73, %80 : vector<16x392xf32>
    %82 = arith.mulf %79, %81 : vector<16x392xf32>
    %cst_48 = arith.constant dense<0.000000e+00> : vector<16xf32>
    %83 = vector.multi_reduction <add>, %82, %cst_48 [1] : vector<16x392xf32> to vector<16xf32>
    %84 = vector.shape_cast %83 : vector<16xf32> to vector<16x1xf32>
    %cst_49 = arith.constant 3.920000e+02 : f32
    %85 = vector.broadcast %cst_49 : f32 to vector<16x1xf32>
    %86 = arith.divf %84, %85 : vector<16x1xf32>
    %c0_50 = arith.constant 0 : index
    %c0_51 = arith.constant 0 : index
    %87 = vector.load %arg8[%c0_50, %c0_51] : memref<16x1xf32, #tpu.memory_space<vmem>>, vector<16x1xf32>
    %cst_52 = arith.constant 9.99999974E-6 : f32
    %88 = vector.broadcast %cst_52 : f32 to vector<16x1xf32>
    %89 = arith.addf %86, %88 : vector<16x1xf32>
    %90 = math.rsqrt %89 : vector<16x1xf32>
    %91 = arith.mulf %87, %90 : vector<16x1xf32>
    %c0_53 = arith.constant 0 : index
    %c0_54 = arith.constant 0 : index
    %92 = vector.load %arg9[%c0_53, %c0_54] : memref<16x1xf32, #tpu.memory_space<vmem>>, vector<16x1xf32>
    %93 = arith.mulf %91, %77 : vector<16x1xf32>
    %94 = arith.subf %92, %93 : vector<16x1xf32>
    %95 = vector.broadcast %91 : vector<16x1xf32> to vector<16x392xf32>
    %96 = arith.mulf %73, %95 : vector<16x392xf32>
    %97 = vector.broadcast %94 : vector<16x1xf32> to vector<16x392xf32>
    %98 = arith.addf %96, %97 : vector<16x392xf32>
    %c0_55 = arith.constant 0 : index
    %c0_56 = arith.constant 0 : index
    %c0_57 = arith.constant 0 : index
    %99 = vector.load %arg2[%c0_55, %c0_56, %c0_57] : memref<3x392x1xi32, #tpu.memory_space<vmem>>, vector<1x392x1xi32>
    %100 = vector.shape_cast %99 : vector<1x392x1xi32> to vector<392x1xi32>
    %c1_58 = arith.constant 1 : index
    %c0_59 = arith.constant 0 : index
    %c0_60 = arith.constant 0 : index
    %101 = vector.load %arg2[%c1_58, %c0_59, %c0_60] : memref<3x392x1xi32, #tpu.memory_space<vmem>>, vector<1x392x1xi32>
    %102 = vector.shape_cast %101 : vector<1x392x1xi32> to vector<392x1xi32>
    %c2_61 = arith.constant 2 : index
    %c0_62 = arith.constant 0 : index
    %c0_63 = arith.constant 0 : index
    %103 = vector.load %arg2[%c2_61, %c0_62, %c0_63] : memref<3x392x1xi32, #tpu.memory_space<vmem>>, vector<1x392x1xi32>
    %104 = vector.shape_cast %103 : vector<1x392x1xi32> to vector<392x1xi32>
    %c0_64 = arith.constant 0 : index
    %c0_65 = arith.constant 0 : index
    %c0_66 = arith.constant 0 : index
    %105 = vector.load %arg3[%c0_64, %c0_65, %c0_66] : memref<3x1x98xi32, #tpu.memory_space<vmem>>, vector<1x1x98xi32>
    %106 = vector.shape_cast %105 : vector<1x1x98xi32> to vector<1x98xi32>
    %c1_67 = arith.constant 1 : index
    %c0_68 = arith.constant 0 : index
    %c0_69 = arith.constant 0 : index
    %107 = vector.load %arg3[%c1_67, %c0_68, %c0_69] : memref<3x1x98xi32, #tpu.memory_space<vmem>>, vector<1x1x98xi32>
    %108 = vector.shape_cast %107 : vector<1x1x98xi32> to vector<1x98xi32>
    %c2_70 = arith.constant 2 : index
    %c0_71 = arith.constant 0 : index
    %c0_72 = arith.constant 0 : index
    %109 = vector.load %arg3[%c2_70, %c0_71, %c0_72] : memref<3x1x98xi32, #tpu.memory_space<vmem>>, vector<1x1x98xi32>
    %110 = vector.shape_cast %109 : vector<1x1x98xi32> to vector<1x98xi32>
    %111 = vector.broadcast %100 : vector<392x1xi32> to vector<392x98xi32>
    %112 = vector.broadcast %106 : vector<1x98xi32> to vector<392x98xi32>
    %113 = arith.cmpi eq, %111, %112 : vector<392x98xi32>
    %c0_i32 = arith.constant 0 : i32
    %114 = vector.broadcast %c0_i32 : i32 to vector<1x98xi32>
    %115 = arith.addi %108, %114 : vector<1x98xi32>
    %116 = vector.broadcast %102 : vector<392x1xi32> to vector<392x98xi32>
    %117 = vector.broadcast %115 : vector<1x98xi32> to vector<392x98xi32>
    %118 = arith.cmpi eq, %116, %117 : vector<392x98xi32>
    %119 = arith.andi %113, %118 : vector<392x98xi1>
    %c0_i32_73 = arith.constant 0 : i32
    %120 = vector.broadcast %c0_i32_73 : i32 to vector<1x98xi32>
    %121 = arith.addi %110, %120 : vector<1x98xi32>
    %122 = vector.broadcast %104 : vector<392x1xi32> to vector<392x98xi32>
    %123 = vector.broadcast %121 : vector<1x98xi32> to vector<392x98xi32>
    %124 = arith.cmpi eq, %122, %123 : vector<392x98xi32>
    %125 = arith.andi %119, %124 : vector<392x98xi1>
    %cst_74 = arith.constant 1.000000e+00 : f32
    %cst_75 = arith.constant 0.000000e+00 : f32
    %126 = vector.broadcast %cst_74 : f32 to vector<392x98xf32>
    %127 = vector.broadcast %cst_75 : f32 to vector<392x98xf32>
    %128 = arith.select %125, %126, %127 : vector<392x98xi1>, vector<392x98xf32>
    %cst_76 = arith.constant dense<0.000000e+00> : vector<16x98xf32>
    %129 = tpu.matmul %98, %128, %cst_76 {dimension_numbers = #tpu.dot_dimension_numbers<[1], [0], [0], [1], [0, 0, 1, 1], [], []>} : vector<16x392xf32>, vector<392x98xf32>, vector<16x98xf32> -> vector<16x98xf32>
    %c0_77 = arith.constant 0 : index
    %c0_78 = arith.constant 0 : index
    %c0_79 = arith.constant 0 : index
    %130 = vector.load %arg10[%c0_77, %c0_78, %c0_79] : memref<9x16x1xf32, #tpu.memory_space<vmem>>, vector<1x16x1xf32>
    %131 = vector.shape_cast %130 : vector<1x16x1xf32> to vector<16x1xf32>
    %132 = vector.broadcast %131 : vector<16x1xf32> to vector<16x98xf32>
    %133 = arith.mulf %129, %132 : vector<16x98xf32>
    %c0_i32_80 = arith.constant 0 : i32
    %134 = vector.broadcast %c0_i32_80 : i32 to vector<1x98xi32>
    %135 = arith.addi %108, %134 : vector<1x98xi32>
    %136 = vector.broadcast %102 : vector<392x1xi32> to vector<392x98xi32>
    %137 = vector.broadcast %135 : vector<1x98xi32> to vector<392x98xi32>
    %138 = arith.cmpi eq, %136, %137 : vector<392x98xi32>
    %139 = arith.andi %113, %138 : vector<392x98xi1>
    %c1_i32 = arith.constant 1 : i32
    %140 = vector.broadcast %c1_i32 : i32 to vector<1x98xi32>
    %141 = arith.addi %110, %140 : vector<1x98xi32>
    %142 = vector.broadcast %104 : vector<392x1xi32> to vector<392x98xi32>
    %143 = vector.broadcast %141 : vector<1x98xi32> to vector<392x98xi32>
    %144 = arith.cmpi eq, %142, %143 : vector<392x98xi32>
    %145 = arith.andi %139, %144 : vector<392x98xi1>
    %cst_81 = arith.constant 1.000000e+00 : f32
    %cst_82 = arith.constant 0.000000e+00 : f32
    %146 = vector.broadcast %cst_81 : f32 to vector<392x98xf32>
    %147 = vector.broadcast %cst_82 : f32 to vector<392x98xf32>
    %148 = arith.select %145, %146, %147 : vector<392x98xi1>, vector<392x98xf32>
    %cst_83 = arith.constant dense<0.000000e+00> : vector<16x98xf32>
    %149 = tpu.matmul %98, %148, %cst_83 {dimension_numbers = #tpu.dot_dimension_numbers<[1], [0], [0], [1], [0, 0, 1, 1], [], []>} : vector<16x392xf32>, vector<392x98xf32>, vector<16x98xf32> -> vector<16x98xf32>
    %c1_84 = arith.constant 1 : index
    %c0_85 = arith.constant 0 : index
    %c0_86 = arith.constant 0 : index
    %150 = vector.load %arg10[%c1_84, %c0_85, %c0_86] : memref<9x16x1xf32, #tpu.memory_space<vmem>>, vector<1x16x1xf32>
    %151 = vector.shape_cast %150 : vector<1x16x1xf32> to vector<16x1xf32>
    %152 = vector.broadcast %151 : vector<16x1xf32> to vector<16x98xf32>
    %153 = arith.mulf %149, %152 : vector<16x98xf32>
    %154 = arith.addf %133, %153 : vector<16x98xf32>
    %c0_i32_87 = arith.constant 0 : i32
    %155 = vector.broadcast %c0_i32_87 : i32 to vector<1x98xi32>
    %156 = arith.addi %108, %155 : vector<1x98xi32>
    %157 = vector.broadcast %102 : vector<392x1xi32> to vector<392x98xi32>
    %158 = vector.broadcast %156 : vector<1x98xi32> to vector<392x98xi32>
    %159 = arith.cmpi eq, %157, %158 : vector<392x98xi32>
    %160 = arith.andi %113, %159 : vector<392x98xi1>
    %c2_i32 = arith.constant 2 : i32
    %161 = vector.broadcast %c2_i32 : i32 to vector<1x98xi32>
    %162 = arith.addi %110, %161 : vector<1x98xi32>
    %163 = vector.broadcast %104 : vector<392x1xi32> to vector<392x98xi32>
    %164 = vector.broadcast %162 : vector<1x98xi32> to vector<392x98xi32>
    %165 = arith.cmpi eq, %163, %164 : vector<392x98xi32>
    %166 = arith.andi %160, %165 : vector<392x98xi1>
    %cst_88 = arith.constant 1.000000e+00 : f32
    %cst_89 = arith.constant 0.000000e+00 : f32
    %167 = vector.broadcast %cst_88 : f32 to vector<392x98xf32>
    %168 = vector.broadcast %cst_89 : f32 to vector<392x98xf32>
    %169 = arith.select %166, %167, %168 : vector<392x98xi1>, vector<392x98xf32>
    %cst_90 = arith.constant dense<0.000000e+00> : vector<16x98xf32>
    %170 = tpu.matmul %98, %169, %cst_90 {dimension_numbers = #tpu.dot_dimension_numbers<[1], [0], [0], [1], [0, 0, 1, 1], [], []>} : vector<16x392xf32>, vector<392x98xf32>, vector<16x98xf32> -> vector<16x98xf32>
    %c2_91 = arith.constant 2 : index
    %c0_92 = arith.constant 0 : index
    %c0_93 = arith.constant 0 : index
    %171 = vector.load %arg10[%c2_91, %c0_92, %c0_93] : memref<9x16x1xf32, #tpu.memory_space<vmem>>, vector<1x16x1xf32>
    %172 = vector.shape_cast %171 : vector<1x16x1xf32> to vector<16x1xf32>
    %173 = vector.broadcast %172 : vector<16x1xf32> to vector<16x98xf32>
    %174 = arith.mulf %170, %173 : vector<16x98xf32>
    %175 = arith.addf %154, %174 : vector<16x98xf32>
    %c1_i32_94 = arith.constant 1 : i32
    %176 = vector.broadcast %c1_i32_94 : i32 to vector<1x98xi32>
    %177 = arith.addi %108, %176 : vector<1x98xi32>
    %178 = vector.broadcast %102 : vector<392x1xi32> to vector<392x98xi32>
    %179 = vector.broadcast %177 : vector<1x98xi32> to vector<392x98xi32>
    %180 = arith.cmpi eq, %178, %179 : vector<392x98xi32>
    %181 = arith.andi %113, %180 : vector<392x98xi1>
    %c0_i32_95 = arith.constant 0 : i32
    %182 = vector.broadcast %c0_i32_95 : i32 to vector<1x98xi32>
    %183 = arith.addi %110, %182 : vector<1x98xi32>
    %184 = vector.broadcast %104 : vector<392x1xi32> to vector<392x98xi32>
    %185 = vector.broadcast %183 : vector<1x98xi32> to vector<392x98xi32>
    %186 = arith.cmpi eq, %184, %185 : vector<392x98xi32>
    %187 = arith.andi %181, %186 : vector<392x98xi1>
    %cst_96 = arith.constant 1.000000e+00 : f32
    %cst_97 = arith.constant 0.000000e+00 : f32
    %188 = vector.broadcast %cst_96 : f32 to vector<392x98xf32>
    %189 = vector.broadcast %cst_97 : f32 to vector<392x98xf32>
    %190 = arith.select %187, %188, %189 : vector<392x98xi1>, vector<392x98xf32>
    %cst_98 = arith.constant dense<0.000000e+00> : vector<16x98xf32>
    %191 = tpu.matmul %98, %190, %cst_98 {dimension_numbers = #tpu.dot_dimension_numbers<[1], [0], [0], [1], [0, 0, 1, 1], [], []>} : vector<16x392xf32>, vector<392x98xf32>, vector<16x98xf32> -> vector<16x98xf32>
    %c3_99 = arith.constant 3 : index
    %c0_100 = arith.constant 0 : index
    %c0_101 = arith.constant 0 : index
    %192 = vector.load %arg10[%c3_99, %c0_100, %c0_101] : memref<9x16x1xf32, #tpu.memory_space<vmem>>, vector<1x16x1xf32>
    %193 = vector.shape_cast %192 : vector<1x16x1xf32> to vector<16x1xf32>
    %194 = vector.broadcast %193 : vector<16x1xf32> to vector<16x98xf32>
    %195 = arith.mulf %191, %194 : vector<16x98xf32>
    %196 = arith.addf %175, %195 : vector<16x98xf32>
    %c1_i32_102 = arith.constant 1 : i32
    %197 = vector.broadcast %c1_i32_102 : i32 to vector<1x98xi32>
    %198 = arith.addi %108, %197 : vector<1x98xi32>
    %199 = vector.broadcast %102 : vector<392x1xi32> to vector<392x98xi32>
    %200 = vector.broadcast %198 : vector<1x98xi32> to vector<392x98xi32>
    %201 = arith.cmpi eq, %199, %200 : vector<392x98xi32>
    %202 = arith.andi %113, %201 : vector<392x98xi1>
    %c1_i32_103 = arith.constant 1 : i32
    %203 = vector.broadcast %c1_i32_103 : i32 to vector<1x98xi32>
    %204 = arith.addi %110, %203 : vector<1x98xi32>
    %205 = vector.broadcast %104 : vector<392x1xi32> to vector<392x98xi32>
    %206 = vector.broadcast %204 : vector<1x98xi32> to vector<392x98xi32>
    %207 = arith.cmpi eq, %205, %206 : vector<392x98xi32>
    %208 = arith.andi %202, %207 : vector<392x98xi1>
    %cst_104 = arith.constant 1.000000e+00 : f32
    %cst_105 = arith.constant 0.000000e+00 : f32
    %209 = vector.broadcast %cst_104 : f32 to vector<392x98xf32>
    %210 = vector.broadcast %cst_105 : f32 to vector<392x98xf32>
    %211 = arith.select %208, %209, %210 : vector<392x98xi1>, vector<392x98xf32>
    %cst_106 = arith.constant dense<0.000000e+00> : vector<16x98xf32>
    %212 = tpu.matmul %98, %211, %cst_106 {dimension_numbers = #tpu.dot_dimension_numbers<[1], [0], [0], [1], [0, 0, 1, 1], [], []>} : vector<16x392xf32>, vector<392x98xf32>, vector<16x98xf32> -> vector<16x98xf32>
    %c4_107 = arith.constant 4 : index
    %c0_108 = arith.constant 0 : index
    %c0_109 = arith.constant 0 : index
    %213 = vector.load %arg10[%c4_107, %c0_108, %c0_109] : memref<9x16x1xf32, #tpu.memory_space<vmem>>, vector<1x16x1xf32>
    %214 = vector.shape_cast %213 : vector<1x16x1xf32> to vector<16x1xf32>
    %215 = vector.broadcast %214 : vector<16x1xf32> to vector<16x98xf32>
    %216 = arith.mulf %212, %215 : vector<16x98xf32>
    %217 = arith.addf %196, %216 : vector<16x98xf32>
    %c1_i32_110 = arith.constant 1 : i32
    %218 = vector.broadcast %c1_i32_110 : i32 to vector<1x98xi32>
    %219 = arith.addi %108, %218 : vector<1x98xi32>
    %220 = vector.broadcast %102 : vector<392x1xi32> to vector<392x98xi32>
    %221 = vector.broadcast %219 : vector<1x98xi32> to vector<392x98xi32>
    %222 = arith.cmpi eq, %220, %221 : vector<392x98xi32>
    %223 = arith.andi %113, %222 : vector<392x98xi1>
    %c2_i32_111 = arith.constant 2 : i32
    %224 = vector.broadcast %c2_i32_111 : i32 to vector<1x98xi32>
    %225 = arith.addi %110, %224 : vector<1x98xi32>
    %226 = vector.broadcast %104 : vector<392x1xi32> to vector<392x98xi32>
    %227 = vector.broadcast %225 : vector<1x98xi32> to vector<392x98xi32>
    %228 = arith.cmpi eq, %226, %227 : vector<392x98xi32>
    %229 = arith.andi %223, %228 : vector<392x98xi1>
    %cst_112 = arith.constant 1.000000e+00 : f32
    %cst_113 = arith.constant 0.000000e+00 : f32
    %230 = vector.broadcast %cst_112 : f32 to vector<392x98xf32>
    %231 = vector.broadcast %cst_113 : f32 to vector<392x98xf32>
    %232 = arith.select %229, %230, %231 : vector<392x98xi1>, vector<392x98xf32>
    %cst_114 = arith.constant dense<0.000000e+00> : vector<16x98xf32>
    %233 = tpu.matmul %98, %232, %cst_114 {dimension_numbers = #tpu.dot_dimension_numbers<[1], [0], [0], [1], [0, 0, 1, 1], [], []>} : vector<16x392xf32>, vector<392x98xf32>, vector<16x98xf32> -> vector<16x98xf32>
    %c5_115 = arith.constant 5 : index
    %c0_116 = arith.constant 0 : index
    %c0_117 = arith.constant 0 : index
    %234 = vector.load %arg10[%c5_115, %c0_116, %c0_117] : memref<9x16x1xf32, #tpu.memory_space<vmem>>, vector<1x16x1xf32>
    %235 = vector.shape_cast %234 : vector<1x16x1xf32> to vector<16x1xf32>
    %236 = vector.broadcast %235 : vector<16x1xf32> to vector<16x98xf32>
    %237 = arith.mulf %233, %236 : vector<16x98xf32>
    %238 = arith.addf %217, %237 : vector<16x98xf32>
    %c2_i32_118 = arith.constant 2 : i32
    %239 = vector.broadcast %c2_i32_118 : i32 to vector<1x98xi32>
    %240 = arith.addi %108, %239 : vector<1x98xi32>
    %241 = vector.broadcast %102 : vector<392x1xi32> to vector<392x98xi32>
    %242 = vector.broadcast %240 : vector<1x98xi32> to vector<392x98xi32>
    %243 = arith.cmpi eq, %241, %242 : vector<392x98xi32>
    %244 = arith.andi %113, %243 : vector<392x98xi1>
    %c0_i32_119 = arith.constant 0 : i32
    %245 = vector.broadcast %c0_i32_119 : i32 to vector<1x98xi32>
    %246 = arith.addi %110, %245 : vector<1x98xi32>
    %247 = vector.broadcast %104 : vector<392x1xi32> to vector<392x98xi32>
    %248 = vector.broadcast %246 : vector<1x98xi32> to vector<392x98xi32>
    %249 = arith.cmpi eq, %247, %248 : vector<392x98xi32>
    %250 = arith.andi %244, %249 : vector<392x98xi1>
    %cst_120 = arith.constant 1.000000e+00 : f32
    %cst_121 = arith.constant 0.000000e+00 : f32
    %251 = vector.broadcast %cst_120 : f32 to vector<392x98xf32>
    %252 = vector.broadcast %cst_121 : f32 to vector<392x98xf32>
    %253 = arith.select %250, %251, %252 : vector<392x98xi1>, vector<392x98xf32>
    %cst_122 = arith.constant dense<0.000000e+00> : vector<16x98xf32>
    %254 = tpu.matmul %98, %253, %cst_122 {dimension_numbers = #tpu.dot_dimension_numbers<[1], [0], [0], [1], [0, 0, 1, 1], [], []>} : vector<16x392xf32>, vector<392x98xf32>, vector<16x98xf32> -> vector<16x98xf32>
    %c6_123 = arith.constant 6 : index
    %c0_124 = arith.constant 0 : index
    %c0_125 = arith.constant 0 : index
    %255 = vector.load %arg10[%c6_123, %c0_124, %c0_125] : memref<9x16x1xf32, #tpu.memory_space<vmem>>, vector<1x16x1xf32>
    %256 = vector.shape_cast %255 : vector<1x16x1xf32> to vector<16x1xf32>
    %257 = vector.broadcast %256 : vector<16x1xf32> to vector<16x98xf32>
    %258 = arith.mulf %254, %257 : vector<16x98xf32>
    %259 = arith.addf %238, %258 : vector<16x98xf32>
    %c2_i32_126 = arith.constant 2 : i32
    %260 = vector.broadcast %c2_i32_126 : i32 to vector<1x98xi32>
    %261 = arith.addi %108, %260 : vector<1x98xi32>
    %262 = vector.broadcast %102 : vector<392x1xi32> to vector<392x98xi32>
    %263 = vector.broadcast %261 : vector<1x98xi32> to vector<392x98xi32>
    %264 = arith.cmpi eq, %262, %263 : vector<392x98xi32>
    %265 = arith.andi %113, %264 : vector<392x98xi1>
    %c1_i32_127 = arith.constant 1 : i32
    %266 = vector.broadcast %c1_i32_127 : i32 to vector<1x98xi32>
    %267 = arith.addi %110, %266 : vector<1x98xi32>
    %268 = vector.broadcast %104 : vector<392x1xi32> to vector<392x98xi32>
    %269 = vector.broadcast %267 : vector<1x98xi32> to vector<392x98xi32>
    %270 = arith.cmpi eq, %268, %269 : vector<392x98xi32>
    %271 = arith.andi %265, %270 : vector<392x98xi1>
    %cst_128 = arith.constant 1.000000e+00 : f32
    %cst_129 = arith.constant 0.000000e+00 : f32
    %272 = vector.broadcast %cst_128 : f32 to vector<392x98xf32>
    %273 = vector.broadcast %cst_129 : f32 to vector<392x98xf32>
    %274 = arith.select %271, %272, %273 : vector<392x98xi1>, vector<392x98xf32>
    %cst_130 = arith.constant dense<0.000000e+00> : vector<16x98xf32>
    %275 = tpu.matmul %98, %274, %cst_130 {dimension_numbers = #tpu.dot_dimension_numbers<[1], [0], [0], [1], [0, 0, 1, 1], [], []>} : vector<16x392xf32>, vector<392x98xf32>, vector<16x98xf32> -> vector<16x98xf32>
    %c7_131 = arith.constant 7 : index
    %c0_132 = arith.constant 0 : index
    %c0_133 = arith.constant 0 : index
    %276 = vector.load %arg10[%c7_131, %c0_132, %c0_133] : memref<9x16x1xf32, #tpu.memory_space<vmem>>, vector<1x16x1xf32>
    %277 = vector.shape_cast %276 : vector<1x16x1xf32> to vector<16x1xf32>
    %278 = vector.broadcast %277 : vector<16x1xf32> to vector<16x98xf32>
    %279 = arith.mulf %275, %278 : vector<16x98xf32>
    %280 = arith.addf %259, %279 : vector<16x98xf32>
    %c2_i32_134 = arith.constant 2 : i32
    %281 = vector.broadcast %c2_i32_134 : i32 to vector<1x98xi32>
    %282 = arith.addi %108, %281 : vector<1x98xi32>
    %283 = vector.broadcast %102 : vector<392x1xi32> to vector<392x98xi32>
    %284 = vector.broadcast %282 : vector<1x98xi32> to vector<392x98xi32>
    %285 = arith.cmpi eq, %283, %284 : vector<392x98xi32>
    %286 = arith.andi %113, %285 : vector<392x98xi1>
    %c2_i32_135 = arith.constant 2 : i32
    %287 = vector.broadcast %c2_i32_135 : i32 to vector<1x98xi32>
    %288 = arith.addi %110, %287 : vector<1x98xi32>
    %289 = vector.broadcast %104 : vector<392x1xi32> to vector<392x98xi32>
    %290 = vector.broadcast %288 : vector<1x98xi32> to vector<392x98xi32>
    %291 = arith.cmpi eq, %289, %290 : vector<392x98xi32>
    %292 = arith.andi %286, %291 : vector<392x98xi1>
    %cst_136 = arith.constant 1.000000e+00 : f32
    %cst_137 = arith.constant 0.000000e+00 : f32
    %293 = vector.broadcast %cst_136 : f32 to vector<392x98xf32>
    %294 = vector.broadcast %cst_137 : f32 to vector<392x98xf32>
    %295 = arith.select %292, %293, %294 : vector<392x98xi1>, vector<392x98xf32>
    %cst_138 = arith.constant dense<0.000000e+00> : vector<16x98xf32>
    %296 = tpu.matmul %98, %295, %cst_138 {dimension_numbers = #tpu.dot_dimension_numbers<[1], [0], [0], [1], [0, 0, 1, 1], [], []>} : vector<16x392xf32>, vector<392x98xf32>, vector<16x98xf32> -> vector<16x98xf32>
    %c8_139 = arith.constant 8 : index
    %c0_140 = arith.constant 0 : index
    %c0_141 = arith.constant 0 : index
    %297 = vector.load %arg10[%c8_139, %c0_140, %c0_141] : memref<9x16x1xf32, #tpu.memory_space<vmem>>, vector<1x16x1xf32>
    %298 = vector.shape_cast %297 : vector<1x16x1xf32> to vector<16x1xf32>
    %299 = vector.broadcast %298 : vector<16x1xf32> to vector<16x98xf32>
    %300 = arith.mulf %296, %299 : vector<16x98xf32>
    %301 = arith.addf %280, %300 : vector<16x98xf32>
    %c0_142 = arith.constant 0 : index
    %c0_143 = arith.constant 0 : index
    %302 = vector.load %arg11[%c0_142, %c0_143] : memref<16x1xf32, #tpu.memory_space<vmem>>, vector<16x1xf32>
    %303 = vector.broadcast %302 : vector<16x1xf32> to vector<16x98xf32>
    %304 = arith.addf %301, %303 : vector<16x98xf32>
    %cst_144 = arith.constant dense<0.000000e+00> : vector<16xf32>
    %305 = vector.multi_reduction <add>, %304, %cst_144 [1] : vector<16x98xf32> to vector<16xf32>
    %306 = vector.shape_cast %305 : vector<16xf32> to vector<16x1xf32>
    %cst_145 = arith.constant 9.800000e+01 : f32
    %307 = vector.broadcast %cst_145 : f32 to vector<16x1xf32>
    %308 = arith.divf %306, %307 : vector<16x1xf32>
    %309 = vector.broadcast %308 : vector<16x1xf32> to vector<16x98xf32>
    %310 = arith.subf %304, %309 : vector<16x98xf32>
    %311 = vector.broadcast %308 : vector<16x1xf32> to vector<16x98xf32>
    %312 = arith.subf %304, %311 : vector<16x98xf32>
    %313 = arith.mulf %310, %312 : vector<16x98xf32>
    %cst_146 = arith.constant dense<0.000000e+00> : vector<16xf32>
    %314 = vector.multi_reduction <add>, %313, %cst_146 [1] : vector<16x98xf32> to vector<16xf32>
    %315 = vector.shape_cast %314 : vector<16xf32> to vector<16x1xf32>
    %cst_147 = arith.constant 9.800000e+01 : f32
    %316 = vector.broadcast %cst_147 : f32 to vector<16x1xf32>
    %317 = arith.divf %315, %316 : vector<16x1xf32>
    %c0_148 = arith.constant 0 : index
    %c0_149 = arith.constant 0 : index
    %318 = vector.load %arg12[%c0_148, %c0_149] : memref<16x1xf32, #tpu.memory_space<vmem>>, vector<16x1xf32>
    %cst_150 = arith.constant 9.99999974E-6 : f32
    %319 = vector.broadcast %cst_150 : f32 to vector<16x1xf32>
    %320 = arith.addf %317, %319 : vector<16x1xf32>
    %321 = math.rsqrt %320 : vector<16x1xf32>
    %322 = arith.mulf %318, %321 : vector<16x1xf32>
    %c0_151 = arith.constant 0 : index
    %c0_152 = arith.constant 0 : index
    %323 = vector.load %arg13[%c0_151, %c0_152] : memref<16x1xf32, #tpu.memory_space<vmem>>, vector<16x1xf32>
    %324 = arith.mulf %322, %308 : vector<16x1xf32>
    %325 = arith.subf %323, %324 : vector<16x1xf32>
    %326 = vector.broadcast %322 : vector<16x1xf32> to vector<16x98xf32>
    %327 = arith.mulf %304, %326 : vector<16x98xf32>
    %328 = vector.broadcast %325 : vector<16x1xf32> to vector<16x98xf32>
    %329 = arith.addf %327, %328 : vector<16x98xf32>
    %c0_153 = arith.constant 0 : index
    %c0_154 = arith.constant 0 : index
    %c0_155 = arith.constant 0 : index
    %330 = vector.load %arg4[%c0_153, %c0_154, %c0_155] : memref<3x98x1xi32, #tpu.memory_space<vmem>>, vector<1x98x1xi32>
    %331 = vector.shape_cast %330 : vector<1x98x1xi32> to vector<98x1xi32>
    %c1_156 = arith.constant 1 : index
    %c0_157 = arith.constant 0 : index
    %c0_158 = arith.constant 0 : index
    %332 = vector.load %arg4[%c1_156, %c0_157, %c0_158] : memref<3x98x1xi32, #tpu.memory_space<vmem>>, vector<1x98x1xi32>
    %333 = vector.shape_cast %332 : vector<1x98x1xi32> to vector<98x1xi32>
    %c2_159 = arith.constant 2 : index
    %c0_160 = arith.constant 0 : index
    %c0_161 = arith.constant 0 : index
    %334 = vector.load %arg4[%c2_159, %c0_160, %c0_161] : memref<3x98x1xi32, #tpu.memory_space<vmem>>, vector<1x98x1xi32>
    %335 = vector.shape_cast %334 : vector<1x98x1xi32> to vector<98x1xi32>
    %c0_162 = arith.constant 0 : index
    %c0_163 = arith.constant 0 : index
    %c0_164 = arith.constant 0 : index
    %336 = vector.load %arg5[%c0_162, %c0_163, %c0_164] : memref<3x1x32xi32, #tpu.memory_space<vmem>>, vector<1x1x32xi32>
    %337 = vector.shape_cast %336 : vector<1x1x32xi32> to vector<1x32xi32>
    %c1_165 = arith.constant 1 : index
    %c0_166 = arith.constant 0 : index
    %c0_167 = arith.constant 0 : index
    %338 = vector.load %arg5[%c1_165, %c0_166, %c0_167] : memref<3x1x32xi32, #tpu.memory_space<vmem>>, vector<1x1x32xi32>
    %339 = vector.shape_cast %338 : vector<1x1x32xi32> to vector<1x32xi32>
    %c2_168 = arith.constant 2 : index
    %c0_169 = arith.constant 0 : index
    %c0_170 = arith.constant 0 : index
    %340 = vector.load %arg5[%c2_168, %c0_169, %c0_170] : memref<3x1x32xi32, #tpu.memory_space<vmem>>, vector<1x1x32xi32>
    %341 = vector.shape_cast %340 : vector<1x1x32xi32> to vector<1x32xi32>
    %342 = vector.broadcast %331 : vector<98x1xi32> to vector<98x32xi32>
    %343 = vector.broadcast %337 : vector<1x32xi32> to vector<98x32xi32>
    %344 = arith.cmpi eq, %342, %343 : vector<98x32xi32>
    %c0_i32_171 = arith.constant 0 : i32
    %345 = vector.broadcast %c0_i32_171 : i32 to vector<1x32xi32>
    %346 = arith.addi %339, %345 : vector<1x32xi32>
    %347 = vector.broadcast %333 : vector<98x1xi32> to vector<98x32xi32>
    %348 = vector.broadcast %346 : vector<1x32xi32> to vector<98x32xi32>
    %349 = arith.cmpi eq, %347, %348 : vector<98x32xi32>
    %350 = arith.andi %344, %349 : vector<98x32xi1>
    %c0_i32_172 = arith.constant 0 : i32
    %351 = vector.broadcast %c0_i32_172 : i32 to vector<1x32xi32>
    %352 = arith.addi %341, %351 : vector<1x32xi32>
    %353 = vector.broadcast %335 : vector<98x1xi32> to vector<98x32xi32>
    %354 = vector.broadcast %352 : vector<1x32xi32> to vector<98x32xi32>
    %355 = arith.cmpi eq, %353, %354 : vector<98x32xi32>
    %356 = arith.andi %350, %355 : vector<98x32xi1>
    %cst_173 = arith.constant 1.000000e+00 : f32
    %cst_174 = arith.constant 0.000000e+00 : f32
    %357 = vector.broadcast %cst_173 : f32 to vector<98x32xf32>
    %358 = vector.broadcast %cst_174 : f32 to vector<98x32xf32>
    %359 = arith.select %356, %357, %358 : vector<98x32xi1>, vector<98x32xf32>
    %cst_175 = arith.constant dense<0.000000e+00> : vector<16x32xf32>
    %360 = tpu.matmul %329, %359, %cst_175 {dimension_numbers = #tpu.dot_dimension_numbers<[1], [0], [0], [1], [0, 0, 1, 1], [], []>} : vector<16x98xf32>, vector<98x32xf32>, vector<16x32xf32> -> vector<16x32xf32>
    %c0_176 = arith.constant 0 : index
    %c0_177 = arith.constant 0 : index
    %c0_178 = arith.constant 0 : index
    %361 = vector.load %arg14[%c0_176, %c0_177, %c0_178] : memref<9x16x1xf32, #tpu.memory_space<vmem>>, vector<1x16x1xf32>
    %362 = vector.shape_cast %361 : vector<1x16x1xf32> to vector<16x1xf32>
    %363 = vector.broadcast %362 : vector<16x1xf32> to vector<16x32xf32>
    %364 = arith.mulf %360, %363 : vector<16x32xf32>
    %c0_i32_179 = arith.constant 0 : i32
    %365 = vector.broadcast %c0_i32_179 : i32 to vector<1x32xi32>
    %366 = arith.addi %339, %365 : vector<1x32xi32>
    %367 = vector.broadcast %333 : vector<98x1xi32> to vector<98x32xi32>
    %368 = vector.broadcast %366 : vector<1x32xi32> to vector<98x32xi32>
    %369 = arith.cmpi eq, %367, %368 : vector<98x32xi32>
    %370 = arith.andi %344, %369 : vector<98x32xi1>
    %c1_i32_180 = arith.constant 1 : i32
    %371 = vector.broadcast %c1_i32_180 : i32 to vector<1x32xi32>
    %372 = arith.addi %341, %371 : vector<1x32xi32>
    %373 = vector.broadcast %335 : vector<98x1xi32> to vector<98x32xi32>
    %374 = vector.broadcast %372 : vector<1x32xi32> to vector<98x32xi32>
    %375 = arith.cmpi eq, %373, %374 : vector<98x32xi32>
    %376 = arith.andi %370, %375 : vector<98x32xi1>
    %cst_181 = arith.constant 1.000000e+00 : f32
    %cst_182 = arith.constant 0.000000e+00 : f32
    %377 = vector.broadcast %cst_181 : f32 to vector<98x32xf32>
    %378 = vector.broadcast %cst_182 : f32 to vector<98x32xf32>
    %379 = arith.select %376, %377, %378 : vector<98x32xi1>, vector<98x32xf32>
    %cst_183 = arith.constant dense<0.000000e+00> : vector<16x32xf32>
    %380 = tpu.matmul %329, %379, %cst_183 {dimension_numbers = #tpu.dot_dimension_numbers<[1], [0], [0], [1], [0, 0, 1, 1], [], []>} : vector<16x98xf32>, vector<98x32xf32>, vector<16x32xf32> -> vector<16x32xf32>
    %c1_184 = arith.constant 1 : index
    %c0_185 = arith.constant 0 : index
    %c0_186 = arith.constant 0 : index
    %381 = vector.load %arg14[%c1_184, %c0_185, %c0_186] : memref<9x16x1xf32, #tpu.memory_space<vmem>>, vector<1x16x1xf32>
    %382 = vector.shape_cast %381 : vector<1x16x1xf32> to vector<16x1xf32>
    %383 = vector.broadcast %382 : vector<16x1xf32> to vector<16x32xf32>
    %384 = arith.mulf %380, %383 : vector<16x32xf32>
    %385 = arith.addf %364, %384 : vector<16x32xf32>
    %c0_i32_187 = arith.constant 0 : i32
    %386 = vector.broadcast %c0_i32_187 : i32 to vector<1x32xi32>
    %387 = arith.addi %339, %386 : vector<1x32xi32>
    %388 = vector.broadcast %333 : vector<98x1xi32> to vector<98x32xi32>
    %389 = vector.broadcast %387 : vector<1x32xi32> to vector<98x32xi32>
    %390 = arith.cmpi eq, %388, %389 : vector<98x32xi32>
    %391 = arith.andi %344, %390 : vector<98x32xi1>
    %c2_i32_188 = arith.constant 2 : i32
    %392 = vector.broadcast %c2_i32_188 : i32 to vector<1x32xi32>
    %393 = arith.addi %341, %392 : vector<1x32xi32>
    %394 = vector.broadcast %335 : vector<98x1xi32> to vector<98x32xi32>
    %395 = vector.broadcast %393 : vector<1x32xi32> to vector<98x32xi32>
    %396 = arith.cmpi eq, %394, %395 : vector<98x32xi32>
    %397 = arith.andi %391, %396 : vector<98x32xi1>
    %cst_189 = arith.constant 1.000000e+00 : f32
    %cst_190 = arith.constant 0.000000e+00 : f32
    %398 = vector.broadcast %cst_189 : f32 to vector<98x32xf32>
    %399 = vector.broadcast %cst_190 : f32 to vector<98x32xf32>
    %400 = arith.select %397, %398, %399 : vector<98x32xi1>, vector<98x32xf32>
    %cst_191 = arith.constant dense<0.000000e+00> : vector<16x32xf32>
    %401 = tpu.matmul %329, %400, %cst_191 {dimension_numbers = #tpu.dot_dimension_numbers<[1], [0], [0], [1], [0, 0, 1, 1], [], []>} : vector<16x98xf32>, vector<98x32xf32>, vector<16x32xf32> -> vector<16x32xf32>
    %c2_192 = arith.constant 2 : index
    %c0_193 = arith.constant 0 : index
    %c0_194 = arith.constant 0 : index
    %402 = vector.load %arg14[%c2_192, %c0_193, %c0_194] : memref<9x16x1xf32, #tpu.memory_space<vmem>>, vector<1x16x1xf32>
    %403 = vector.shape_cast %402 : vector<1x16x1xf32> to vector<16x1xf32>
    %404 = vector.broadcast %403 : vector<16x1xf32> to vector<16x32xf32>
    %405 = arith.mulf %401, %404 : vector<16x32xf32>
    %406 = arith.addf %385, %405 : vector<16x32xf32>
    %c1_i32_195 = arith.constant 1 : i32
    %407 = vector.broadcast %c1_i32_195 : i32 to vector<1x32xi32>
    %408 = arith.addi %339, %407 : vector<1x32xi32>
    %409 = vector.broadcast %333 : vector<98x1xi32> to vector<98x32xi32>
    %410 = vector.broadcast %408 : vector<1x32xi32> to vector<98x32xi32>
    %411 = arith.cmpi eq, %409, %410 : vector<98x32xi32>
    %412 = arith.andi %344, %411 : vector<98x32xi1>
    %c0_i32_196 = arith.constant 0 : i32
    %413 = vector.broadcast %c0_i32_196 : i32 to vector<1x32xi32>
    %414 = arith.addi %341, %413 : vector<1x32xi32>
    %415 = vector.broadcast %335 : vector<98x1xi32> to vector<98x32xi32>
    %416 = vector.broadcast %414 : vector<1x32xi32> to vector<98x32xi32>
    %417 = arith.cmpi eq, %415, %416 : vector<98x32xi32>
    %418 = arith.andi %412, %417 : vector<98x32xi1>
    %cst_197 = arith.constant 1.000000e+00 : f32
    %cst_198 = arith.constant 0.000000e+00 : f32
    %419 = vector.broadcast %cst_197 : f32 to vector<98x32xf32>
    %420 = vector.broadcast %cst_198 : f32 to vector<98x32xf32>
    %421 = arith.select %418, %419, %420 : vector<98x32xi1>, vector<98x32xf32>
    %cst_199 = arith.constant dense<0.000000e+00> : vector<16x32xf32>
    %422 = tpu.matmul %329, %421, %cst_199 {dimension_numbers = #tpu.dot_dimension_numbers<[1], [0], [0], [1], [0, 0, 1, 1], [], []>} : vector<16x98xf32>, vector<98x32xf32>, vector<16x32xf32> -> vector<16x32xf32>
    %c3_200 = arith.constant 3 : index
    %c0_201 = arith.constant 0 : index
    %c0_202 = arith.constant 0 : index
    %423 = vector.load %arg14[%c3_200, %c0_201, %c0_202] : memref<9x16x1xf32, #tpu.memory_space<vmem>>, vector<1x16x1xf32>
    %424 = vector.shape_cast %423 : vector<1x16x1xf32> to vector<16x1xf32>
    %425 = vector.broadcast %424 : vector<16x1xf32> to vector<16x32xf32>
    %426 = arith.mulf %422, %425 : vector<16x32xf32>
    %427 = arith.addf %406, %426 : vector<16x32xf32>
    %c1_i32_203 = arith.constant 1 : i32
    %428 = vector.broadcast %c1_i32_203 : i32 to vector<1x32xi32>
    %429 = arith.addi %339, %428 : vector<1x32xi32>
    %430 = vector.broadcast %333 : vector<98x1xi32> to vector<98x32xi32>
    %431 = vector.broadcast %429 : vector<1x32xi32> to vector<98x32xi32>
    %432 = arith.cmpi eq, %430, %431 : vector<98x32xi32>
    %433 = arith.andi %344, %432 : vector<98x32xi1>
    %c1_i32_204 = arith.constant 1 : i32
    %434 = vector.broadcast %c1_i32_204 : i32 to vector<1x32xi32>
    %435 = arith.addi %341, %434 : vector<1x32xi32>
    %436 = vector.broadcast %335 : vector<98x1xi32> to vector<98x32xi32>
    %437 = vector.broadcast %435 : vector<1x32xi32> to vector<98x32xi32>
    %438 = arith.cmpi eq, %436, %437 : vector<98x32xi32>
    %439 = arith.andi %433, %438 : vector<98x32xi1>
    %cst_205 = arith.constant 1.000000e+00 : f32
    %cst_206 = arith.constant 0.000000e+00 : f32
    %440 = vector.broadcast %cst_205 : f32 to vector<98x32xf32>
    %441 = vector.broadcast %cst_206 : f32 to vector<98x32xf32>
    %442 = arith.select %439, %440, %441 : vector<98x32xi1>, vector<98x32xf32>
    %cst_207 = arith.constant dense<0.000000e+00> : vector<16x32xf32>
    %443 = tpu.matmul %329, %442, %cst_207 {dimension_numbers = #tpu.dot_dimension_numbers<[1], [0], [0], [1], [0, 0, 1, 1], [], []>} : vector<16x98xf32>, vector<98x32xf32>, vector<16x32xf32> -> vector<16x32xf32>
    %c4_208 = arith.constant 4 : index
    %c0_209 = arith.constant 0 : index
    %c0_210 = arith.constant 0 : index
    %444 = vector.load %arg14[%c4_208, %c0_209, %c0_210] : memref<9x16x1xf32, #tpu.memory_space<vmem>>, vector<1x16x1xf32>
    %445 = vector.shape_cast %444 : vector<1x16x1xf32> to vector<16x1xf32>
    %446 = vector.broadcast %445 : vector<16x1xf32> to vector<16x32xf32>
    %447 = arith.mulf %443, %446 : vector<16x32xf32>
    %448 = arith.addf %427, %447 : vector<16x32xf32>
    %c1_i32_211 = arith.constant 1 : i32
    %449 = vector.broadcast %c1_i32_211 : i32 to vector<1x32xi32>
    %450 = arith.addi %339, %449 : vector<1x32xi32>
    %451 = vector.broadcast %333 : vector<98x1xi32> to vector<98x32xi32>
    %452 = vector.broadcast %450 : vector<1x32xi32> to vector<98x32xi32>
    %453 = arith.cmpi eq, %451, %452 : vector<98x32xi32>
    %454 = arith.andi %344, %453 : vector<98x32xi1>
    %c2_i32_212 = arith.constant 2 : i32
    %455 = vector.broadcast %c2_i32_212 : i32 to vector<1x32xi32>
    %456 = arith.addi %341, %455 : vector<1x32xi32>
    %457 = vector.broadcast %335 : vector<98x1xi32> to vector<98x32xi32>
    %458 = vector.broadcast %456 : vector<1x32xi32> to vector<98x32xi32>
    %459 = arith.cmpi eq, %457, %458 : vector<98x32xi32>
    %460 = arith.andi %454, %459 : vector<98x32xi1>
    %cst_213 = arith.constant 1.000000e+00 : f32
    %cst_214 = arith.constant 0.000000e+00 : f32
    %461 = vector.broadcast %cst_213 : f32 to vector<98x32xf32>
    %462 = vector.broadcast %cst_214 : f32 to vector<98x32xf32>
    %463 = arith.select %460, %461, %462 : vector<98x32xi1>, vector<98x32xf32>
    %cst_215 = arith.constant dense<0.000000e+00> : vector<16x32xf32>
    %464 = tpu.matmul %329, %463, %cst_215 {dimension_numbers = #tpu.dot_dimension_numbers<[1], [0], [0], [1], [0, 0, 1, 1], [], []>} : vector<16x98xf32>, vector<98x32xf32>, vector<16x32xf32> -> vector<16x32xf32>
    %c5_216 = arith.constant 5 : index
    %c0_217 = arith.constant 0 : index
    %c0_218 = arith.constant 0 : index
    %465 = vector.load %arg14[%c5_216, %c0_217, %c0_218] : memref<9x16x1xf32, #tpu.memory_space<vmem>>, vector<1x16x1xf32>
    %466 = vector.shape_cast %465 : vector<1x16x1xf32> to vector<16x1xf32>
    %467 = vector.broadcast %466 : vector<16x1xf32> to vector<16x32xf32>
    %468 = arith.mulf %464, %467 : vector<16x32xf32>
    %469 = arith.addf %448, %468 : vector<16x32xf32>
    %c2_i32_219 = arith.constant 2 : i32
    %470 = vector.broadcast %c2_i32_219 : i32 to vector<1x32xi32>
    %471 = arith.addi %339, %470 : vector<1x32xi32>
    %472 = vector.broadcast %333 : vector<98x1xi32> to vector<98x32xi32>
    %473 = vector.broadcast %471 : vector<1x32xi32> to vector<98x32xi32>
    %474 = arith.cmpi eq, %472, %473 : vector<98x32xi32>
    %475 = arith.andi %344, %474 : vector<98x32xi1>
    %c0_i32_220 = arith.constant 0 : i32
    %476 = vector.broadcast %c0_i32_220 : i32 to vector<1x32xi32>
    %477 = arith.addi %341, %476 : vector<1x32xi32>
    %478 = vector.broadcast %335 : vector<98x1xi32> to vector<98x32xi32>
    %479 = vector.broadcast %477 : vector<1x32xi32> to vector<98x32xi32>
    %480 = arith.cmpi eq, %478, %479 : vector<98x32xi32>
    %481 = arith.andi %475, %480 : vector<98x32xi1>
    %cst_221 = arith.constant 1.000000e+00 : f32
    %cst_222 = arith.constant 0.000000e+00 : f32
    %482 = vector.broadcast %cst_221 : f32 to vector<98x32xf32>
    %483 = vector.broadcast %cst_222 : f32 to vector<98x32xf32>
    %484 = arith.select %481, %482, %483 : vector<98x32xi1>, vector<98x32xf32>
    %cst_223 = arith.constant dense<0.000000e+00> : vector<16x32xf32>
    %485 = tpu.matmul %329, %484, %cst_223 {dimension_numbers = #tpu.dot_dimension_numbers<[1], [0], [0], [1], [0, 0, 1, 1], [], []>} : vector<16x98xf32>, vector<98x32xf32>, vector<16x32xf32> -> vector<16x32xf32>
    %c6_224 = arith.constant 6 : index
    %c0_225 = arith.constant 0 : index
    %c0_226 = arith.constant 0 : index
    %486 = vector.load %arg14[%c6_224, %c0_225, %c0_226] : memref<9x16x1xf32, #tpu.memory_space<vmem>>, vector<1x16x1xf32>
    %487 = vector.shape_cast %486 : vector<1x16x1xf32> to vector<16x1xf32>
    %488 = vector.broadcast %487 : vector<16x1xf32> to vector<16x32xf32>
    %489 = arith.mulf %485, %488 : vector<16x32xf32>
    %490 = arith.addf %469, %489 : vector<16x32xf32>
    %c2_i32_227 = arith.constant 2 : i32
    %491 = vector.broadcast %c2_i32_227 : i32 to vector<1x32xi32>
    %492 = arith.addi %339, %491 : vector<1x32xi32>
    %493 = vector.broadcast %333 : vector<98x1xi32> to vector<98x32xi32>
    %494 = vector.broadcast %492 : vector<1x32xi32> to vector<98x32xi32>
    %495 = arith.cmpi eq, %493, %494 : vector<98x32xi32>
    %496 = arith.andi %344, %495 : vector<98x32xi1>
    %c1_i32_228 = arith.constant 1 : i32
    %497 = vector.broadcast %c1_i32_228 : i32 to vector<1x32xi32>
    %498 = arith.addi %341, %497 : vector<1x32xi32>
    %499 = vector.broadcast %335 : vector<98x1xi32> to vector<98x32xi32>
    %500 = vector.broadcast %498 : vector<1x32xi32> to vector<98x32xi32>
    %501 = arith.cmpi eq, %499, %500 : vector<98x32xi32>
    %502 = arith.andi %496, %501 : vector<98x32xi1>
    %cst_229 = arith.constant 1.000000e+00 : f32
    %cst_230 = arith.constant 0.000000e+00 : f32
    %503 = vector.broadcast %cst_229 : f32 to vector<98x32xf32>
    %504 = vector.broadcast %cst_230 : f32 to vector<98x32xf32>
    %505 = arith.select %502, %503, %504 : vector<98x32xi1>, vector<98x32xf32>
    %cst_231 = arith.constant dense<0.000000e+00> : vector<16x32xf32>
    %506 = tpu.matmul %329, %505, %cst_231 {dimension_numbers = #tpu.dot_dimension_numbers<[1], [0], [0], [1], [0, 0, 1, 1], [], []>} : vector<16x98xf32>, vector<98x32xf32>, vector<16x32xf32> -> vector<16x32xf32>
    %c7_232 = arith.constant 7 : index
    %c0_233 = arith.constant 0 : index
    %c0_234 = arith.constant 0 : index
    %507 = vector.load %arg14[%c7_232, %c0_233, %c0_234] : memref<9x16x1xf32, #tpu.memory_space<vmem>>, vector<1x16x1xf32>
    %508 = vector.shape_cast %507 : vector<1x16x1xf32> to vector<16x1xf32>
    %509 = vector.broadcast %508 : vector<16x1xf32> to vector<16x32xf32>
    %510 = arith.mulf %506, %509 : vector<16x32xf32>
    %511 = arith.addf %490, %510 : vector<16x32xf32>
    %c2_i32_235 = arith.constant 2 : i32
    %512 = vector.broadcast %c2_i32_235 : i32 to vector<1x32xi32>
    %513 = arith.addi %339, %512 : vector<1x32xi32>
    %514 = vector.broadcast %333 : vector<98x1xi32> to vector<98x32xi32>
    %515 = vector.broadcast %513 : vector<1x32xi32> to vector<98x32xi32>
    %516 = arith.cmpi eq, %514, %515 : vector<98x32xi32>
    %517 = arith.andi %344, %516 : vector<98x32xi1>
    %c2_i32_236 = arith.constant 2 : i32
    %518 = vector.broadcast %c2_i32_236 : i32 to vector<1x32xi32>
    %519 = arith.addi %341, %518 : vector<1x32xi32>
    %520 = vector.broadcast %335 : vector<98x1xi32> to vector<98x32xi32>
    %521 = vector.broadcast %519 : vector<1x32xi32> to vector<98x32xi32>
    %522 = arith.cmpi eq, %520, %521 : vector<98x32xi32>
    %523 = arith.andi %517, %522 : vector<98x32xi1>
    %cst_237 = arith.constant 1.000000e+00 : f32
    %cst_238 = arith.constant 0.000000e+00 : f32
    %524 = vector.broadcast %cst_237 : f32 to vector<98x32xf32>
    %525 = vector.broadcast %cst_238 : f32 to vector<98x32xf32>
    %526 = arith.select %523, %524, %525 : vector<98x32xi1>, vector<98x32xf32>
    %cst_239 = arith.constant dense<0.000000e+00> : vector<16x32xf32>
    %527 = tpu.matmul %329, %526, %cst_239 {dimension_numbers = #tpu.dot_dimension_numbers<[1], [0], [0], [1], [0, 0, 1, 1], [], []>} : vector<16x98xf32>, vector<98x32xf32>, vector<16x32xf32> -> vector<16x32xf32>
    %c8_240 = arith.constant 8 : index
    %c0_241 = arith.constant 0 : index
    %c0_242 = arith.constant 0 : index
    %528 = vector.load %arg14[%c8_240, %c0_241, %c0_242] : memref<9x16x1xf32, #tpu.memory_space<vmem>>, vector<1x16x1xf32>
    %529 = vector.shape_cast %528 : vector<1x16x1xf32> to vector<16x1xf32>
    %530 = vector.broadcast %529 : vector<16x1xf32> to vector<16x32xf32>
    %531 = arith.mulf %527, %530 : vector<16x32xf32>
    %532 = arith.addf %511, %531 : vector<16x32xf32>
    %c0_243 = arith.constant 0 : index
    %c0_244 = arith.constant 0 : index
    %533 = vector.load %arg15[%c0_243, %c0_244] : memref<16x1xf32, #tpu.memory_space<vmem>>, vector<16x1xf32>
    %534 = vector.broadcast %533 : vector<16x1xf32> to vector<16x32xf32>
    %535 = arith.addf %532, %534 : vector<16x32xf32>
    %cst_245 = arith.constant dense<0.000000e+00> : vector<16xf32>
    %536 = vector.multi_reduction <add>, %535, %cst_245 [1] : vector<16x32xf32> to vector<16xf32>
    %537 = vector.shape_cast %536 : vector<16xf32> to vector<16x1xf32>
    %cst_246 = arith.constant 3.200000e+01 : f32
    %538 = vector.broadcast %cst_246 : f32 to vector<16x1xf32>
    %539 = arith.divf %537, %538 : vector<16x1xf32>
    %540 = vector.broadcast %539 : vector<16x1xf32> to vector<16x32xf32>
    %541 = arith.subf %535, %540 : vector<16x32xf32>
    %542 = vector.broadcast %539 : vector<16x1xf32> to vector<16x32xf32>
    %543 = arith.subf %535, %542 : vector<16x32xf32>
    %544 = arith.mulf %541, %543 : vector<16x32xf32>
    %cst_247 = arith.constant dense<0.000000e+00> : vector<16xf32>
    %545 = vector.multi_reduction <add>, %544, %cst_247 [1] : vector<16x32xf32> to vector<16xf32>
    %546 = vector.shape_cast %545 : vector<16xf32> to vector<16x1xf32>
    %cst_248 = arith.constant 3.200000e+01 : f32
    %547 = vector.broadcast %cst_248 : f32 to vector<16x1xf32>
    %548 = arith.divf %546, %547 : vector<16x1xf32>
    %c0_249 = arith.constant 0 : index
    %c0_250 = arith.constant 0 : index
    %549 = vector.load %arg16[%c0_249, %c0_250] : memref<16x1xf32, #tpu.memory_space<vmem>>, vector<16x1xf32>
    %cst_251 = arith.constant 9.99999974E-6 : f32
    %550 = vector.broadcast %cst_251 : f32 to vector<16x1xf32>
    %551 = arith.addf %548, %550 : vector<16x1xf32>
    %552 = math.rsqrt %551 : vector<16x1xf32>
    %553 = arith.mulf %549, %552 : vector<16x1xf32>
    %c0_252 = arith.constant 0 : index
    %c0_253 = arith.constant 0 : index
    %554 = vector.load %arg17[%c0_252, %c0_253] : memref<16x1xf32, #tpu.memory_space<vmem>>, vector<16x1xf32>
    %555 = arith.mulf %553, %539 : vector<16x1xf32>
    %556 = arith.subf %554, %555 : vector<16x1xf32>
    %557 = vector.broadcast %553 : vector<16x1xf32> to vector<16x32xf32>
    %558 = arith.mulf %535, %557 : vector<16x32xf32>
    %559 = vector.broadcast %556 : vector<16x1xf32> to vector<16x32xf32>
    %560 = arith.addf %558, %559 : vector<16x32xf32>
    %cst_254 = arith.constant 0.000000e+00 : f32
    %561 = vector.broadcast %cst_254 : f32 to vector<16x32xf32>
    %562 = arith.maximumf %560, %561 : vector<16x32xf32>
    %c0_255 = arith.constant 0 : index
    %c0_256 = arith.constant 0 : index
    %563 = vector.load %arg22[%c0_255, %c0_256] : memref<16x32xf32, #tpu.memory_space<vmem>>, vector<16x32xf32>
    tpu.vector_store %arg22[%c0_255, %c0_256], %562 {strides = array<i32>} : memref<16x32xf32, #tpu.memory_space<vmem>>, vector<16x32xf32>,
    %c0_257 = arith.constant 0 : index
    %c0_258 = arith.constant 0 : index
    %c0_259 = arith.constant 0 : index
    %564 = vector.load %arg18[%c0_257, %c0_258, %c0_259] : memref<16x10x32xf32, #tpu.memory_space<vmem>>, vector<1x10x32xf32>
    %565 = vector.shape_cast %564 : vector<1x10x32xf32> to vector<10x32xf32>
    %c0_260 = arith.constant 0 : index
    %c0_261 = arith.constant 0 : index
    %566 = vector.load %arg22[%c0_260, %c0_261] : memref<16x32xf32, #tpu.memory_space<vmem>>, vector<1x32xf32>
    %567 = vector.broadcast %566 : vector<1x32xf32> to vector<10x32xf32>
    %568 = arith.mulf %565, %567 : vector<10x32xf32>
    %c1_262 = arith.constant 1 : index
    %c0_263 = arith.constant 0 : index
    %c0_264 = arith.constant 0 : index
    %569 = vector.load %arg18[%c1_262, %c0_263, %c0_264] : memref<16x10x32xf32, #tpu.memory_space<vmem>>, vector<1x10x32xf32>
    %570 = vector.shape_cast %569 : vector<1x10x32xf32> to vector<10x32xf32>
    %c1_265 = arith.constant 1 : index
    %c0_266 = arith.constant 0 : index
    %571 = vector.load %arg22[%c1_265, %c0_266] : memref<16x32xf32, #tpu.memory_space<vmem>>, vector<1x32xf32>
    %572 = vector.broadcast %571 : vector<1x32xf32> to vector<10x32xf32>
    %573 = arith.mulf %570, %572 : vector<10x32xf32>
    %574 = arith.addf %568, %573 : vector<10x32xf32>
    %c2_267 = arith.constant 2 : index
    %c0_268 = arith.constant 0 : index
    %c0_269 = arith.constant 0 : index
    %575 = vector.load %arg18[%c2_267, %c0_268, %c0_269] : memref<16x10x32xf32, #tpu.memory_space<vmem>>, vector<1x10x32xf32>
    %576 = vector.shape_cast %575 : vector<1x10x32xf32> to vector<10x32xf32>
    %c2_270 = arith.constant 2 : index
    %c0_271 = arith.constant 0 : index
    %577 = vector.load %arg22[%c2_270, %c0_271] : memref<16x32xf32, #tpu.memory_space<vmem>>, vector<1x32xf32>
    %578 = vector.broadcast %577 : vector<1x32xf32> to vector<10x32xf32>
    %579 = arith.mulf %576, %578 : vector<10x32xf32>
    %580 = arith.addf %574, %579 : vector<10x32xf32>
    %c3_272 = arith.constant 3 : index
    %c0_273 = arith.constant 0 : index
    %c0_274 = arith.constant 0 : index
    %581 = vector.load %arg18[%c3_272, %c0_273, %c0_274] : memref<16x10x32xf32, #tpu.memory_space<vmem>>, vector<1x10x32xf32>
    %582 = vector.shape_cast %581 : vector<1x10x32xf32> to vector<10x32xf32>
    %c3_275 = arith.constant 3 : index
    %c0_276 = arith.constant 0 : index
    %583 = vector.load %arg22[%c3_275, %c0_276] : memref<16x32xf32, #tpu.memory_space<vmem>>, vector<1x32xf32>
    %584 = vector.broadcast %583 : vector<1x32xf32> to vector<10x32xf32>
    %585 = arith.mulf %582, %584 : vector<10x32xf32>
    %586 = arith.addf %580, %585 : vector<10x32xf32>
    %c4_277 = arith.constant 4 : index
    %c0_278 = arith.constant 0 : index
    %c0_279 = arith.constant 0 : index
    %587 = vector.load %arg18[%c4_277, %c0_278, %c0_279] : memref<16x10x32xf32, #tpu.memory_space<vmem>>, vector<1x10x32xf32>
    %588 = vector.shape_cast %587 : vector<1x10x32xf32> to vector<10x32xf32>
    %c4_280 = arith.constant 4 : index
    %c0_281 = arith.constant 0 : index
    %589 = vector.load %arg22[%c4_280, %c0_281] : memref<16x32xf32, #tpu.memory_space<vmem>>, vector<1x32xf32>
    %590 = vector.broadcast %589 : vector<1x32xf32> to vector<10x32xf32>
    %591 = arith.mulf %588, %590 : vector<10x32xf32>
    %592 = arith.addf %586, %591 : vector<10x32xf32>
    %c5_282 = arith.constant 5 : index
    %c0_283 = arith.constant 0 : index
    %c0_284 = arith.constant 0 : index
    %593 = vector.load %arg18[%c5_282, %c0_283, %c0_284] : memref<16x10x32xf32, #tpu.memory_space<vmem>>, vector<1x10x32xf32>
    %594 = vector.shape_cast %593 : vector<1x10x32xf32> to vector<10x32xf32>
    %c5_285 = arith.constant 5 : index
    %c0_286 = arith.constant 0 : index
    %595 = vector.load %arg22[%c5_285, %c0_286] : memref<16x32xf32, #tpu.memory_space<vmem>>, vector<1x32xf32>
    %596 = vector.broadcast %595 : vector<1x32xf32> to vector<10x32xf32>
    %597 = arith.mulf %594, %596 : vector<10x32xf32>
    %598 = arith.addf %592, %597 : vector<10x32xf32>
    %c6_287 = arith.constant 6 : index
    %c0_288 = arith.constant 0 : index
    %c0_289 = arith.constant 0 : index
    %599 = vector.load %arg18[%c6_287, %c0_288, %c0_289] : memref<16x10x32xf32, #tpu.memory_space<vmem>>, vector<1x10x32xf32>
    %600 = vector.shape_cast %599 : vector<1x10x32xf32> to vector<10x32xf32>
    %c6_290 = arith.constant 6 : index
    %c0_291 = arith.constant 0 : index
    %601 = vector.load %arg22[%c6_290, %c0_291] : memref<16x32xf32, #tpu.memory_space<vmem>>, vector<1x32xf32>
    %602 = vector.broadcast %601 : vector<1x32xf32> to vector<10x32xf32>
    %603 = arith.mulf %600, %602 : vector<10x32xf32>
    %604 = arith.addf %598, %603 : vector<10x32xf32>
    %c7_292 = arith.constant 7 : index
    %c0_293 = arith.constant 0 : index
    %c0_294 = arith.constant 0 : index
    %605 = vector.load %arg18[%c7_292, %c0_293, %c0_294] : memref<16x10x32xf32, #tpu.memory_space<vmem>>, vector<1x10x32xf32>
    %606 = vector.shape_cast %605 : vector<1x10x32xf32> to vector<10x32xf32>
    %c7_295 = arith.constant 7 : index
    %c0_296 = arith.constant 0 : index
    %607 = vector.load %arg22[%c7_295, %c0_296] : memref<16x32xf32, #tpu.memory_space<vmem>>, vector<1x32xf32>
    %608 = vector.broadcast %607 : vector<1x32xf32> to vector<10x32xf32>
    %609 = arith.mulf %606, %608 : vector<10x32xf32>
    %610 = arith.addf %604, %609 : vector<10x32xf32>
    %c8_297 = arith.constant 8 : index
    %c0_298 = arith.constant 0 : index
    %c0_299 = arith.constant 0 : index
    %611 = vector.load %arg18[%c8_297, %c0_298, %c0_299] : memref<16x10x32xf32, #tpu.memory_space<vmem>>, vector<1x10x32xf32>
    %612 = vector.shape_cast %611 : vector<1x10x32xf32> to vector<10x32xf32>
    %c8_300 = arith.constant 8 : index
    %c0_301 = arith.constant 0 : index
    %613 = vector.load %arg22[%c8_300, %c0_301] : memref<16x32xf32, #tpu.memory_space<vmem>>, vector<1x32xf32>
    %614 = vector.broadcast %613 : vector<1x32xf32> to vector<10x32xf32>
    %615 = arith.mulf %612, %614 : vector<10x32xf32>
    %616 = arith.addf %610, %615 : vector<10x32xf32>
    %c9 = arith.constant 9 : index
    %c0_302 = arith.constant 0 : index
    %c0_303 = arith.constant 0 : index
    %617 = vector.load %arg18[%c9, %c0_302, %c0_303] : memref<16x10x32xf32, #tpu.memory_space<vmem>>, vector<1x10x32xf32>
    %618 = vector.shape_cast %617 : vector<1x10x32xf32> to vector<10x32xf32>
    %c9_304 = arith.constant 9 : index
    %c0_305 = arith.constant 0 : index
    %619 = vector.load %arg22[%c9_304, %c0_305] : memref<16x32xf32, #tpu.memory_space<vmem>>, vector<1x32xf32>
    %620 = vector.broadcast %619 : vector<1x32xf32> to vector<10x32xf32>
    %621 = arith.mulf %618, %620 : vector<10x32xf32>
    %622 = arith.addf %616, %621 : vector<10x32xf32>
    %c10 = arith.constant 10 : index
    %c0_306 = arith.constant 0 : index
    %c0_307 = arith.constant 0 : index
    %623 = vector.load %arg18[%c10, %c0_306, %c0_307] : memref<16x10x32xf32, #tpu.memory_space<vmem>>, vector<1x10x32xf32>
    %624 = vector.shape_cast %623 : vector<1x10x32xf32> to vector<10x32xf32>
    %c10_308 = arith.constant 10 : index
    %c0_309 = arith.constant 0 : index
    %625 = vector.load %arg22[%c10_308, %c0_309] : memref<16x32xf32, #tpu.memory_space<vmem>>, vector<1x32xf32>
    %626 = vector.broadcast %625 : vector<1x32xf32> to vector<10x32xf32>
    %627 = arith.mulf %624, %626 : vector<10x32xf32>
    %628 = arith.addf %622, %627 : vector<10x32xf32>
    %c11 = arith.constant 11 : index
    %c0_310 = arith.constant 0 : index
    %c0_311 = arith.constant 0 : index
    %629 = vector.load %arg18[%c11, %c0_310, %c0_311] : memref<16x10x32xf32, #tpu.memory_space<vmem>>, vector<1x10x32xf32>
    %630 = vector.shape_cast %629 : vector<1x10x32xf32> to vector<10x32xf32>
    %c11_312 = arith.constant 11 : index
    %c0_313 = arith.constant 0 : index
    %631 = vector.load %arg22[%c11_312, %c0_313] : memref<16x32xf32, #tpu.memory_space<vmem>>, vector<1x32xf32>
    %632 = vector.broadcast %631 : vector<1x32xf32> to vector<10x32xf32>
    %633 = arith.mulf %630, %632 : vector<10x32xf32>
    %634 = arith.addf %628, %633 : vector<10x32xf32>
    %c12 = arith.constant 12 : index
    %c0_314 = arith.constant 0 : index
    %c0_315 = arith.constant 0 : index
    %635 = vector.load %arg18[%c12, %c0_314, %c0_315] : memref<16x10x32xf32, #tpu.memory_space<vmem>>, vector<1x10x32xf32>
    %636 = vector.shape_cast %635 : vector<1x10x32xf32> to vector<10x32xf32>
    %c12_316 = arith.constant 12 : index
    %c0_317 = arith.constant 0 : index
    %637 = vector.load %arg22[%c12_316, %c0_317] : memref<16x32xf32, #tpu.memory_space<vmem>>, vector<1x32xf32>
    %638 = vector.broadcast %637 : vector<1x32xf32> to vector<10x32xf32>
    %639 = arith.mulf %636, %638 : vector<10x32xf32>
    %640 = arith.addf %634, %639 : vector<10x32xf32>
    %c13 = arith.constant 13 : index
    %c0_318 = arith.constant 0 : index
    %c0_319 = arith.constant 0 : index
    %641 = vector.load %arg18[%c13, %c0_318, %c0_319] : memref<16x10x32xf32, #tpu.memory_space<vmem>>, vector<1x10x32xf32>
    %642 = vector.shape_cast %641 : vector<1x10x32xf32> to vector<10x32xf32>
    %c13_320 = arith.constant 13 : index
    %c0_321 = arith.constant 0 : index
    %643 = vector.load %arg22[%c13_320, %c0_321] : memref<16x32xf32, #tpu.memory_space<vmem>>, vector<1x32xf32>
    %644 = vector.broadcast %643 : vector<1x32xf32> to vector<10x32xf32>
    %645 = arith.mulf %642, %644 : vector<10x32xf32>
    %646 = arith.addf %640, %645 : vector<10x32xf32>
    %c14 = arith.constant 14 : index
    %c0_322 = arith.constant 0 : index
    %c0_323 = arith.constant 0 : index
    %647 = vector.load %arg18[%c14, %c0_322, %c0_323] : memref<16x10x32xf32, #tpu.memory_space<vmem>>, vector<1x10x32xf32>
    %648 = vector.shape_cast %647 : vector<1x10x32xf32> to vector<10x32xf32>
    %c14_324 = arith.constant 14 : index
    %c0_325 = arith.constant 0 : index
    %649 = vector.load %arg22[%c14_324, %c0_325] : memref<16x32xf32, #tpu.memory_space<vmem>>, vector<1x32xf32>
    %650 = vector.broadcast %649 : vector<1x32xf32> to vector<10x32xf32>
    %651 = arith.mulf %648, %650 : vector<10x32xf32>
    %652 = arith.addf %646, %651 : vector<10x32xf32>
    %c15 = arith.constant 15 : index
    %c0_326 = arith.constant 0 : index
    %c0_327 = arith.constant 0 : index
    %653 = vector.load %arg18[%c15, %c0_326, %c0_327] : memref<16x10x32xf32, #tpu.memory_space<vmem>>, vector<1x10x32xf32>
    %654 = vector.shape_cast %653 : vector<1x10x32xf32> to vector<10x32xf32>
    %c15_328 = arith.constant 15 : index
    %c0_329 = arith.constant 0 : index
    %655 = vector.load %arg22[%c15_328, %c0_329] : memref<16x32xf32, #tpu.memory_space<vmem>>, vector<1x32xf32>
    %656 = vector.broadcast %655 : vector<1x32xf32> to vector<10x32xf32>
    %657 = arith.mulf %654, %656 : vector<10x32xf32>
    %658 = arith.addf %652, %657 : vector<10x32xf32>
    %c0_330 = arith.constant 0 : index
    %c0_331 = arith.constant 0 : index
    %659 = vector.load %arg19[%c0_330, %c0_331] : memref<32x2xf32, #tpu.memory_space<vmem>>, vector<32x2xf32>
    %cst_332 = arith.constant dense<0.000000e+00> : vector<10x2xf32>
    %660 = tpu.matmul %658, %659, %cst_332 {dimension_numbers = #tpu.dot_dimension_numbers<[1], [0], [0], [1], [0, 0, 1, 1], [], []>} : vector<10x32xf32>, vector<32x2xf32>, vector<10x2xf32> -> vector<10x2xf32>
    %c0_333 = arith.constant 0 : index
    %c0_334 = arith.constant 0 : index
    %661 = vector.load %arg20[%c0_333, %c0_334] : memref<10x1xf32, #tpu.memory_space<vmem>>, vector<10x1xf32>
    %662 = vector.broadcast %661 : vector<10x1xf32> to vector<10x2xf32>
    %663 = arith.addf %660, %662 : vector<10x2xf32>
    %c0_335 = arith.constant 0 : index
    %c0_336 = arith.constant 0 : index
    %664 = vector.load %arg21[%c0_335, %c0_336] : memref<10x2xf32, #tpu.memory_space<vmem>>, vector<10x2xf32>
    tpu.vector_store %arg21[%c0_335, %c0_336], %663 {strides = array<i32>} : memref<10x2xf32, #tpu.memory_space<vmem>>, vector<10x2xf32>,
    return
  }
  func.func @transform_0(%arg0: i32) -> (i32, i32, i32) {
    %c0_i32 = arith.constant 0 : i32
    %c0_i32_0 = arith.constant 0 : i32
    %c0_i32_1 = arith.constant 0 : i32
    %c0_i32_2 = arith.constant 0 : i32
    return %c0_i32, %c0_i32_0, %c0_i32_1 : i32, i32, i32
  }
  func.func @transform_1(%arg0: i32) -> (i32, i32, i32) {
    %c0_i32 = arith.constant 0 : i32
    %c0_i32_0 = arith.constant 0 : i32
    %c0_i32_1 = arith.constant 0 : i32
    %c0_i32_2 = arith.constant 0 : i32
    return %c0_i32, %c0_i32_0, %c0_i32_1 : i32, i32, i32
  }
  func.func @transform_2(%arg0: i32) -> (i32, i32, i32) {
    %c0_i32 = arith.constant 0 : i32
    %c0_i32_0 = arith.constant 0 : i32
    %c0_i32_1 = arith.constant 0 : i32
    %c0_i32_2 = arith.constant 0 : i32
    return %c0_i32, %c0_i32_0, %c0_i32_1 : i32, i32, i32
  }
  func.func @transform_3(%arg0: i32) -> (i32, i32, i32) {
    %c0_i32 = arith.constant 0 : i32
    %c0_i32_0 = arith.constant 0 : i32
    %c0_i32_1 = arith.constant 0 : i32
    %c0_i32_2 = arith.constant 0 : i32
    return %c0_i32, %c0_i32_0, %c0_i32_1 : i32, i32, i32
  }
  func.func @transform_4(%arg0: i32) -> (i32, i32, i32) {
    %c0_i32 = arith.constant 0 : i32
    %c0_i32_0 = arith.constant 0 : i32
    %c0_i32_1 = arith.constant 0 : i32
    %c0_i32_2 = arith.constant 0 : i32
    return %c0_i32, %c0_i32_0, %c0_i32_1 : i32, i32, i32
  }
  func.func @transform_5(%arg0: i32) -> (i32, i32, i32) {
    %c0_i32 = arith.constant 0 : i32
    %c0_i32_0 = arith.constant 0 : i32
    %c0_i32_1 = arith.constant 0 : i32
    %c0_i32_2 = arith.constant 0 : i32
    return %c0_i32, %c0_i32_0, %c0_i32_1 : i32, i32, i32
  }
  func.func @transform_6(%arg0: i32) -> (i32, i32) {
    %c0_i32 = arith.constant 0 : i32
    %c0_i32_0 = arith.constant 0 : i32
    %c0_i32_1 = arith.constant 0 : i32
    return %c0_i32, %c0_i32_0 : i32, i32
  }
  func.func @transform_7(%arg0: i32) -> (i32, i32) {
    %c0_i32 = arith.constant 0 : i32
    %c0_i32_0 = arith.constant 0 : i32
    %c0_i32_1 = arith.constant 0 : i32
    return %c0_i32, %c0_i32_0 : i32, i32
  }
  func.func @transform_8(%arg0: i32) -> (i32, i32) {
    %c0_i32 = arith.constant 0 : i32
    %c0_i32_0 = arith.constant 0 : i32
    %c0_i32_1 = arith.constant 0 : i32
    return %c0_i32, %c0_i32_0 : i32, i32
  }
  func.func @transform_9(%arg0: i32) -> (i32, i32, i32) {
    %c0_i32 = arith.constant 0 : i32
    %c0_i32_0 = arith.constant 0 : i32
    %c0_i32_1 = arith.constant 0 : i32
    %c0_i32_2 = arith.constant 0 : i32
    return %c0_i32, %c0_i32_0, %c0_i32_1 : i32, i32, i32
  }
  func.func @transform_10(%arg0: i32) -> (i32, i32) {
    %c0_i32 = arith.constant 0 : i32
    %c0_i32_0 = arith.constant 0 : i32
    %c0_i32_1 = arith.constant 0 : i32
    return %c0_i32, %c0_i32_0 : i32, i32
  }
  func.func @transform_11(%arg0: i32) -> (i32, i32) {
    %c0_i32 = arith.constant 0 : i32
    %c0_i32_0 = arith.constant 0 : i32
    %c0_i32_1 = arith.constant 0 : i32
    return %c0_i32, %c0_i32_0 : i32, i32
  }
  func.func @transform_12(%arg0: i32) -> (i32, i32) {
    %c0_i32 = arith.constant 0 : i32
    %c0_i32_0 = arith.constant 0 : i32
    %c0_i32_1 = arith.constant 0 : i32
    return %c0_i32, %c0_i32_0 : i32, i32
  }
  func.func @transform_13(%arg0: i32) -> (i32, i32, i32) {
    %c0_i32 = arith.constant 0 : i32
    %c0_i32_0 = arith.constant 0 : i32
    %c0_i32_1 = arith.constant 0 : i32
    %c0_i32_2 = arith.constant 0 : i32
    return %c0_i32, %c0_i32_0, %c0_i32_1 : i32, i32, i32
  }
  func.func @transform_14(%arg0: i32) -> (i32, i32) {
    %c0_i32 = arith.constant 0 : i32
    %c0_i32_0 = arith.constant 0 : i32
    %c0_i32_1 = arith.constant 0 : i32
    return %c0_i32, %c0_i32_0 : i32, i32
  }
  func.func @transform_15(%arg0: i32) -> (i32, i32) {
    %c0_i32 = arith.constant 0 : i32
    %c0_i32_0 = arith.constant 0 : i32
    %c0_i32_1 = arith.constant 0 : i32
    return %c0_i32, %c0_i32_0 : i32, i32
  }
  func.func @transform_16(%arg0: i32) -> (i32, i32) {
    %c0_i32 = arith.constant 0 : i32
    %c0_i32_0 = arith.constant 0 : i32
    %c0_i32_1 = arith.constant 0 : i32
    return %c0_i32, %c0_i32_0 : i32, i32
  }
  func.func @transform_17(%arg0: i32) -> (i32, i32, i32) {
    %c0_i32 = arith.constant 0 : i32
    %c0_i32_0 = arith.constant 0 : i32
    %c0_i32_1 = arith.constant 0 : i32
    %c0_i32_2 = arith.constant 0 : i32
    return %c0_i32, %c0_i32_0, %c0_i32_1 : i32, i32, i32
  }
  func.func @transform_18(%arg0: i32) -> (i32, i32) {
    %c0_i32 = arith.constant 0 : i32
    %c0_i32_0 = arith.constant 0 : i32
    %c0_i32_1 = arith.constant 0 : i32
    return %c0_i32, %c0_i32_0 : i32, i32
  }
  func.func @transform_19(%arg0: i32) -> (i32, i32) {
    %c0_i32 = arith.constant 0 : i32
    %c0_i32_0 = arith.constant 0 : i32
    %c0_i32_1 = arith.constant 0 : i32
    return %c0_i32, %c0_i32_0 : i32, i32
  }
  func.func @transform_20(%arg0: i32) -> (i32, i32) {
    %c0_i32 = arith.constant 0 : i32
    %c0_i32_0 = arith.constant 0 : i32
    %c0_i32_1 = arith.constant 0 : i32
    return %c0_i32, %c0_i32_0 : i32, i32
  }
}

</mosaic_0001>

<llo_original>
// kernel: tile.7
$region0: #{tile.7}
  %s0 = inlined_call_operand.vmem [shape: f32[10,16,2,16], index: 0, kind: input, shape index: {}]
  %s1 = inlined_call_operand.vmem [shape: f32[10,16,32], index: 1, kind: output, shape index: {}]
  $region1: #{tile.7} parent=0
    #allocation0 [shape = 'u8[655360]{0}', space=vmem, size = 0xa0000, scoped, tag = 'scoped mem for input reshape']
    %s3 = sshll.u32 1, 2
    %s4 = ssub.s32 %s3, 1
    %s5 = smul.addr 2, 159
    %s6 = scalar_lea.vmem %s0, %s5
    %v7 = vld [vmem:[%s6] sm:%s4]
    %s8 = scalar_lea.vmem [#allocation0], 1272
    %9 = vst [vmem:[%s8] sm:%s4] %v7
    %s10 = smul.addr 2, 158
    %s11 = scalar_lea.vmem %s0, %s10
    %v12 = vld [vmem:[%s11] sm:%s4]
    %s13 = scalar_lea.vmem [#allocation0], 1264
    %14 = vst [vmem:[%s13] sm:%s4] %v12
    %s15 = smul.addr 2, 157
    %s16 = scalar_lea.vmem %s0, %s15
    %v17 = vld [vmem:[%s16] sm:%s4]
    %s18 = scalar_lea.vmem [#allocation0], 1256
    %19 = vst [vmem:[%s18] sm:%s4] %v17
    %s20 = smul.addr 2, 156
    %s21 = scalar_lea.vmem %s0, %s20
    %v22 = vld [vmem:[%s21] sm:%s4]
    %s23 = scalar_lea.vmem [#allocation0], 1248
    %24 = vst [vmem:[%s23] sm:%s4] %v22
    %s25 = smul.addr 2, 155
    %s26 = scalar_lea.vmem %s0, %s25
    %v27 = vld [vmem:[%s26] sm:%s4]
    %s28 = scalar_lea.vmem [#allocation0], 1240
    %29 = vst [vmem:[%s28] sm:%s4] %v27
    %s30 = smul.addr 2, 154
    %s31 = scalar_lea.vmem %s0, %s30
    %v32 = vld [vmem:[%s31] sm:%s4]
    %s33 = scalar_lea.vmem [#allocation0], 1232
    %34 = vst [vmem:[%s33] sm:%s4] %v32
    %s35 = smul.addr 2, 153
    %s36 = scalar_lea.vmem %s0, %s35
    %v37 = vld [vmem:[%s36] sm:%s4]
    %s38 = scalar_lea.vmem [#allocation0], 1224
    %39 = vst [vmem:[%s38] sm:%s4] %v37
    %s40 = smul.addr 2, 152
    %s41 = scalar_lea.vmem %s0, %s40
    %v42 = vld [vmem:[%s41] sm:%s4]
    %s43 = scalar_lea.vmem [#allocation0], 1216
    %44 = vst [vmem:[%s43] sm:%s4] %v42
    %s45 = smul.addr 2, 151
    %s46 = scalar_lea.vmem %s0, %s45
    %v47 = vld [vmem:[%s46] sm:%s4]
    %s48 = scalar_lea.vmem [#allocation0], 1208
    %49 = vst [vmem:[%s48] sm:%s4] %v47
    %s50 = smul.addr 2, 150
    %s51 = scalar_lea.vmem %s0, %s50
    %v52 = vld [vmem:[%s51] sm:%s4]
    %s53 = scalar_lea.vmem [#allocation0], 1200
    %54 = vst [vmem:[%s53] sm:%s4] %v52
    %s55 = smul.addr 2, 149
    %s56 = scalar_lea.vmem %s0, %s55
    %v57 = vld [vmem:[%s56] sm:%s4]
    %s58 = scalar_lea.vmem [#allocation0], 1192
    %59 = vst [vmem:[%s58] sm:%s4] %v57
    %s60 = smul.addr 2, 148
    %s61 = scalar_lea.vmem %s0, %s60
    %v62 = vld [vmem:[%s61] sm:%s4]
    %s63 = scalar_lea.vmem [#allocation0], 1184
    %64 = vst [vmem:[%s63] sm:%s4] %v62
    %s65 = smul.addr 2, 147
    %s66 = scalar_lea.vmem %s0, %s65
    %v67 = vld [vmem:[%s66] sm:%s4]
    %s68 = scalar_lea.vmem [#allocation0], 1176
    %69 = vst [vmem:[%s68] sm:%s4] %v67
    %s70 = smul.addr 2, 146
    %s71 = scalar_lea.vmem %s0, %s70
    %v72 = vld [vmem:[%s71] sm:%s4]
    %s73 = scalar_lea.vmem [#allocation0], 1168
    %74 = vst [vmem:[%s73] sm:%s4] %v72
    %s75 = smul.addr 2, 145
    %s76 = scalar_lea.vmem %s0, %s75
    %v77 = vld [vmem:[%s76] sm:%s4]
    %s78 = scalar_lea.vmem [#allocation0], 1160
    %79 = vst [vmem:[%s78] sm:%s4] %v77
    %s80 = smul.addr 2, 144
    %s81 = scalar_lea.vmem %s0, %s80
    %v82 = vld [vmem:[%s81] sm:%s4]
    %s83 = scalar_lea.vmem [#allocation0], 1152
    %84 = vst [vmem:[%s83] sm:%s4] %v82
    %s85 = smul.addr 2, 143
    %s86 = scalar_lea.vmem %s0, %s85
    %v87 = vld [vmem:[%s86] sm:%s4]
    %s88 = scalar_lea.vmem [#allocation0], 1144
    %89 = vst [vmem:[%s88] sm:%s4] %v87
    %s90 = smul.addr 2, 142
    %s91 = scalar_lea.vmem %s0, %s90
    %v92 = vld [vmem:[%s91] sm:%s4]
    %s93 = scalar_lea.vmem [#allocation0], 1136
    %94 = vst [vmem:[%s93] sm:%s4] %v92
    %s95 = smul.addr 2, 141
    %s96 = scalar_lea.vmem %s0, %s95
    %v97 = vld [vmem:[%s96] sm:%s4]
    %s98 = scalar_lea.vmem [#allocation0], 1128
    %99 = vst [vmem:[%s98] sm:%s4] %v97
    %s100 = smul.addr 2, 140
    %s101 = scalar_lea.vmem %s0, %s100
    %v102 = vld [vmem:[%s101] sm:%s4]
    %s103 = scalar_lea.vmem [#allocation0], 1120
    %104 = vst [vmem:[%s103] sm:%s4] %v102
    %s105 = smul.addr 2, 139
    %s106 = scalar_lea.vmem %s0, %s105
    %v107 = vld [vmem:[%s106] sm:%s4]
    %s108 = scalar_lea.vmem [#allocation0], 1112
    %109 = vst [vmem:[%s108] sm:%s4] %v107
    %s110 = smul.addr 2, 138
    %s111 = scalar_lea.vmem %s0, %s110
    %v112 = vld [vmem:[%s111] sm:%s4]
    %s113 = scalar_lea.vmem [#allocation0], 1104
    %114 = vst [vmem:[%s113] sm:%s4] %v112
    %s115 = smul.addr 2, 137
    %s116 = scalar_lea.vmem %s0, %s115
    %v117 = vld [vmem:[%s116] sm:%s4]
    %s118 = scalar_lea.vmem [#allocation0], 1096
    %119 = vst [vmem:[%s118] sm:%s4] %v117
    %s120 = smul.addr 2, 136
    %s121 = scalar_lea.vmem %s0, %s120
    %v122 = vld [vmem:[%s121] sm:%s4]
    %s123 = scalar_lea.vmem [#allocation0], 1088
    %124 = vst [vmem:[%s123] sm:%s4] %v122
    %s125 = smul.addr 2, 135
    %s126 = scalar_lea.vmem %s0, %s125
    %v127 = vld [vmem:[%s126] sm:%s4]
    %s128 = scalar_lea.vmem [#allocation0], 1080
    %129 = vst [vmem:[%s128] sm:%s4] %v127
    %s130 = smul.addr 2, 134
    %s131 = scalar_lea.vmem %s0, %s130
    %v132 = vld [vmem:[%s131] sm:%s4]
    %s133 = scalar_lea.vmem [#allocation0], 1072
    %134 = vst [vmem:[%s133] sm:%s4] %v132
    %s135 = smul.addr 2, 133
    %s136 = scalar_lea.vmem %s0, %s135
    %v137 = vld [vmem:[%s136] sm:%s4]
    %s138 = scalar_lea.vmem [#allocation0], 1064
    %139 = vst [vmem:[%s138] sm:%s4] %v137
    %s140 = smul.addr 2, 132
    %s141 = scalar_lea.vmem %s0, %s140
    %v142 = vld [vmem:[%s141] sm:%s4]
    %s143 = scalar_lea.vmem [#allocation0], 1056
    %144 = vst [vmem:[%s143] sm:%s4] %v142
    %s145 = smul.addr 2, 131
    %s146 = scalar_lea.vmem %s0, %s145
    %v147 = vld [vmem:[%s146] sm:%s4]
    %s148 = scalar_lea.vmem [#allocation0], 1048
    %149 = vst [vmem:[%s148] sm:%s4] %v147
    %s150 = smul.addr 2, 130
    %s151 = scalar_lea.vmem %s0, %s150
    %v152 = vld [vmem:[%s151] sm:%s4]
    %s153 = scalar_lea.vmem [#allocation0], 1040
    %154 = vst [vmem:[%s153] sm:%s4] %v152
    %s155 = smul.addr 2, 129
    %s156 = scalar_lea.vmem %s0, %s155
    %v157 = vld [vmem:[%s156] sm:%s4]
    %s158 = scalar_lea.vmem [#allocation0], 1032
    %159 = vst [vmem:[%s158] sm:%s4] %v157
    %s160 = smul.addr 2, 128
    %s161 = scalar_lea.vmem %s0, %s160
    %v162 = vld [vmem:[%s161] sm:%s4]
    %s163 = scalar_lea.vmem [#allocation0], 1024
    %164 = vst [vmem:[%s163] sm:%s4] %v162
    %s165 = smul.addr 2, 127
    %s166 = scalar_lea.vmem %s0, %s165
    %v167 = vld [vmem:[%s166] sm:%s4]
    %s168 = scalar_lea.vmem [#allocation0], 1016
    %169 = vst [vmem:[%s168] sm:%s4] %v167
    %s170 = smul.addr 2, 126
    %s171 = scalar_lea.vmem %s0, %s170
    %v172 = vld [vmem:[%s171] sm:%s4]
    %s173 = scalar_lea.vmem [#allocation0], 1008
    %174 = vst [vmem:[%s173] sm:%s4] %v172
    %s175 = smul.addr 2, 125
    %s176 = scalar_lea.vmem %s0, %s175
    %v177 = vld [vmem:[%s176] sm:%s4]
    %s178 = scalar_lea.vmem [#allocation0], 1000
    %179 = vst [vmem:[%s178] sm:%s4] %v177
    %s180 = smul.addr 2, 124
    %s181 = scalar_lea.vmem %s0, %s180
    %v182 = vld [vmem:[%s181] sm:%s4]
    %s183 = scalar_lea.vmem [#allocation0], 992
    %184 = vst [vmem:[%s183] sm:%s4] %v182
    %s185 = smul.addr 2, 123
    %s186 = scalar_lea.vmem %s0, %s185
    %v187 = vld [vmem:[%s186] sm:%s4]
    %s188 = scalar_lea.vmem [#allocation0], 984
    %189 = vst [vmem:[%s188] sm:%s4] %v187
    %s190 = smul.addr 2, 122
    %s191 = scalar_lea.vmem %s0, %s190
    %v192 = vld [vmem:[%s191] sm:%s4]
    %s193 = scalar_lea.vmem [#allocation0], 976
    %194 = vst [vmem:[%s193] sm:%s4] %v192
    %s195 = smul.addr 2, 121
    %s196 = scalar_lea.vmem %s0, %s195
    %v197 = vld [vmem:[%s196] sm:%s4]
    %s198 = scalar_lea.vmem [#allocation0], 968
    %199 = vst [vmem:[%s198] sm:%s4] %v197
    %s200 = smul.addr 2, 120
    %s201 = scalar_lea.vmem %s0, %s200
    %v202 = vld [vmem:[%s201] sm:%s4]
    %s203 = scalar_lea.vmem [#allocation0], 960
    %204 = vst [vmem:[%s203] sm:%s4] %v202
    %s205 = smul.addr 2, 119
    %s206 = scalar_lea.vmem %s0, %s205
    %v207 = vld [vmem:[%s206] sm:%s4]
    %s208 = scalar_lea.vmem [#allocation0], 952
    %209 = vst [vmem:[%s208] sm:%s4] %v207
    %s210 = smul.addr 2, 118
    %s211 = scalar_lea.vmem %s0, %s210
    %v212 = vld [vmem:[%s211] sm:%s4]
    %s213 = scalar_lea.vmem [#allocation0], 944
    %214 = vst [vmem:[%s213] sm:%s4] %v212
    %s215 = smul.addr 2, 117
    %s216 = scalar_lea.vmem %s0, %s215
    %v217 = vld [vmem:[%s216] sm:%s4]
    %s218 = scalar_lea.vmem [#allocation0], 936
    %219 = vst [vmem:[%s218] sm:%s4] %v217
    %s220 = smul.addr 2, 116
    %s221 = scalar_lea.vmem %s0, %s220
    %v222 = vld [vmem:[%s221] sm:%s4]
    %s223 = scalar_lea.vmem [#allocation0], 928
    %224 = vst [vmem:[%s223] sm:%s4] %v222
    %s225 = smul.addr 2, 115
    %s226 = scalar_lea.vmem %s0, %s225
    %v227 = vld [vmem:[%s226] sm:%s4]
    %s228 = scalar_lea.vmem [#allocation0], 920
    %229 = vst [vmem:[%s228] sm:%s4] %v227
    %s230 = smul.addr 2, 114
    %s231 = scalar_lea.vmem %s0, %s230
    %v232 = vld [vmem:[%s231] sm:%s4]
    %s233 = scalar_lea.vmem [#allocation0], 912
    %234 = vst [vmem:[%s233] sm:%s4] %v232
    %s235 = smul.addr 2, 113
    %s236 = scalar_lea.vmem %s0, %s235
    %v237 = vld [vmem:[%s236] sm:%s4]
    %s238 = scalar_lea.vmem [#allocation0], 904
    %239 = vst [vmem:[%s238] sm:%s4] %v237
    %s240 = smul.addr 2, 112
    %s241 = scalar_lea.vmem %s0, %s240
    %v242 = vld [vmem:[%s241] sm:%s4]
    %s243 = scalar_lea.vmem [#allocation0], 896
    %244 = vst [vmem:[%s243] sm:%s4] %v242
    %s245 = smul.addr 2, 111
    %s246 = scalar_lea.vmem %s0, %s245
    %v247 = vld [vmem:[%s246] sm:%s4]
    %s248 = scalar_lea.vmem [#allocation0], 888
    %249 = vst [vmem:[%s248] sm:%s4] %v247
    %s250 = smul.addr 2, 110
    %s251 = scalar_lea.vmem %s0, %s250
    %v252 = vld [vmem:[%s251] sm:%s4]
    %s253 = scalar_lea.vmem [#allocation0], 880
    %254 = vst [vmem:[%s253] sm:%s4] %v252
    %s255 = smul.addr 2, 109
    %s256 = scalar_lea.vmem %s0, %s255
    %v257 = vld [vmem:[%s256] sm:%s4]
    %s258 = scalar_lea.vmem [#allocation0], 872
    %259 = vst [vmem:[%s258] sm:%s4] %v257
    %s260 = smul.addr 2, 108
    %s261 = scalar_lea.vmem %s0, %s260
    %v262 = vld [vmem:[%s261] sm:%s4]
    %s263 = scalar_lea.vmem [#allocation0], 864
    %264 = vst [vmem:[%s263] sm:%s4] %v262
    %s265 = smul.addr 2, 107
    %s266 = scalar_lea.vmem %s0, %s265
    %v267 = vld [vmem:[%s266] sm:%s4]
    %s268 = scalar_lea.vmem [#allocation0], 856
    %269 = vst [vmem:[%s268] sm:%s4] %v267
    %s270 = smul.addr 2, 106
    %s271 = scalar_lea.vmem %s0, %s270
    %v272 = vld [vmem:[%s271] sm:%s4]
    %s273 = scalar_lea.vmem [#allocation0], 848
    %274 = vst [vmem:[%s273] sm:%s4] %v272
    %s275 = smul.addr 2, 105
    %s276 = scalar_lea.vmem %s0, %s275
    %v277 = vld [vmem:[%s276] sm:%s4]
    %s278 = scalar_lea.vmem [#allocation0], 840
    %279 = vst [vmem:[%s278] sm:%s4] %v277
    %s280 = smul.addr 2, 104
    %s281 = scalar_lea.vmem %s0, %s280
    %v282 = vld [vmem:[%s281] sm:%s4]
    %s283 = scalar_lea.vmem [#allocation0], 832
    %284 = vst [vmem:[%s283] sm:%s4] %v282
    %s285 = smul.addr 2, 103
    %s286 = scalar_lea.vmem %s0, %s285
    %v287 = vld [vmem:[%s286] sm:%s4]
    %s288 = scalar_lea.vmem [#allocation0], 824
    %289 = vst [vmem:[%s288] sm:%s4] %v287
    %s290 = smul.addr 2, 102
    %s291 = scalar_lea.vmem %s0, %s290
    %v292 = vld [vmem:[%s291] sm:%s4]
    %s293 = scalar_lea.vmem [#allocation0], 816
    %294 = vst [vmem:[%s293] sm:%s4] %v292
    %s295 = smul.addr 2, 101
    %s296 = scalar_lea.vmem %s0, %s295
    %v297 = vld [vmem:[%s296] sm:%s4]
    %s298 = scalar_lea.vmem [#allocation0], 808
    %299 = vst [vmem:[%s298] sm:%s4] %v297
    %s300 = smul.addr 2, 100
    %s301 = scalar_lea.vmem %s0, %s300
    %v302 = vld [vmem:[%s301] sm:%s4]
    %s303 = scalar_lea.vmem [#allocation0], 800
    %304 = vst [vmem:[%s303] sm:%s4] %v302
    %s305 = smul.addr 2, 99
    %s306 = scalar_lea.vmem %s0, %s305
    %v307 = vld [vmem:[%s306] sm:%s4]
    %s308 = scalar_lea.vmem [#allocation0], 792
    %309 = vst [vmem:[%s308] sm:%s4] %v307
    %s310 = smul.addr 2, 98
    %s311 = scalar_lea.vmem %s0, %s310
    %v312 = vld [vmem:[%s311] sm:%s4]
    %s313 = scalar_lea.vmem [#allocation0], 784
    %314 = vst [vmem:[%s313] sm:%s4] %v312
    %s315 = smul.addr 2, 97
    %s316 = scalar_lea.vmem %s0, %s315
    %v317 = vld [vmem:[%s316] sm:%s4]
    %s318 = scalar_lea.vmem [#allocation0], 776
    %319 = vst [vmem:[%s318] sm:%s4] %v317
    %s320 = smul.addr 2, 96
    %s321 = scalar_lea.vmem %s0, %s320
    %v322 = vld [vmem:[%s321] sm:%s4]
    %s323 = scalar_lea.vmem [#allocation0], 768
    %324 = vst [vmem:[%s323] sm:%s4] %v322
    %s325 = smul.addr 2, 95
    %s326 = scalar_lea.vmem %s0, %s325
    %v327 = vld [vmem:[%s326] sm:%s4]
    %s328 = scalar_lea.vmem [#allocation0], 760
    %329 = vst [vmem:[%s328] sm:%s4] %v327
    %s330 = smul.addr 2, 94
    %s331 = scalar_lea.vmem %s0, %s330
    %v332 = vld [vmem:[%s331] sm:%s4]
    %s333 = scalar_lea.vmem [#allocation0], 752
    %334 = vst [vmem:[%s333] sm:%s4] %v332
    %s335 = smul.addr 2, 93
    %s336 = scalar_lea.vmem %s0, %s335
    %v337 = vld [vmem:[%s336] sm:%s4]
    %s338 = scalar_lea.vmem [#allocation0], 744
    %339 = vst [vmem:[%s338] sm:%s4] %v337
    %s340 = smul.addr 2, 92
    %s341 = scalar_lea.vmem %s0, %s340
    %v342 = vld [vmem:[%s341] sm:%s4]
    %s343 = scalar_lea.vmem [#allocation0], 736
    %344 = vst [vmem:[%s343] sm:%s4] %v342
    %s345 = smul.addr 2, 91
    %s346 = scalar_lea.vmem %s0, %s345
    %v347 = vld [vmem:[%s346] sm:%s4]
    %s348 = scalar_lea.vmem [#allocation0], 728
    %349 = vst [vmem:[%s348] sm:%s4] %v347
    %s350 = smul.addr 2, 90
    %s351 = scalar_lea.vmem %s0, %s350
    %v352 = vld [vmem:[%s351] sm:%s4]
    %s353 = scalar_lea.vmem [#allocation0], 720
    %354 = vst [vmem:[%s353] sm:%s4] %v352
    %s355 = smul.addr 2, 89
    %s356 = scalar_lea.vmem %s0, %s355
    %v357 = vld [vmem:[%s356] sm:%s4]
    %s358 = scalar_lea.vmem [#allocation0], 712
    %359 = vst [vmem:[%s358] sm:%s4] %v357
    %s360 = smul.addr 2, 88
    %s361 = scalar_lea.vmem %s0, %s360
    %v362 = vld [vmem:[%s361] sm:%s4]
    %s363 = scalar_lea.vmem [#allocation0], 704
    %364 = vst [vmem:[%s363] sm:%s4] %v362
    %s365 = smul.addr 2, 87
    %s366 = scalar_lea.vmem %s0, %s365
    %v367 = vld [vmem:[%s366] sm:%s4]
    %s368 = scalar_lea.vmem [#allocation0], 696
    %369 = vst [vmem:[%s368] sm:%s4] %v367
    %s370 = smul.addr 2, 86
    %s371 = scalar_lea.vmem %s0, %s370
    %v372 = vld [vmem:[%s371] sm:%s4]
    %s373 = scalar_lea.vmem [#allocation0], 688
    %374 = vst [vmem:[%s373] sm:%s4] %v372
    %s375 = smul.addr 2, 85
    %s376 = scalar_lea.vmem %s0, %s375
    %v377 = vld [vmem:[%s376] sm:%s4]
    %s378 = scalar_lea.vmem [#allocation0], 680
    %379 = vst [vmem:[%s378] sm:%s4] %v377
    %s380 = smul.addr 2, 84
    %s381 = scalar_lea.vmem %s0, %s380
    %v382 = vld [vmem:[%s381] sm:%s4]
    %s383 = scalar_lea.vmem [#allocation0], 672
    %384 = vst [vmem:[%s383] sm:%s4] %v382
    %s385 = smul.addr 2, 83
    %s386 = scalar_lea.vmem %s0, %s385
    %v387 = vld [vmem:[%s386] sm:%s4]
    %s388 = scalar_lea.vmem [#allocation0], 664
    %389 = vst [vmem:[%s388] sm:%s4] %v387
    %s390 = smul.addr 2, 82
    %s391 = scalar_lea.vmem %s0, %s390
    %v392 = vld [vmem:[%s391] sm:%s4]
    %s393 = scalar_lea.vmem [#allocation0], 656
    %394 = vst [vmem:[%s393] sm:%s4] %v392
    %s395 = smul.addr 2, 81
    %s396 = scalar_lea.vmem %s0, %s395
    %v397 = vld [vmem:[%s396] sm:%s4]
    %s398 = scalar_lea.vmem [#allocation0], 648
    %399 = vst [vmem:[%s398] sm:%s4] %v397
    %s400 = smul.addr 2, 80
    %s401 = scalar_lea.vmem %s0, %s400
    %v402 = vld [vmem:[%s401] sm:%s4]
    %s403 = scalar_lea.vmem [#allocation0], 640
    %404 = vst [vmem:[%s403] sm:%s4] %v402
    %s405 = smul.addr 2, 79
    %s406 = scalar_lea.vmem %s0, %s405
    %v407 = vld [vmem:[%s406] sm:%s4]
    %s408 = scalar_lea.vmem [#allocation0], 632
    %409 = vst [vmem:[%s408] sm:%s4] %v407
    %s410 = smul.addr 2, 78
    %s411 = scalar_lea.vmem %s0, %s410
    %v412 = vld [vmem:[%s411] sm:%s4]
    %s413 = scalar_lea.vmem [#allocation0], 624
    %414 = vst [vmem:[%s413] sm:%s4] %v412
    %s415 = smul.addr 2, 77
    %s416 = scalar_lea.vmem %s0, %s415
    %v417 = vld [vmem:[%s416] sm:%s4]
    %s418 = scalar_lea.vmem [#allocation0], 616
    %419 = vst [vmem:[%s418] sm:%s4] %v417
    %s420 = smul.addr 2, 76
    %s421 = scalar_lea.vmem %s0, %s420
    %v422 = vld [vmem:[%s421] sm:%s4]
    %s423 = scalar_lea.vmem [#allocation0], 608
    %424 = vst [vmem:[%s423] sm:%s4] %v422
    %s425 = smul.addr 2, 75
    %s426 = scalar_lea.vmem %s0, %s425
    %v427 = vld [vmem:[%s426] sm:%s4]
    %s428 = scalar_lea.vmem [#allocation0], 600
    %429 = vst [vmem:[%s428] sm:%s4] %v427
    %s430 = smul.addr 2, 74
    %s431 = scalar_lea.vmem %s0, %s430
    %v432 = vld [vmem:[%s431] sm:%s4]
    %s433 = scalar_lea.vmem [#allocation0], 592
    %434 = vst [vmem:[%s433] sm:%s4] %v432
    %s435 = smul.addr 2, 73
    %s436 = scalar_lea.vmem %s0, %s435
    %v437 = vld [vmem:[%s436] sm:%s4]
    %s438 = scalar_lea.vmem [#allocation0], 584
    %439 = vst [vmem:[%s438] sm:%s4] %v437
    %s440 = smul.addr 2, 72
    %s441 = scalar_lea.vmem %s0, %s440
    %v442 = vld [vmem:[%s441] sm:%s4]
    %s443 = scalar_lea.vmem [#allocation0], 576
    %444 = vst [vmem:[%s443] sm:%s4] %v442
    %s445 = smul.addr 2, 71
    %s446 = scalar_lea.vmem %s0, %s445
    %v447 = vld [vmem:[%s446] sm:%s4]
    %s448 = scalar_lea.vmem [#allocation0], 568
    %449 = vst [vmem:[%s448] sm:%s4] %v447
    %s450 = smul.addr 2, 70
    %s451 = scalar_lea.vmem %s0, %s450
    %v452 = vld [vmem:[%s451] sm:%s4]
    %s453 = scalar_lea.vmem [#allocation0], 560
    %454 = vst [vmem:[%s453] sm:%s4] %v452
    %s455 = smul.addr 2, 69
    %s456 = scalar_lea.vmem %s0, %s455
    %v457 = vld [vmem:[%s456] sm:%s4]
    %s458 = scalar_lea.vmem [#allocation0], 552
    %459 = vst [vmem:[%s458] sm:%s4] %v457
    %s460 = smul.addr 2, 68
    %s461 = scalar_lea.vmem %s0, %s460
    %v462 = vld [vmem:[%s461] sm:%s4]
    %s463 = scalar_lea.vmem [#allocation0], 544
    %464 = vst [vmem:[%s463] sm:%s4] %v462
    %s465 = smul.addr 2, 67
    %s466 = scalar_lea.vmem %s0, %s465
    %v467 = vld [vmem:[%s466] sm:%s4]
    %s468 = scalar_lea.vmem [#allocation0], 536
    %469 = vst [vmem:[%s468] sm:%s4] %v467
    %s470 = smul.addr 2, 66
    %s471 = scalar_lea.vmem %s0, %s470
    %v472 = vld [vmem:[%s471] sm:%s4]
    %s473 = scalar_lea.vmem [#allocation0], 528
    %474 = vst [vmem:[%s473] sm:%s4] %v472
    %s475 = smul.addr 2, 65
    %s476 = scalar_lea.vmem %s0, %s475
    %v477 = vld [vmem:[%s476] sm:%s4]
    %s478 = scalar_lea.vmem [#allocation0], 520
    %479 = vst [vmem:[%s478] sm:%s4] %v477
    %s480 = smul.addr 2, 64
    %s481 = scalar_lea.vmem %s0, %s480
    %v482 = vld [vmem:[%s481] sm:%s4]
    %s483 = scalar_lea.vmem [#allocation0], 512
    %484 = vst [vmem:[%s483] sm:%s4] %v482
    %s485 = smul.addr 2, 63
    %s486 = scalar_lea.vmem %s0, %s485
    %v487 = vld [vmem:[%s486] sm:%s4]
    %s488 = scalar_lea.vmem [#allocation0], 504
    %489 = vst [vmem:[%s488] sm:%s4] %v487
    %s490 = smul.addr 2, 62
    %s491 = scalar_lea.vmem %s0, %s490
    %v492 = vld [vmem:[%s491] sm:%s4]
    %s493 = scalar_lea.vmem [#allocation0], 496
    %494 = vst [vmem:[%s493] sm:%s4] %v492
    %s495 = smul.addr 2, 61
    %s496 = scalar_lea.vmem %s0, %s495
    %v497 = vld [vmem:[%s496] sm:%s4]
    %s498 = scalar_lea.vmem [#allocation0], 488
    %499 = vst [vmem:[%s498] sm:%s4] %v497
    %s500 = smul.addr 2, 60
    %s501 = scalar_lea.vmem %s0, %s500
    %v502 = vld [vmem:[%s501] sm:%s4]
    %s503 = scalar_lea.vmem [#allocation0], 480
    %504 = vst [vmem:[%s503] sm:%s4] %v502
    %s505 = smul.addr 2, 59
    %s506 = scalar_lea.vmem %s0, %s505
    %v507 = vld [vmem:[%s506] sm:%s4]
    %s508 = scalar_lea.vmem [#allocation0], 472
    %509 = vst [vmem:[%s508] sm:%s4] %v507
    %s510 = smul.addr 2, 58
    %s511 = scalar_lea.vmem %s0, %s510
    %v512 = vld [vmem:[%s511] sm:%s4]
    %s513 = scalar_lea.vmem [#allocation0], 464
    %514 = vst [vmem:[%s513] sm:%s4] %v512
    %s515 = smul.addr 2, 57
    %s516 = scalar_lea.vmem %s0, %s515
    %v517 = vld [vmem:[%s516] sm:%s4]
    %s518 = scalar_lea.vmem [#allocation0], 456
    %519 = vst [vmem:[%s518] sm:%s4] %v517
    %s520 = smul.addr 2, 56
    %s521 = scalar_lea.vmem %s0, %s520
    %v522 = vld [vmem:[%s521] sm:%s4]
    %s523 = scalar_lea.vmem [#allocation0], 448
    %524 = vst [vmem:[%s523] sm:%s4] %v522
    %s525 = smul.addr 2, 55
    %s526 = scalar_lea.vmem %s0, %s525
    %v527 = vld [vmem:[%s526] sm:%s4]
    %s528 = scalar_lea.vmem [#allocation0], 440
    %529 = vst [vmem:[%s528] sm:%s4] %v527
    %s530 = smul.addr 2, 54
    %s531 = scalar_lea.vmem %s0, %s530
    %v532 = vld [vmem:[%s531] sm:%s4]
    %s533 = scalar_lea.vmem [#allocation0], 432
    %534 = vst [vmem:[%s533] sm:%s4] %v532
    %s535 = smul.addr 2, 53
    %s536 = scalar_lea.vmem %s0, %s535
    %v537 = vld [vmem:[%s536] sm:%s4]
    %s538 = scalar_lea.vmem [#allocation0], 424
    %539 = vst [vmem:[%s538] sm:%s4] %v537
    %s540 = smul.addr 2, 52
    %s541 = scalar_lea.vmem %s0, %s540
    %v542 = vld [vmem:[%s541] sm:%s4]
    %s543 = scalar_lea.vmem [#allocation0], 416
    %544 = vst [vmem:[%s543] sm:%s4] %v542
    %s545 = smul.addr 2, 51
    %s546 = scalar_lea.vmem %s0, %s545
    %v547 = vld [vmem:[%s546] sm:%s4]
    %s548 = scalar_lea.vmem [#allocation0], 408
    %549 = vst [vmem:[%s548] sm:%s4] %v547
    %s550 = smul.addr 2, 50
    %s551 = scalar_lea.vmem %s0, %s550
    %v552 = vld [vmem:[%s551] sm:%s4]
    %s553 = scalar_lea.vmem [#allocation0], 400
    %554 = vst [vmem:[%s553] sm:%s4] %v552
    %s555 = smul.addr 2, 49
    %s556 = scalar_lea.vmem %s0, %s555
    %v557 = vld [vmem:[%s556] sm:%s4]
    %s558 = scalar_lea.vmem [#allocation0], 392
    %559 = vst [vmem:[%s558] sm:%s4] %v557
    %s560 = smul.addr 2, 48
    %s561 = scalar_lea.vmem %s0, %s560
    %v562 = vld [vmem:[%s561] sm:%s4]
    %s563 = scalar_lea.vmem [#allocation0], 384
    %564 = vst [vmem:[%s563] sm:%s4] %v562
    %s565 = smul.addr 2, 47
    %s566 = scalar_lea.vmem %s0, %s565
    %v567 = vld [vmem:[%s566] sm:%s4]
    %s568 = scalar_lea.vmem [#allocation0], 376
    %569 = vst [vmem:[%s568] sm:%s4] %v567
    %s570 = smul.addr 2, 46
    %s571 = scalar_lea.vmem %s0, %s570
    %v572 = vld [vmem:[%s571] sm:%s4]
    %s573 = scalar_lea.vmem [#allocation0], 368
    %574 = vst [vmem:[%s573] sm:%s4] %v572
    %s575 = smul.addr 2, 45
    %s576 = scalar_lea.vmem %s0, %s575
    %v577 = vld [vmem:[%s576] sm:%s4]
    %s578 = scalar_lea.vmem [#allocation0], 360
    %579 = vst [vmem:[%s578] sm:%s4] %v577
    %s580 = smul.addr 2, 44
    %s581 = scalar_lea.vmem %s0, %s580
    %v582 = vld [vmem:[%s581] sm:%s4]
    %s583 = scalar_lea.vmem [#allocation0], 352
    %584 = vst [vmem:[%s583] sm:%s4] %v582
    %s585 = smul.addr 2, 43
    %s586 = scalar_lea.vmem %s0, %s585
    %v587 = vld [vmem:[%s586] sm:%s4]
    %s588 = scalar_lea.vmem [#allocation0], 344
    %589 = vst [vmem:[%s588] sm:%s4] %v587
    %s590 = smul.addr 2, 42
    %s591 = scalar_lea.vmem %s0, %s590
    %v592 = vld [vmem:[%s591] sm:%s4]
    %s593 = scalar_lea.vmem [#allocation0], 336
    %594 = vst [vmem:[%s593] sm:%s4] %v592
    %s595 = smul.addr 2, 41
    %s596 = scalar_lea.vmem %s0, %s595
    %v597 = vld [vmem:[%s596] sm:%s4]
    %s598 = scalar_lea.vmem [#allocation0], 328
    %599 = vst [vmem:[%s598] sm:%s4] %v597
    %s600 = smul.addr 2, 40
    %s601 = scalar_lea.vmem %s0, %s600
    %v602 = vld [vmem:[%s601] sm:%s4]
    %s603 = scalar_lea.vmem [#allocation0], 320
    %604 = vst [vmem:[%s603] sm:%s4] %v602
    %s605 = smul.addr 2, 39
    %s606 = scalar_lea.vmem %s0, %s605
    %v607 = vld [vmem:[%s606] sm:%s4]
    %s608 = scalar_lea.vmem [#allocation0], 312
    %609 = vst [vmem:[%s608] sm:%s4] %v607
    %s610 = smul.addr 2, 38
    %s611 = scalar_lea.vmem %s0, %s610
    %v612 = vld [vmem:[%s611] sm:%s4]
    %s613 = scalar_lea.vmem [#allocation0], 304
    %614 = vst [vmem:[%s613] sm:%s4] %v612
    %s615 = smul.addr 2, 37
    %s616 = scalar_lea.vmem %s0, %s615
    %v617 = vld [vmem:[%s616] sm:%s4]
    %s618 = scalar_lea.vmem [#allocation0], 296
    %619 = vst [vmem:[%s618] sm:%s4] %v617
    %s620 = smul.addr 2, 36
    %s621 = scalar_lea.vmem %s0, %s620
    %v622 = vld [vmem:[%s621] sm:%s4]
    %s623 = scalar_lea.vmem [#allocation0], 288
    %624 = vst [vmem:[%s623] sm:%s4] %v622
    %s625 = smul.addr 2, 35
    %s626 = scalar_lea.vmem %s0, %s625
    %v627 = vld [vmem:[%s626] sm:%s4]
    %s628 = scalar_lea.vmem [#allocation0], 280
    %629 = vst [vmem:[%s628] sm:%s4] %v627
    %s630 = smul.addr 2, 34
    %s631 = scalar_lea.vmem %s0, %s630
    %v632 = vld [vmem:[%s631] sm:%s4]
    %s633 = scalar_lea.vmem [#allocation0], 272
    %634 = vst [vmem:[%s633] sm:%s4] %v632
    %s635 = smul.addr 2, 33
    %s636 = scalar_lea.vmem %s0, %s635
    %v637 = vld [vmem:[%s636] sm:%s4]
    %s638 = scalar_lea.vmem [#allocation0], 264
    %639 = vst [vmem:[%s638] sm:%s4] %v637
    %s640 = smul.addr 2, 32
    %s641 = scalar_lea.vmem %s0, %s640
    %v642 = vld [vmem:[%s641] sm:%s4]
    %s643 = scalar_lea.vmem [#allocation0], 256
    %644 = vst [vmem:[%s643] sm:%s4] %v642
    %s645 = smul.addr 2, 31
    %s646 = scalar_lea.vmem %s0, %s645
    %v647 = vld [vmem:[%s646] sm:%s4]
    %s648 = scalar_lea.vmem [#allocation0], 248
    %649 = vst [vmem:[%s648] sm:%s4] %v647
    %s650 = smul.addr 2, 30
    %s651 = scalar_lea.vmem %s0, %s650
    %v652 = vld [vmem:[%s651] sm:%s4]
    %s653 = scalar_lea.vmem [#allocation0], 240
    %654 = vst [vmem:[%s653] sm:%s4] %v652
    %s655 = smul.addr 2, 29
    %s656 = scalar_lea.vmem %s0, %s655
    %v657 = vld [vmem:[%s656] sm:%s4]
    %s658 = scalar_lea.vmem [#allocation0], 232
    %659 = vst [vmem:[%s658] sm:%s4] %v657
    %s660 = smul.addr 2, 28
    %s661 = scalar_lea.vmem %s0, %s660
    %v662 = vld [vmem:[%s661] sm:%s4]
    %s663 = scalar_lea.vmem [#allocation0], 224
    %664 = vst [vmem:[%s663] sm:%s4] %v662
    %s665 = smul.addr 2, 27
    %s666 = scalar_lea.vmem %s0, %s665
    %v667 = vld [vmem:[%s666] sm:%s4]
    %s668 = scalar_lea.vmem [#allocation0], 216
    %669 = vst [vmem:[%s668] sm:%s4] %v667
    %s670 = smul.addr 2, 26
    %s671 = scalar_lea.vmem %s0, %s670
    %v672 = vld [vmem:[%s671] sm:%s4]
    %s673 = scalar_lea.vmem [#allocation0], 208
    %674 = vst [vmem:[%s673] sm:%s4] %v672
    %s675 = smul.addr 2, 25
    %s676 = scalar_lea.vmem %s0, %s675
    %v677 = vld [vmem:[%s676] sm:%s4]
    %s678 = scalar_lea.vmem [#allocation0], 200
    %679 = vst [vmem:[%s678] sm:%s4] %v677
    %s680 = smul.addr 2, 24
    %s681 = scalar_lea.vmem %s0, %s680
    %v682 = vld [vmem:[%s681] sm:%s4]
    %s683 = scalar_lea.vmem [#allocation0], 192
    %684 = vst [vmem:[%s683] sm:%s4] %v682
    %s685 = smul.addr 2, 23
    %s686 = scalar_lea.vmem %s0, %s685
    %v687 = vld [vmem:[%s686] sm:%s4]
    %s688 = scalar_lea.vmem [#allocation0], 184
    %689 = vst [vmem:[%s688] sm:%s4] %v687
    %s690 = smul.addr 2, 22
    %s691 = scalar_lea.vmem %s0, %s690
    %v692 = vld [vmem:[%s691] sm:%s4]
    %s693 = scalar_lea.vmem [#allocation0], 176
    %694 = vst [vmem:[%s693] sm:%s4] %v692
    %s695 = smul.addr 2, 21
    %s696 = scalar_lea.vmem %s0, %s695
    %v697 = vld [vmem:[%s696] sm:%s4]
    %s698 = scalar_lea.vmem [#allocation0], 168
    %699 = vst [vmem:[%s698] sm:%s4] %v697
    %s700 = smul.addr 2, 20
    %s701 = scalar_lea.vmem %s0, %s700
    %v702 = vld [vmem:[%s701] sm:%s4]
    %s703 = scalar_lea.vmem [#allocation0], 160
    %704 = vst [vmem:[%s703] sm:%s4] %v702
    %s705 = smul.addr 2, 19
    %s706 = scalar_lea.vmem %s0, %s705
    %v707 = vld [vmem:[%s706] sm:%s4]
    %s708 = scalar_lea.vmem [#allocation0], 152
    %709 = vst [vmem:[%s708] sm:%s4] %v707
    %s710 = smul.addr 2, 18
    %s711 = scalar_lea.vmem %s0, %s710
    %v712 = vld [vmem:[%s711] sm:%s4]
    %s713 = scalar_lea.vmem [#allocation0], 144
    %714 = vst [vmem:[%s713] sm:%s4] %v712
    %s715 = smul.addr 2, 17
    %s716 = scalar_lea.vmem %s0, %s715
    %v717 = vld [vmem:[%s716] sm:%s4]
    %s718 = scalar_lea.vmem [#allocation0], 136
    %719 = vst [vmem:[%s718] sm:%s4] %v717
    %s720 = smul.addr 2, 16
    %s721 = scalar_lea.vmem %s0, %s720
    %v722 = vld [vmem:[%s721] sm:%s4]
    %s723 = scalar_lea.vmem [#allocation0], 128
    %724 = vst [vmem:[%s723] sm:%s4] %v722
    %s725 = smul.addr 2, 15
    %s726 = scalar_lea.vmem %s0, %s725
    %v727 = vld [vmem:[%s726] sm:%s4]
    %s728 = scalar_lea.vmem [#allocation0], 120
    %729 = vst [vmem:[%s728] sm:%s4] %v727
    %s730 = smul.addr 2, 14
    %s731 = scalar_lea.vmem %s0, %s730
    %v732 = vld [vmem:[%s731] sm:%s4]
    %s733 = scalar_lea.vmem [#allocation0], 112
    %734 = vst [vmem:[%s733] sm:%s4] %v732
    %s735 = smul.addr 2, 13
    %s736 = scalar_lea.vmem %s0, %s735
    %v737 = vld [vmem:[%s736] sm:%s4]
    %s738 = scalar_lea.vmem [#allocation0], 104
    %739 = vst [vmem:[%s738] sm:%s4] %v737
    %s740 = smul.addr 2, 12
    %s741 = scalar_lea.vmem %s0, %s740
    %v742 = vld [vmem:[%s741] sm:%s4]
    %s743 = scalar_lea.vmem [#allocation0], 96
    %744 = vst [vmem:[%s743] sm:%s4] %v742
    %s745 = smul.addr 2, 11
    %s746 = scalar_lea.vmem %s0, %s745
    %v747 = vld [vmem:[%s746] sm:%s4]
    %s748 = scalar_lea.vmem [#allocation0], 88
    %749 = vst [vmem:[%s748] sm:%s4] %v747
    %s750 = smul.addr 2, 10
    %s751 = scalar_lea.vmem %s0, %s750
    %v752 = vld [vmem:[%s751] sm:%s4]
    %s753 = scalar_lea.vmem [#allocation0], 80
    %754 = vst [vmem:[%s753] sm:%s4] %v752
    %s755 = smul.addr 2, 9
    %s756 = scalar_lea.vmem %s0, %s755
    %v757 = vld [vmem:[%s756] sm:%s4]
    %s758 = scalar_lea.vmem [#allocation0], 72
    %759 = vst [vmem:[%s758] sm:%s4] %v757
    %s760 = smul.addr 2, 8
    %s761 = scalar_lea.vmem %s0, %s760
    %v762 = vld [vmem:[%s761] sm:%s4]
    %s763 = scalar_lea.vmem [#allocation0], 64
    %764 = vst [vmem:[%s763] sm:%s4] %v762
    %s765 = smul.addr 2, 7
    %s766 = scalar_lea.vmem %s0, %s765
    %v767 = vld [vmem:[%s766] sm:%s4]
    %s768 = scalar_lea.vmem [#allocation0], 56
    %769 = vst [vmem:[%s768] sm:%s4] %v767
    %s770 = smul.addr 2, 6
    %s771 = scalar_lea.vmem %s0, %s770
    %v772 = vld [vmem:[%s771] sm:%s4]
    %s773 = scalar_lea.vmem [#allocation0], 48
    %774 = vst [vmem:[%s773] sm:%s4] %v772
    %s775 = smul.addr 2, 5
    %s776 = scalar_lea.vmem %s0, %s775
    %v777 = vld [vmem:[%s776] sm:%s4]
    %s778 = scalar_lea.vmem [#allocation0], 40
    %779 = vst [vmem:[%s778] sm:%s4] %v777
    %s780 = smul.addr 2, 4
    %s781 = scalar_lea.vmem %s0, %s780
    %v782 = vld [vmem:[%s781] sm:%s4]
    %s783 = scalar_lea.vmem [#allocation0], 32
    %784 = vst [vmem:[%s783] sm:%s4] %v782
    %s785 = smul.addr 2, 3
    %s786 = scalar_lea.vmem %s0, %s785
    %v787 = vld [vmem:[%s786] sm:%s4]
    %s788 = scalar_lea.vmem [#allocation0], 24
    %789 = vst [vmem:[%s788] sm:%s4] %v787
    %s790 = smul.addr 2, 2
    %s791 = scalar_lea.vmem %s0, %s790
    %v792 = vld [vmem:[%s791] sm:%s4]
    %s793 = scalar_lea.vmem [#allocation0], 16
    %794 = vst [vmem:[%s793] sm:%s4] %v792
    %s795 = scalar_lea.vmem %s0, 2
    %v796 = vld [vmem:[%s795] sm:%s4]
    %s797 = scalar_lea.vmem [#allocation0], 8
    %798 = vst [vmem:[%s797] sm:%s4] %v796
    %v799 = vld [vmem:[%s0] sm:%s4]
    %800 = vst [vmem:[#allocation0] sm:%s4] %v799
    %v801 = vld [vmem:[#allocation0] ss:$8 sm:$0xf]
    %v802 = vld [vmem:[#allocation0] ss:$8 sm:$0xf0]
    %vm803 = vcmask 1047556
    %v804 = vsel %vm803, %v802, %v801
    %vm805 = vcmask 130048
    %806 = vst.msk [vmem:[%s1] sm:$0xff] %vm805, %v804
    %s807 = scalar_lea.vmem [#allocation0], 64
    %v808 = vld [vmem:[%s807] ss:$8 sm:$0xf]
    %s809 = scalar_lea.vmem [#allocation0], 64
    %v810 = vld [vmem:[%s809] ss:$8 sm:$0xf0]
    %vm811 = vcmask 1047556
    %v812 = vsel %vm811, %v810, %v808
    %vm813 = vcmask 130048
    %s814 = scalar_lea.vmem %s1, 8
    %815 = vst.msk [vmem:[%s814] sm:$0xff] %vm813, %v812
    %s816 = scalar_lea.vmem [#allocation0], 128
    %v817 = vld [vmem:[%s816] ss:$8 sm:$0xf]
    %s818 = scalar_lea.vmem [#allocation0], 128
    %v819 = vld [vmem:[%s818] ss:$8 sm:$0xf0]
    %vm820 = vcmask 1047556
    %v821 = vsel %vm820, %v819, %v817
    %vm822 = vcmask 130048
    %s823 = scalar_lea.vmem %s1, 16
    %824 = vst.msk [vmem:[%s823] sm:$0xff] %vm822, %v821
    %s825 = scalar_lea.vmem [#allocation0], 192
    %v826 = vld [vmem:[%s825] ss:$8 sm:$0xf]
    %s827 = scalar_lea.vmem [#allocation0], 192
    %v828 = vld [vmem:[%s827] ss:$8 sm:$0xf0]
    %vm829 = vcmask 1047556
    %v830 = vsel %vm829, %v828, %v826
    %vm831 = vcmask 130048
    %s832 = scalar_lea.vmem %s1, 24
    %833 = vst.msk [vmem:[%s832] sm:$0xff] %vm831, %v830
    %s834 = scalar_lea.vmem [#allocation0], 256
    %v835 = vld [vmem:[%s834] ss:$8 sm:$0xf]
    %s836 = scalar_lea.vmem [#allocation0], 256
    %v837 = vld [vmem:[%s836] ss:$8 sm:$0xf0]
    %vm838 = vcmask 1047556
    %v839 = vsel %vm838, %v837, %v835
    %vm840 = vcmask 130048
    %s841 = scalar_lea.vmem %s1, 32
    %842 = vst.msk [vmem:[%s841] sm:$0xff] %vm840, %v839
    %s843 = scalar_lea.vmem [#allocation0], 320
    %v844 = vld [vmem:[%s843] ss:$8 sm:$0xf]
    %s845 = scalar_lea.vmem [#allocation0], 320
    %v846 = vld [vmem:[%s845] ss:$8 sm:$0xf0]
    %vm847 = vcmask 1047556
    %v848 = vsel %vm847, %v846, %v844
    %vm849 = vcmask 130048
    %s850 = scalar_lea.vmem %s1, 40
    %851 = vst.msk [vmem:[%s850] sm:$0xff] %vm849, %v848
    %s852 = scalar_lea.vmem [#allocation0], 384
    %v853 = vld [vmem:[%s852] ss:$8 sm:$0xf]
    %s854 = scalar_lea.vmem [#allocation0], 384
    %v855 = vld [vmem:[%s854] ss:$8 sm:$0xf0]
    %vm856 = vcmask 1047556
    %v857 = vsel %vm856, %v855, %v853
    %vm858 = vcmask 130048
    %s859 = scalar_lea.vmem %s1, 48
    %860 = vst.msk [vmem:[%s859] sm:$0xff] %vm858, %v857
    %s861 = scalar_lea.vmem [#allocation0], 448
    %v862 = vld [vmem:[%s861] ss:$8 sm:$0xf]
    %s863 = scalar_lea.vmem [#allocation0], 448
    %v864 = vld [vmem:[%s863] ss:$8 sm:$0xf0]
    %vm865 = vcmask 1047556
    %v866 = vsel %vm865, %v864, %v862
    %vm867 = vcmask 130048
    %s868 = scalar_lea.vmem %s1, 56
    %869 = vst.msk [vmem:[%s868] sm:$0xff] %vm867, %v866
    %s870 = scalar_lea.vmem [#allocation0], 512
    %v871 = vld [vmem:[%s870] ss:$8 sm:$0xf]
    %s872 = scalar_lea.vmem [#allocation0], 512
    %v873 = vld [vmem:[%s872] ss:$8 sm:$0xf0]
    %vm874 = vcmask 1047556
    %v875 = vsel %vm874, %v873, %v871
    %vm876 = vcmask 130048
    %s877 = scalar_lea.vmem %s1, 64
    %878 = vst.msk [vmem:[%s877] sm:$0xff] %vm876, %v875
    %s879 = scalar_lea.vmem [#allocation0], 576
    %v880 = vld [vmem:[%s879] ss:$8 sm:$0xf]
    %s881 = scalar_lea.vmem [#allocation0], 576
    %v882 = vld [vmem:[%s881] ss:$8 sm:$0xf0]
    %vm883 = vcmask 1047556
    %v884 = vsel %vm883, %v882, %v880
    %vm885 = vcmask 130048
    %s886 = scalar_lea.vmem %s1, 72
    %887 = vst.msk [vmem:[%s886] sm:$0xff] %vm885, %v884
    %s888 = scalar_lea.vmem [#allocation0], 640
    %v889 = vld [vmem:[%s888] ss:$8 sm:$0xf]
    %s890 = scalar_lea.vmem [#allocation0], 640
    %v891 = vld [vmem:[%s890] ss:$8 sm:$0xf0]
    %vm892 = vcmask 1047556
    %v893 = vsel %vm892, %v891, %v889
    %vm894 = vcmask 130048
    %s895 = scalar_lea.vmem %s1, 80
    %896 = vst.msk [vmem:[%s895] sm:$0xff] %vm894, %v893
    %s897 = scalar_lea.vmem [#allocation0], 704
    %v898 = vld [vmem:[%s897] ss:$8 sm:$0xf]
    %s899 = scalar_lea.vmem [#allocation0], 704
    %v900 = vld [vmem:[%s899] ss:$8 sm:$0xf0]
    %vm901 = vcmask 1047556
    %v902 = vsel %vm901, %v900, %v898
    %vm903 = vcmask 130048
    %s904 = scalar_lea.vmem %s1, 88
    %905 = vst.msk [vmem:[%s904] sm:$0xff] %vm903, %v902
    %s906 = scalar_lea.vmem [#allocation0], 768
    %v907 = vld [vmem:[%s906] ss:$8 sm:$0xf]
    %s908 = scalar_lea.vmem [#allocation0], 768
    %v909 = vld [vmem:[%s908] ss:$8 sm:$0xf0]
    %vm910 = vcmask 1047556
    %v911 = vsel %vm910, %v909, %v907
    %vm912 = vcmask 130048
    %s913 = scalar_lea.vmem %s1, 96
    %914 = vst.msk [vmem:[%s913] sm:$0xff] %vm912, %v911
    %s915 = scalar_lea.vmem [#allocation0], 832
    %v916 = vld [vmem:[%s915] ss:$8 sm:$0xf]
    %s917 = scalar_lea.vmem [#allocation0], 832
    %v918 = vld [vmem:[%s917] ss:$8 sm:$0xf0]
    %vm919 = vcmask 1047556
    %v920 = vsel %vm919, %v918, %v916
    %vm921 = vcmask 130048
    %s922 = scalar_lea.vmem %s1, 104
    %923 = vst.msk [vmem:[%s922] sm:$0xff] %vm921, %v920
    %s924 = scalar_lea.vmem [#allocation0], 896
    %v925 = vld [vmem:[%s924] ss:$8 sm:$0xf]
    %s926 = scalar_lea.vmem [#allocation0], 896
    %v927 = vld [vmem:[%s926] ss:$8 sm:$0xf0]
    %vm928 = vcmask 1047556
    %v929 = vsel %vm928, %v927, %v925
    %vm930 = vcmask 130048
    %s931 = scalar_lea.vmem %s1, 112
    %932 = vst.msk [vmem:[%s931] sm:$0xff] %vm930, %v929
    %s933 = scalar_lea.vmem [#allocation0], 960
    %v934 = vld [vmem:[%s933] ss:$8 sm:$0xf]
    %s935 = scalar_lea.vmem [#allocation0], 960
    %v936 = vld [vmem:[%s935] ss:$8 sm:$0xf0]
    %vm937 = vcmask 1047556
    %v938 = vsel %vm937, %v936, %v934
    %vm939 = vcmask 130048
    %s940 = scalar_lea.vmem %s1, 120
    %941 = vst.msk [vmem:[%s940] sm:$0xff] %vm939, %v938
    %s942 = scalar_lea.vmem [#allocation0], 1024
    %v943 = vld [vmem:[%s942] ss:$8 sm:$0xf]
    %s944 = scalar_lea.vmem [#allocation0], 1024
    %v945 = vld [vmem:[%s944] ss:$8 sm:$0xf0]
    %vm946 = vcmask 1047556
    %v947 = vsel %vm946, %v945, %v943
    %vm948 = vcmask 130048
    %s949 = scalar_lea.vmem %s1, 128
    %950 = vst.msk [vmem:[%s949] sm:$0xff] %vm948, %v947
    %s951 = scalar_lea.vmem [#allocation0], 1088
    %v952 = vld [vmem:[%s951] ss:$8 sm:$0xf]
    %s953 = scalar_lea.vmem [#allocation0], 1088
    %v954 = vld [vmem:[%s953] ss:$8 sm:$0xf0]
    %vm955 = vcmask 1047556
    %v956 = vsel %vm955, %v954, %v952
    %vm957 = vcmask 130048
    %s958 = scalar_lea.vmem %s1, 136
    %959 = vst.msk [vmem:[%s958] sm:$0xff] %vm957, %v956
    %s960 = scalar_lea.vmem [#allocation0], 1152
    %v961 = vld [vmem:[%s960] ss:$8 sm:$0xf]
    %s962 = scalar_lea.vmem [#allocation0], 1152
    %v963 = vld [vmem:[%s962] ss:$8 sm:$0xf0]
    %vm964 = vcmask 1047556
    %v965 = vsel %vm964, %v963, %v961
    %vm966 = vcmask 130048
    %s967 = scalar_lea.vmem %s1, 144
    %968 = vst.msk [vmem:[%s967] sm:$0xff] %vm966, %v965
    %s969 = scalar_lea.vmem [#allocation0], 1216
    %v970 = vld [vmem:[%s969] ss:$8 sm:$0xf]
    %s971 = scalar_lea.vmem [#allocation0], 1216
    %v972 = vld [vmem:[%s971] ss:$8 sm:$0xf0]
    %vm973 = vcmask 1047556
    %v974 = vsel %vm973, %v972, %v970
    %vm975 = vcmask 130048
    %s976 = scalar_lea.vmem %s1, 152
    %977 = vst.msk [vmem:[%s976] sm:$0xff] %vm975, %v974
    %s978 = scalar_lea.vmem [#allocation0], 1
    %v979 = vld [vmem:[%s978] ss:$8 sm:$0xf]
    %s980 = scalar_lea.vmem [#allocation0], 1
    %v981 = vld [vmem:[%s980] ss:$8 sm:$0xf0]
    %vm982 = vcmask 1047556
    %v983 = vsel %vm982, %v981, %v979
    %984 = vrot.lane.b32.xlu0 %v983, 16
    %v985 = vpop.permute.xlu0 %984
    %vm986 = vcmask 261248
    %987 = vst.msk [vmem:[%s1] sm:$0xff] %vm986, %v985
    %s988 = scalar_lea.vmem [#allocation0], 257
    %v989 = vld [vmem:[%s988] ss:$8 sm:$0xf]
    %s990 = scalar_lea.vmem [#allocation0], 257
    %v991 = vld [vmem:[%s990] ss:$8 sm:$0xf0]
    %vm992 = vcmask 1047556
    %v993 = vsel %vm992, %v991, %v989
    %994 = vrot.lane.b32.xlu0 %v993, 16
    %v995 = vpop.permute.xlu0 %994
    %vm996 = vcmask 261248
    %s997 = scalar_lea.vmem %s1, 32
    %998 = vst.msk [vmem:[%s997] sm:$0xff] %vm996, %v995
    %s999 = scalar_lea.vmem [#allocation0], 513
    %v1000 = vld [vmem:[%s999] ss:$8 sm:$0xf]
    %s1001 = scalar_lea.vmem [#allocation0], 513
    %v1002 = vld [vmem:[%s1001] ss:$8 sm:$0xf0]
    %vm1003 = vcmask 1047556
    %v1004 = vsel %vm1003, %v1002, %v1000
    %1005 = vrot.lane.b32.xlu0 %v1004, 16
    %v1006 = vpop.permute.xlu0 %1005
    %vm1007 = vcmask 261248
    %s1008 = scalar_lea.vmem %s1, 64
    %1009 = vst.msk [vmem:[%s1008] sm:$0xff] %vm1007, %v1006
    %s1010 = scalar_lea.vmem [#allocation0], 769
    %v1011 = vld [vmem:[%s1010] ss:$8 sm:$0xf]
    %s1012 = scalar_lea.vmem [#allocation0], 769
    %v1013 = vld [vmem:[%s1012] ss:$8 sm:$0xf0]
    %vm1014 = vcmask 1047556
    %v1015 = vsel %vm1014, %v1013, %v1011
    %1016 = vrot.lane.b32.xlu0 %v1015, 16
    %v1017 = vpop.permute.xlu0 %1016
    %vm1018 = vcmask 261248
    %s1019 = scalar_lea.vmem %s1, 96
    %1020 = vst.msk [vmem:[%s1019] sm:$0xff] %vm1018, %v1017
    %s1021 = scalar_lea.vmem [#allocation0], 1025
    %v1022 = vld [vmem:[%s1021] ss:$8 sm:$0xf]
    %s1023 = scalar_lea.vmem [#allocation0], 1025
    %v1024 = vld [vmem:[%s1023] ss:$8 sm:$0xf0]
    %vm1025 = vcmask 1047556
    %v1026 = vsel %vm1025, %v1024, %v1022
    %1027 = vrot.lane.b32.xlu0 %v1026, 16
    %v1028 = vpop.permute.xlu0 %1027
    %vm1029 = vcmask 261248
    %s1030 = scalar_lea.vmem %s1, 128
    %1031 = vst.msk [vmem:[%s1030] sm:$0xff] %vm1029, %v1028
    %s1032 = scalar_lea.vmem [#allocation0], 65
    %v1033 = vld [vmem:[%s1032] ss:$8 sm:$0xf]
    %s1034 = scalar_lea.vmem [#allocation0], 65
    %v1035 = vld [vmem:[%s1034] ss:$8 sm:$0xf0]
    %vm1036 = vcmask 1047556
    %v1037 = vsel %vm1036, %v1035, %v1033
    %1038 = vrot.lane.b32.xlu0 %v1037, 16
    %v1039 = vpop.permute.xlu0 %1038
    %vm1040 = vcmask 261248
    %s1041 = scalar_lea.vmem %s1, 8
    %1042 = vst.msk [vmem:[%s1041] sm:$0xff] %vm1040, %v1039
    %s1043 = scalar_lea.vmem [#allocation0], 321
    %v1044 = vld [vmem:[%s1043] ss:$8 sm:$0xf]
    %s1045 = scalar_lea.vmem [#allocation0], 321
    %v1046 = vld [vmem:[%s1045] ss:$8 sm:$0xf0]
    %vm1047 = vcmask 1047556
    %v1048 = vsel %vm1047, %v1046, %v1044
    %1049 = vrot.lane.b32.xlu0 %v1048, 16
    %v1050 = vpop.permute.xlu0 %1049
    %vm1051 = vcmask 261248
    %s1052 = scalar_lea.vmem %s1, 40
    %1053 = vst.msk [vmem:[%s1052] sm:$0xff] %vm1051, %v1050
    %s1054 = scalar_lea.vmem [#allocation0], 577
    %v1055 = vld [vmem:[%s1054] ss:$8 sm:$0xf]
    %s1056 = scalar_lea.vmem [#allocation0], 577
    %v1057 = vld [vmem:[%s1056] ss:$8 sm:$0xf0]
    %vm1058 = vcmask 1047556
    %v1059 = vsel %vm1058, %v1057, %v1055
    %1060 = vrot.lane.b32.xlu0 %v1059, 16
    %v1061 = vpop.permute.xlu0 %1060
    %vm1062 = vcmask 261248
    %s1063 = scalar_lea.vmem %s1, 72
    %1064 = vst.msk [vmem:[%s1063] sm:$0xff] %vm1062, %v1061
    %s1065 = scalar_lea.vmem [#allocation0], 833
    %v1066 = vld [vmem:[%s1065] ss:$8 sm:$0xf]
    %s1067 = scalar_lea.vmem [#allocation0], 833
    %v1068 = vld [vmem:[%s1067] ss:$8 sm:$0xf0]
    %vm1069 = vcmask 1047556
    %v1070 = vsel %vm1069, %v1068, %v1066
    %1071 = vrot.lane.b32.xlu0 %v1070, 16
    %v1072 = vpop.permute.xlu0 %1071
    %vm1073 = vcmask 261248
    %s1074 = scalar_lea.vmem %s1, 104
    %1075 = vst.msk [vmem:[%s1074] sm:$0xff] %vm1073, %v1072
    %s1076 = scalar_lea.vmem [#allocation0], 1089
    %v1077 = vld [vmem:[%s1076] ss:$8 sm:$0xf]
    %s1078 = scalar_lea.vmem [#allocation0], 1089
    %v1079 = vld [vmem:[%s1078] ss:$8 sm:$0xf0]
    %vm1080 = vcmask 1047556
    %v1081 = vsel %vm1080, %v1079, %v1077
    %1082 = vrot.lane.b32.xlu0 %v1081, 16
    %v1083 = vpop.permute.xlu0 %1082
    %vm1084 = vcmask 261248
    %s1085 = scalar_lea.vmem %s1, 136
    %1086 = vst.msk [vmem:[%s1085] sm:$0xff] %vm1084, %v1083
    %s1087 = scalar_lea.vmem [#allocation0], 129
    %v1088 = vld [vmem:[%s1087] ss:$8 sm:$0xf]
    %s1089 = scalar_lea.vmem [#allocation0], 129
    %v1090 = vld [vmem:[%s1089] ss:$8 sm:$0xf0]
    %vm1091 = vcmask 1047556
    %v1092 = vsel %vm1091, %v1090, %v1088
    %1093 = vrot.lane.b32.xlu0 %v1092, 16
    %v1094 = vpop.permute.xlu0 %1093
    %vm1095 = vcmask 261248
    %s1096 = scalar_lea.vmem %s1, 16
    %1097 = vst.msk [vmem:[%s1096] sm:$0xff] %vm1095, %v1094
    %s1098 = scalar_lea.vmem [#allocation0], 385
    %v1099 = vld [vmem:[%s1098] ss:$8 sm:$0xf]
    %s1100 = scalar_lea.vmem [#allocation0], 385
    %v1101 = vld [vmem:[%s1100] ss:$8 sm:$0xf0]
    %vm1102 = vcmask 1047556
    %v1103 = vsel %vm1102, %v1101, %v1099
    %1104 = vrot.lane.b32.xlu0 %v1103, 16
    %v1105 = vpop.permute.xlu0 %1104
    %vm1106 = vcmask 261248
    %s1107 = scalar_lea.vmem %s1, 48
    %1108 = vst.msk [vmem:[%s1107] sm:$0xff] %vm1106, %v1105
    %s1109 = scalar_lea.vmem [#allocation0], 641
    %v1110 = vld [vmem:[%s1109] ss:$8 sm:$0xf]
    %s1111 = scalar_lea.vmem [#allocation0], 641
    %v1112 = vld [vmem:[%s1111] ss:$8 sm:$0xf0]
    %vm1113 = vcmask 1047556
    %v1114 = vsel %vm1113, %v1112, %v1110
    %1115 = vrot.lane.b32.xlu0 %v1114, 16
    %v1116 = vpop.permute.xlu0 %1115
    %vm1117 = vcmask 261248
    %s1118 = scalar_lea.vmem %s1, 80
    %1119 = vst.msk [vmem:[%s1118] sm:$0xff] %vm1117, %v1116
    %s1120 = scalar_lea.vmem [#allocation0], 897
    %v1121 = vld [vmem:[%s1120] ss:$8 sm:$0xf]
    %s1122 = scalar_lea.vmem [#allocation0], 897
    %v1123 = vld [vmem:[%s1122] ss:$8 sm:$0xf0]
    %vm1124 = vcmask 1047556
    %v1125 = vsel %vm1124, %v1123, %v1121
    %1126 = vrot.lane.b32.xlu0 %v1125, 16
    %v1127 = vpop.permute.xlu0 %1126
    %vm1128 = vcmask 261248
    %s1129 = scalar_lea.vmem %s1, 112
    %1130 = vst.msk [vmem:[%s1129] sm:$0xff] %vm1128, %v1127
    %s1131 = scalar_lea.vmem [#allocation0], 1153
    %v1132 = vld [vmem:[%s1131] ss:$8 sm:$0xf]
    %s1133 = scalar_lea.vmem [#allocation0], 1153
    %v1134 = vld [vmem:[%s1133] ss:$8 sm:$0xf0]
    %vm1135 = vcmask 1047556
    %v1136 = vsel %vm1135, %v1134, %v1132
    %1137 = vrot.lane.b32.xlu0 %v1136, 16
    %v1138 = vpop.permute.xlu0 %1137
    %vm1139 = vcmask 261248
    %s1140 = scalar_lea.vmem %s1, 144
    %1141 = vst.msk [vmem:[%s1140] sm:$0xff] %vm1139, %v1138
    %s1142 = scalar_lea.vmem [#allocation0], 193
    %v1143 = vld [vmem:[%s1142] ss:$8 sm:$0xf]
    %s1144 = scalar_lea.vmem [#allocation0], 193
    %v1145 = vld [vmem:[%s1144] ss:$8 sm:$0xf0]
    %vm1146 = vcmask 1047556
    %v1147 = vsel %vm1146, %v1145, %v1143
    %1148 = vrot.lane.b32.xlu0 %v1147, 16
    %v1149 = vpop.permute.xlu0 %1148
    %vm1150 = vcmask 261248
    %s1151 = scalar_lea.vmem %s1, 24
    %1152 = vst.msk [vmem:[%s1151] sm:$0xff] %vm1150, %v1149
    %s1153 = scalar_lea.vmem [#allocation0], 449
    %v1154 = vld [vmem:[%s1153] ss:$8 sm:$0xf]
    %s1155 = scalar_lea.vmem [#allocation0], 449
    %v1156 = vld [vmem:[%s1155] ss:$8 sm:$0xf0]
    %vm1157 = vcmask 1047556
    %v1158 = vsel %vm1157, %v1156, %v1154
    %1159 = vrot.lane.b32.xlu0 %v1158, 16
    %v1160 = vpop.permute.xlu0 %1159
    %vm1161 = vcmask 261248
    %s1162 = scalar_lea.vmem %s1, 56
    %1163 = vst.msk [vmem:[%s1162] sm:$0xff] %vm1161, %v1160
    %s1164 = scalar_lea.vmem [#allocation0], 705
    %v1165 = vld [vmem:[%s1164] ss:$8 sm:$0xf]
    %s1166 = scalar_lea.vmem [#allocation0], 705
    %v1167 = vld [vmem:[%s1166] ss:$8 sm:$0xf0]
    %vm1168 = vcmask 1047556
    %v1169 = vsel %vm1168, %v1167, %v1165
    %1170 = vrot.lane.b32.xlu0 %v1169, 16
    %v1171 = vpop.permute.xlu0 %1170
    %vm1172 = vcmask 261248
    %s1173 = scalar_lea.vmem %s1, 88
    %1174 = vst.msk [vmem:[%s1173] sm:$0xff] %vm1172, %v1171
    %s1175 = scalar_lea.vmem [#allocation0], 961
    %v1176 = vld [vmem:[%s1175] ss:$8 sm:$0xf]
    %s1177 = scalar_lea.vmem [#allocation0], 961
    %v1178 = vld [vmem:[%s1177] ss:$8 sm:$0xf0]
    %vm1179 = vcmask 1047556
    %v1180 = vsel %vm1179, %v1178, %v1176
    %1181 = vrot.lane.b32.xlu0 %v1180, 16
    %v1182 = vpop.permute.xlu0 %1181
    %vm1183 = vcmask 261248
    %s1184 = scalar_lea.vmem %s1, 120
    %1185 = vst.msk [vmem:[%s1184] sm:$0xff] %vm1183, %v1182
    %s1186 = scalar_lea.vmem [#allocation0], 1217
    %v1187 = vld [vmem:[%s1186] ss:$8 sm:$0xf]
    %s1188 = scalar_lea.vmem [#allocation0], 1217
    %v1189 = vld [vmem:[%s1188] ss:$8 sm:$0xf0]
    %vm1190 = vcmask 1047556
    %v1191 = vsel %vm1190, %v1189, %v1187
    %1192 = vrot.lane.b32.xlu0 %v1191, 16
    %v1193 = vpop.permute.xlu0 %1192
    %vm1194 = vcmask 261248
    %s1195 = scalar_lea.vmem %s1, 152
    %1196 = vst.msk [vmem:[%s1195] sm:$0xff] %vm1194, %v1193

// kernel: compact_net_forward.1
$region0: #{compact_net_forward.1}
  #allocation0 [shape = 'u32[]', space=smem, size = 0x4, offset = 0x4, fixed_abs, tag = 'smem constant byte address 0x4 - core index']
  #allocation1 [shape = 'u32[144,128]{1,0:T(1,128)}', space=vmem, size = 0x12000, scoped, tag = 'internal scratch']
  #allocation2 [shape = 'f32[16,32]{1,0:T(8,128)}', space=vmem, size = 0x2000, scoped, tag = 'scratch operand']
  %s0 = inlined_call_operand.vmem [shape: f32[9,1,392], index: 0, kind: input, shape index: {}]
  %s1 = inlined_call_operand.vmem [shape: s32[3,392,1], index: 1, kind: input, shape index: {}]
  %s2 = inlined_call_operand.vmem [shape: s32[3,1,98], index: 2, kind: input, shape index: {}]
  %s3 = inlined_call_operand.vmem [shape: s32[3,98,1], index: 3, kind: input, shape index: {}]
  %s4 = inlined_call_operand.vmem [shape: s32[3,1,32], index: 4, kind: input, shape index: {}]
  %s5 = inlined_call_operand.vmem [shape: f32[9,16,1], index: 5, kind: input, shape index: {}]
  %s6 = inlined_call_operand.vmem [shape: f32[16,1], index: 6, kind: input, shape index: {}]
  %s7 = inlined_call_operand.vmem [shape: f32[16,1], index: 7, kind: input, shape index: {}]
  %s8 = inlined_call_operand.vmem [shape: f32[16,1], index: 8, kind: input, shape index: {}]
  %s9 = inlined_call_operand.vmem [shape: f32[9,16,1], index: 9, kind: input, shape index: {}]
  %s10 = inlined_call_operand.vmem [shape: f32[16,1], index: 10, kind: input, shape index: {}]
  %s11 = inlined_call_operand.vmem [shape: f32[16,1], index: 11, kind: input, shape index: {}]
  %s12 = inlined_call_operand.vmem [shape: f32[16,1], index: 12, kind: input, shape index: {}]
  %s13 = inlined_call_operand.vmem [shape: f32[9,16,1], index: 13, kind: input, shape index: {}]
  %s14 = inlined_call_operand.vmem [shape: f32[16,1], index: 14, kind: input, shape index: {}]
  %s15 = inlined_call_operand.vmem [shape: f32[16,1], index: 15, kind: input, shape index: {}]
  %s16 = inlined_call_operand.vmem [shape: f32[16,1], index: 16, kind: input, shape index: {}]
  %s17 = inlined_call_operand.vmem [shape: f32[16,10,32], index: 17, kind: input, shape index: {}]
  %s18 = inlined_call_operand.vmem [shape: f32[32,2], index: 18, kind: input, shape index: {}]
  %s19 = inlined_call_operand.vmem [shape: f32[10,1], index: 19, kind: input, shape index: {}]
  %s20 = inlined_call_operand.vmem [shape: f32[10,2], index: 20, kind: output, shape index: {}]
  %s21 = sld [smem:[#allocation0]]
  $region90: #{compact_net_forward.1} parent=0
    _
  %s23 = ssub.s32 1, %s21
  %s24 = scalar_select 0, %s23, %s21
  // Predicated region
  $region2: #{compact_net_forward.1} parent=0 // pred_check
    _
  $region3: #{compact_net_forward.1} parent=0 // pred_check_branch
    %26 = sbr.rel (0) target = $region5
  $region4: #{compact_net_forward.1} parent=0 // pred_region
    _
  $region5: #{compact_net_forward.1} parent=0 // pred_fallthru
    _
  // Predicated region
  $region6: #{compact_net_forward.1} parent=0 // pred_check
    _
  $region7: #{compact_net_forward.1} parent=0 // pred_check_branch
    %28 = sbr.rel (0) target = $region9
  $region8: #{compact_net_forward.1} parent=0 // pred_region
    _
  $region9: #{compact_net_forward.1} parent=0 // pred_fallthru
    _
  // Predicated region
  $region10: #{compact_net_forward.1} parent=0 // pred_check
    _
  $region11: #{compact_net_forward.1} parent=0 // pred_check_branch
    %30 = sbr.rel (0) target = $region13
  $region12: #{compact_net_forward.1} parent=0 // pred_region
    _
  $region13: #{compact_net_forward.1} parent=0 // pred_fallthru
    _
  // Predicated region
  $region14: #{compact_net_forward.1} parent=0 // pred_check
    _
  $region15: #{compact_net_forward.1} parent=0 // pred_check_branch
    %32 = sbr.rel (0) target = $region17
  $region16: #{compact_net_forward.1} parent=0 // pred_region
    _
  $region17: #{compact_net_forward.1} parent=0 // pred_fallthru
    _
  // Predicated region
  $region18: #{compact_net_forward.1} parent=0 // pred_check
    _
  $region19: #{compact_net_forward.1} parent=0 // pred_check_branch
    %34 = sbr.rel (0) target = $region21
  $region20: #{compact_net_forward.1} parent=0 // pred_region
    _
  $region21: #{compact_net_forward.1} parent=0 // pred_fallthru
    _
  // Predicated region
  $region22: #{compact_net_forward.1} parent=0 // pred_check
    _
  $region23: #{compact_net_forward.1} parent=0 // pred_check_branch
    %36 = sbr.rel (0) target = $region25
  $region24: #{compact_net_forward.1} parent=0 // pred_region
    _
  $region25: #{compact_net_forward.1} parent=0 // pred_fallthru
    _
  // Predicated region
  $region26: #{compact_net_forward.1} parent=0 // pred_check
    _
  $region27: #{compact_net_forward.1} parent=0 // pred_check_branch
    %38 = sbr.rel (0) target = $region29
  $region28: #{compact_net_forward.1} parent=0 // pred_region
    _
  $region29: #{compact_net_forward.1} parent=0 // pred_fallthru
    _
  // Predicated region
  $region30: #{compact_net_forward.1} parent=0 // pred_check
    _
  $region31: #{compact_net_forward.1} parent=0 // pred_check_branch
    %40 = sbr.rel (0) target = $region33
  $region32: #{compact_net_forward.1} parent=0 // pred_region
    _
  $region33: #{compact_net_forward.1} parent=0 // pred_fallthru
    _
  // Predicated region
  $region34: #{compact_net_forward.1} parent=0 // pred_check
    _
  $region35: #{compact_net_forward.1} parent=0 // pred_check_branch
    %42 = sbr.rel (0) target = $region37
  $region36: #{compact_net_forward.1} parent=0 // pred_region
    _
  $region37: #{compact_net_forward.1} parent=0 // pred_fallthru
    _
  // Predicated region
  $region38: #{compact_net_forward.1} parent=0 // pred_check
    _
  $region39: #{compact_net_forward.1} parent=0 // pred_check_branch
    %44 = sbr.rel (0) target = $region41
  $region40: #{compact_net_forward.1} parent=0 // pred_region
    _
  $region41: #{compact_net_forward.1} parent=0 // pred_fallthru
    _
  // Predicated region
  $region42: #{compact_net_forward.1} parent=0 // pred_check
    _
  $region43: #{compact_net_forward.1} parent=0 // pred_check_branch
    %46 = sbr.rel (0) target = $region45
  $region44: #{compact_net_forward.1} parent=0 // pred_region
    _
  $region45: #{compact_net_forward.1} parent=0 // pred_fallthru
    _
  // Predicated region
  $region46: #{compact_net_forward.1} parent=0 // pred_check
    _
  $region47: #{compact_net_forward.1} parent=0 // pred_check_branch
    %48 = sbr.rel (0) target = $region49
  $region48: #{compact_net_forward.1} parent=0 // pred_region
    _
  $region49: #{compact_net_forward.1} parent=0 // pred_fallthru
    _
  // Predicated region
  $region50: #{compact_net_forward.1} parent=0 // pred_check
    _
  $region51: #{compact_net_forward.1} parent=0 // pred_check_branch
    %50 = sbr.rel (0) target = $region53
  $region52: #{compact_net_forward.1} parent=0 // pred_region
    _
  $region53: #{compact_net_forward.1} parent=0 // pred_fallthru
    _
  // Predicated region
  $region54: #{compact_net_forward.1} parent=0 // pred_check
    _
  $region55: #{compact_net_forward.1} parent=0 // pred_check_branch
    %52 = sbr.rel (0) target = $region57
  $region56: #{compact_net_forward.1} parent=0 // pred_region
    _
  $region57: #{compact_net_forward.1} parent=0 // pred_fallthru
    _
  // Predicated region
  $region58: #{compact_net_forward.1} parent=0 // pred_check
    _
  $region59: #{compact_net_forward.1} parent=0 // pred_check_branch
    %54 = sbr.rel (0) target = $region61
  $region60: #{compact_net_forward.1} parent=0 // pred_region
    _
  $region61: #{compact_net_forward.1} parent=0 // pred_fallthru
    _
  // Predicated region
  $region62: #{compact_net_forward.1} parent=0 // pred_check
    _
  $region63: #{compact_net_forward.1} parent=0 // pred_check_branch
    %56 = sbr.rel (0) target = $region65
  $region64: #{compact_net_forward.1} parent=0 // pred_region
    _
  $region65: #{compact_net_forward.1} parent=0 // pred_fallthru
    _
  // Predicated region
  $region66: #{compact_net_forward.1} parent=0 // pred_check
    _
  $region67: #{compact_net_forward.1} parent=0 // pred_check_branch
    %58 = sbr.rel (0) target = $region69
  $region68: #{compact_net_forward.1} parent=0 // pred_region
    _
  $region69: #{compact_net_forward.1} parent=0 // pred_fallthru
    _
  // Predicated region
  $region70: #{compact_net_forward.1} parent=0 // pred_check
    _
  $region71: #{compact_net_forward.1} parent=0 // pred_check_branch
    %60 = sbr.rel (0) target = $region73
  $region72: #{compact_net_forward.1} parent=0 // pred_region
    _
  $region73: #{compact_net_forward.1} parent=0 // pred_fallthru
    _
  // Predicated region
  $region74: #{compact_net_forward.1} parent=0 // pred_check
    _
  $region75: #{compact_net_forward.1} parent=0 // pred_check_branch
    %62 = sbr.rel (0) target = $region77
  $region76: #{compact_net_forward.1} parent=0 // pred_region
    _
  $region77: #{compact_net_forward.1} parent=0 // pred_fallthru
    _
  // Predicated region
  $region78: #{compact_net_forward.1} parent=0 // pred_check
    _
  $region79: #{compact_net_forward.1} parent=0 // pred_check_branch
    %64 = sbr.rel (0) target = $region81
  $region80: #{compact_net_forward.1} parent=0 // pred_region
    _
  $region81: #{compact_net_forward.1} parent=0 // pred_fallthru
    _
  %v65 = vld [vmem:[%s5] sm:$0xff]
  %v66 = vld [vmem:[%s5 + $0x8] sm:$0xff]
  %v67 = vld [vmem:[%s0] sm:$0xf]
  %69 = vset.pattern.permute.xlu0 0
  %70 = vperm.xlu0 %69, %v65
  %v71 = vpop.permute.xlu0 %70
  %74 = vset.pattern.permute.xlu0 0
  %75 = vperm.xlu0 %74, %v66
  %v76 = vpop.permute.xlu0 %75
  %v79 = vlaneseq
  %v80 = vshrl.u32 %v79, 7
  %v81 = vsub.s32 0, %v80
  %v82 = vrot.slane %v67, %v81
  %v83 = vlaneseq
  %v84 = vshrl.u32 %v83, 7
  %v85 = vsub.s32 1, %v84
  %v86 = vrot.slane %v67, %v85
  %v87 = vlaneseq
  %v88 = vshrl.u32 %v87, 7
  %v89 = vsub.s32 2, %v88
  %v90 = vrot.slane %v67, %v89
  %v91 = vlaneseq
  %v92 = vshrl.u32 %v91, 7
  %v93 = vsub.s32 3, %v92
  %v94 = vrot.slane %v67, %v93
  %v99 = vmul.f32 %v71, %v82
  %v100 = vmul.f32 %v71, %v86
  %v101 = vmul.f32 %v71, %v90
  %v102 = vmul.f32 %v71, %v94
  %v103 = vmul.f32 %v76, %v82
  %v104 = vmul.f32 %v76, %v86
  %v105 = vmul.f32 %v76, %v90
  %v106 = vmul.f32 %v76, %v94
  %s107 = scalar_lea.vmem %s5, 16
  %v108 = vld [vmem:[%s107] sm:$0xff]
  %v109 = vld [vmem:[%s107 + $0x8] sm:$0xff]
  %s110 = scalar_lea.vmem %s0, 4
  %v111 = vld [vmem:[%s110] sm:$0xf]
  %113 = vset.pattern.permute.xlu0 0
  %114 = vperm.xlu0 %113, %v108
  %v115 = vpop.permute.xlu0 %114
  %118 = vset.pattern.permute.xlu0 0
  %119 = vperm.xlu0 %118, %v109
  %v120 = vpop.permute.xlu0 %119
  %v123 = vlaneseq
  %v124 = vshrl.u32 %v123, 7
  %v125 = vsub.s32 0, %v124
  %v126 = vrot.slane %v111, %v125
  %v127 = vlaneseq
  %v128 = vshrl.u32 %v127, 7
  %v129 = vsub.s32 1, %v128
  %v130 = vrot.slane %v111, %v129
  %v131 = vlaneseq
  %v132 = vshrl.u32 %v131, 7
  %v133 = vsub.s32 2, %v132
  %v134 = vrot.slane %v111, %v133
  %v135 = vlaneseq
  %v136 = vshrl.u32 %v135, 7
  %v137 = vsub.s32 3, %v136
  %v138 = vrot.slane %v111, %v137
  %v143 = vmul.f32 %v115, %v126
  %v144 = vmul.f32 %v115, %v130
  %v145 = vmul.f32 %v115, %v134
  %v146 = vmul.f32 %v115, %v138
  %v147 = vmul.f32 %v120, %v126
  %v148 = vmul.f32 %v120, %v130
  %v149 = vmul.f32 %v120, %v134
  %v150 = vmul.f32 %v120, %v138
  %v151 = vadd.f32 %v99, %v143
  %v152 = vadd.f32 %v100, %v144
  %v153 = vadd.f32 %v101, %v145
  %v154 = vadd.f32 %v102, %v146
  %v155 = vadd.f32 %v103, %v147
  %v156 = vadd.f32 %v104, %v148
  %v157 = vadd.f32 %v105, %v149
  %v158 = vadd.f32 %v106, %v150
  %s159 = scalar_lea.vmem %s5, 32
  %v160 = vld [vmem:[%s159] sm:$0xff]
  %v161 = vld [vmem:[%s159 + $0x8] sm:$0xff]
  %s162 = scalar_lea.vmem %s0, 8
  %v163 = vld [vmem:[%s162] sm:$0xf]
  %165 = vset.pattern.permute.xlu0 0
  %166 = vperm.xlu0 %165, %v160
  %v167 = vpop.permute.xlu0 %166
  %170 = vset.pattern.permute.xlu0 0
  %171 = vperm.xlu0 %170, %v161
  %v172 = vpop.permute.xlu0 %171
  %v175 = vlaneseq
  %v176 = vshrl.u32 %v175, 7
  %v177 = vsub.s32 0, %v176
  %v178 = vrot.slane %v163, %v177
  %v179 = vlaneseq
  %v180 = vshrl.u32 %v179, 7
  %v181 = vsub.s32 1, %v180
  %v182 = vrot.slane %v163, %v181
  %v183 = vlaneseq
  %v184 = vshrl.u32 %v183, 7
  %v185 = vsub.s32 2, %v184
  %v186 = vrot.slane %v163, %v185
  %v187 = vlaneseq
  %v188 = vshrl.u32 %v187, 7
  %v189 = vsub.s32 3, %v188
  %v190 = vrot.slane %v163, %v189
  %v195 = vmul.f32 %v167, %v178
  %v196 = vmul.f32 %v167, %v182
  %v197 = vmul.f32 %v167, %v186
  %v198 = vmul.f32 %v167, %v190
  %v199 = vmul.f32 %v172, %v178
  %v200 = vmul.f32 %v172, %v182
  %v201 = vmul.f32 %v172, %v186
  %v202 = vmul.f32 %v172, %v190
  %v203 = vadd.f32 %v151, %v195
  %v204 = vadd.f32 %v152, %v196
  %v205 = vadd.f32 %v153, %v197
  %v206 = vadd.f32 %v154, %v198
  %v207 = vadd.f32 %v155, %v199
  %v208 = vadd.f32 %v156, %v200
  %v209 = vadd.f32 %v157, %v201
  %v210 = vadd.f32 %v158, %v202
  %s211 = scalar_lea.vmem %s5, 48
  %v212 = vld [vmem:[%s211] sm:$0xff]
  %v213 = vld [vmem:[%s211 + $0x8] sm:$0xff]
  %s214 = scalar_lea.vmem %s0, 12
  %v215 = vld [vmem:[%s214] sm:$0xf]
  %217 = vset.pattern.permute.xlu0 0
  %218 = vperm.xlu0 %217, %v212
  %v219 = vpop.permute.xlu0 %218
  %222 = vset.pattern.permute.xlu0 0
  %223 = vperm.xlu0 %222, %v213
  %v224 = vpop.permute.xlu0 %223
  %v227 = vlaneseq
  %v228 = vshrl.u32 %v227, 7
  %v229 = vsub.s32 0, %v228
  %v230 = vrot.slane %v215, %v229
  %v231 = vlaneseq
  %v232 = vshrl.u32 %v231, 7
  %v233 = vsub.s32 1, %v232
  %v234 = vrot.slane %v215, %v233
  %v235 = vlaneseq
  %v236 = vshrl.u32 %v235, 7
  %v237 = vsub.s32 2, %v236
  %v238 = vrot.slane %v215, %v237
  %v239 = vlaneseq
  %v240 = vshrl.u32 %v239, 7
  %v241 = vsub.s32 3, %v240
  %v242 = vrot.slane %v215, %v241
  %v247 = vmul.f32 %v219, %v230
  %v248 = vmul.f32 %v219, %v234
  %v249 = vmul.f32 %v219, %v238
  %v250 = vmul.f32 %v219, %v242
  %v251 = vmul.f32 %v224, %v230
  %v252 = vmul.f32 %v224, %v234
  %v253 = vmul.f32 %v224, %v238
  %v254 = vmul.f32 %v224, %v242
  %v255 = vadd.f32 %v203, %v247
  %v256 = vadd.f32 %v204, %v248
  %v257 = vadd.f32 %v205, %v249
  %v258 = vadd.f32 %v206, %v250
  %v259 = vadd.f32 %v207, %v251
  %v260 = vadd.f32 %v208, %v252
  %v261 = vadd.f32 %v209, %v253
  %v262 = vadd.f32 %v210, %v254
  %s263 = scalar_lea.vmem %s5, 64
  %v264 = vld [vmem:[%s263] sm:$0xff]
  %v265 = vld [vmem:[%s263 + $0x8] sm:$0xff]
  %s266 = scalar_lea.vmem %s0, 16
  %v267 = vld [vmem:[%s266] sm:$0xf]
  %269 = vset.pattern.permute.xlu0 0
  %270 = vperm.xlu0 %269, %v264
  %v271 = vpop.permute.xlu0 %270
  %274 = vset.pattern.permute.xlu0 0
  %275 = vperm.xlu0 %274, %v265
  %v276 = vpop.permute.xlu0 %275
  %v279 = vlaneseq
  %v280 = vshrl.u32 %v279, 7
  %v281 = vsub.s32 0, %v280
  %v282 = vrot.slane %v267, %v281
  %v283 = vlaneseq
  %v284 = vshrl.u32 %v283, 7
  %v285 = vsub.s32 1, %v284
  %v286 = vrot.slane %v267, %v285
  %v287 = vlaneseq
  %v288 = vshrl.u32 %v287, 7
  %v289 = vsub.s32 2, %v288
  %v290 = vrot.slane %v267, %v289
  %v291 = vlaneseq
  %v292 = vshrl.u32 %v291, 7
  %v293 = vsub.s32 3, %v292
  %v294 = vrot.slane %v267, %v293
  %v299 = vmul.f32 %v271, %v282
  %v300 = vmul.f32 %v271, %v286
  %v301 = vmul.f32 %v271, %v290
  %v302 = vmul.f32 %v271, %v294
  %v303 = vmul.f32 %v276, %v282
  %v304 = vmul.f32 %v276, %v286
  %v305 = vmul.f32 %v276, %v290
  %v306 = vmul.f32 %v276, %v294
  %v307 = vadd.f32 %v255, %v299
  %v308 = vadd.f32 %v256, %v300
  %v309 = vadd.f32 %v257, %v301
  %v310 = vadd.f32 %v258, %v302
  %v311 = vadd.f32 %v259, %v303
  %v312 = vadd.f32 %v260, %v304
  %v313 = vadd.f32 %v261, %v305
  %v314 = vadd.f32 %v262, %v306
  %s315 = scalar_lea.vmem %s5, 80
  %v316 = vld [vmem:[%s315] sm:$0xff]
  %v317 = vld [vmem:[%s315 + $0x8] sm:$0xff]
  %s318 = scalar_lea.vmem %s0, 20
  %v319 = vld [vmem:[%s318] sm:$0xf]
  %321 = vset.pattern.permute.xlu0 0
  %322 = vperm.xlu0 %321, %v316
  %v323 = vpop.permute.xlu0 %322
  %326 = vset.pattern.permute.xlu0 0
  %327 = vperm.xlu0 %326, %v317
  %v328 = vpop.permute.xlu0 %327
  %v331 = vlaneseq
  %v332 = vshrl.u32 %v331, 7
  %v333 = vsub.s32 0, %v332
  %v334 = vrot.slane %v319, %v333
  %v335 = vlaneseq
  %v336 = vshrl.u32 %v335, 7
  %v337 = vsub.s32 1, %v336
  %v338 = vrot.slane %v319, %v337
  %v339 = vlaneseq
  %v340 = vshrl.u32 %v339, 7
  %v341 = vsub.s32 2, %v340
  %v342 = vrot.slane %v319, %v341
  %v343 = vlaneseq
  %v344 = vshrl.u32 %v343, 7
  %v345 = vsub.s32 3, %v344
  %v346 = vrot.slane %v319, %v345
  %v351 = vmul.f32 %v323, %v334
  %v352 = vmul.f32 %v323, %v338
  %v353 = vmul.f32 %v323, %v342
  %v354 = vmul.f32 %v323, %v346
  %v355 = vmul.f32 %v328, %v334
  %v356 = vmul.f32 %v328, %v338
  %v357 = vmul.f32 %v328, %v342
  %v358 = vmul.f32 %v328, %v346
  %v359 = vadd.f32 %v307, %v351
  %v360 = vadd.f32 %v308, %v352
  %v361 = vadd.f32 %v309, %v353
  %v362 = vadd.f32 %v310, %v354
  %v363 = vadd.f32 %v311, %v355
  %v364 = vadd.f32 %v312, %v356
  %v365 = vadd.f32 %v313, %v357
  %v366 = vadd.f32 %v314, %v358
  %s367 = scalar_lea.vmem %s5, 96
  %v368 = vld [vmem:[%s367] sm:$0xff]
  %v369 = vld [vmem:[%s367 + $0x8] sm:$0xff]
  %s370 = scalar_lea.vmem %s0, 24
  %v371 = vld [vmem:[%s370] sm:$0xf]
  %373 = vset.pattern.permute.xlu0 0
  %374 = vperm.xlu0 %373, %v368
  %v375 = vpop.permute.xlu0 %374
  %378 = vset.pattern.permute.xlu0 0
  %379 = vperm.xlu0 %378, %v369
  %v380 = vpop.permute.xlu0 %379
  %v383 = vlaneseq
  %v384 = vshrl.u32 %v383, 7
  %v385 = vsub.s32 0, %v384
  %v386 = vrot.slane %v371, %v385
  %v387 = vlaneseq
  %v388 = vshrl.u32 %v387, 7
  %v389 = vsub.s32 1, %v388
  %v390 = vrot.slane %v371, %v389
  %v391 = vlaneseq
  %v392 = vshrl.u32 %v391, 7
  %v393 = vsub.s32 2, %v392
  %v394 = vrot.slane %v371, %v393
  %v395 = vlaneseq
  %v396 = vshrl.u32 %v395, 7
  %v397 = vsub.s32 3, %v396
  %v398 = vrot.slane %v371, %v397
  %v403 = vmul.f32 %v375, %v386
  %v404 = vmul.f32 %v375, %v390
  %v405 = vmul.f32 %v375, %v394
  %v406 = vmul.f32 %v375, %v398
  %v407 = vmul.f32 %v380, %v386
  %v408 = vmul.f32 %v380, %v390
  %v409 = vmul.f32 %v380, %v394
  %v410 = vmul.f32 %v380, %v398
  %v411 = vadd.f32 %v359, %v403
  %v412 = vadd.f32 %v360, %v404
  %v413 = vadd.f32 %v361, %v405
  %v414 = vadd.f32 %v362, %v406
  %v415 = vadd.f32 %v363, %v407
  %v416 = vadd.f32 %v364, %v408
  %v417 = vadd.f32 %v365, %v409
  %v418 = vadd.f32 %v366, %v410
  %s419 = scalar_lea.vmem %s5, 112
  %v420 = vld [vmem:[%s419] sm:$0xff]
  %v421 = vld [vmem:[%s419 + $0x8] sm:$0xff]
  %s422 = scalar_lea.vmem %s0, 28
  %v423 = vld [vmem:[%s422] sm:$0xf]
  %425 = vset.pattern.permute.xlu0 0
  %426 = vperm.xlu0 %425, %v420
  %v427 = vpop.permute.xlu0 %426
  %430 = vset.pattern.permute.xlu0 0
  %431 = vperm.xlu0 %430, %v421
  %v432 = vpop.permute.xlu0 %431
  %v435 = vlaneseq
  %v436 = vshrl.u32 %v435, 7
  %v437 = vsub.s32 0, %v436
  %v438 = vrot.slane %v423, %v437
  %v439 = vlaneseq
  %v440 = vshrl.u32 %v439, 7
  %v441 = vsub.s32 1, %v440
  %v442 = vrot.slane %v423, %v441
  %v443 = vlaneseq
  %v444 = vshrl.u32 %v443, 7
  %v445 = vsub.s32 2, %v444
  %v446 = vrot.slane %v423, %v445
  %v447 = vlaneseq
  %v448 = vshrl.u32 %v447, 7
  %v449 = vsub.s32 3, %v448
  %v450 = vrot.slane %v423, %v449
  %v455 = vmul.f32 %v427, %v438
  %v456 = vmul.f32 %v427, %v442
  %v457 = vmul.f32 %v427, %v446
  %v458 = vmul.f32 %v427, %v450
  %v459 = vmul.f32 %v432, %v438
  %v460 = vmul.f32 %v432, %v442
  %v461 = vmul.f32 %v432, %v446
  %v462 = vmul.f32 %v432, %v450
  %v463 = vadd.f32 %v411, %v455
  %v464 = vadd.f32 %v412, %v456
  %v465 = vadd.f32 %v413, %v457
  %v466 = vadd.f32 %v414, %v458
  %v467 = vadd.f32 %v415, %v459
  %v468 = vadd.f32 %v416, %v460
  %v469 = vadd.f32 %v417, %v461
  %v470 = vadd.f32 %v418, %v462
  %s471 = scalar_lea.vmem %s5, 128
  %v472 = vld [vmem:[%s471] sm:$0xff]
  %v473 = vld [vmem:[%s471 + $0x8] sm:$0xff]
  %s474 = scalar_lea.vmem %s0, 32
  %v475 = vld [vmem:[%s474] sm:$0xf]
  %477 = vset.pattern.permute.xlu0 0
  %478 = vperm.xlu0 %477, %v472
  %v479 = vpop.permute.xlu0 %478
  %482 = vset.pattern.permute.xlu0 0
  %483 = vperm.xlu0 %482, %v473
  %v484 = vpop.permute.xlu0 %483
  %v487 = vlaneseq
  %v488 = vshrl.u32 %v487, 7
  %v489 = vsub.s32 0, %v488
  %v490 = vrot.slane %v475, %v489
  %v491 = vlaneseq
  %v492 = vshrl.u32 %v491, 7
  %v493 = vsub.s32 1, %v492
  %v494 = vrot.slane %v475, %v493
  %v495 = vlaneseq
  %v496 = vshrl.u32 %v495, 7
  %v497 = vsub.s32 2, %v496
  %v498 = vrot.slane %v475, %v497
  %v499 = vlaneseq
  %v500 = vshrl.u32 %v499, 7
  %v501 = vsub.s32 3, %v500
  %v502 = vrot.slane %v475, %v501
  %v507 = vmul.f32 %v479, %v490
  %v508 = vmul.f32 %v479, %v494
  %v509 = vmul.f32 %v479, %v498
  %v510 = vmul.f32 %v479, %v502
  %v511 = vmul.f32 %v484, %v490
  %v512 = vmul.f32 %v484, %v494
  %v513 = vmul.f32 %v484, %v498
  %v514 = vmul.f32 %v484, %v502
  %v515 = vadd.f32 %v463, %v507
  %v516 = vadd.f32 %v464, %v508
  %v517 = vadd.f32 %v465, %v509
  %v518 = vadd.f32 %v466, %v510
  %v519 = vadd.f32 %v467, %v511
  %v520 = vadd.f32 %v468, %v512
  %v521 = vadd.f32 %v469, %v513
  %v522 = vadd.f32 %v470, %v514
  %v523 = vld [vmem:[%s6] sm:$0xff]
  %v524 = vld [vmem:[%s6 + $0x8] sm:$0xff]
  %526 = vset.pattern.permute.xlu0 0
  %527 = vperm.xlu0 %526, %v523
  %v528 = vpop.permute.xlu0 %527
  %531 = vset.pattern.permute.xlu0 0
  %532 = vperm.xlu0 %531, %v524
  %v533 = vpop.permute.xlu0 %532
  %v535 = vadd.f32 %v515, %v528
  %v536 = vadd.f32 %v516, %v528
  %v537 = vadd.f32 %v517, %v528
  %v538 = vadd.f32 %v518, %v528
  %v539 = vadd.f32 %v519, %v533
  %v540 = vadd.f32 %v520, %v533
  %v541 = vadd.f32 %v521, %v533
  %v542 = vadd.f32 %v522, %v533
  %v543 = vadd.f32 %v535, %v536
  %v544 = vadd.f32 %v543, %v537
  %vm545 = vcmask 64512
  %v546 = vsel %vm545, %v538, 0.0
  %v547 = vadd.f32 %v544, %v546
  %548 = vadd.xlane.f32.xlu0 %v547
  %v549 = vpop.xlane.xlu0 %548
  %v550 = vadd.f32 %v539, %v540
  %v551 = vadd.f32 %v550, %v541
  %v552 = vsel %vm545, %v542, 0.0
  %v553 = vadd.f32 %v551, %v552
  %554 = vadd.xlane.f32.xlu0 %v553
  %v555 = vpop.xlane.xlu0 %554
  %v556 = vrcp.pop 392.0
  %v557 = vmul.f32 %v549, %v556
  %v558 = vmul.f32 %v555, %v556
  %v559 = vsub.f32 %v535, %v557
  %v560 = vsub.f32 %v536, %v557
  %v561 = vsub.f32 %v537, %v557
  %v562 = vsub.f32 %v538, %v557
  %v563 = vsub.f32 %v539, %v558
  %v564 = vsub.f32 %v540, %v558
  %v565 = vsub.f32 %v541, %v558
  %v566 = vsub.f32 %v542, %v558
  %v567 = vmul.f32 %v559, %v559
  %v568 = vmul.f32 %v560, %v560
  %v569 = vmul.f32 %v561, %v561
  %v570 = vmul.f32 %v562, %v562
  %v571 = vmul.f32 %v563, %v563
  %v572 = vmul.f32 %v564, %v564
  %v573 = vmul.f32 %v565, %v565
  %v574 = vmul.f32 %v566, %v566
  %v575 = vadd.f32 %v567, %v568
  %v576 = vadd.f32 %v575, %v569
  %v577 = vsel %vm545, %v570, 0.0
  %v578 = vadd.f32 %v576, %v577
  %579 = vadd.xlane.f32.xlu0 %v578
  %v580 = vpop.xlane.xlu0 %579
  %v581 = vadd.f32 %v571, %v572
  %v582 = vadd.f32 %v581, %v573
  %v583 = vsel %vm545, %v574, 0.0
  %v584 = vadd.f32 %v582, %v583
  %585 = vadd.xlane.f32.xlu0 %v584
  %v586 = vpop.xlane.xlu0 %585
  %v587 = vmul.f32 %v580, %v556
  %v588 = vmul.f32 %v586, %v556
  %v589 = vld [vmem:[%s7] sm:$0xff]
  %v590 = vld [vmem:[%s7 + $0x8] sm:$0xff]
  %v591 = vadd.f32 %v587, 1e-05
  %v592 = vadd.f32 %v588, 1e-05
  %v593 = vrsqrt.pop %v591
  %v594 = vrsqrt.pop %v592
  %v595 = vmul.f32 %v589, %v593
  %v596 = vmul.f32 %v590, %v594
  %v597 = vld [vmem:[%s8] sm:$0xff]
  %v598 = vld [vmem:[%s8 + $0x8] sm:$0xff]
  %v599 = vmul.f32 %v595, %v557
  %v600 = vmul.f32 %v596, %v558
  %v601 = vsub.f32 %v597, %v599
  %v602 = vsub.f32 %v598, %v600
  %604 = vset.pattern.permute.xlu0 0
  %605 = vperm.xlu0 %604, %v595
  %v606 = vpop.permute.xlu0 %605
  %609 = vset.pattern.permute.xlu0 0
  %610 = vperm.xlu0 %609, %v596
  %v611 = vpop.permute.xlu0 %610
  %v613 = vmul.f32 %v535, %v606
  %v614 = vmul.f32 %v536, %v606
  %v615 = vmul.f32 %v537, %v606
  %v616 = vmul.f32 %v538, %v606
  %v617 = vmul.f32 %v539, %v611
  %v618 = vmul.f32 %v540, %v611
  %v619 = vmul.f32 %v541, %v611
  %v620 = vmul.f32 %v542, %v611
  %622 = vset.pattern.permute.xlu0 0
  %623 = vperm.xlu0 %622, %v601
  %v624 = vpop.permute.xlu0 %623
  %627 = vset.pattern.permute.xlu0 0
  %628 = vperm.xlu0 %627, %v602
  %v629 = vpop.permute.xlu0 %628
  %v631 = vadd.f32 %v613, %v624
  %v632 = vadd.f32 %v614, %v624
  %v633 = vadd.f32 %v615, %v624
  %v634 = vadd.f32 %v616, %v624
  %v635 = vadd.f32 %v617, %v629
  %v636 = vadd.f32 %v618, %v629
  %v637 = vadd.f32 %v619, %v629
  %v638 = vadd.f32 %v620, %v629
  %v639 = vld [vmem:[%s1] sm:$0xff]
  %v640 = vld [vmem:[%s1 + $0x8] sm:$0xff]
  %v641 = vld [vmem:[%s1 + $0x10] sm:$0xff]
  %v642 = vld [vmem:[%s1 + $0x18] sm:$0xff]
  %v643 = vld [vmem:[%s1 + $0x20] sm:$0xff]
  %v644 = vld [vmem:[%s1 + $0x28] sm:$0xff]
  %v645 = vld [vmem:[%s1 + $0x30] sm:$0xff]
  %v646 = vld [vmem:[%s1 + $0x38] sm:$0xff]
  %v647 = vld [vmem:[%s1 + $0x40] sm:$0xff]
  %v648 = vld [vmem:[%s1 + $0x48] sm:$0xff]
  %v649 = vld [vmem:[%s1 + $0x50] sm:$0xff]
  %v650 = vld [vmem:[%s1 + $0x58] sm:$0xff]
  %v651 = vld [vmem:[%s1 + $0x60] sm:$0xff]
  %v652 = vld [vmem:[%s1 + $0x68] sm:$0xff]
  %v653 = vld [vmem:[%s1 + $0x70] sm:$0xff]
  %v654 = vld [vmem:[%s1 + $0x78] sm:$0xff]
  %v655 = vld [vmem:[%s1 + $0x80] sm:$0xff]
  %v656 = vld [vmem:[%s1 + $0x88] sm:$0xff]
  %v657 = vld [vmem:[%s1 + $0x90] sm:$0xff]
  %v658 = vld [vmem:[%s1 + $0x98] sm:$0xff]
  %v659 = vld [vmem:[%s1 + $0xa0] sm:$0xff]
  %v660 = vld [vmem:[%s1 + $0xa8] sm:$0xff]
  %v661 = vld [vmem:[%s1 + $0xb0] sm:$0xff]
  %v662 = vld [vmem:[%s1 + $0xb8] sm:$0xff]
  %v663 = vld [vmem:[%s1 + $0xc0] sm:$0xff]
  %v664 = vld [vmem:[%s1 + $0xc8] sm:$0xff]
  %v665 = vld [vmem:[%s1 + $0xd0] sm:$0xff]
  %v666 = vld [vmem:[%s1 + $0xd8] sm:$0xff]
  %v667 = vld [vmem:[%s1 + $0xe0] sm:$0xff]
  %v668 = vld [vmem:[%s1 + $0xe8] sm:$0xff]
  %v669 = vld [vmem:[%s1 + $0xf0] sm:$0xff]
  %v670 = vld [vmem:[%s1 + $0xf8] sm:$0xff]
  %v671 = vld [vmem:[%s1 + $0x100] sm:$0xff]
  %v672 = vld [vmem:[%s1 + $0x108] sm:$0xff]
  %v673 = vld [vmem:[%s1 + $0x110] sm:$0xff]
  %v674 = vld [vmem:[%s1 + $0x118] sm:$0xff]
  %v675 = vld [vmem:[%s1 + $0x120] sm:$0xff]
  %v676 = vld [vmem:[%s1 + $0x128] sm:$0xff]
  %v677 = vld [vmem:[%s1 + $0x130] sm:$0xff]
  %v678 = vld [vmem:[%s1 + $0x138] sm:$0xff]
  %v679 = vld [vmem:[%s1 + $0x140] sm:$0xff]
  %v680 = vld [vmem:[%s1 + $0x148] sm:$0xff]
  %v681 = vld [vmem:[%s1 + $0x150] sm:$0xff]
  %v682 = vld [vmem:[%s1 + $0x158] sm:$0xff]
  %v683 = vld [vmem:[%s1 + $0x160] sm:$0xff]
  %v684 = vld [vmem:[%s1 + $0x168] sm:$0xff]
  %v685 = vld [vmem:[%s1 + $0x170] sm:$0xff]
  %v686 = vld [vmem:[%s1 + $0x178] sm:$0xff]
  %v687 = vld [vmem:[%s1 + $0x180] sm:$0xff]
  %s688 = scalar_lea.vmem %s1, 392
  %v689 = vld [vmem:[%s688] sm:$0xff]
  %v690 = vld [vmem:[%s688 + $0x8] sm:$0xff]
  %v691 = vld [vmem:[%s688 + $0x10] sm:$0xff]
  %v692 = vld [vmem:[%s688 + $0x18] sm:$0xff]
  %v693 = vld [vmem:[%s688 + $0x20] sm:$0xff]
  %v694 = vld [vmem:[%s688 + $0x28] sm:$0xff]
  %v695 = vld [vmem:[%s688 + $0x30] sm:$0xff]
  %v696 = vld [vmem:[%s688 + $0x38] sm:$0xff]
  %v697 = vld [vmem:[%s688 + $0x40] sm:$0xff]
  %v698 = vld [vmem:[%s688 + $0x48] sm:$0xff]
  %v699 = vld [vmem:[%s688 + $0x50] sm:$0xff]
  %v700 = vld [vmem:[%s688 + $0x58] sm:$0xff]
  %v701 = vld [vmem:[%s688 + $0x60] sm:$0xff]
  %v702 = vld [vmem:[%s688 + $0x68] sm:$0xff]
  %v703 = vld [vmem:[%s688 + $0x70] sm:$0xff]
  %v704 = vld [vmem:[%s688 + $0x78] sm:$0xff]
  %v705 = vld [vmem:[%s688 + $0x80] sm:$0xff]
  %v706 = vld [vmem:[%s688 + $0x88] sm:$0xff]
  %v707 = vld [vmem:[%s688 + $0x90] sm:$0xff]
  %v708 = vld [vmem:[%s688 + $0x98] sm:$0xff]
  %v709 = vld [vmem:[%s688 + $0xa0] sm:$0xff]
  %v710 = vld [vmem:[%s688 + $0xa8] sm:$0xff]
  %v711 = vld [vmem:[%s688 + $0xb0] sm:$0xff]
  %v712 = vld [vmem:[%s688 + $0xb8] sm:$0xff]
  %v713 = vld [vmem:[%s688 + $0xc0] sm:$0xff]
  %v714 = vld [vmem:[%s688 + $0xc8] sm:$0xff]
  %v715 = vld [vmem:[%s688 + $0xd0] sm:$0xff]
  %v716 = vld [vmem:[%s688 + $0xd8] sm:$0xff]
  %v717 = vld [vmem:[%s688 + $0xe0] sm:$0xff]
  %v718 = vld [vmem:[%s688 + $0xe8] sm:$0xff]
  %v719 = vld [vmem:[%s688 + $0xf0] sm:$0xff]
  %v720 = vld [vmem:[%s688 + $0xf8] sm:$0xff]
  %v721 = vld [vmem:[%s688 + $0x100] sm:$0xff]
  %v722 = vld [vmem:[%s688 + $0x108] sm:$0xff]
  %v723 = vld [vmem:[%s688 + $0x110] sm:$0xff]
  %v724 = vld [vmem:[%s688 + $0x118] sm:$0xff]
  %v725 = vld [vmem:[%s688 + $0x120] sm:$0xff]
  %v726 = vld [vmem:[%s688 + $0x128] sm:$0xff]
  %v727 = vld [vmem:[%s688 + $0x130] sm:$0xff]
  %v728 = vld [vmem:[%s688 + $0x138] sm:$0xff]
  %v729 = vld [vmem:[%s688 + $0x140] sm:$0xff]
  %v730 = vld [vmem:[%s688 + $0x148] sm:$0xff]
  %v731 = vld [vmem:[%s688 + $0x150] sm:$0xff]
  %v732 = vld [vmem:[%s688 + $0x158] sm:$0xff]
  %v733 = vld [vmem:[%s688 + $0x160] sm:$0xff]
  %v734 = vld [vmem:[%s688 + $0x168] sm:$0xff]
  %v735 = vld [vmem:[%s688 + $0x170] sm:$0xff]
  %v736 = vld [vmem:[%s688 + $0x178] sm:$0xff]
  %v737 = vld [vmem:[%s688 + $0x180] sm:$0xff]
  %s738 = scalar_lea.vmem %s1, 784
  %v739 = vld [vmem:[%s738] sm:$0xff]
  %v740 = vld [vmem:[%s738 + $0x8] sm:$0xff]
  %v741 = vld [vmem:[%s738 + $0x10] sm:$0xff]
  %v742 = vld [vmem:[%s738 + $0x18] sm:$0xff]
  %v743 = vld [vmem:[%s738 + $0x20] sm:$0xff]
  %v744 = vld [vmem:[%s738 + $0x28] sm:$0xff]
  %v745 = vld [vmem:[%s738 + $0x30] sm:$0xff]
  %v746 = vld [vmem:[%s738 + $0x38] sm:$0xff]
  %v747 = vld [vmem:[%s738 + $0x40] sm:$0xff]
  %v748 = vld [vmem:[%s738 + $0x48] sm:$0xff]
  %v749 = vld [vmem:[%s738 + $0x50] sm:$0xff]
  %v750 = vld [vmem:[%s738 + $0x58] sm:$0xff]
  %v751 = vld [vmem:[%s738 + $0x60] sm:$0xff]
  %v752 = vld [vmem:[%s738 + $0x68] sm:$0xff]
  %v753 = vld [vmem:[%s738 + $0x70] sm:$0xff]
  %v754 = vld [vmem:[%s738 + $0x78] sm:$0xff]
  %v755 = vld [vmem:[%s738 + $0x80] sm:$0xff]
  %v756 = vld [vmem:[%s738 + $0x88] sm:$0xff]
  %v757 = vld [vmem:[%s738 + $0x90] sm:$0xff]
  %v758 = vld [vmem:[%s738 + $0x98] sm:$0xff]
  %v759 = vld [vmem:[%s738 + $0xa0] sm:$0xff]
  %v760 = vld [vmem:[%s738 + $0xa8] sm:$0xff]
  %v761 = vld [vmem:[%s738 + $0xb0] sm:$0xff]
  %v762 = vld [vmem:[%s738 + $0xb8] sm:$0xff]
  %v763 = vld [vmem:[%s738 + $0xc0] sm:$0xff]
  %v764 = vld [vmem:[%s738 + $0xc8] sm:$0xff]
  %v765 = vld [vmem:[%s738 + $0xd0] sm:$0xff]
  %v766 = vld [vmem:[%s738 + $0xd8] sm:$0xff]
  %v767 = vld [vmem:[%s738 + $0xe0] sm:$0xff]
  %v768 = vld [vmem:[%s738 + $0xe8] sm:$0xff]
  %v769 = vld [vmem:[%s738 + $0xf0] sm:$0xff]
  %v770 = vld [vmem:[%s738 + $0xf8] sm:$0xff]
  %v771 = vld [vmem:[%s738 + $0x100] sm:$0xff]
  %v772 = vld [vmem:[%s738 + $0x108] sm:$0xff]
  %v773 = vld [vmem:[%s738 + $0x110] sm:$0xff]
  %v774 = vld [vmem:[%s738 + $0x118] sm:$0xff]
  %v775 = vld [vmem:[%s738 + $0x120] sm:$0xff]
  %v776 = vld [vmem:[%s738 + $0x128] sm:$0xff]
  %v777 = vld [vmem:[%s738 + $0x130] sm:$0xff]
  %v778 = vld [vmem:[%s738 + $0x138] sm:$0xff]
  %v779 = vld [vmem:[%s738 + $0x140] sm:$0xff]
  %v780 = vld [vmem:[%s738 + $0x148] sm:$0xff]
  %v781 = vld [vmem:[%s738 + $0x150] sm:$0xff]
  %v782 = vld [vmem:[%s738 + $0x158] sm:$0xff]
  %v783 = vld [vmem:[%s738 + $0x160] sm:$0xff]
  %v784 = vld [vmem:[%s738 + $0x168] sm:$0xff]
  %v785 = vld [vmem:[%s738 + $0x170] sm:$0xff]
  %v786 = vld [vmem:[%s738 + $0x178] sm:$0xff]
  %v787 = vld [vmem:[%s738 + $0x180] sm:$0xff]
  %v788 = vld [vmem:[%s2] sm:$0x1]
  %s789 = scalar_lea.vmem %s2, 1
  %v790 = vld [vmem:[%s789] sm:$0x1]
  %s791 = scalar_lea.vmem %s2, 2
  %v792 = vld [vmem:[%s791] sm:$0x1]
  %793 = vset.pattern.permute.xlu0 0
  %794 = vperm.xlu0 %793, %v639
  %v795 = vpop.permute.xlu0 %794
  %796 = vset.pattern.permute.xlu0 0
  %797 = vperm.xlu0 %796, %v640
  %v798 = vpop.permute.xlu0 %797
  %799 = vset.pattern.permute.xlu0 0
  %800 = vperm.xlu0 %799, %v641
  %v801 = vpop.permute.xlu0 %800
  %802 = vset.pattern.permute.xlu0 0
  %803 = vperm.xlu0 %802, %v642
  %v804 = vpop.permute.xlu0 %803
  %805 = vset.pattern.permute.xlu0 0
  %806 = vperm.xlu0 %805, %v643
  %v807 = vpop.permute.xlu0 %806
  %808 = vset.pattern.permute.xlu0 0
  %809 = vperm.xlu0 %808, %v644
  %v810 = vpop.permute.xlu0 %809
  %811 = vset.pattern.permute.xlu0 0
  %812 = vperm.xlu0 %811, %v645
  %v813 = vpop.permute.xlu0 %812
  %814 = vset.pattern.permute.xlu0 0
  %815 = vperm.xlu0 %814, %v646
  %v816 = vpop.permute.xlu0 %815
  %817 = vset.pattern.permute.xlu0 0
  %818 = vperm.xlu0 %817, %v647
  %v819 = vpop.permute.xlu0 %818
  %820 = vset.pattern.permute.xlu0 0
  %821 = vperm.xlu0 %820, %v648
  %v822 = vpop.permute.xlu0 %821
  %823 = vset.pattern.permute.xlu0 0
  %824 = vperm.xlu0 %823, %v649
  %v825 = vpop.permute.xlu0 %824
  %826 = vset.pattern.permute.xlu0 0
  %827 = vperm.xlu0 %826, %v650
  %v828 = vpop.permute.xlu0 %827
  %829 = vset.pattern.permute.xlu0 0
  %830 = vperm.xlu0 %829, %v651
  %v831 = vpop.permute.xlu0 %830
  %832 = vset.pattern.permute.xlu0 0
  %833 = vperm.xlu0 %832, %v652
  %v834 = vpop.permute.xlu0 %833
  %835 = vset.pattern.permute.xlu0 0
  %836 = vperm.xlu0 %835, %v653
  %v837 = vpop.permute.xlu0 %836
  %838 = vset.pattern.permute.xlu0 0
  %839 = vperm.xlu0 %838, %v654
  %v840 = vpop.permute.xlu0 %839
  %841 = vset.pattern.permute.xlu0 0
  %842 = vperm.xlu0 %841, %v655
  %v843 = vpop.permute.xlu0 %842
  %844 = vset.pattern.permute.xlu0 0
  %845 = vperm.xlu0 %844, %v656
  %v846 = vpop.permute.xlu0 %845
  %847 = vset.pattern.permute.xlu0 0
  %848 = vperm.xlu0 %847, %v657
  %v849 = vpop.permute.xlu0 %848
  %850 = vset.pattern.permute.xlu0 0
  %851 = vperm.xlu0 %850, %v658
  %v852 = vpop.permute.xlu0 %851
  %853 = vset.pattern.permute.xlu0 0
  %854 = vperm.xlu0 %853, %v659
  %v855 = vpop.permute.xlu0 %854
  %856 = vset.pattern.permute.xlu0 0
  %857 = vperm.xlu0 %856, %v660
  %v858 = vpop.permute.xlu0 %857
  %859 = vset.pattern.permute.xlu0 0
  %860 = vperm.xlu0 %859, %v661
  %v861 = vpop.permute.xlu0 %860
  %862 = vset.pattern.permute.xlu0 0
  %863 = vperm.xlu0 %862, %v662
  %v864 = vpop.permute.xlu0 %863
  %865 = vset.pattern.permute.xlu0 0
  %866 = vperm.xlu0 %865, %v663
  %v867 = vpop.permute.xlu0 %866
  %868 = vset.pattern.permute.xlu0 0
  %869 = vperm.xlu0 %868, %v664
  %v870 = vpop.permute.xlu0 %869
  %871 = vset.pattern.permute.xlu0 0
  %872 = vperm.xlu0 %871, %v665
  %v873 = vpop.permute.xlu0 %872
  %874 = vset.pattern.permute.xlu0 0
  %875 = vperm.xlu0 %874, %v666
  %v876 = vpop.permute.xlu0 %875
  %877 = vset.pattern.permute.xlu0 0
  %878 = vperm.xlu0 %877, %v667
  %v879 = vpop.permute.xlu0 %878
  %880 = vset.pattern.permute.xlu0 0
  %881 = vperm.xlu0 %880, %v668
  %v882 = vpop.permute.xlu0 %881
  %883 = vset.pattern.permute.xlu0 0
  %884 = vperm.xlu0 %883, %v669
  %v885 = vpop.permute.xlu0 %884
  %886 = vset.pattern.permute.xlu0 0
  %887 = vperm.xlu0 %886, %v670
  %v888 = vpop.permute.xlu0 %887
  %889 = vset.pattern.permute.xlu0 0
  %890 = vperm.xlu0 %889, %v671
  %v891 = vpop.permute.xlu0 %890
  %892 = vset.pattern.permute.xlu0 0
  %893 = vperm.xlu0 %892, %v672
  %v894 = vpop.permute.xlu0 %893
  %895 = vset.pattern.permute.xlu0 0
  %896 = vperm.xlu0 %895, %v673
  %v897 = vpop.permute.xlu0 %896
  %898 = vset.pattern.permute.xlu0 0
  %899 = vperm.xlu0 %898, %v674
  %v900 = vpop.permute.xlu0 %899
  %901 = vset.pattern.permute.xlu0 0
  %902 = vperm.xlu0 %901, %v675
  %v903 = vpop.permute.xlu0 %902
  %904 = vset.pattern.permute.xlu0 0
  %905 = vperm.xlu0 %904, %v676
  %v906 = vpop.permute.xlu0 %905
  %907 = vset.pattern.permute.xlu0 0
  %908 = vperm.xlu0 %907, %v677
  %v909 = vpop.permute.xlu0 %908
  %910 = vset.pattern.permute.xlu0 0
  %911 = vperm.xlu0 %910, %v678
  %v912 = vpop.permute.xlu0 %911
  %913 = vset.pattern.permute.xlu0 0
  %914 = vperm.xlu0 %913, %v679
  %v915 = vpop.permute.xlu0 %914
  %916 = vset.pattern.permute.xlu0 0
  %917 = vperm.xlu0 %916, %v680
  %v918 = vpop.permute.xlu0 %917
  %919 = vset.pattern.permute.xlu0 0
  %920 = vperm.xlu0 %919, %v681
  %v921 = vpop.permute.xlu0 %920
  %922 = vset.pattern.permute.xlu0 0
  %923 = vperm.xlu0 %922, %v682
  %v924 = vpop.permute.xlu0 %923
  %925 = vset.pattern.permute.xlu0 0
  %926 = vperm.xlu0 %925, %v683
  %v927 = vpop.permute.xlu0 %926
  %928 = vset.pattern.permute.xlu0 0
  %929 = vperm.xlu0 %928, %v684
  %v930 = vpop.permute.xlu0 %929
  %931 = vset.pattern.permute.xlu0 0
  %932 = vperm.xlu0 %931, %v685
  %v933 = vpop.permute.xlu0 %932
  %934 = vset.pattern.permute.xlu0 0
  %935 = vperm.xlu0 %934, %v686
  %v936 = vpop.permute.xlu0 %935
  %937 = vset.pattern.permute.xlu0 0
  %938 = vperm.xlu0 %937, %v687
  %v939 = vpop.permute.xlu0 %938
  %v940 = vlaneseq
  %v941 = vshrl.u32 %v940, 7
  %v942 = vsub.s32 0, %v941
  %v943 = vrot.slane %v788, %v942
  %vm944 = vcmp.eq.s32.totalorder %v795, %v943
  %vm945 = vcmp.eq.s32.totalorder %v798, %v943
  %vm946 = vcmp.eq.s32.totalorder %v801, %v943
  %vm947 = vcmp.eq.s32.totalorder %v804, %v943
  %vm948 = vcmp.eq.s32.totalorder %v807, %v943
  %vm949 = vcmp.eq.s32.totalorder %v810, %v943
  %vm950 = vcmp.eq.s32.totalorder %v813, %v943
  %vm951 = vcmp.eq.s32.totalorder %v816, %v943
  %vm952 = vcmp.eq.s32.totalorder %v819, %v943
  %vm953 = vcmp.eq.s32.totalorder %v822, %v943
  %vm954 = vcmp.eq.s32.totalorder %v825, %v943
  %vm955 = vcmp.eq.s32.totalorder %v828, %v943
  %vm956 = vcmp.eq.s32.totalorder %v831, %v943
  %vm957 = vcmp.eq.s32.totalorder %v834, %v943
  %vm958 = vcmp.eq.s32.totalorder %v837, %v943
  %vm959 = vcmp.eq.s32.totalorder %v840, %v943
  %vm960 = vcmp.eq.s32.totalorder %v843, %v943
  %vm961 = vcmp.eq.s32.totalorder %v846, %v943
  %vm962 = vcmp.eq.s32.totalorder %v849, %v943
  %vm963 = vcmp.eq.s32.totalorder %v852, %v943
  %vm964 = vcmp.eq.s32.totalorder %v855, %v943
  %vm965 = vcmp.eq.s32.totalorder %v858, %v943
  %vm966 = vcmp.eq.s32.totalorder %v861, %v943
  %vm967 = vcmp.eq.s32.totalorder %v864, %v943
  %vm968 = vcmp.eq.s32.totalorder %v867, %v943
  %vm969 = vcmp.eq.s32.totalorder %v870, %v943
  %vm970 = vcmp.eq.s32.totalorder %v873, %v943
  %vm971 = vcmp.eq.s32.totalorder %v876, %v943
  %vm972 = vcmp.eq.s32.totalorder %v879, %v943
  %vm973 = vcmp.eq.s32.totalorder %v882, %v943
  %vm974 = vcmp.eq.s32.totalorder %v885, %v943
  %vm975 = vcmp.eq.s32.totalorder %v888, %v943
  %vm976 = vcmp.eq.s32.totalorder %v891, %v943
  %vm977 = vcmp.eq.s32.totalorder %v894, %v943
  %vm978 = vcmp.eq.s32.totalorder %v897, %v943
  %vm979 = vcmp.eq.s32.totalorder %v900, %v943
  %vm980 = vcmp.eq.s32.totalorder %v903, %v943
  %vm981 = vcmp.eq.s32.totalorder %v906, %v943
  %vm982 = vcmp.eq.s32.totalorder %v909, %v943
  %vm983 = vcmp.eq.s32.totalorder %v912, %v943
  %vm984 = vcmp.eq.s32.totalorder %v915, %v943
  %vm985 = vcmp.eq.s32.totalorder %v918, %v943
  %vm986 = vcmp.eq.s32.totalorder %v921, %v943
  %vm987 = vcmp.eq.s32.totalorder %v924, %v943
  %vm988 = vcmp.eq.s32.totalorder %v927, %v943
  %vm989 = vcmp.eq.s32.totalorder %v930, %v943
  %vm990 = vcmp.eq.s32.totalorder %v933, %v943
  %vm991 = vcmp.eq.s32.totalorder %v936, %v943
  %vm992 = vcmp.eq.s32.totalorder %v939, %v943
  %993 = vset.pattern.permute.xlu0 0
  %994 = vperm.xlu0 %993, %v689
  %v995 = vpop.permute.xlu0 %994
  %996 = vset.pattern.permute.xlu0 0
  %997 = vperm.xlu0 %996, %v690
  %v998 = vpop.permute.xlu0 %997
  %999 = vset.pattern.permute.xlu0 0
  %1000 = vperm.xlu0 %999, %v691
  %v1001 = vpop.permute.xlu0 %1000
  %1002 = vset.pattern.permute.xlu0 0
  %1003 = vperm.xlu0 %1002, %v692
  %v1004 = vpop.permute.xlu0 %1003
  %1005 = vset.pattern.permute.xlu0 0
  %1006 = vperm.xlu0 %1005, %v693
  %v1007 = vpop.permute.xlu0 %1006
  %1008 = vset.pattern.permute.xlu0 0
  %1009 = vperm.xlu0 %1008, %v694
  %v1010 = vpop.permute.xlu0 %1009
  %1011 = vset.pattern.permute.xlu0 0
  %1012 = vperm.xlu0 %1011, %v695
  %v1013 = vpop.permute.xlu0 %1012
  %1014 = vset.pattern.permute.xlu0 0
  %1015 = vperm.xlu0 %1014, %v696
  %v1016 = vpop.permute.xlu0 %1015
  %1017 = vset.pattern.permute.xlu0 0
  %1018 = vperm.xlu0 %1017, %v697
  %v1019 = vpop.permute.xlu0 %1018
  %1020 = vset.pattern.permute.xlu0 0
  %1021 = vperm.xlu0 %1020, %v698
  %v1022 = vpop.permute.xlu0 %1021
  %1023 = vset.pattern.permute.xlu0 0
  %1024 = vperm.xlu0 %1023, %v699
  %v1025 = vpop.permute.xlu0 %1024
  %1026 = vset.pattern.permute.xlu0 0
  %1027 = vperm.xlu0 %1026, %v700
  %v1028 = vpop.permute.xlu0 %1027
  %1029 = vset.pattern.permute.xlu0 0
  %1030 = vperm.xlu0 %1029, %v701
  %v1031 = vpop.permute.xlu0 %1030
  %1032 = vset.pattern.permute.xlu0 0
  %1033 = vperm.xlu0 %1032, %v702
  %v1034 = vpop.permute.xlu0 %1033
  %1035 = vset.pattern.permute.xlu0 0
  %1036 = vperm.xlu0 %1035, %v703
  %v1037 = vpop.permute.xlu0 %1036
  %1038 = vset.pattern.permute.xlu0 0
  %1039 = vperm.xlu0 %1038, %v704
  %v1040 = vpop.permute.xlu0 %1039
  %1041 = vset.pattern.permute.xlu0 0
  %1042 = vperm.xlu0 %1041, %v705
  %v1043 = vpop.permute.xlu0 %1042
  %1044 = vset.pattern.permute.xlu0 0
  %1045 = vperm.xlu0 %1044, %v706
  %v1046 = vpop.permute.xlu0 %1045
  %1047 = vset.pattern.permute.xlu0 0
  %1048 = vperm.xlu0 %1047, %v707
  %v1049 = vpop.permute.xlu0 %1048
  %1050 = vset.pattern.permute.xlu0 0
  %1051 = vperm.xlu0 %1050, %v708
  %v1052 = vpop.permute.xlu0 %1051
  %1053 = vset.pattern.permute.xlu0 0
  %1054 = vperm.xlu0 %1053, %v709
  %v1055 = vpop.permute.xlu0 %1054
  %1056 = vset.pattern.permute.xlu0 0
  %1057 = vperm.xlu0 %1056, %v710
  %v1058 = vpop.permute.xlu0 %1057
  %1059 = vset.pattern.permute.xlu0 0
  %1060 = vperm.xlu0 %1059, %v711
  %v1061 = vpop.permute.xlu0 %1060
  %1062 = vset.pattern.permute.xlu0 0
  %1063 = vperm.xlu0 %1062, %v712
  %v1064 = vpop.permute.xlu0 %1063
  %1065 = vset.pattern.permute.xlu0 0
  %1066 = vperm.xlu0 %1065, %v713
  %v1067 = vpop.permute.xlu0 %1066
  %1068 = vset.pattern.permute.xlu0 0
  %1069 = vperm.xlu0 %1068, %v714
  %v1070 = vpop.permute.xlu0 %1069
  %1071 = vset.pattern.permute.xlu0 0
  %1072 = vperm.xlu0 %1071, %v715
  %v1073 = vpop.permute.xlu0 %1072
  %1074 = vset.pattern.permute.xlu0 0
  %1075 = vperm.xlu0 %1074, %v716
  %v1076 = vpop.permute.xlu0 %1075
  %1077 = vset.pattern.permute.xlu0 0
  %1078 = vperm.xlu0 %1077, %v717
  %v1079 = vpop.permute.xlu0 %1078
  %1080 = vset.pattern.permute.xlu0 0
  %1081 = vperm.xlu0 %1080, %v718
  %v1082 = vpop.permute.xlu0 %1081
  %1083 = vset.pattern.permute.xlu0 0
  %1084 = vperm.xlu0 %1083, %v719
  %v1085 = vpop.permute.xlu0 %1084
  %1086 = vset.pattern.permute.xlu0 0
  %1087 = vperm.xlu0 %1086, %v720
  %v1088 = vpop.permute.xlu0 %1087
  %1089 = vset.pattern.permute.xlu0 0
  %1090 = vperm.xlu0 %1089, %v721
  %v1091 = vpop.permute.xlu0 %1090
  %1092 = vset.pattern.permute.xlu0 0
  %1093 = vperm.xlu0 %1092, %v722
  %v1094 = vpop.permute.xlu0 %1093
  %1095 = vset.pattern.permute.xlu0 0
  %1096 = vperm.xlu0 %1095, %v723
  %v1097 = vpop.permute.xlu0 %1096
  %1098 = vset.pattern.permute.xlu0 0
  %1099 = vperm.xlu0 %1098, %v724
  %v1100 = vpop.permute.xlu0 %1099
  %1101 = vset.pattern.permute.xlu0 0
  %1102 = vperm.xlu0 %1101, %v725
  %v1103 = vpop.permute.xlu0 %1102
  %1104 = vset.pattern.permute.xlu0 0
  %1105 = vperm.xlu0 %1104, %v726
  %v1106 = vpop.permute.xlu0 %1105
  %1107 = vset.pattern.permute.xlu0 0
  %1108 = vperm.xlu0 %1107, %v727
  %v1109 = vpop.permute.xlu0 %1108
  %1110 = vset.pattern.permute.xlu0 0
  %1111 = vperm.xlu0 %1110, %v728
  %v1112 = vpop.permute.xlu0 %1111
  %1113 = vset.pattern.permute.xlu0 0
  %1114 = vperm.xlu0 %1113, %v729
  %v1115 = vpop.permute.xlu0 %1114
  %1116 = vset.pattern.permute.xlu0 0
  %1117 = vperm.xlu0 %1116, %v730
  %v1118 = vpop.permute.xlu0 %1117
  %1119 = vset.pattern.permute.xlu0 0
  %1120 = vperm.xlu0 %1119, %v731
  %v1121 = vpop.permute.xlu0 %1120
  %1122 = vset.pattern.permute.xlu0 0
  %1123 = vperm.xlu0 %1122, %v732
  %v1124 = vpop.permute.xlu0 %1123
  %1125 = vset.pattern.permute.xlu0 0
  %1126 = vperm.xlu0 %1125, %v733
  %v1127 = vpop.permute.xlu0 %1126
  %1128 = vset.pattern.permute.xlu0 0
  %1129 = vperm.xlu0 %1128, %v734
  %v1130 = vpop.permute.xlu0 %1129
  %1131 = vset.pattern.permute.xlu0 0
  %1132 = vperm.xlu0 %1131, %v735
  %v1133 = vpop.permute.xlu0 %1132
  %1134 = vset.pattern.permute.xlu0 0
  %1135 = vperm.xlu0 %1134, %v736
  %v1136 = vpop.permute.xlu0 %1135
  %1137 = vset.pattern.permute.xlu0 0
  %1138 = vperm.xlu0 %1137, %v737
  %v1139 = vpop.permute.xlu0 %1138
  %v1140 = vlaneseq
  %v1141 = vshrl.u32 %v1140, 7
  %v1142 = vsub.s32 0, %v1141
  %v1143 = vrot.slane %v790, %v1142
  %vm1144 = vcmp.eq.s32.totalorder %v995, %v1143
  %vm1145 = vcmp.eq.s32.totalorder %v998, %v1143
  %vm1146 = vcmp.eq.s32.totalorder %v1001, %v1143
  %vm1147 = vcmp.eq.s32.totalorder %v1004, %v1143
  %vm1148 = vcmp.eq.s32.totalorder %v1007, %v1143
  %vm1149 = vcmp.eq.s32.totalorder %v1010, %v1143
  %vm1150 = vcmp.eq.s32.totalorder %v1013, %v1143
  %vm1151 = vcmp.eq.s32.totalorder %v1016, %v1143
  %vm1152 = vcmp.eq.s32.totalorder %v1019, %v1143
  %vm1153 = vcmp.eq.s32.totalorder %v1022, %v1143
  %vm1154 = vcmp.eq.s32.totalorder %v1025, %v1143
  %vm1155 = vcmp.eq.s32.totalorder %v1028, %v1143
  %vm1156 = vcmp.eq.s32.totalorder %v1031, %v1143
  %vm1157 = vcmp.eq.s32.totalorder %v1034, %v1143
  %vm1158 = vcmp.eq.s32.totalorder %v1037, %v1143
  %vm1159 = vcmp.eq.s32.totalorder %v1040, %v1143
  %vm1160 = vcmp.eq.s32.totalorder %v1043, %v1143
  %vm1161 = vcmp.eq.s32.totalorder %v1046, %v1143
  %vm1162 = vcmp.eq.s32.totalorder %v1049, %v1143
  %vm1163 = vcmp.eq.s32.totalorder %v1052, %v1143
  %vm1164 = vcmp.eq.s32.totalorder %v1055, %v1143
  %vm1165 = vcmp.eq.s32.totalorder %v1058, %v1143
  %vm1166 = vcmp.eq.s32.totalorder %v1061, %v1143
  %vm1167 = vcmp.eq.s32.totalorder %v1064, %v1143
  %vm1168 = vcmp.eq.s32.totalorder %v1067, %v1143
  %vm1169 = vcmp.eq.s32.totalorder %v1070, %v1143
  %vm1170 = vcmp.eq.s32.totalorder %v1073, %v1143
  %vm1171 = vcmp.eq.s32.totalorder %v1076, %v1143
  %vm1172 = vcmp.eq.s32.totalorder %v1079, %v1143
  %vm1173 = vcmp.eq.s32.totalorder %v1082, %v1143
  %vm1174 = vcmp.eq.s32.totalorder %v1085, %v1143
  %vm1175 = vcmp.eq.s32.totalorder %v1088, %v1143
  %vm1176 = vcmp.eq.s32.totalorder %v1091, %v1143
  %vm1177 = vcmp.eq.s32.totalorder %v1094, %v1143
  %vm1178 = vcmp.eq.s32.totalorder %v1097, %v1143
  %vm1179 = vcmp.eq.s32.totalorder %v1100, %v1143
  %vm1180 = vcmp.eq.s32.totalorder %v1103, %v1143
  %vm1181 = vcmp.eq.s32.totalorder %v1106, %v1143
  %vm1182 = vcmp.eq.s32.totalorder %v1109, %v1143
  %vm1183 = vcmp.eq.s32.totalorder %v1112, %v1143
  %vm1184 = vcmp.eq.s32.totalorder %v1115, %v1143
  %vm1185 = vcmp.eq.s32.totalorder %v1118, %v1143
  %vm1186 = vcmp.eq.s32.totalorder %v1121, %v1143
  %vm1187 = vcmp.eq.s32.totalorder %v1124, %v1143
  %vm1188 = vcmp.eq.s32.totalorder %v1127, %v1143
  %vm1189 = vcmp.eq.s32.totalorder %v1130, %v1143
  %vm1190 = vcmp.eq.s32.totalorder %v1133, %v1143
  %vm1191 = vcmp.eq.s32.totalorder %v1136, %v1143
  %vm1192 = vcmp.eq.s32.totalorder %v1139, %v1143
  %vm1193 = vmand %vm944, %vm1144
  %vm1194 = vmand %vm945, %vm1145
  %vm1195 = vmand %vm946, %vm1146
  %vm1196 = vmand %vm947, %vm1147
  %vm1197 = vmand %vm948, %vm1148
  %vm1198 = vmand %vm949, %vm1149
  %vm1199 = vmand %vm950, %vm1150
  %vm1200 = vmand %vm951, %vm1151
  %vm1201 = vmand %vm952, %vm1152
  %vm1202 = vmand %vm953, %vm1153
  %vm1203 = vmand %vm954, %vm1154
  %vm1204 = vmand %vm955, %vm1155
  %vm1205 = vmand %vm956, %vm1156
  %vm1206 = vmand %vm957, %vm1157
  %vm1207 = vmand %vm958, %vm1158
  %vm1208 = vmand %vm959, %vm1159
  %vm1209 = vmand %vm960, %vm1160
  %vm1210 = vmand %vm961, %vm1161
  %vm1211 = vmand %vm962, %vm1162
  %vm1212 = vmand %vm963, %vm1163
  %vm1213 = vmand %vm964, %vm1164
  %vm1214 = vmand %vm965, %vm1165
  %vm1215 = vmand %vm966, %vm1166
  %vm1216 = vmand %vm967, %vm1167
  %vm1217 = vmand %vm968, %vm1168
  %vm1218 = vmand %vm969, %vm1169
  %vm1219 = vmand %vm970, %vm1170
  %vm1220 = vmand %vm971, %vm1171
  %vm1221 = vmand %vm972, %vm1172
  %vm1222 = vmand %vm973, %vm1173
  %vm1223 = vmand %vm974, %vm1174
  %vm1224 = vmand %vm975, %vm1175
  %vm1225 = vmand %vm976, %vm1176
  %vm1226 = vmand %vm977, %vm1177
  %vm1227 = vmand %vm978, %vm1178
  %vm1228 = vmand %vm979, %vm1179
  %vm1229 = vmand %vm980, %vm1180
  %vm1230 = vmand %vm981, %vm1181
  %vm1231 = vmand %vm982, %vm1182
  %vm1232 = vmand %vm983, %vm1183
  %vm1233 = vmand %vm984, %vm1184
  %vm1234 = vmand %vm985, %vm1185
  %vm1235 = vmand %vm986, %vm1186
  %vm1236 = vmand %vm987, %vm1187
  %vm1237 = vmand %vm988, %vm1188
  %vm1238 = vmand %vm989, %vm1189
  %vm1239 = vmand %vm990, %vm1190
  %vm1240 = vmand %vm991, %vm1191
  %vm1241 = vmand %vm992, %vm1192
  %1242 = vset.pattern.permute.xlu0 0
  %1243 = vperm.xlu0 %1242, %v739
  %v1244 = vpop.permute.xlu0 %1243
  %1245 = vset.pattern.permute.xlu0 0
  %1246 = vperm.xlu0 %1245, %v740
  %v1247 = vpop.permute.xlu0 %1246
  %1248 = vset.pattern.permute.xlu0 0
  %1249 = vperm.xlu0 %1248, %v741
  %v1250 = vpop.permute.xlu0 %1249
  %1251 = vset.pattern.permute.xlu0 0
  %1252 = vperm.xlu0 %1251, %v742
  %v1253 = vpop.permute.xlu0 %1252
  %1254 = vset.pattern.permute.xlu0 0
  %1255 = vperm.xlu0 %1254, %v743
  %v1256 = vpop.permute.xlu0 %1255
  %1257 = vset.pattern.permute.xlu0 0
  %1258 = vperm.xlu0 %1257, %v744
  %v1259 = vpop.permute.xlu0 %1258
  %1260 = vset.pattern.permute.xlu0 0
  %1261 = vperm.xlu0 %1260, %v745
  %v1262 = vpop.permute.xlu0 %1261
  %1263 = vset.pattern.permute.xlu0 0
  %1264 = vperm.xlu0 %1263, %v746
  %v1265 = vpop.permute.xlu0 %1264
  %1266 = vset.pattern.permute.xlu0 0
  %1267 = vperm.xlu0 %1266, %v747
  %v1268 = vpop.permute.xlu0 %1267
  %1269 = vset.pattern.permute.xlu0 0
  %1270 = vperm.xlu0 %1269, %v748
  %v1271 = vpop.permute.xlu0 %1270
  %1272 = vset.pattern.permute.xlu0 0
  %1273 = vperm.xlu0 %1272, %v749
  %v1274 = vpop.permute.xlu0 %1273
  %1275 = vset.pattern.permute.xlu0 0
  %1276 = vperm.xlu0 %1275, %v750
  %v1277 = vpop.permute.xlu0 %1276
  %1278 = vset.pattern.permute.xlu0 0
  %1279 = vperm.xlu0 %1278, %v751
  %v1280 = vpop.permute.xlu0 %1279
  %1281 = vset.pattern.permute.xlu0 0
  %1282 = vperm.xlu0 %1281, %v752
  %v1283 = vpop.permute.xlu0 %1282
  %1284 = vset.pattern.permute.xlu0 0
  %1285 = vperm.xlu0 %1284, %v753
  %v1286 = vpop.permute.xlu0 %1285
  %1287 = vset.pattern.permute.xlu0 0
  %1288 = vperm.xlu0 %1287, %v754
  %v1289 = vpop.permute.xlu0 %1288
  %1290 = vset.pattern.permute.xlu0 0
  %1291 = vperm.xlu0 %1290, %v755
  %v1292 = vpop.permute.xlu0 %1291
  %1293 = vset.pattern.permute.xlu0 0
  %1294 = vperm.xlu0 %1293, %v756
  %v1295 = vpop.permute.xlu0 %1294
  %1296 = vset.pattern.permute.xlu0 0
  %1297 = vperm.xlu0 %1296, %v757
  %v1298 = vpop.permute.xlu0 %1297
  %1299 = vset.pattern.permute.xlu0 0
  %1300 = vperm.xlu0 %1299, %v758
  %v1301 = vpop.permute.xlu0 %1300
  %1302 = vset.pattern.permute.xlu0 0
  %1303 = vperm.xlu0 %1302, %v759
  %v1304 = vpop.permute.xlu0 %1303
  %1305 = vset.pattern.permute.xlu0 0
  %1306 = vperm.xlu0 %1305, %v760
  %v1307 = vpop.permute.xlu0 %1306
  %1308 = vset.pattern.permute.xlu0 0
  %1309 = vperm.xlu0 %1308, %v761
  %v1310 = vpop.permute.xlu0 %1309
  %1311 = vset.pattern.permute.xlu0 0
  %1312 = vperm.xlu0 %1311, %v762
  %v1313 = vpop.permute.xlu0 %1312
  %1314 = vset.pattern.permute.xlu0 0
  %1315 = vperm.xlu0 %1314, %v763
  %v1316 = vpop.permute.xlu0 %1315
  %1317 = vset.pattern.permute.xlu0 0
  %1318 = vperm.xlu0 %1317, %v764
  %v1319 = vpop.permute.xlu0 %1318
  %1320 = vset.pattern.permute.xlu0 0
  %1321 = vperm.xlu0 %1320, %v765
  %v1322 = vpop.permute.xlu0 %1321
  %1323 = vset.pattern.permute.xlu0 0
  %1324 = vperm.xlu0 %1323, %v766
  %v1325 = vpop.permute.xlu0 %1324
  %1326 = vset.pattern.permute.xlu0 0
  %1327 = vperm.xlu0 %1326, %v767
  %v1328 = vpop.permute.xlu0 %1327
  %1329 = vset.pattern.permute.xlu0 0
  %1330 = vperm.xlu0 %1329, %v768
  %v1331 = vpop.permute.xlu0 %1330
  %1332 = vset.pattern.permute.xlu0 0
  %1333 = vperm.xlu0 %1332, %v769
  %v1334 = vpop.permute.xlu0 %1333
  %1335 = vset.pattern.permute.xlu0 0
  %1336 = vperm.xlu0 %1335, %v770
  %v1337 = vpop.permute.xlu0 %1336
  %1338 = vset.pattern.permute.xlu0 0
  %1339 = vperm.xlu0 %1338, %v771
  %v1340 = vpop.permute.xlu0 %1339
  %1341 = vset.pattern.permute.xlu0 0
  %1342 = vperm.xlu0 %1341, %v772
  %v1343 = vpop.permute.xlu0 %1342
  %1344 = vset.pattern.permute.xlu0 0
  %1345 = vperm.xlu0 %1344, %v773
  %v1346 = vpop.permute.xlu0 %1345
  %1347 = vset.pattern.permute.xlu0 0
  %1348 = vperm.xlu0 %1347, %v774
  %v1349 = vpop.permute.xlu0 %1348
  %1350 = vset.pattern.permute.xlu0 0
  %1351 = vperm.xlu0 %1350, %v775
  %v1352 = vpop.permute.xlu0 %1351
  %1353 = vset.pattern.permute.xlu0 0
  %1354 = vperm.xlu0 %1353, %v776
  %v1355 = vpop.permute.xlu0 %1354
  %1356 = vset.pattern.permute.xlu0 0
  %1357 = vperm.xlu0 %1356, %v777
  %v1358 = vpop.permute.xlu0 %1357
  %1359 = vset.pattern.permute.xlu0 0
  %1360 = vperm.xlu0 %1359, %v778
  %v1361 = vpop.permute.xlu0 %1360
  %1362 = vset.pattern.permute.xlu0 0
  %1363 = vperm.xlu0 %1362, %v779
  %v1364 = vpop.permute.xlu0 %1363
  %1365 = vset.pattern.permute.xlu0 0
  %1366 = vperm.xlu0 %1365, %v780
  %v1367 = vpop.permute.xlu0 %1366
  %1368 = vset.pattern.permute.xlu0 0
  %1369 = vperm.xlu0 %1368, %v781
  %v1370 = vpop.permute.xlu0 %1369
  %1371 = vset.pattern.permute.xlu0 0
  %1372 = vperm.xlu0 %1371, %v782
  %v1373 = vpop.permute.xlu0 %1372
  %1374 = vset.pattern.permute.xlu0 0
  %1375 = vperm.xlu0 %1374, %v783
  %v1376 = vpop.permute.xlu0 %1375
  %1377 = vset.pattern.permute.xlu0 0
  %1378 = vperm.xlu0 %1377, %v784
  %v1379 = vpop.permute.xlu0 %1378
  %1380 = vset.pattern.permute.xlu0 0
  %1381 = vperm.xlu0 %1380, %v785
  %v1382 = vpop.permute.xlu0 %1381
  %1383 = vset.pattern.permute.xlu0 0
  %1384 = vperm.xlu0 %1383, %v786
  %v1385 = vpop.permute.xlu0 %1384
  %1386 = vset.pattern.permute.xlu0 0
  %1387 = vperm.xlu0 %1386, %v787
  %v1388 = vpop.permute.xlu0 %1387
  %v1389 = vlaneseq
  %v1390 = vshrl.u32 %v1389, 7
  %v1391 = vsub.s32 0, %v1390
  %v1392 = vrot.slane %v792, %v1391
  %vm1393 = vcmp.eq.s32.totalorder %v1244, %v1392
  %vm1394 = vcmp.eq.s32.totalorder %v1247, %v1392
  %vm1395 = vcmp.eq.s32.totalorder %v1250, %v1392
  %vm1396 = vcmp.eq.s32.totalorder %v1253, %v1392
  %vm1397 = vcmp.eq.s32.totalorder %v1256, %v1392
  %vm1398 = vcmp.eq.s32.totalorder %v1259, %v1392
  %vm1399 = vcmp.eq.s32.totalorder %v1262, %v1392
  %vm1400 = vcmp.eq.s32.totalorder %v1265, %v1392
  %vm1401 = vcmp.eq.s32.totalorder %v1268, %v1392
  %vm1402 = vcmp.eq.s32.totalorder %v1271, %v1392
  %vm1403 = vcmp.eq.s32.totalorder %v1274, %v1392
  %vm1404 = vcmp.eq.s32.totalorder %v1277, %v1392
  %vm1405 = vcmp.eq.s32.totalorder %v1280, %v1392
  %vm1406 = vcmp.eq.s32.totalorder %v1283, %v1392
  %vm1407 = vcmp.eq.s32.totalorder %v1286, %v1392
  %vm1408 = vcmp.eq.s32.totalorder %v1289, %v1392
  %vm1409 = vcmp.eq.s32.totalorder %v1292, %v1392
  %vm1410 = vcmp.eq.s32.totalorder %v1295, %v1392
  %vm1411 = vcmp.eq.s32.totalorder %v1298, %v1392
  %vm1412 = vcmp.eq.s32.totalorder %v1301, %v1392
  %vm1413 = vcmp.eq.s32.totalorder %v1304, %v1392
  %vm1414 = vcmp.eq.s32.totalorder %v1307, %v1392
  %vm1415 = vcmp.eq.s32.totalorder %v1310, %v1392
  %vm1416 = vcmp.eq.s32.totalorder %v1313, %v1392
  %vm1417 = vcmp.eq.s32.totalorder %v1316, %v1392
  %vm1418 = vcmp.eq.s32.totalorder %v1319, %v1392
  %vm1419 = vcmp.eq.s32.totalorder %v1322, %v1392
  %vm1420 = vcmp.eq.s32.totalorder %v1325, %v1392
  %vm1421 = vcmp.eq.s32.totalorder %v1328, %v1392
  %vm1422 = vcmp.eq.s32.totalorder %v1331, %v1392
  %vm1423 = vcmp.eq.s32.totalorder %v1334, %v1392
  %vm1424 = vcmp.eq.s32.totalorder %v1337, %v1392
  %vm1425 = vcmp.eq.s32.totalorder %v1340, %v1392
  %vm1426 = vcmp.eq.s32.totalorder %v1343, %v1392
  %vm1427 = vcmp.eq.s32.totalorder %v1346, %v1392
  %vm1428 = vcmp.eq.s32.totalorder %v1349, %v1392
  %vm1429 = vcmp.eq.s32.totalorder %v1352, %v1392
  %vm1430 = vcmp.eq.s32.totalorder %v1355, %v1392
  %vm1431 = vcmp.eq.s32.totalorder %v1358, %v1392
  %vm1432 = vcmp.eq.s32.totalorder %v1361, %v1392
  %vm1433 = vcmp.eq.s32.totalorder %v1364, %v1392
  %vm1434 = vcmp.eq.s32.totalorder %v1367, %v1392
  %vm1435 = vcmp.eq.s32.totalorder %v1370, %v1392
  %vm1436 = vcmp.eq.s32.totalorder %v1373, %v1392
  %vm1437 = vcmp.eq.s32.totalorder %v1376, %v1392
  %vm1438 = vcmp.eq.s32.totalorder %v1379, %v1392
  %vm1439 = vcmp.eq.s32.totalorder %v1382, %v1392
  %vm1440 = vcmp.eq.s32.totalorder %v1385, %v1392
  %vm1441 = vcmp.eq.s32.totalorder %v1388, %v1392
  %vm1442 = vmand %vm1193, %vm1393
  %vm1443 = vmand %vm1194, %vm1394
  %vm1444 = vmand %vm1195, %vm1395
  %vm1445 = vmand %vm1196, %vm1396
  %vm1446 = vmand %vm1197, %vm1397
  %vm1447 = vmand %vm1198, %vm1398
  %vm1448 = vmand %vm1199, %vm1399
  %vm1449 = vmand %vm1200, %vm1400
  %vm1450 = vmand %vm1201, %vm1401
  %vm1451 = vmand %vm1202, %vm1402
  %vm1452 = vmand %vm1203, %vm1403
  %vm1453 = vmand %vm1204, %vm1404
  %vm1454 = vmand %vm1205, %vm1405
  %vm1455 = vmand %vm1206, %vm1406
  %vm1456 = vmand %vm1207, %vm1407
  %vm1457 = vmand %vm1208, %vm1408
  %vm1458 = vmand %vm1209, %vm1409
  %vm1459 = vmand %vm1210, %vm1410
  %vm1460 = vmand %vm1211, %vm1411
  %vm1461 = vmand %vm1212, %vm1412
  %vm1462 = vmand %vm1213, %vm1413
  %vm1463 = vmand %vm1214, %vm1414
  %vm1464 = vmand %vm1215, %vm1415
  %vm1465 = vmand %vm1216, %vm1416
  %vm1466 = vmand %vm1217, %vm1417
  %vm1467 = vmand %vm1218, %vm1418
  %vm1468 = vmand %vm1219, %vm1419
  %vm1469 = vmand %vm1220, %vm1420
  %vm1470 = vmand %vm1221, %vm1421
  %vm1471 = vmand %vm1222, %vm1422
  %vm1472 = vmand %vm1223, %vm1423
  %vm1473 = vmand %vm1224, %vm1424
  %vm1474 = vmand %vm1225, %vm1425
  %vm1475 = vmand %vm1226, %vm1426
  %vm1476 = vmand %vm1227, %vm1427
  %vm1477 = vmand %vm1228, %vm1428
  %vm1478 = vmand %vm1229, %vm1429
  %vm1479 = vmand %vm1230, %vm1430
  %vm1480 = vmand %vm1231, %vm1431
  %vm1481 = vmand %vm1232, %vm1432
  %vm1482 = vmand %vm1233, %vm1433
  %vm1483 = vmand %vm1234, %vm1434
  %vm1484 = vmand %vm1235, %vm1435
  %vm1485 = vmand %vm1236, %vm1436
  %vm1486 = vmand %vm1237, %vm1437
  %vm1487 = vmand %vm1238, %vm1438
  %vm1488 = vmand %vm1239, %vm1439
  %vm1489 = vmand %vm1240, %vm1440
  %vm1490 = vmand %vm1241, %vm1441
  %v1491 = vsel %vm1442, 1.0, 0.0
  %v1492 = vsel %vm1443, 1.0, 0.0
  %v1493 = vsel %vm1444, 1.0, 0.0
  %v1494 = vsel %vm1445, 1.0, 0.0
  %v1495 = vsel %vm1446, 1.0, 0.0
  %v1496 = vsel %vm1447, 1.0, 0.0
  %v1497 = vsel %vm1448, 1.0, 0.0
  %v1498 = vsel %vm1449, 1.0, 0.0
  %v1499 = vsel %vm1450, 1.0, 0.0
  %v1500 = vsel %vm1451, 1.0, 0.0
  %v1501 = vsel %vm1452, 1.0, 0.0
  %v1502 = vsel %vm1453, 1.0, 0.0
  %v1503 = vsel %vm1454, 1.0, 0.0
  %v1504 = vsel %vm1455, 1.0, 0.0
  %v1505 = vsel %vm1456, 1.0, 0.0
  %v1506 = vsel %vm1457, 1.0, 0.0
  %v1507 = vsel %vm1458, 1.0, 0.0
  %v1508 = vsel %vm1459, 1.0, 0.0
  %v1509 = vsel %vm1460, 1.0, 0.0
  %v1510 = vsel %vm1461, 1.0, 0.0
  %v1511 = vsel %vm1462, 1.0, 0.0
  %v1512 = vsel %vm1463, 1.0, 0.0
  %v1513 = vsel %vm1464, 1.0, 0.0
  %v1514 = vsel %vm1465, 1.0, 0.0
  %v1515 = vsel %vm1466, 1.0, 0.0
  %v1516 = vsel %vm1467, 1.0, 0.0
  %v1517 = vsel %vm1468, 1.0, 0.0
  %v1518 = vsel %vm1469, 1.0, 0.0
  %v1519 = vsel %vm1470, 1.0, 0.0
  %v1520 = vsel %vm1471, 1.0, 0.0
  %v1521 = vsel %vm1472, 1.0, 0.0
  %v1522 = vsel %vm1473, 1.0, 0.0
  %v1523 = vsel %vm1474, 1.0, 0.0
  %v1524 = vsel %vm1475, 1.0, 0.0
  %v1525 = vsel %vm1476, 1.0, 0.0
  %v1526 = vsel %vm1477, 1.0, 0.0
  %v1527 = vsel %vm1478, 1.0, 0.0
  %v1528 = vsel %vm1479, 1.0, 0.0
  %v1529 = vsel %vm1480, 1.0, 0.0
  %v1530 = vsel %vm1481, 1.0, 0.0
  %v1531 = vsel %vm1482, 1.0, 0.0
  %v1532 = vsel %vm1483, 1.0, 0.0
  %v1533 = vsel %vm1484, 1.0, 0.0
  %v1534 = vsel %vm1485, 1.0, 0.0
  %v1535 = vsel %vm1486, 1.0, 0.0
  %v1536 = vsel %vm1487, 1.0, 0.0
  %v1537 = vsel %vm1488, 1.0, 0.0
  %v1538 = vsel %vm1489, 1.0, 0.0
  %v1539 = vsel %vm1490, 1.0, 0.0
  %v1541 = vsel %vm545, %v634, 0
  %v1544 = vsel %vm545, %v638, 0
  %1546 = vmatprep.subr.mxu0 0.0
  %1547 = vmatpush1.msra.mxu0 %v1506
  %1548 = vmatprep.subr.mxu0 0.0
  %1549 = vmatpush1.msra.mxu0 %v1505
  %1550 = vmatprep.subr.mxu0 0.0
  %1551 = vmatpush1.msra.mxu0 %v1504
  %1552 = vmatprep.subr.mxu0 0.0
  %1553 = vmatpush1.msra.mxu0 %v1503
  %1554 = vmatprep.subr.mxu0 0.0
  %1555 = vmatpush1.msra.mxu0 %v1502
  %1556 = vmatprep.subr.mxu0 0.0
  %1557 = vmatpush1.msra.mxu0 %v1501
  %1558 = vmatprep.subr.mxu0 0.0
  %1559 = vmatpush1.msra.mxu0 %v1500
  %1560 = vmatprep.subr.mxu0 0.0
  %1561 = vmatpush1.msra.mxu0 %v1499
  %1562 = vmatprep.subr.mxu0 0.0
  %1563 = vmatpush1.msra.mxu0 %v1498
  %1564 = vmatprep.subr.mxu0 0.0
  %1565 = vmatpush1.msra.mxu0 %v1497
  %1566 = vmatprep.subr.mxu0 0.0
  %1567 = vmatpush1.msra.mxu0 %v1496
  %1568 = vmatprep.subr.mxu0 0.0
  %1569 = vmatpush1.msra.mxu0 %v1495
  %1570 = vmatprep.subr.mxu0 0.0
  %1571 = vmatpush1.msra.mxu0 %v1494
  %1572 = vmatprep.subr.mxu0 0.0
  %1573 = vmatpush1.msra.mxu0 %v1493
  %1574 = vmatprep.subr.mxu0 0.0
  %1575 = vmatpush1.msra.mxu0 %v1492
  %1576 = vmatprep.subr.mxu0 0.0
  %1577 = vmatpush1.msra.mxu0 %v1491
  %1578 = vmatprep.subr.mxu0 0.0
  %1579 = vmatpush2.msra.mxu0 %v1522
  %1580 = vmatprep.subr.mxu0 0.0
  %1581 = vmatpush2.msra.mxu0 %v1521
  %1582 = vmatprep.subr.mxu0 0.0
  %1583 = vmatpush2.msra.mxu0 %v1520
  %1584 = vmatprep.subr.mxu0 0.0
  %1585 = vmatpush2.msra.mxu0 %v1519
  %1586 = vmatprep.subr.mxu0 0.0
  %1587 = vmatpush2.msra.mxu0 %v1518
  %1588 = vmatprep.subr.mxu0 0.0
  %1589 = vmatpush2.msra.mxu0 %v1517
  %1590 = vmatprep.subr.mxu0 0.0
  %1591 = vmatpush2.msra.mxu0 %v1516
  %1592 = vmatprep.subr.mxu0 0.0
  %1593 = vmatpush2.msra.mxu0 %v1515
  %1594 = vmatprep.subr.mxu0 0.0
  %1595 = vmatpush2.msra.mxu0 %v1514
  %1596 = vmatprep.subr.mxu0 0.0
  %1597 = vmatpush2.msra.mxu0 %v1513
  %1598 = vmatprep.subr.mxu0 0.0
  %1599 = vmatpush2.msra.mxu0 %v1512
  %1600 = vmatprep.subr.mxu0 0.0
  %1601 = vmatpush2.msra.mxu0 %v1511
  %1602 = vmatprep.subr.mxu0 0.0
  %1603 = vmatpush2.msra.mxu0 %v1510
  %1604 = vmatprep.subr.mxu0 0.0
  %1605 = vmatpush2.msra.mxu0 %v1509
  %1606 = vmatprep.subr.mxu0 0.0
  %1607 = vmatpush2.msra.mxu0 %v1508
  %1608 = vmatprep.subr.mxu0 0.0
  %1609 = vmatpush2.msra.mxu0 %v1507
  %1610 = vmatprep.mubr.f32.mxu0 %v632
  %1611 = vmatmul.mubr.f32.gmra.mxu0 %v631
  %v1612 = vpop.f32.mrf.mxu0
  %v1613 = vadd.f32 0.0, %v1612
  %v1614 = vpop.f32.mrf.mxu0
  %1615 = vmatprep.mubr.f32.mxu0 %v636
  %1616 = vmatmul.mubr.f32.gmra.mxu0 %v635
  %v1617 = vpop.f32.mrf.mxu0
  %v1618 = vadd.f32 0.0, %v1617
  %v1619 = vpop.f32.mrf.mxu0
  %1620 = vdwg.mxu0
  %1621 = vmatprep.subr.mxu0 0.0
  %1622 = vmatpush1.msra.mxu0 %v1538
  %1623 = vmatprep.subr.mxu0 0.0
  %1624 = vmatpush1.msra.mxu0 %v1537
  %1625 = vmatprep.subr.mxu0 0.0
  %1626 = vmatpush1.msra.mxu0 %v1536
  %1627 = vmatprep.subr.mxu0 0.0
  %1628 = vmatpush1.msra.mxu0 %v1535
  %1629 = vmatprep.subr.mxu0 0.0
  %1630 = vmatpush1.msra.mxu0 %v1534
  %1631 = vmatprep.subr.mxu0 0.0
  %1632 = vmatpush1.msra.mxu0 %v1533
  %1633 = vmatprep.subr.mxu0 0.0
  %1634 = vmatpush1.msra.mxu0 %v1532
  %1635 = vmatprep.subr.mxu0 0.0
  %1636 = vmatpush1.msra.mxu0 %v1531
  %1637 = vmatprep.subr.mxu0 0.0
  %1638 = vmatpush1.msra.mxu0 %v1530
  %1639 = vmatprep.subr.mxu0 0.0
  %1640 = vmatpush1.msra.mxu0 %v1529
  %1641 = vmatprep.subr.mxu0 0.0
  %1642 = vmatpush1.msra.mxu0 %v1528
  %1643 = vmatprep.subr.mxu0 0.0
  %1644 = vmatpush1.msra.mxu0 %v1527
  %1645 = vmatprep.subr.mxu0 0.0
  %1646 = vmatpush1.msra.mxu0 %v1526
  %1647 = vmatprep.subr.mxu0 0.0
  %1648 = vmatpush1.msra.mxu0 %v1525
  %1649 = vmatprep.subr.mxu0 0.0
  %1650 = vmatpush1.msra.mxu0 %v1524
  %1651 = vmatprep.subr.mxu0 0.0
  %1652 = vmatpush1.msra.mxu0 %v1523
  %1653 = vmatprep.subr.mxu0 0.0
  %1654 = vmatpush2.msra.mxu0 0.0
  %1655 = vmatprep.subr.mxu0 0.0
  %1656 = vmatpush2.msra.mxu0 0.0
  %1657 = vmatprep.subr.mxu0 0.0
  %1658 = vmatpush2.msra.mxu0 0.0
  %1659 = vmatprep.subr.mxu0 0.0
  %1660 = vmatpush2.msra.mxu0 0.0
  %1661 = vmatprep.subr.mxu0 0.0
  %1662 = vmatpush2.msra.mxu0 0.0
  %1663 = vmatprep.subr.mxu0 0.0
  %1664 = vmatpush2.msra.mxu0 0.0
  %1665 = vmatprep.subr.mxu0 0.0
  %1666 = vmatpush2.msra.mxu0 0.0
  %1667 = vmatprep.subr.mxu0 0.0
  %1668 = vmatpush2.msra.mxu0 0.0
  %1669 = vmatprep.subr.mxu0 0.0
  %1670 = vmatpush2.msra.mxu0 0.0
  %1671 = vmatprep.subr.mxu0 0.0
  %1672 = vmatpush2.msra.mxu0 0.0
  %1673 = vmatprep.subr.mxu0 0.0
  %1674 = vmatpush2.msra.mxu0 0.0
  %1675 = vmatprep.subr.mxu0 0.0
  %1676 = vmatpush2.msra.mxu0 0.0
  %1677 = vmatprep.subr.mxu0 0.0
  %1678 = vmatpush2.msra.mxu0 0.0
  %1679 = vmatprep.subr.mxu0 0.0
  %1680 = vmatpush2.msra.mxu0 0.0
  %1681 = vmatprep.subr.mxu0 0.0
  %1682 = vmatpush2.msra.mxu0 0.0
  %1683 = vmatprep.subr.mxu0 0.0
  %1684 = vmatpush2.msra.mxu0 %v1539
  %1685 = vmatprep.mubr.f32.mxu0 %v1541
  %1686 = vmatmul.mubr.f32.gmra.mxu0 %v633
  %v1687 = vpop.f32.mrf.mxu0
  %v1688 = vadd.f32 %v1613, %v1687
  %v1689 = vpop.f32.mrf.mxu0
  %1690 = vmatprep.mubr.f32.mxu0 %v1544
  %1691 = vmatmul.mubr.f32.gmra.mxu0 %v637
  %v1692 = vpop.f32.mrf.mxu0
  %v1693 = vadd.f32 %v1618, %v1692
  %v1694 = vpop.f32.mrf.mxu0
  %1695 = vdwg.mxu0
  %v1696 = vld [vmem:[%s9] sm:$0xff]
  %v1697 = vld [vmem:[%s9 + $0x8] sm:$0xff]
  %1699 = vset.pattern.permute.xlu0 0
  %1700 = vperm.xlu0 %1699, %v1696
  %v1701 = vpop.permute.xlu0 %1700
  %1704 = vset.pattern.permute.xlu0 0
  %1705 = vperm.xlu0 %1704, %v1697
  %v1706 = vpop.permute.xlu0 %1705
  %v1708 = vmul.f32 %v1688, %v1701
  %v1709 = vmul.f32 %v1693, %v1706
  %v1710 = vadd.s32 %v792, 1
  %v1711 = vlaneseq
  %v1712 = vshrl.u32 %v1711, 7
  %v1713 = vsub.s32 0, %v1712
  %v1714 = vrot.slane %v1710, %v1713
  %vm1715 = vcmp.eq.s32.totalorder %v1244, %v1714
  %vm1716 = vcmp.eq.s32.totalorder %v1247, %v1714
  %vm1717 = vcmp.eq.s32.totalorder %v1250, %v1714
  %vm1718 = vcmp.eq.s32.totalorder %v1253, %v1714
  %vm1719 = vcmp.eq.s32.totalorder %v1256, %v1714
  %vm1720 = vcmp.eq.s32.totalorder %v1259, %v1714
  %vm1721 = vcmp.eq.s32.totalorder %v1262, %v1714
  %vm1722 = vcmp.eq.s32.totalorder %v1265, %v1714
  %vm1723 = vcmp.eq.s32.totalorder %v1268, %v1714
  %vm1724 = vcmp.eq.s32.totalorder %v1271, %v1714
  %vm1725 = vcmp.eq.s32.totalorder %v1274, %v1714
  %vm1726 = vcmp.eq.s32.totalorder %v1277, %v1714
  %vm1727 = vcmp.eq.s32.totalorder %v1280, %v1714
  %vm1728 = vcmp.eq.s32.totalorder %v1283, %v1714
  %vm1729 = vcmp.eq.s32.totalorder %v1286, %v1714
  %vm1730 = vcmp.eq.s32.totalorder %v1289, %v1714
  %vm1731 = vcmp.eq.s32.totalorder %v1292, %v1714
  %vm1732 = vcmp.eq.s32.totalorder %v1295, %v1714
  %vm1733 = vcmp.eq.s32.totalorder %v1298, %v1714
  %vm1734 = vcmp.eq.s32.totalorder %v1301, %v1714
  %vm1735 = vcmp.eq.s32.totalorder %v1304, %v1714
  %vm1736 = vcmp.eq.s32.totalorder %v1307, %v1714
  %vm1737 = vcmp.eq.s32.totalorder %v1310, %v1714
  %vm1738 = vcmp.eq.s32.totalorder %v1313, %v1714
  %vm1739 = vcmp.eq.s32.totalorder %v1316, %v1714
  %vm1740 = vcmp.eq.s32.totalorder %v1319, %v1714
  %vm1741 = vcmp.eq.s32.totalorder %v1322, %v1714
  %vm1742 = vcmp.eq.s32.totalorder %v1325, %v1714
  %vm1743 = vcmp.eq.s32.totalorder %v1328, %v1714
  %vm1744 = vcmp.eq.s32.totalorder %v1331, %v1714
  %vm1745 = vcmp.eq.s32.totalorder %v1334, %v1714
  %vm1746 = vcmp.eq.s32.totalorder %v1337, %v1714
  %vm1747 = vcmp.eq.s32.totalorder %v1340, %v1714
  %vm1748 = vcmp.eq.s32.totalorder %v1343, %v1714
  %vm1749 = vcmp.eq.s32.totalorder %v1346, %v1714
  %vm1750 = vcmp.eq.s32.totalorder %v1349, %v1714
  %vm1751 = vcmp.eq.s32.totalorder %v1352, %v1714
  %vm1752 = vcmp.eq.s32.totalorder %v1355, %v1714
  %vm1753 = vcmp.eq.s32.totalorder %v1358, %v1714
  %vm1754 = vcmp.eq.s32.totalorder %v1361, %v1714
  %vm1755 = vcmp.eq.s32.totalorder %v1364, %v1714
  %vm1756 = vcmp.eq.s32.totalorder %v1367, %v1714
  %vm1757 = vcmp.eq.s32.totalorder %v1370, %v1714
  %vm1758 = vcmp.eq.s32.totalorder %v1373, %v1714
  %vm1759 = vcmp.eq.s32.totalorder %v1376, %v1714
  %vm1760 = vcmp.eq.s32.totalorder %v1379, %v1714
  %vm1761 = vcmp.eq.s32.totalorder %v1382, %v1714
  %vm1762 = vcmp.eq.s32.totalorder %v1385, %v1714
  %vm1763 = vcmp.eq.s32.totalorder %v1388, %v1714
  %vm1764 = vmand %vm1193, %vm1715
  %vm1765 = vmand %vm1194, %vm1716
  %vm1766 = vmand %vm1195, %vm1717
  %vm1767 = vmand %vm1196, %vm1718
  %vm1768 = vmand %vm1197, %vm1719
  %vm1769 = vmand %vm1198, %vm1720
  %vm1770 = vmand %vm1199, %vm1721
  %vm1771 = vmand %vm1200, %vm1722
  %vm1772 = vmand %vm1201, %vm1723
  %vm1773 = vmand %vm1202, %vm1724
  %vm1774 = vmand %vm1203, %vm1725
  %vm1775 = vmand %vm1204, %vm1726
  %vm1776 = vmand %vm1205, %vm1727
  %vm1777 = vmand %vm1206, %vm1728
  %vm1778 = vmand %vm1207, %vm1729
  %vm1779 = vmand %vm1208, %vm1730
  %vm1780 = vmand %vm1209, %vm1731
  %vm1781 = vmand %vm1210, %vm1732
  %vm1782 = vmand %vm1211, %vm1733
  %vm1783 = vmand %vm1212, %vm1734
  %vm1784 = vmand %vm1213, %vm1735
  %vm1785 = vmand %vm1214, %vm1736
  %vm1786 = vmand %vm1215, %vm1737
  %vm1787 = vmand %vm1216, %vm1738
  %vm1788 = vmand %vm1217, %vm1739
  %vm1789 = vmand %vm1218, %vm1740
  %vm1790 = vmand %vm1219, %vm1741
  %vm1791 = vmand %vm1220, %vm1742
  %vm1792 = vmand %vm1221, %vm1743
  %vm1793 = vmand %vm1222, %vm1744
  %vm1794 = vmand %vm1223, %vm1745
  %vm1795 = vmand %vm1224, %vm1746
  %vm1796 = vmand %vm1225, %vm1747
  %vm1797 = vmand %vm1226, %vm1748
  %vm1798 = vmand %vm1227, %vm1749
  %vm1799 = vmand %vm1228, %vm1750
  %vm1800 = vmand %vm1229, %vm1751
  %vm1801 = vmand %vm1230, %vm1752
  %vm1802 = vmand %vm1231, %vm1753
  %vm1803 = vmand %vm1232, %vm1754
  %vm1804 = vmand %vm1233, %vm1755
  %vm1805 = vmand %vm1234, %vm1756
  %vm1806 = vmand %vm1235, %vm1757
  %vm1807 = vmand %vm1236, %vm1758
  %vm1808 = vmand %vm1237, %vm1759
  %vm1809 = vmand %vm1238, %vm1760
  %vm1810 = vmand %vm1239, %vm1761
  %vm1811 = vmand %vm1240, %vm1762
  %vm1812 = vmand %vm1241, %vm1763
  %v1813 = vsel %vm1764, 1.0, 0.0
  %v1814 = vsel %vm1765, 1.0, 0.0
  %v1815 = vsel %vm1766, 1.0, 0.0
  %v1816 = vsel %vm1767, 1.0, 0.0
  %v1817 = vsel %vm1768, 1.0, 0.0
  %v1818 = vsel %vm1769, 1.0, 0.0
  %v1819 = vsel %vm1770, 1.0, 0.0
  %v1820 = vsel %vm1771, 1.0, 0.0
  %v1821 = vsel %vm1772, 1.0, 0.0
  %v1822 = vsel %vm1773, 1.0, 0.0
  %v1823 = vsel %vm1774, 1.0, 0.0
  %v1824 = vsel %vm1775, 1.0, 0.0
  %v1825 = vsel %vm1776, 1.0, 0.0
  %v1826 = vsel %vm1777, 1.0, 0.0
  %v1827 = vsel %vm1778, 1.0, 0.0
  %v1828 = vsel %vm1779, 1.0, 0.0
  %v1829 = vsel %vm1780, 1.0, 0.0
  %v1830 = vsel %vm1781, 1.0, 0.0
  %v1831 = vsel %vm1782, 1.0, 0.0
  %v1832 = vsel %vm1783, 1.0, 0.0
  %v1833 = vsel %vm1784, 1.0, 0.0
  %v1834 = vsel %vm1785, 1.0, 0.0
  %v1835 = vsel %vm1786, 1.0, 0.0
  %v1836 = vsel %vm1787, 1.0, 0.0
  %v1837 = vsel %vm1788, 1.0, 0.0
  %v1838 = vsel %vm1789, 1.0, 0.0
  %v1839 = vsel %vm1790, 1.0, 0.0
  %v1840 = vsel %vm1791, 1.0, 0.0
  %v1841 = vsel %vm1792, 1.0, 0.0
  %v1842 = vsel %vm1793, 1.0, 0.0
  %v1843 = vsel %vm1794, 1.0, 0.0
  %v1844 = vsel %vm1795, 1.0, 0.0
  %v1845 = vsel %vm1796, 1.0, 0.0
  %v1846 = vsel %vm1797, 1.0, 0.0
  %v1847 = vsel %vm1798, 1.0, 0.0
  %v1848 = vsel %vm1799, 1.0, 0.0
  %v1849 = vsel %vm1800, 1.0, 0.0
  %v1850 = vsel %vm1801, 1.0, 0.0
  %v1851 = vsel %vm1802, 1.0, 0.0
  %v1852 = vsel %vm1803, 1.0, 0.0
  %v1853 = vsel %vm1804, 1.0, 0.0
  %v1854 = vsel %vm1805, 1.0, 0.0
  %v1855 = vsel %vm1806, 1.0, 0.0
  %v1856 = vsel %vm1807, 1.0, 0.0
  %v1857 = vsel %vm1808, 1.0, 0.0
  %v1858 = vsel %vm1809, 1.0, 0.0
  %v1859 = vsel %vm1810, 1.0, 0.0
  %v1860 = vsel %vm1811, 1.0, 0.0
  %v1861 = vsel %vm1812, 1.0, 0.0
  %1862 = vmatprep.subr.mxu0 0.0
  %1863 = vmatpush1.msra.mxu0 %v1828
  %1864 = vmatprep.subr.mxu0 0.0
  %1865 = vmatpush1.msra.mxu0 %v1827
  %1866 = vmatprep.subr.mxu0 0.0
  %1867 = vmatpush1.msra.mxu0 %v1826
  %1868 = vmatprep.subr.mxu0 0.0
  %1869 = vmatpush1.msra.mxu0 %v1825
  %1870 = vmatprep.subr.mxu0 0.0
  %1871 = vmatpush1.msra.mxu0 %v1824
  %1872 = vmatprep.subr.mxu0 0.0
  %1873 = vmatpush1.msra.mxu0 %v1823
  %1874 = vmatprep.subr.mxu0 0.0
  %1875 = vmatpush1.msra.mxu0 %v1822
  %1876 = vmatprep.subr.mxu0 0.0
  %1877 = vmatpush1.msra.mxu0 %v1821
  %1878 = vmatprep.subr.mxu0 0.0
  %1879 = vmatpush1.msra.mxu0 %v1820
  %1880 = vmatprep.subr.mxu0 0.0
  %1881 = vmatpush1.msra.mxu0 %v1819
  %1882 = vmatprep.subr.mxu0 0.0
  %1883 = vmatpush1.msra.mxu0 %v1818
  %1884 = vmatprep.subr.mxu0 0.0
  %1885 = vmatpush1.msra.mxu0 %v1817
  %1886 = vmatprep.subr.mxu0 0.0
  %1887 = vmatpush1.msra.mxu0 %v1816
  %1888 = vmatprep.subr.mxu0 0.0
  %1889 = vmatpush1.msra.mxu0 %v1815
  %1890 = vmatprep.subr.mxu0 0.0
  %1891 = vmatpush1.msra.mxu0 %v1814
  %1892 = vmatprep.subr.mxu0 0.0
  %1893 = vmatpush1.msra.mxu0 %v1813
  %1894 = vmatprep.subr.mxu0 0.0
  %1895 = vmatpush2.msra.mxu0 %v1844
  %1896 = vmatprep.subr.mxu0 0.0
  %1897 = vmatpush2.msra.mxu0 %v1843
  %1898 = vmatprep.subr.mxu0 0.0
  %1899 = vmatpush2.msra.mxu0 %v1842
  %1900 = vmatprep.subr.mxu0 0.0
  %1901 = vmatpush2.msra.mxu0 %v1841
  %1902 = vmatprep.subr.mxu0 0.0
  %1903 = vmatpush2.msra.mxu0 %v1840
  %1904 = vmatprep.subr.mxu0 0.0
  %1905 = vmatpush2.msra.mxu0 %v1839
  %1906 = vmatprep.subr.mxu0 0.0
  %1907 = vmatpush2.msra.mxu0 %v1838
  %1908 = vmatprep.subr.mxu0 0.0
  %1909 = vmatpush2.msra.mxu0 %v1837
  %1910 = vmatprep.subr.mxu0 0.0
  %1911 = vmatpush2.msra.mxu0 %v1836
  %1912 = vmatprep.subr.mxu0 0.0
  %1913 = vmatpush2.msra.mxu0 %v1835
  %1914 = vmatprep.subr.mxu0 0.0
  %1915 = vmatpush2.msra.mxu0 %v1834
  %1916 = vmatprep.subr.mxu0 0.0
  %1917 = vmatpush2.msra.mxu0 %v1833
  %1918 = vmatprep.subr.mxu0 0.0
  %1919 = vmatpush2.msra.mxu0 %v1832
  %1920 = vmatprep.subr.mxu0 0.0
  %1921 = vmatpush2.msra.mxu0 %v1831
  %1922 = vmatprep.subr.mxu0 0.0
  %1923 = vmatpush2.msra.mxu0 %v1830
  %1924 = vmatprep.subr.mxu0 0.0
  %1925 = vmatpush2.msra.mxu0 %v1829
  %1926 = vmatprep.mubr.f32.mxu0 %v632
  %1927 = vmatmul.mubr.f32.gmra.mxu0 %v631
  %v1928 = vpop.f32.mrf.mxu0
  %v1929 = vadd.f32 0.0, %v1928
  %v1930 = vpop.f32.mrf.mxu0
  %1931 = vmatprep.mubr.f32.mxu0 %v636
  %1932 = vmatmul.mubr.f32.gmra.mxu0 %v635
  %v1933 = vpop.f32.mrf.mxu0
  %v1934 = vadd.f32 0.0, %v1933
  %v1935 = vpop.f32.mrf.mxu0
  %1936 = vdwg.mxu0
  %1937 = vmatprep.subr.mxu0 0.0
  %1938 = vmatpush1.msra.mxu0 %v1860
  %1939 = vmatprep.subr.mxu0 0.0
  %1940 = vmatpush1.msra.mxu0 %v1859
  %1941 = vmatprep.subr.mxu0 0.0
  %1942 = vmatpush1.msra.mxu0 %v1858
  %1943 = vmatprep.subr.mxu0 0.0
  %1944 = vmatpush1.msra.mxu0 %v1857
  %1945 = vmatprep.subr.mxu0 0.0
  %1946 = vmatpush1.msra.mxu0 %v1856
  %1947 = vmatprep.subr.mxu0 0.0
  %1948 = vmatpush1.msra.mxu0 %v1855
  %1949 = vmatprep.subr.mxu0 0.0
  %1950 = vmatpush1.msra.mxu0 %v1854
  %1951 = vmatprep.subr.mxu0 0.0
  %1952 = vmatpush1.msra.mxu0 %v1853
  %1953 = vmatprep.subr.mxu0 0.0
  %1954 = vmatpush1.msra.mxu0 %v1852
  %1955 = vmatprep.subr.mxu0 0.0
  %1956 = vmatpush1.msra.mxu0 %v1851
  %1957 = vmatprep.subr.mxu0 0.0
  %1958 = vmatpush1.msra.mxu0 %v1850
  %1959 = vmatprep.subr.mxu0 0.0
  %1960 = vmatpush1.msra.mxu0 %v1849
  %1961 = vmatprep.subr.mxu0 0.0
  %1962 = vmatpush1.msra.mxu0 %v1848
  %1963 = vmatprep.subr.mxu0 0.0
  %1964 = vmatpush1.msra.mxu0 %v1847
  %1965 = vmatprep.subr.mxu0 0.0
  %1966 = vmatpush1.msra.mxu0 %v1846
  %1967 = vmatprep.subr.mxu0 0.0
  %1968 = vmatpush1.msra.mxu0 %v1845
  %1969 = vmatprep.subr.mxu0 0.0
  %1970 = vmatpush2.msra.mxu0 0.0
  %1971 = vmatprep.subr.mxu0 0.0
  %1972 = vmatpush2.msra.mxu0 0.0
  %1973 = vmatprep.subr.mxu0 0.0
  %1974 = vmatpush2.msra.mxu0 0.0
  %1975 = vmatprep.subr.mxu0 0.0
  %1976 = vmatpush2.msra.mxu0 0.0
  %1977 = vmatprep.subr.mxu0 0.0
  %1978 = vmatpush2.msra.mxu0 0.0
  %1979 = vmatprep.subr.mxu0 0.0
  %1980 = vmatpush2.msra.mxu0 0.0
  %1981 = vmatprep.subr.mxu0 0.0
  %1982 = vmatpush2.msra.mxu0 0.0
  %1983 = vmatprep.subr.mxu0 0.0
  %1984 = vmatpush2.msra.mxu0 0.0
  %1985 = vmatprep.subr.mxu0 0.0
  %1986 = vmatpush2.msra.mxu0 0.0
  %1987 = vmatprep.subr.mxu0 0.0
  %1988 = vmatpush2.msra.mxu0 0.0
  %1989 = vmatprep.subr.mxu0 0.0
  %1990 = vmatpush2.msra.mxu0 0.0
  %1991 = vmatprep.subr.mxu0 0.0
  %1992 = vmatpush2.msra.mxu0 0.0
  %1993 = vmatprep.subr.mxu0 0.0
  %1994 = vmatpush2.msra.mxu0 0.0
  %1995 = vmatprep.subr.mxu0 0.0
  %1996 = vmatpush2.msra.mxu0 0.0
  %1997 = vmatprep.subr.mxu0 0.0
  %1998 = vmatpush2.msra.mxu0 0.0
  %1999 = vmatprep.subr.mxu0 0.0
  %2000 = vmatpush2.msra.mxu0 %v1861
  %2001 = vmatprep.mubr.f32.mxu0 %v1541
  %2002 = vmatmul.mubr.f32.gmra.mxu0 %v633
  %v2003 = vpop.f32.mrf.mxu0
  %v2004 = vadd.f32 %v1929, %v2003
  %v2005 = vpop.f32.mrf.mxu0
  %2006 = vmatprep.mubr.f32.mxu0 %v1544
  %2007 = vmatmul.mubr.f32.gmra.mxu0 %v637
  %v2008 = vpop.f32.mrf.mxu0
  %v2009 = vadd.f32 %v1934, %v2008
  %v2010 = vpop.f32.mrf.mxu0
  %2011 = vdwg.mxu0
  %s2012 = scalar_lea.vmem %s9, 16
  %v2013 = vld [vmem:[%s2012] sm:$0xff]
  %v2014 = vld [vmem:[%s2012 + $0x8] sm:$0xff]
  %2016 = vset.pattern.permute.xlu0 0
  %2017 = vperm.xlu0 %2016, %v2013
  %v2018 = vpop.permute.xlu0 %2017
  %2021 = vset.pattern.permute.xlu0 0
  %2022 = vperm.xlu0 %2021, %v2014
  %v2023 = vpop.permute.xlu0 %2022
  %v2025 = vmul.f32 %v2004, %v2018
  %v2026 = vmul.f32 %v2009, %v2023
  %v2027 = vadd.f32 %v1708, %v2025
  %v2028 = vadd.f32 %v1709, %v2026
  %v2029 = vadd.s32 %v792, 2
  %v2030 = vlaneseq
  %v2031 = vshrl.u32 %v2030, 7
  %v2032 = vsub.s32 0, %v2031
  %v2033 = vrot.slane %v2029, %v2032
  %vm2034 = vcmp.eq.s32.totalorder %v1244, %v2033
  %vm2035 = vcmp.eq.s32.totalorder %v1247, %v2033
  %vm2036 = vcmp.eq.s32.totalorder %v1250, %v2033
  %vm2037 = vcmp.eq.s32.totalorder %v1253, %v2033
  %vm2038 = vcmp.eq.s32.totalorder %v1256, %v2033
  %vm2039 = vcmp.eq.s32.totalorder %v1259, %v2033
  %vm2040 = vcmp.eq.s32.totalorder %v1262, %v2033
  %vm2041 = vcmp.eq.s32.totalorder %v1265, %v2033
  %vm2042 = vcmp.eq.s32.totalorder %v1268, %v2033
  %vm2043 = vcmp.eq.s32.totalorder %v1271, %v2033
  %vm2044 = vcmp.eq.s32.totalorder %v1274, %v2033
  %vm2045 = vcmp.eq.s32.totalorder %v1277, %v2033
  %vm2046 = vcmp.eq.s32.totalorder %v1280, %v2033
  %vm2047 = vcmp.eq.s32.totalorder %v1283, %v2033
  %vm2048 = vcmp.eq.s32.totalorder %v1286, %v2033
  %vm2049 = vcmp.eq.s32.totalorder %v1289, %v2033
  %vm2050 = vcmp.eq.s32.totalorder %v1292, %v2033
  %vm2051 = vcmp.eq.s32.totalorder %v1295, %v2033
  %vm2052 = vcmp.eq.s32.totalorder %v1298, %v2033
  %vm2053 = vcmp.eq.s32.totalorder %v1301, %v2033
  %vm2054 = vcmp.eq.s32.totalorder %v1304, %v2033
  %vm2055 = vcmp.eq.s32.totalorder %v1307, %v2033
  %vm2056 = vcmp.eq.s32.totalorder %v1310, %v2033
  %vm2057 = vcmp.eq.s32.totalorder %v1313, %v2033
  %vm2058 = vcmp.eq.s32.totalorder %v1316, %v2033
  %vm2059 = vcmp.eq.s32.totalorder %v1319, %v2033
  %vm2060 = vcmp.eq.s32.totalorder %v1322, %v2033
  %vm2061 = vcmp.eq.s32.totalorder %v1325, %v2033
  %vm2062 = vcmp.eq.s32.totalorder %v1328, %v2033
  %vm2063 = vcmp.eq.s32.totalorder %v1331, %v2033
  %vm2064 = vcmp.eq.s32.totalorder %v1334, %v2033
  %vm2065 = vcmp.eq.s32.totalorder %v1337, %v2033
  %vm2066 = vcmp.eq.s32.totalorder %v1340, %v2033
  %vm2067 = vcmp.eq.s32.totalorder %v1343, %v2033
  %vm2068 = vcmp.eq.s32.totalorder %v1346, %v2033
  %vm2069 = vcmp.eq.s32.totalorder %v1349, %v2033
  %vm2070 = vcmp.eq.s32.totalorder %v1352, %v2033
  %vm2071 = vcmp.eq.s32.totalorder %v1355, %v2033
  %vm2072 = vcmp.eq.s32.totalorder %v1358, %v2033
  %vm2073 = vcmp.eq.s32.totalorder %v1361, %v2033
  %vm2074 = vcmp.eq.s32.totalorder %v1364, %v2033
  %vm2075 = vcmp.eq.s32.totalorder %v1367, %v2033
  %vm2076 = vcmp.eq.s32.totalorder %v1370, %v2033
  %vm2077 = vcmp.eq.s32.totalorder %v1373, %v2033
  %vm2078 = vcmp.eq.s32.totalorder %v1376, %v2033
  %vm2079 = vcmp.eq.s32.totalorder %v1379, %v2033
  %vm2080 = vcmp.eq.s32.totalorder %v1382, %v2033
  %vm2081 = vcmp.eq.s32.totalorder %v1385, %v2033
  %vm2082 = vcmp.eq.s32.totalorder %v1388, %v2033
  %vm2083 = vmand %vm1193, %vm2034
  %vm2084 = vmand %vm1194, %vm2035
  %vm2085 = vmand %vm1195, %vm2036
  %vm2086 = vmand %vm1196, %vm2037
  %vm2087 = vmand %vm1197, %vm2038
  %vm2088 = vmand %vm1198, %vm2039
  %vm2089 = vmand %vm1199, %vm2040
  %vm2090 = vmand %vm1200, %vm2041
  %vm2091 = vmand %vm1201, %vm2042
  %vm2092 = vmand %vm1202, %vm2043
  %vm2093 = vmand %vm1203, %vm2044
  %vm2094 = vmand %vm1204, %vm2045
  %vm2095 = vmand %vm1205, %vm2046
  %vm2096 = vmand %vm1206, %vm2047
  %vm2097 = vmand %vm1207, %vm2048
  %vm2098 = vmand %vm1208, %vm2049
  %vm2099 = vmand %vm1209, %vm2050
  %vm2100 = vmand %vm1210, %vm2051
  %vm2101 = vmand %vm1211, %vm2052
  %vm2102 = vmand %vm1212, %vm2053
  %vm2103 = vmand %vm1213, %vm2054
  %vm2104 = vmand %vm1214, %vm2055
  %vm2105 = vmand %vm1215, %vm2056
  %vm2106 = vmand %vm1216, %vm2057
  %vm2107 = vmand %vm1217, %vm2058
  %vm2108 = vmand %vm1218, %vm2059
  %vm2109 = vmand %vm1219, %vm2060
  %vm2110 = vmand %vm1220, %vm2061
  %vm2111 = vmand %vm1221, %vm2062
  %vm2112 = vmand %vm1222, %vm2063
  %vm2113 = vmand %vm1223, %vm2064
  %vm2114 = vmand %vm1224, %vm2065
  %vm2115 = vmand %vm1225, %vm2066
  %vm2116 = vmand %vm1226, %vm2067
  %vm2117 = vmand %vm1227, %vm2068
  %vm2118 = vmand %vm1228, %vm2069
  %vm2119 = vmand %vm1229, %vm2070
  %vm2120 = vmand %vm1230, %vm2071
  %vm2121 = vmand %vm1231, %vm2072
  %vm2122 = vmand %vm1232, %vm2073
  %vm2123 = vmand %vm1233, %vm2074
  %vm2124 = vmand %vm1234, %vm2075
  %vm2125 = vmand %vm1235, %vm2076
  %vm2126 = vmand %vm1236, %vm2077
  %vm2127 = vmand %vm1237, %vm2078
  %vm2128 = vmand %vm1238, %vm2079
  %vm2129 = vmand %vm1239, %vm2080
  %vm2130 = vmand %vm1240, %vm2081
  %vm2131 = vmand %vm1241, %vm2082
  %v2132 = vsel %vm2083, 1.0, 0.0
  %v2133 = vsel %vm2084, 1.0, 0.0
  %v2134 = vsel %vm2085, 1.0, 0.0
  %v2135 = vsel %vm2086, 1.0, 0.0
  %v2136 = vsel %vm2087, 1.0, 0.0
  %v2137 = vsel %vm2088, 1.0, 0.0
  %v2138 = vsel %vm2089, 1.0, 0.0
  %v2139 = vsel %vm2090, 1.0, 0.0
  %v2140 = vsel %vm2091, 1.0, 0.0
  %v2141 = vsel %vm2092, 1.0, 0.0
  %v2142 = vsel %vm2093, 1.0, 0.0
  %v2143 = vsel %vm2094, 1.0, 0.0
  %v2144 = vsel %vm2095, 1.0, 0.0
  %v2145 = vsel %vm2096, 1.0, 0.0
  %v2146 = vsel %vm2097, 1.0, 0.0
  %v2147 = vsel %vm2098, 1.0, 0.0
  %v2148 = vsel %vm2099, 1.0, 0.0
  %v2149 = vsel %vm2100, 1.0, 0.0
  %v2150 = vsel %vm2101, 1.0, 0.0
  %v2151 = vsel %vm2102, 1.0, 0.0
  %v2152 = vsel %vm2103, 1.0, 0.0
  %v2153 = vsel %vm2104, 1.0, 0.0
  %v2154 = vsel %vm2105, 1.0, 0.0
  %v2155 = vsel %vm2106, 1.0, 0.0
  %v2156 = vsel %vm2107, 1.0, 0.0
  %v2157 = vsel %vm2108, 1.0, 0.0
  %v2158 = vsel %vm2109, 1.0, 0.0
  %v2159 = vsel %vm2110, 1.0, 0.0
  %v2160 = vsel %vm2111, 1.0, 0.0
  %v2161 = vsel %vm2112, 1.0, 0.0
  %v2162 = vsel %vm2113, 1.0, 0.0
  %v2163 = vsel %vm2114, 1.0, 0.0
  %v2164 = vsel %vm2115, 1.0, 0.0
  %v2165 = vsel %vm2116, 1.0, 0.0
  %v2166 = vsel %vm2117, 1.0, 0.0
  %v2167 = vsel %vm2118, 1.0, 0.0
  %v2168 = vsel %vm2119, 1.0, 0.0
  %v2169 = vsel %vm2120, 1.0, 0.0
  %v2170 = vsel %vm2121, 1.0, 0.0
  %v2171 = vsel %vm2122, 1.0, 0.0
  %v2172 = vsel %vm2123, 1.0, 0.0
  %v2173 = vsel %vm2124, 1.0, 0.0
  %v2174 = vsel %vm2125, 1.0, 0.0
  %v2175 = vsel %vm2126, 1.0, 0.0
  %v2176 = vsel %vm2127, 1.0, 0.0
  %v2177 = vsel %vm2128, 1.0, 0.0
  %v2178 = vsel %vm2129, 1.0, 0.0
  %v2179 = vsel %vm2130, 1.0, 0.0
  %v2180 = vsel %vm2131, 1.0, 0.0
  %2181 = vmatprep.subr.mxu0 0.0
  %2182 = vmatpush1.msra.mxu0 %v2147
  %2183 = vmatprep.subr.mxu0 0.0
  %2184 = vmatpush1.msra.mxu0 %v2146
  %2185 = vmatprep.subr.mxu0 0.0
  %2186 = vmatpush1.msra.mxu0 %v2145
  %2187 = vmatprep.subr.mxu0 0.0
  %2188 = vmatpush1.msra.mxu0 %v2144
  %2189 = vmatprep.subr.mxu0 0.0
  %2190 = vmatpush1.msra.mxu0 %v2143
  %2191 = vmatprep.subr.mxu0 0.0
  %2192 = vmatpush1.msra.mxu0 %v2142
  %2193 = vmatprep.subr.mxu0 0.0
  %2194 = vmatpush1.msra.mxu0 %v2141
  %2195 = vmatprep.subr.mxu0 0.0
  %2196 = vmatpush1.msra.mxu0 %v2140
  %2197 = vmatprep.subr.mxu0 0.0
  %2198 = vmatpush1.msra.mxu0 %v2139
  %2199 = vmatprep.subr.mxu0 0.0
  %2200 = vmatpush1.msra.mxu0 %v2138
  %2201 = vmatprep.subr.mxu0 0.0
  %2202 = vmatpush1.msra.mxu0 %v2137
  %2203 = vmatprep.subr.mxu0 0.0
  %2204 = vmatpush1.msra.mxu0 %v2136
  %2205 = vmatprep.subr.mxu0 0.0
  %2206 = vmatpush1.msra.mxu0 %v2135
  %2207 = vmatprep.subr.mxu0 0.0
  %2208 = vmatpush1.msra.mxu0 %v2134
  %2209 = vmatprep.subr.mxu0 0.0
  %2210 = vmatpush1.msra.mxu0 %v2133
  %2211 = vmatprep.subr.mxu0 0.0
  %2212 = vmatpush1.msra.mxu0 %v2132
  %2213 = vmatprep.subr.mxu0 0.0
  %2214 = vmatpush2.msra.mxu0 %v2163
  %2215 = vmatprep.subr.mxu0 0.0
  %2216 = vmatpush2.msra.mxu0 %v2162
  %2217 = vmatprep.subr.mxu0 0.0
  %2218 = vmatpush2.msra.mxu0 %v2161
  %2219 = vmatprep.subr.mxu0 0.0
  %2220 = vmatpush2.msra.mxu0 %v2160
  %2221 = vmatprep.subr.mxu0 0.0
  %2222 = vmatpush2.msra.mxu0 %v2159
  %2223 = vmatprep.subr.mxu0 0.0
  %2224 = vmatpush2.msra.mxu0 %v2158
  %2225 = vmatprep.subr.mxu0 0.0
  %2226 = vmatpush2.msra.mxu0 %v2157
  %2227 = vmatprep.subr.mxu0 0.0
  %2228 = vmatpush2.msra.mxu0 %v2156
  %2229 = vmatprep.subr.mxu0 0.0
  %2230 = vmatpush2.msra.mxu0 %v2155
  %2231 = vmatprep.subr.mxu0 0.0
  %2232 = vmatpush2.msra.mxu0 %v2154
  %2233 = vmatprep.subr.mxu0 0.0
  %2234 = vmatpush2.msra.mxu0 %v2153
  %2235 = vmatprep.subr.mxu0 0.0
  %2236 = vmatpush2.msra.mxu0 %v2152
  %2237 = vmatprep.subr.mxu0 0.0
  %2238 = vmatpush2.msra.mxu0 %v2151
  %2239 = vmatprep.subr.mxu0 0.0
  %2240 = vmatpush2.msra.mxu0 %v2150
  %2241 = vmatprep.subr.mxu0 0.0
  %2242 = vmatpush2.msra.mxu0 %v2149
  %2243 = vmatprep.subr.mxu0 0.0
  %2244 = vmatpush2.msra.mxu0 %v2148
  %2245 = vmatprep.mubr.f32.mxu0 %v632
  %2246 = vmatmul.mubr.f32.gmra.mxu0 %v631
  %v2247 = vpop.f32.mrf.mxu0
  %v2248 = vadd.f32 0.0, %v2247
  %v2249 = vpop.f32.mrf.mxu0
  %2250 = vmatprep.mubr.f32.mxu0 %v636
  %2251 = vmatmul.mubr.f32.gmra.mxu0 %v635
  %v2252 = vpop.f32.mrf.mxu0
  %v2253 = vadd.f32 0.0, %v2252
  %v2254 = vpop.f32.mrf.mxu0
  %2255 = vdwg.mxu0
  %2256 = vmatprep.subr.mxu0 0.0
  %2257 = vmatpush1.msra.mxu0 %v2179
  %2258 = vmatprep.subr.mxu0 0.0
  %2259 = vmatpush1.msra.mxu0 %v2178
  %2260 = vmatprep.subr.mxu0 0.0
  %2261 = vmatpush1.msra.mxu0 %v2177
  %2262 = vmatprep.subr.mxu0 0.0
  %2263 = vmatpush1.msra.mxu0 %v2176
  %2264 = vmatprep.subr.mxu0 0.0
  %2265 = vmatpush1.msra.mxu0 %v2175
  %2266 = vmatprep.subr.mxu0 0.0
  %2267 = vmatpush1.msra.mxu0 %v2174
  %2268 = vmatprep.subr.mxu0 0.0
  %2269 = vmatpush1.msra.mxu0 %v2173
  %2270 = vmatprep.subr.mxu0 0.0
  %2271 = vmatpush1.msra.mxu0 %v2172
  %2272 = vmatprep.subr.mxu0 0.0
  %2273 = vmatpush1.msra.mxu0 %v2171
  %2274 = vmatprep.subr.mxu0 0.0
  %2275 = vmatpush1.msra.mxu0 %v2170
  %2276 = vmatprep.subr.mxu0 0.0
  %2277 = vmatpush1.msra.mxu0 %v2169
  %2278 = vmatprep.subr.mxu0 0.0
  %2279 = vmatpush1.msra.mxu0 %v2168
  %2280 = vmatprep.subr.mxu0 0.0
  %2281 = vmatpush1.msra.mxu0 %v2167
  %2282 = vmatprep.subr.mxu0 0.0
  %2283 = vmatpush1.msra.mxu0 %v2166
  %2284 = vmatprep.subr.mxu0 0.0
  %2285 = vmatpush1.msra.mxu0 %v2165
  %2286 = vmatprep.subr.mxu0 0.0
  %2287 = vmatpush1.msra.mxu0 %v2164
  %2288 = vmatprep.subr.mxu0 0.0
  %2289 = vmatpush2.msra.mxu0 0.0
  %2290 = vmatprep.subr.mxu0 0.0
  %2291 = vmatpush2.msra.mxu0 0.0
  %2292 = vmatprep.subr.mxu0 0.0
  %2293 = vmatpush2.msra.mxu0 0.0
  %2294 = vmatprep.subr.mxu0 0.0
  %2295 = vmatpush2.msra.mxu0 0.0
  %2296 = vmatprep.subr.mxu0 0.0
  %2297 = vmatpush2.msra.mxu0 0.0
  %2298 = vmatprep.subr.mxu0 0.0
  %2299 = vmatpush2.msra.mxu0 0.0
  %2300 = vmatprep.subr.mxu0 0.0
  %2301 = vmatpush2.msra.mxu0 0.0
  %2302 = vmatprep.subr.mxu0 0.0
  %2303 = vmatpush2.msra.mxu0 0.0
  %2304 = vmatprep.subr.mxu0 0.0
  %2305 = vmatpush2.msra.mxu0 0.0
  %2306 = vmatprep.subr.mxu0 0.0
  %2307 = vmatpush2.msra.mxu0 0.0
  %2308 = vmatprep.subr.mxu0 0.0
  %2309 = vmatpush2.msra.mxu0 0.0
  %2310 = vmatprep.subr.mxu0 0.0
  %2311 = vmatpush2.msra.mxu0 0.0
  %2312 = vmatprep.subr.mxu0 0.0
  %2313 = vmatpush2.msra.mxu0 0.0
  %2314 = vmatprep.subr.mxu0 0.0
  %2315 = vmatpush2.msra.mxu0 0.0
  %2316 = vmatprep.subr.mxu0 0.0
  %2317 = vmatpush2.msra.mxu0 0.0
  %2318 = vmatprep.subr.mxu0 0.0
  %2319 = vmatpush2.msra.mxu0 %v2180
  %2320 = vmatprep.mubr.f32.mxu0 %v1541
  %2321 = vmatmul.mubr.f32.gmra.mxu0 %v633
  %v2322 = vpop.f32.mrf.mxu0
  %v2323 = vadd.f32 %v2248, %v2322
  %v2324 = vpop.f32.mrf.mxu0
  %2325 = vmatprep.mubr.f32.mxu0 %v1544
  %2326 = vmatmul.mubr.f32.gmra.mxu0 %v637
  %v2327 = vpop.f32.mrf.mxu0
  %v2328 = vadd.f32 %v2253, %v2327
  %v2329 = vpop.f32.mrf.mxu0
  %2330 = vdwg.mxu0
  %s2331 = scalar_lea.vmem %s9, 32
  %v2332 = vld [vmem:[%s2331] sm:$0xff]
  %v2333 = vld [vmem:[%s2331 + $0x8] sm:$0xff]
  %2335 = vset.pattern.permute.xlu0 0
  %2336 = vperm.xlu0 %2335, %v2332
  %v2337 = vpop.permute.xlu0 %2336
  %2340 = vset.pattern.permute.xlu0 0
  %2341 = vperm.xlu0 %2340, %v2333
  %v2342 = vpop.permute.xlu0 %2341
  %v2344 = vmul.f32 %v2323, %v2337
  %v2345 = vmul.f32 %v2328, %v2342
  %v2346 = vadd.f32 %v2027, %v2344
  %v2347 = vadd.f32 %v2028, %v2345
  %v2348 = vadd.s32 %v790, 1
  %v2349 = vlaneseq
  %v2350 = vshrl.u32 %v2349, 7
  %v2351 = vsub.s32 0, %v2350
  %v2352 = vrot.slane %v2348, %v2351
  %vm2353 = vcmp.eq.s32.totalorder %v995, %v2352
  %vm2354 = vcmp.eq.s32.totalorder %v998, %v2352
  %vm2355 = vcmp.eq.s32.totalorder %v1001, %v2352
  %vm2356 = vcmp.eq.s32.totalorder %v1004, %v2352
  %vm2357 = vcmp.eq.s32.totalorder %v1007, %v2352
  %vm2358 = vcmp.eq.s32.totalorder %v1010, %v2352
  %vm2359 = vcmp.eq.s32.totalorder %v1013, %v2352
  %vm2360 = vcmp.eq.s32.totalorder %v1016, %v2352
  %vm2361 = vcmp.eq.s32.totalorder %v1019, %v2352
  %vm2362 = vcmp.eq.s32.totalorder %v1022, %v2352
  %vm2363 = vcmp.eq.s32.totalorder %v1025, %v2352
  %vm2364 = vcmp.eq.s32.totalorder %v1028, %v2352
  %vm2365 = vcmp.eq.s32.totalorder %v1031, %v2352
  %vm2366 = vcmp.eq.s32.totalorder %v1034, %v2352
  %vm2367 = vcmp.eq.s32.totalorder %v1037, %v2352
  %vm2368 = vcmp.eq.s32.totalorder %v1040, %v2352
  %vm2369 = vcmp.eq.s32.totalorder %v1043, %v2352
  %vm2370 = vcmp.eq.s32.totalorder %v1046, %v2352
  %vm2371 = vcmp.eq.s32.totalorder %v1049, %v2352
  %vm2372 = vcmp.eq.s32.totalorder %v1052, %v2352
  %vm2373 = vcmp.eq.s32.totalorder %v1055, %v2352
  %vm2374 = vcmp.eq.s32.totalorder %v1058, %v2352
  %vm2375 = vcmp.eq.s32.totalorder %v1061, %v2352
  %vm2376 = vcmp.eq.s32.totalorder %v1064, %v2352
  %vm2377 = vcmp.eq.s32.totalorder %v1067, %v2352
  %vm2378 = vcmp.eq.s32.totalorder %v1070, %v2352
  %vm2379 = vcmp.eq.s32.totalorder %v1073, %v2352
  %vm2380 = vcmp.eq.s32.totalorder %v1076, %v2352
  %vm2381 = vcmp.eq.s32.totalorder %v1079, %v2352
  %vm2382 = vcmp.eq.s32.totalorder %v1082, %v2352
  %vm2383 = vcmp.eq.s32.totalorder %v1085, %v2352
  %vm2384 = vcmp.eq.s32.totalorder %v1088, %v2352
  %vm2385 = vcmp.eq.s32.totalorder %v1091, %v2352
  %vm2386 = vcmp.eq.s32.totalorder %v1094, %v2352
  %vm2387 = vcmp.eq.s32.totalorder %v1097, %v2352
  %vm2388 = vcmp.eq.s32.totalorder %v1100, %v2352
  %vm2389 = vcmp.eq.s32.totalorder %v1103, %v2352
  %vm2390 = vcmp.eq.s32.totalorder %v1106, %v2352
  %vm2391 = vcmp.eq.s32.totalorder %v1109, %v2352
  %vm2392 = vcmp.eq.s32.totalorder %v1112, %v2352
  %vm2393 = vcmp.eq.s32.totalorder %v1115, %v2352
  %vm2394 = vcmp.eq.s32.totalorder %v1118, %v2352
  %vm2395 = vcmp.eq.s32.totalorder %v1121, %v2352
  %vm2396 = vcmp.eq.s32.totalorder %v1124, %v2352
  %vm2397 = vcmp.eq.s32.totalorder %v1127, %v2352
  %vm2398 = vcmp.eq.s32.totalorder %v1130, %v2352
  %vm2399 = vcmp.eq.s32.totalorder %v1133, %v2352
  %vm2400 = vcmp.eq.s32.totalorder %v1136, %v2352
  %vm2401 = vcmp.eq.s32.totalorder %v1139, %v2352
  %vm2402 = vmand %vm944, %vm2353
  %vm2403 = vmand %vm945, %vm2354
  %vm2404 = vmand %vm946, %vm2355
  %vm2405 = vmand %vm947, %vm2356
  %vm2406 = vmand %vm948, %vm2357
  %vm2407 = vmand %vm949, %vm2358
  %vm2408 = vmand %vm950, %vm2359
  %vm2409 = vmand %vm951, %vm2360
  %vm2410 = vmand %vm952, %vm2361
  %vm2411 = vmand %vm953, %vm2362
  %vm2412 = vmand %vm954, %vm2363
  %vm2413 = vmand %vm955, %vm2364
  %vm2414 = vmand %vm956, %vm2365
  %vm2415 = vmand %vm957, %vm2366
  %vm2416 = vmand %vm958, %vm2367
  %vm2417 = vmand %vm959, %vm2368
  %vm2418 = vmand %vm960, %vm2369
  %vm2419 = vmand %vm961, %vm2370
  %vm2420 = vmand %vm962, %vm2371
  %vm2421 = vmand %vm963, %vm2372
  %vm2422 = vmand %vm964, %vm2373
  %vm2423 = vmand %vm965, %vm2374
  %vm2424 = vmand %vm966, %vm2375
  %vm2425 = vmand %vm967, %vm2376
  %vm2426 = vmand %vm968, %vm2377
  %vm2427 = vmand %vm969, %vm2378
  %vm2428 = vmand %vm970, %vm2379
  %vm2429 = vmand %vm971, %vm2380
  %vm2430 = vmand %vm972, %vm2381
  %vm2431 = vmand %vm973, %vm2382
  %vm2432 = vmand %vm974, %vm2383
  %vm2433 = vmand %vm975, %vm2384
  %vm2434 = vmand %vm976, %vm2385
  %vm2435 = vmand %vm977, %vm2386
  %vm2436 = vmand %vm978, %vm2387
  %vm2437 = vmand %vm979, %vm2388
  %vm2438 = vmand %vm980, %vm2389
  %vm2439 = vmand %vm981, %vm2390
  %vm2440 = vmand %vm982, %vm2391
  %vm2441 = vmand %vm983, %vm2392
  %vm2442 = vmand %vm984, %vm2393
  %vm2443 = vmand %vm985, %vm2394
  %vm2444 = vmand %vm986, %vm2395
  %vm2445 = vmand %vm987, %vm2396
  %vm2446 = vmand %vm988, %vm2397
  %vm2447 = vmand %vm989, %vm2398
  %vm2448 = vmand %vm990, %vm2399
  %vm2449 = vmand %vm991, %vm2400
  %vm2450 = vmand %vm992, %vm2401
  %vm2451 = vmand %vm2402, %vm1393
  %vm2452 = vmand %vm2403, %vm1394
  %vm2453 = vmand %vm2404, %vm1395
  %vm2454 = vmand %vm2405, %vm1396
  %vm2455 = vmand %vm2406, %vm1397
  %vm2456 = vmand %vm2407, %vm1398
  %vm2457 = vmand %vm2408, %vm1399
  %vm2458 = vmand %vm2409, %vm1400
  %vm2459 = vmand %vm2410, %vm1401
  %vm2460 = vmand %vm2411, %vm1402
  %vm2461 = vmand %vm2412, %vm1403
  %vm2462 = vmand %vm2413, %vm1404
  %vm2463 = vmand %vm2414, %vm1405
  %vm2464 = vmand %vm2415, %vm1406
  %vm2465 = vmand %vm2416, %vm1407
  %vm2466 = vmand %vm2417, %vm1408
  %vm2467 = vmand %vm2418, %vm1409
  %vm2468 = vmand %vm2419, %vm1410
  %vm2469 = vmand %vm2420, %vm1411
  %vm2470 = vmand %vm2421, %vm1412
  %vm2471 = vmand %vm2422, %vm1413
  %vm2472 = vmand %vm2423, %vm1414
  %vm2473 = vmand %vm2424, %vm1415
  %vm2474 = vmand %vm2425, %vm1416
  %vm2475 = vmand %vm2426, %vm1417
  %vm2476 = vmand %vm2427, %vm1418
  %vm2477 = vmand %vm2428, %vm1419
  %vm2478 = vmand %vm2429, %vm1420
  %vm2479 = vmand %vm2430, %vm1421
  %vm2480 = vmand %vm2431, %vm1422
  %vm2481 = vmand %vm2432, %vm1423
  %vm2482 = vmand %vm2433, %vm1424
  %vm2483 = vmand %vm2434, %vm1425
  %vm2484 = vmand %vm2435, %vm1426
  %vm2485 = vmand %vm2436, %vm1427
  %vm2486 = vmand %vm2437, %vm1428
  %vm2487 = vmand %vm2438, %vm1429
  %vm2488 = vmand %vm2439, %vm1430
  %vm2489 = vmand %vm2440, %vm1431
  %vm2490 = vmand %vm2441, %vm1432
  %vm2491 = vmand %vm2442, %vm1433
  %vm2492 = vmand %vm2443, %vm1434
  %vm2493 = vmand %vm2444, %vm1435
  %vm2494 = vmand %vm2445, %vm1436
  %vm2495 = vmand %vm2446, %vm1437
  %vm2496 = vmand %vm2447, %vm1438
  %vm2497 = vmand %vm2448, %vm1439
  %vm2498 = vmand %vm2449, %vm1440
  %vm2499 = vmand %vm2450, %vm1441
  %v2500 = vsel %vm2451, 1.0, 0.0
  %v2501 = vsel %vm2452, 1.0, 0.0
  %v2502 = vsel %vm2453, 1.0, 0.0
  %v2503 = vsel %vm2454, 1.0, 0.0
  %v2504 = vsel %vm2455, 1.0, 0.0
  %v2505 = vsel %vm2456, 1.0, 0.0
  %v2506 = vsel %vm2457, 1.0, 0.0
  %v2507 = vsel %vm2458, 1.0, 0.0
  %v2508 = vsel %vm2459, 1.0, 0.0
  %v2509 = vsel %vm2460, 1.0, 0.0
  %v2510 = vsel %vm2461, 1.0, 0.0
  %v2511 = vsel %vm2462, 1.0, 0.0
  %v2512 = vsel %vm2463, 1.0, 0.0
  %v2513 = vsel %vm2464, 1.0, 0.0
  %v2514 = vsel %vm2465, 1.0, 0.0
  %v2515 = vsel %vm2466, 1.0, 0.0
  %v2516 = vsel %vm2467, 1.0, 0.0
  %v2517 = vsel %vm2468, 1.0, 0.0
  %v2518 = vsel %vm2469, 1.0, 0.0
  %v2519 = vsel %vm2470, 1.0, 0.0
  %v2520 = vsel %vm2471, 1.0, 0.0
  %v2521 = vsel %vm2472, 1.0, 0.0
  %v2522 = vsel %vm2473, 1.0, 0.0
  %v2523 = vsel %vm2474, 1.0, 0.0
  %v2524 = vsel %vm2475, 1.0, 0.0
  %v2525 = vsel %vm2476, 1.0, 0.0
  %v2526 = vsel %vm2477, 1.0, 0.0
  %v2527 = vsel %vm2478, 1.0, 0.0
  %v2528 = vsel %vm2479, 1.0, 0.0
  %v2529 = vsel %vm2480, 1.0, 0.0
  %v2530 = vsel %vm2481, 1.0, 0.0
  %v2531 = vsel %vm2482, 1.0, 0.0
  %v2532 = vsel %vm2483, 1.0, 0.0
  %v2533 = vsel %vm2484, 1.0, 0.0
  %v2534 = vsel %vm2485, 1.0, 0.0
  %v2535 = vsel %vm2486, 1.0, 0.0
  %v2536 = vsel %vm2487, 1.0, 0.0
  %v2537 = vsel %vm2488, 1.0, 0.0
  %v2538 = vsel %vm2489, 1.0, 0.0
  %v2539 = vsel %vm2490, 1.0, 0.0
  %v2540 = vsel %vm2491, 1.0, 0.0
  %v2541 = vsel %vm2492, 1.0, 0.0
  %v2542 = vsel %vm2493, 1.0, 0.0
  %v2543 = vsel %vm2494, 1.0, 0.0
  %v2544 = vsel %vm2495, 1.0, 0.0
  %v2545 = vsel %vm2496, 1.0, 0.0
  %v2546 = vsel %vm2497, 1.0, 0.0
  %v2547 = vsel %vm2498, 1.0, 0.0
  %v2548 = vsel %vm2499, 1.0, 0.0
  %2549 = vmatprep.subr.mxu0 0.0
  %2550 = vmatpush1.msra.mxu0 %v2515
  %2551 = vmatprep.subr.mxu0 0.0
  %2552 = vmatpush1.msra.mxu0 %v2514
  %2553 = vmatprep.subr.mxu0 0.0
  %2554 = vmatpush1.msra.mxu0 %v2513
  %2555 = vmatprep.subr.mxu0 0.0
  %2556 = vmatpush1.msra.mxu0 %v2512
  %2557 = vmatprep.subr.mxu0 0.0
  %2558 = vmatpush1.msra.mxu0 %v2511
  %2559 = vmatprep.subr.mxu0 0.0
  %2560 = vmatpush1.msra.mxu0 %v2510
  %2561 = vmatprep.subr.mxu0 0.0
  %2562 = vmatpush1.msra.mxu0 %v2509
  %2563 = vmatprep.subr.mxu0 0.0
  %2564 = vmatpush1.msra.mxu0 %v2508
  %2565 = vmatprep.subr.mxu0 0.0
  %2566 = vmatpush1.msra.mxu0 %v2507
  %2567 = vmatprep.subr.mxu0 0.0
  %2568 = vmatpush1.msra.mxu0 %v2506
  %2569 = vmatprep.subr.mxu0 0.0
  %2570 = vmatpush1.msra.mxu0 %v2505
  %2571 = vmatprep.subr.mxu0 0.0
  %2572 = vmatpush1.msra.mxu0 %v2504
  %2573 = vmatprep.subr.mxu0 0.0
  %2574 = vmatpush1.msra.mxu0 %v2503
  %2575 = vmatprep.subr.mxu0 0.0
  %2576 = vmatpush1.msra.mxu0 %v2502
  %2577 = vmatprep.subr.mxu0 0.0
  %2578 = vmatpush1.msra.mxu0 %v2501
  %2579 = vmatprep.subr.mxu0 0.0
  %2580 = vmatpush1.msra.mxu0 %v2500
  %2581 = vmatprep.subr.mxu0 0.0
  %2582 = vmatpush2.msra.mxu0 %v2531
  %2583 = vmatprep.subr.mxu0 0.0
  %2584 = vmatpush2.msra.mxu0 %v2530
  %2585 = vmatprep.subr.mxu0 0.0
  %2586 = vmatpush2.msra.mxu0 %v2529
  %2587 = vmatprep.subr.mxu0 0.0
  %2588 = vmatpush2.msra.mxu0 %v2528
  %2589 = vmatprep.subr.mxu0 0.0
  %2590 = vmatpush2.msra.mxu0 %v2527
  %2591 = vmatprep.subr.mxu0 0.0
  %2592 = vmatpush2.msra.mxu0 %v2526
  %2593 = vmatprep.subr.mxu0 0.0
  %2594 = vmatpush2.msra.mxu0 %v2525
  %2595 = vmatprep.subr.mxu0 0.0
  %2596 = vmatpush2.msra.mxu0 %v2524
  %2597 = vmatprep.subr.mxu0 0.0
  %2598 = vmatpush2.msra.mxu0 %v2523
  %2599 = vmatprep.subr.mxu0 0.0
  %2600 = vmatpush2.msra.mxu0 %v2522
  %2601 = vmatprep.subr.mxu0 0.0
  %2602 = vmatpush2.msra.mxu0 %v2521
  %2603 = vmatprep.subr.mxu0 0.0
  %2604 = vmatpush2.msra.mxu0 %v2520
  %2605 = vmatprep.subr.mxu0 0.0
  %2606 = vmatpush2.msra.mxu0 %v2519
  %2607 = vmatprep.subr.mxu0 0.0
  %2608 = vmatpush2.msra.mxu0 %v2518
  %2609 = vmatprep.subr.mxu0 0.0
  %2610 = vmatpush2.msra.mxu0 %v2517
  %2611 = vmatprep.subr.mxu0 0.0
  %2612 = vmatpush2.msra.mxu0 %v2516
  %2613 = vmatprep.mubr.f32.mxu0 %v632
  %2614 = vmatmul.mubr.f32.gmra.mxu0 %v631
  %v2615 = vpop.f32.mrf.mxu0
  %v2616 = vadd.f32 0.0, %v2615
  %v2617 = vpop.f32.mrf.mxu0
  %2618 = vmatprep.mubr.f32.mxu0 %v636
  %2619 = vmatmul.mubr.f32.gmra.mxu0 %v635
  %v2620 = vpop.f32.mrf.mxu0
  %v2621 = vadd.f32 0.0, %v2620
  %v2622 = vpop.f32.mrf.mxu0
  %2623 = vdwg.mxu0
  %2624 = vmatprep.subr.mxu0 0.0
  %2625 = vmatpush1.msra.mxu0 %v2547
  %2626 = vmatprep.subr.mxu0 0.0
  %2627 = vmatpush1.msra.mxu0 %v2546
  %2628 = vmatprep.subr.mxu0 0.0
  %2629 = vmatpush1.msra.mxu0 %v2545
  %2630 = vmatprep.subr.mxu0 0.0
  %2631 = vmatpush1.msra.mxu0 %v2544
  %2632 = vmatprep.subr.mxu0 0.0
  %2633 = vmatpush1.msra.mxu0 %v2543
  %2634 = vmatprep.subr.mxu0 0.0
  %2635 = vmatpush1.msra.mxu0 %v2542
  %2636 = vmatprep.subr.mxu0 0.0
  %2637 = vmatpush1.msra.mxu0 %v2541
  %2638 = vmatprep.subr.mxu0 0.0
  %2639 = vmatpush1.msra.mxu0 %v2540
  %2640 = vmatprep.subr.mxu0 0.0
  %2641 = vmatpush1.msra.mxu0 %v2539
  %2642 = vmatprep.subr.mxu0 0.0
  %2643 = vmatpush1.msra.mxu0 %v2538
  %2644 = vmatprep.subr.mxu0 0.0
  %2645 = vmatpush1.msra.mxu0 %v2537
  %2646 = vmatprep.subr.mxu0 0.0
  %2647 = vmatpush1.msra.mxu0 %v2536
  %2648 = vmatprep.subr.mxu0 0.0
  %2649 = vmatpush1.msra.mxu0 %v2535
  %2650 = vmatprep.subr.mxu0 0.0
  %2651 = vmatpush1.msra.mxu0 %v2534
  %2652 = vmatprep.subr.mxu0 0.0
  %2653 = vmatpush1.msra.mxu0 %v2533
  %2654 = vmatprep.subr.mxu0 0.0
  %2655 = vmatpush1.msra.mxu0 %v2532
  %2656 = vmatprep.subr.mxu0 0.0
  %2657 = vmatpush2.msra.mxu0 0.0
  %2658 = vmatprep.subr.mxu0 0.0
  %2659 = vmatpush2.msra.mxu0 0.0
  %2660 = vmatprep.subr.mxu0 0.0
  %2661 = vmatpush2.msra.mxu0 0.0
  %2662 = vmatprep.subr.mxu0 0.0
  %2663 = vmatpush2.msra.mxu0 0.0
  %2664 = vmatprep.subr.mxu0 0.0
  %2665 = vmatpush2.msra.mxu0 0.0
  %2666 = vmatprep.subr.mxu0 0.0
  %2667 = vmatpush2.msra.mxu0 0.0
  %2668 = vmatprep.subr.mxu0 0.0
  %2669 = vmatpush2.msra.mxu0 0.0
  %2670 = vmatprep.subr.mxu0 0.0
  %2671 = vmatpush2.msra.mxu0 0.0
  %2672 = vmatprep.subr.mxu0 0.0
  %2673 = vmatpush2.msra.mxu0 0.0
  %2674 = vmatprep.subr.mxu0 0.0
  %2675 = vmatpush2.msra.mxu0 0.0
  %2676 = vmatprep.subr.mxu0 0.0
  %2677 = vmatpush2.msra.mxu0 0.0
  %2678 = vmatprep.subr.mxu0 0.0
  %2679 = vmatpush2.msra.mxu0 0.0
  %2680 = vmatprep.subr.mxu0 0.0
  %2681 = vmatpush2.msra.mxu0 0.0
  %2682 = vmatprep.subr.mxu0 0.0
  %2683 = vmatpush2.msra.mxu0 0.0
  %2684 = vmatprep.subr.mxu0 0.0
  %2685 = vmatpush2.msra.mxu0 0.0
  %2686 = vmatprep.subr.mxu0 0.0
  %2687 = vmatpush2.msra.mxu0 %v2548
  %2688 = vmatprep.mubr.f32.mxu0 %v1541
  %2689 = vmatmul.mubr.f32.gmra.mxu0 %v633
  %v2690 = vpop.f32.mrf.mxu0
  %v2691 = vadd.f32 %v2616, %v2690
  %v2692 = vpop.f32.mrf.mxu0
  %2693 = vmatprep.mubr.f32.mxu0 %v1544
  %2694 = vmatmul.mubr.f32.gmra.mxu0 %v637
  %v2695 = vpop.f32.mrf.mxu0
  %v2696 = vadd.f32 %v2621, %v2695
  %v2697 = vpop.f32.mrf.mxu0
  %2698 = vdwg.mxu0
  %s2699 = scalar_lea.vmem %s9, 48
  %v2700 = vld [vmem:[%s2699] sm:$0xff]
  %v2701 = vld [vmem:[%s2699 + $0x8] sm:$0xff]
  %2703 = vset.pattern.permute.xlu0 0
  %2704 = vperm.xlu0 %2703, %v2700
  %v2705 = vpop.permute.xlu0 %2704
  %2708 = vset.pattern.permute.xlu0 0
  %2709 = vperm.xlu0 %2708, %v2701
  %v2710 = vpop.permute.xlu0 %2709
  %v2712 = vmul.f32 %v2691, %v2705
  %v2713 = vmul.f32 %v2696, %v2710
  %v2714 = vadd.f32 %v2346, %v2712
  %v2715 = vadd.f32 %v2347, %v2713
  %vm2716 = vmand %vm2402, %vm1715
  %vm2717 = vmand %vm2403, %vm1716
  %vm2718 = vmand %vm2404, %vm1717
  %vm2719 = vmand %vm2405, %vm1718
  %vm2720 = vmand %vm2406, %vm1719
  %vm2721 = vmand %vm2407, %vm1720
  %vm2722 = vmand %vm2408, %vm1721
  %vm2723 = vmand %vm2409, %vm1722
  %vm2724 = vmand %vm2410, %vm1723
  %vm2725 = vmand %vm2411, %vm1724
  %vm2726 = vmand %vm2412, %vm1725
  %vm2727 = vmand %vm2413, %vm1726
  %vm2728 = vmand %vm2414, %vm1727
  %vm2729 = vmand %vm2415, %vm1728
  %vm2730 = vmand %vm2416, %vm1729
  %vm2731 = vmand %vm2417, %vm1730
  %vm2732 = vmand %vm2418, %vm1731
  %vm2733 = vmand %vm2419, %vm1732
  %vm2734 = vmand %vm2420, %vm1733
  %vm2735 = vmand %vm2421, %vm1734
  %vm2736 = vmand %vm2422, %vm1735
  %vm2737 = vmand %vm2423, %vm1736
  %vm2738 = vmand %vm2424, %vm1737
  %vm2739 = vmand %vm2425, %vm1738
  %vm2740 = vmand %vm2426, %vm1739
  %vm2741 = vmand %vm2427, %vm1740
  %vm2742 = vmand %vm2428, %vm1741
  %vm2743 = vmand %vm2429, %vm1742
  %vm2744 = vmand %vm2430, %vm1743
  %vm2745 = vmand %vm2431, %vm1744
  %vm2746 = vmand %vm2432, %vm1745
  %vm2747 = vmand %vm2433, %vm1746
  %vm2748 = vmand %vm2434, %vm1747
  %vm2749 = vmand %vm2435, %vm1748
  %vm2750 = vmand %vm2436, %vm1749
  %vm2751 = vmand %vm2437, %vm1750
  %vm2752 = vmand %vm2438, %vm1751
  %vm2753 = vmand %vm2439, %vm1752
  %vm2754 = vmand %vm2440, %vm1753
  %vm2755 = vmand %vm2441, %vm1754
  %vm2756 = vmand %vm2442, %vm1755
  %vm2757 = vmand %vm2443, %vm1756
  %vm2758 = vmand %vm2444, %vm1757
  %vm2759 = vmand %vm2445, %vm1758
  %vm2760 = vmand %vm2446, %vm1759
  %vm2761 = vmand %vm2447, %vm1760
  %vm2762 = vmand %vm2448, %vm1761
  %vm2763 = vmand %vm2449, %vm1762
  %vm2764 = vmand %vm2450, %vm1763
  %v2765 = vsel %vm2716, 1.0, 0.0
  %v2766 = vsel %vm2717, 1.0, 0.0
  %v2767 = vsel %vm2718, 1.0, 0.0
  %v2768 = vsel %vm2719, 1.0, 0.0
  %v2769 = vsel %vm2720, 1.0, 0.0
  %v2770 = vsel %vm2721, 1.0, 0.0
  %v2771 = vsel %vm2722, 1.0, 0.0
  %v2772 = vsel %vm2723, 1.0, 0.0
  %v2773 = vsel %vm2724, 1.0, 0.0
  %v2774 = vsel %vm2725, 1.0, 0.0
  %v2775 = vsel %vm2726, 1.0, 0.0
  %v2776 = vsel %vm2727, 1.0, 0.0
  %v2777 = vsel %vm2728, 1.0, 0.0
  %v2778 = vsel %vm2729, 1.0, 0.0
  %v2779 = vsel %vm2730, 1.0, 0.0
  %v2780 = vsel %vm2731, 1.0, 0.0
  %v2781 = vsel %vm2732, 1.0, 0.0
  %v2782 = vsel %vm2733, 1.0, 0.0
  %v2783 = vsel %vm2734, 1.0, 0.0
  %v2784 = vsel %vm2735, 1.0, 0.0
  %v2785 = vsel %vm2736, 1.0, 0.0
  %v2786 = vsel %vm2737, 1.0, 0.0
  %v2787 = vsel %vm2738, 1.0, 0.0
  %v2788 = vsel %vm2739, 1.0, 0.0
  %v2789 = vsel %vm2740, 1.0, 0.0
  %v2790 = vsel %vm2741, 1.0, 0.0
  %v2791 = vsel %vm2742, 1.0, 0.0
  %v2792 = vsel %vm2743, 1.0, 0.0
  %v2793 = vsel %vm2744, 1.0, 0.0
  %v2794 = vsel %vm2745, 1.0, 0.0
  %v2795 = vsel %vm2746, 1.0, 0.0
  %v2796 = vsel %vm2747, 1.0, 0.0
  %v2797 = vsel %vm2748, 1.0, 0.0
  %v2798 = vsel %vm2749, 1.0, 0.0
  %v2799 = vsel %vm2750, 1.0, 0.0
  %v2800 = vsel %vm2751, 1.0, 0.0
  %v2801 = vsel %vm2752, 1.0, 0.0
  %v2802 = vsel %vm2753, 1.0, 0.0
  %v2803 = vsel %vm2754, 1.0, 0.0
  %v2804 = vsel %vm2755, 1.0, 0.0
  %v2805 = vsel %vm2756, 1.0, 0.0
  %v2806 = vsel %vm2757, 1.0, 0.0
  %v2807 = vsel %vm2758, 1.0, 0.0
  %v2808 = vsel %vm2759, 1.0, 0.0
  %v2809 = vsel %vm2760, 1.0, 0.0
  %v2810 = vsel %vm2761, 1.0, 0.0
  %v2811 = vsel %vm2762, 1.0, 0.0
  %v2812 = vsel %vm2763, 1.0, 0.0
  %v2813 = vsel %vm2764, 1.0, 0.0
  %2814 = vmatprep.subr.mxu0 0.0
  %2815 = vmatpush1.msra.mxu0 %v2780
  %2816 = vmatprep.subr.mxu0 0.0
  %2817 = vmatpush1.msra.mxu0 %v2779
  %2818 = vmatprep.subr.mxu0 0.0
  %2819 = vmatpush1.msra.mxu0 %v2778
  %2820 = vmatprep.subr.mxu0 0.0
  %2821 = vmatpush1.msra.mxu0 %v2777
  %2822 = vmatprep.subr.mxu0 0.0
  %2823 = vmatpush1.msra.mxu0 %v2776
  %2824 = vmatprep.subr.mxu0 0.0
  %2825 = vmatpush1.msra.mxu0 %v2775
  %2826 = vmatprep.subr.mxu0 0.0
  %2827 = vmatpush1.msra.mxu0 %v2774
  %2828 = vmatprep.subr.mxu0 0.0
  %2829 = vmatpush1.msra.mxu0 %v2773
  %2830 = vmatprep.subr.mxu0 0.0
  %2831 = vmatpush1.msra.mxu0 %v2772
  %2832 = vmatprep.subr.mxu0 0.0
  %2833 = vmatpush1.msra.mxu0 %v2771
  %2834 = vmatprep.subr.mxu0 0.0
  %2835 = vmatpush1.msra.mxu0 %v2770
  %2836 = vmatprep.subr.mxu0 0.0
  %2837 = vmatpush1.msra.mxu0 %v2769
  %2838 = vmatprep.subr.mxu0 0.0
  %2839 = vmatpush1.msra.mxu0 %v2768
  %2840 = vmatprep.subr.mxu0 0.0
  %2841 = vmatpush1.msra.mxu0 %v2767
  %2842 = vmatprep.subr.mxu0 0.0
  %2843 = vmatpush1.msra.mxu0 %v2766
  %2844 = vmatprep.subr.mxu0 0.0
  %2845 = vmatpush1.msra.mxu0 %v2765
  %2846 = vmatprep.subr.mxu0 0.0
  %2847 = vmatpush2.msra.mxu0 %v2796
  %2848 = vmatprep.subr.mxu0 0.0
  %2849 = vmatpush2.msra.mxu0 %v2795
  %2850 = vmatprep.subr.mxu0 0.0
  %2851 = vmatpush2.msra.mxu0 %v2794
  %2852 = vmatprep.subr.mxu0 0.0
  %2853 = vmatpush2.msra.mxu0 %v2793
  %2854 = vmatprep.subr.mxu0 0.0
  %2855 = vmatpush2.msra.mxu0 %v2792
  %2856 = vmatprep.subr.mxu0 0.0
  %2857 = vmatpush2.msra.mxu0 %v2791
  %2858 = vmatprep.subr.mxu0 0.0
  %2859 = vmatpush2.msra.mxu0 %v2790
  %2860 = vmatprep.subr.mxu0 0.0
  %2861 = vmatpush2.msra.mxu0 %v2789
  %2862 = vmatprep.subr.mxu0 0.0
  %2863 = vmatpush2.msra.mxu0 %v2788
  %2864 = vmatprep.subr.mxu0 0.0
  %2865 = vmatpush2.msra.mxu0 %v2787
  %2866 = vmatprep.subr.mxu0 0.0
  %2867 = vmatpush2.msra.mxu0 %v2786
  %2868 = vmatprep.subr.mxu0 0.0
  %2869 = vmatpush2.msra.mxu0 %v2785
  %2870 = vmatprep.subr.mxu0 0.0
  %2871 = vmatpush2.msra.mxu0 %v2784
  %2872 = vmatprep.subr.mxu0 0.0
  %2873 = vmatpush2.msra.mxu0 %v2783
  %2874 = vmatprep.subr.mxu0 0.0
  %2875 = vmatpush2.msra.mxu0 %v2782
  %2876 = vmatprep.subr.mxu0 0.0
  %2877 = vmatpush2.msra.mxu0 %v2781
  %2878 = vmatprep.mubr.f32.mxu0 %v632
  %2879 = vmatmul.mubr.f32.gmra.mxu0 %v631
  %v2880 = vpop.f32.mrf.mxu0
  %v2881 = vadd.f32 0.0, %v2880
  %v2882 = vpop.f32.mrf.mxu0
  %2883 = vmatprep.mubr.f32.mxu0 %v636
  %2884 = vmatmul.mubr.f32.gmra.mxu0 %v635
  %v2885 = vpop.f32.mrf.mxu0
  %v2886 = vadd.f32 0.0, %v2885
  %v2887 = vpop.f32.mrf.mxu0
  %2888 = vdwg.mxu0
  %2889 = vmatprep.subr.mxu0 0.0
  %2890 = vmatpush1.msra.mxu0 %v2812
  %2891 = vmatprep.subr.mxu0 0.0
  %2892 = vmatpush1.msra.mxu0 %v2811
  %2893 = vmatprep.subr.mxu0 0.0
  %2894 = vmatpush1.msra.mxu0 %v2810
  %2895 = vmatprep.subr.mxu0 0.0
  %2896 = vmatpush1.msra.mxu0 %v2809
  %2897 = vmatprep.subr.mxu0 0.0
  %2898 = vmatpush1.msra.mxu0 %v2808
  %2899 = vmatprep.subr.mxu0 0.0
  %2900 = vmatpush1.msra.mxu0 %v2807
  %2901 = vmatprep.subr.mxu0 0.0
  %2902 = vmatpush1.msra.mxu0 %v2806
  %2903 = vmatprep.subr.mxu0 0.0
  %2904 = vmatpush1.msra.mxu0 %v2805
  %2905 = vmatprep.subr.mxu0 0.0
  %2906 = vmatpush1.msra.mxu0 %v2804
  %2907 = vmatprep.subr.mxu0 0.0
  %2908 = vmatpush1.msra.mxu0 %v2803
  %2909 = vmatprep.subr.mxu0 0.0
  %2910 = vmatpush1.msra.mxu0 %v2802
  %2911 = vmatprep.subr.mxu0 0.0
  %2912 = vmatpush1.msra.mxu0 %v2801
  %2913 = vmatprep.subr.mxu0 0.0
  %2914 = vmatpush1.msra.mxu0 %v2800
  %2915 = vmatprep.subr.mxu0 0.0
  %2916 = vmatpush1.msra.mxu0 %v2799
  %2917 = vmatprep.subr.mxu0 0.0
  %2918 = vmatpush1.msra.mxu0 %v2798
  %2919 = vmatprep.subr.mxu0 0.0
  %2920 = vmatpush1.msra.mxu0 %v2797
  %2921 = vmatprep.subr.mxu0 0.0
  %2922 = vmatpush2.msra.mxu0 0.0
  %2923 = vmatprep.subr.mxu0 0.0
  %2924 = vmatpush2.msra.mxu0 0.0
  %2925 = vmatprep.subr.mxu0 0.0
  %2926 = vmatpush2.msra.mxu0 0.0
  %2927 = vmatprep.subr.mxu0 0.0
  %2928 = vmatpush2.msra.mxu0 0.0
  %2929 = vmatprep.subr.mxu0 0.0
  %2930 = vmatpush2.msra.mxu0 0.0
  %2931 = vmatprep.subr.mxu0 0.0
  %2932 = vmatpush2.msra.mxu0 0.0
  %2933 = vmatprep.subr.mxu0 0.0
  %2934 = vmatpush2.msra.mxu0 0.0
  %2935 = vmatprep.subr.mxu0 0.0
  %2936 = vmatpush2.msra.mxu0 0.0
  %2937 = vmatprep.subr.mxu0 0.0
  %2938 = vmatpush2.msra.mxu0 0.0
  %2939 = vmatprep.subr.mxu0 0.0
  %2940 = vmatpush2.msra.mxu0 0.0
  %2941 = vmatprep.subr.mxu0 0.0
  %2942 = vmatpush2.msra.mxu0 0.0
  %2943 = vmatprep.subr.mxu0 0.0
  %2944 = vmatpush2.msra.mxu0 0.0
  %2945 = vmatprep.subr.mxu0 0.0
  %2946 = vmatpush2.msra.mxu0 0.0
  %2947 = vmatprep.subr.mxu0 0.0
  %2948 = vmatpush2.msra.mxu0 0.0
  %2949 = vmatprep.subr.mxu0 0.0
  %2950 = vmatpush2.msra.mxu0 0.0
  %2951 = vmatprep.subr.mxu0 0.0
  %2952 = vmatpush2.msra.mxu0 %v2813
  %2953 = vmatprep.mubr.f32.mxu0 %v1541
  %2954 = vmatmul.mubr.f32.gmra.mxu0 %v633
  %v2955 = vpop.f32.mrf.mxu0
  %v2956 = vadd.f32 %v2881, %v2955
  %v2957 = vpop.f32.mrf.mxu0
  %2958 = vmatprep.mubr.f32.mxu0 %v1544
  %2959 = vmatmul.mubr.f32.gmra.mxu0 %v637
  %v2960 = vpop.f32.mrf.mxu0
  %v2961 = vadd.f32 %v2886, %v2960
  %v2962 = vpop.f32.mrf.mxu0
  %2963 = vdwg.mxu0
  %s2964 = scalar_lea.vmem %s9, 64
  %v2965 = vld [vmem:[%s2964] sm:$0xff]
  %v2966 = vld [vmem:[%s2964 + $0x8] sm:$0xff]
  %2968 = vset.pattern.permute.xlu0 0
  %2969 = vperm.xlu0 %2968, %v2965
  %v2970 = vpop.permute.xlu0 %2969
  %2973 = vset.pattern.permute.xlu0 0
  %2974 = vperm.xlu0 %2973, %v2966
  %v2975 = vpop.permute.xlu0 %2974
  %v2977 = vmul.f32 %v2956, %v2970
  %v2978 = vmul.f32 %v2961, %v2975
  %v2979 = vadd.f32 %v2714, %v2977
  %v2980 = vadd.f32 %v2715, %v2978
  %vm2981 = vmand %vm2402, %vm2034
  %vm2982 = vmand %vm2403, %vm2035
  %vm2983 = vmand %vm2404, %vm2036
  %vm2984 = vmand %vm2405, %vm2037
  %vm2985 = vmand %vm2406, %vm2038
  %vm2986 = vmand %vm2407, %vm2039
  %vm2987 = vmand %vm2408, %vm2040
  %vm2988 = vmand %vm2409, %vm2041
  %vm2989 = vmand %vm2410, %vm2042
  %vm2990 = vmand %vm2411, %vm2043
  %vm2991 = vmand %vm2412, %vm2044
  %vm2992 = vmand %vm2413, %vm2045
  %vm2993 = vmand %vm2414, %vm2046
  %vm2994 = vmand %vm2415, %vm2047
  %vm2995 = vmand %vm2416, %vm2048
  %vm2996 = vmand %vm2417, %vm2049
  %vm2997 = vmand %vm2418, %vm2050
  %vm2998 = vmand %vm2419, %vm2051
  %vm2999 = vmand %vm2420, %vm2052
  %vm3000 = vmand %vm2421, %vm2053
  %vm3001 = vmand %vm2422, %vm2054
  %vm3002 = vmand %vm2423, %vm2055
  %vm3003 = vmand %vm2424, %vm2056
  %vm3004 = vmand %vm2425, %vm2057
  %vm3005 = vmand %vm2426, %vm2058
  %vm3006 = vmand %vm2427, %vm2059
  %vm3007 = vmand %vm2428, %vm2060
  %vm3008 = vmand %vm2429, %vm2061
  %vm3009 = vmand %vm2430, %vm2062
  %vm3010 = vmand %vm2431, %vm2063
  %vm3011 = vmand %vm2432, %vm2064
  %vm3012 = vmand %vm2433, %vm2065
  %vm3013 = vmand %vm2434, %vm2066
  %vm3014 = vmand %vm2435, %vm2067
  %vm3015 = vmand %vm2436, %vm2068
  %vm3016 = vmand %vm2437, %vm2069
  %vm3017 = vmand %vm2438, %vm2070
  %vm3018 = vmand %vm2439, %vm2071
  %vm3019 = vmand %vm2440, %vm2072
  %vm3020 = vmand %vm2441, %vm2073
  %vm3021 = vmand %vm2442, %vm2074
  %vm3022 = vmand %vm2443, %vm2075
  %vm3023 = vmand %vm2444, %vm2076
  %vm3024 = vmand %vm2445, %vm2077
  %vm3025 = vmand %vm2446, %vm2078
  %vm3026 = vmand %vm2447, %vm2079
  %vm3027 = vmand %vm2448, %vm2080
  %vm3028 = vmand %vm2449, %vm2081
  %vm3029 = vmand %vm2450, %vm2082
  %v3030 = vsel %vm2981, 1.0, 0.0
  %v3031 = vsel %vm2982, 1.0, 0.0
  %v3032 = vsel %vm2983, 1.0, 0.0
  %v3033 = vsel %vm2984, 1.0, 0.0
  %v3034 = vsel %vm2985, 1.0, 0.0
  %v3035 = vsel %vm2986, 1.0, 0.0
  %v3036 = vsel %vm2987, 1.0, 0.0
  %v3037 = vsel %vm2988, 1.0, 0.0
  %v3038 = vsel %vm2989, 1.0, 0.0
  %v3039 = vsel %vm2990, 1.0, 0.0
  %v3040 = vsel %vm2991, 1.0, 0.0
  %v3041 = vsel %vm2992, 1.0, 0.0
  %v3042 = vsel %vm2993, 1.0, 0.0
  %v3043 = vsel %vm2994, 1.0, 0.0
  %v3044 = vsel %vm2995, 1.0, 0.0
  %v3045 = vsel %vm2996, 1.0, 0.0
  %v3046 = vsel %vm2997, 1.0, 0.0
  %v3047 = vsel %vm2998, 1.0, 0.0
  %v3048 = vsel %vm2999, 1.0, 0.0
  %v3049 = vsel %vm3000, 1.0, 0.0
  %v3050 = vsel %vm3001, 1.0, 0.0
  %v3051 = vsel %vm3002, 1.0, 0.0
  %v3052 = vsel %vm3003, 1.0, 0.0
  %v3053 = vsel %vm3004, 1.0, 0.0
  %v3054 = vsel %vm3005, 1.0, 0.0
  %v3055 = vsel %vm3006, 1.0, 0.0
  %v3056 = vsel %vm3007, 1.0, 0.0
  %v3057 = vsel %vm3008, 1.0, 0.0
  %v3058 = vsel %vm3009, 1.0, 0.0
  %v3059 = vsel %vm3010, 1.0, 0.0
  %v3060 = vsel %vm3011, 1.0, 0.0
  %v3061 = vsel %vm3012, 1.0, 0.0
  %v3062 = vsel %vm3013, 1.0, 0.0
  %v3063 = vsel %vm3014, 1.0, 0.0
  %v3064 = vsel %vm3015, 1.0, 0.0
  %v3065 = vsel %vm3016, 1.0, 0.0
  %v3066 = vsel %vm3017, 1.0, 0.0
  %v3067 = vsel %vm3018, 1.0, 0.0
  %v3068 = vsel %vm3019, 1.0, 0.0
  %v3069 = vsel %vm3020, 1.0, 0.0
  %v3070 = vsel %vm3021, 1.0, 0.0
  %v3071 = vsel %vm3022, 1.0, 0.0
  %v3072 = vsel %vm3023, 1.0, 0.0
  %v3073 = vsel %vm3024, 1.0, 0.0
  %v3074 = vsel %vm3025, 1.0, 0.0
  %v3075 = vsel %vm3026, 1.0, 0.0
  %v3076 = vsel %vm3027, 1.0, 0.0
  %v3077 = vsel %vm3028, 1.0, 0.0
  %v3078 = vsel %vm3029, 1.0, 0.0
  %3079 = vmatprep.subr.mxu0 0.0
  %3080 = vmatpush1.msra.mxu0 %v3045
  %3081 = vmatprep.subr.mxu0 0.0
  %3082 = vmatpush1.msra.mxu0 %v3044
  %3083 = vmatprep.subr.mxu0 0.0
  %3084 = vmatpush1.msra.mxu0 %v3043
  %3085 = vmatprep.subr.mxu0 0.0
  %3086 = vmatpush1.msra.mxu0 %v3042
  %3087 = vmatprep.subr.mxu0 0.0
  %3088 = vmatpush1.msra.mxu0 %v3041
  %3089 = vmatprep.subr.mxu0 0.0
  %3090 = vmatpush1.msra.mxu0 %v3040
  %3091 = vmatprep.subr.mxu0 0.0
  %3092 = vmatpush1.msra.mxu0 %v3039
  %3093 = vmatprep.subr.mxu0 0.0
  %3094 = vmatpush1.msra.mxu0 %v3038
  %3095 = vmatprep.subr.mxu0 0.0
  %3096 = vmatpush1.msra.mxu0 %v3037
  %3097 = vmatprep.subr.mxu0 0.0
  %3098 = vmatpush1.msra.mxu0 %v3036
  %3099 = vmatprep.subr.mxu0 0.0
  %3100 = vmatpush1.msra.mxu0 %v3035
  %3101 = vmatprep.subr.mxu0 0.0
  %3102 = vmatpush1.msra.mxu0 %v3034
  %3103 = vmatprep.subr.mxu0 0.0
  %3104 = vmatpush1.msra.mxu0 %v3033
  %3105 = vmatprep.subr.mxu0 0.0
  %3106 = vmatpush1.msra.mxu0 %v3032
  %3107 = vmatprep.subr.mxu0 0.0
  %3108 = vmatpush1.msra.mxu0 %v3031
  %3109 = vmatprep.subr.mxu0 0.0
  %3110 = vmatpush1.msra.mxu0 %v3030
  %3111 = vmatprep.subr.mxu0 0.0
  %3112 = vmatpush2.msra.mxu0 %v3061
  %3113 = vmatprep.subr.mxu0 0.0
  %3114 = vmatpush2.msra.mxu0 %v3060
  %3115 = vmatprep.subr.mxu0 0.0
  %3116 = vmatpush2.msra.mxu0 %v3059
  %3117 = vmatprep.subr.mxu0 0.0
  %3118 = vmatpush2.msra.mxu0 %v3058
  %3119 = vmatprep.subr.mxu0 0.0
  %3120 = vmatpush2.msra.mxu0 %v3057
  %3121 = vmatprep.subr.mxu0 0.0
  %3122 = vmatpush2.msra.mxu0 %v3056
  %3123 = vmatprep.subr.mxu0 0.0
  %3124 = vmatpush2.msra.mxu0 %v3055
  %3125 = vmatprep.subr.mxu0 0.0
  %3126 = vmatpush2.msra.mxu0 %v3054
  %3127 = vmatprep.subr.mxu0 0.0
  %3128 = vmatpush2.msra.mxu0 %v3053
  %3129 = vmatprep.subr.mxu0 0.0
  %3130 = vmatpush2.msra.mxu0 %v3052
  %3131 = vmatprep.subr.mxu0 0.0
  %3132 = vmatpush2.msra.mxu0 %v3051
  %3133 = vmatprep.subr.mxu0 0.0
  %3134 = vmatpush2.msra.mxu0 %v3050
  %3135 = vmatprep.subr.mxu0 0.0
  %3136 = vmatpush2.msra.mxu0 %v3049
  %3137 = vmatprep.subr.mxu0 0.0
  %3138 = vmatpush2.msra.mxu0 %v3048
  %3139 = vmatprep.subr.mxu0 0.0
  %3140 = vmatpush2.msra.mxu0 %v3047
  %3141 = vmatprep.subr.mxu0 0.0
  %3142 = vmatpush2.msra.mxu0 %v3046
  %3143 = vmatprep.mubr.f32.mxu0 %v632
  %3144 = vmatmul.mubr.f32.gmra.mxu0 %v631
  %v3145 = vpop.f32.mrf.mxu0
  %v3146 = vadd.f32 0.0, %v3145
  %v3147 = vpop.f32.mrf.mxu0
  %3148 = vmatprep.mubr.f32.mxu0 %v636
  %3149 = vmatmul.mubr.f32.gmra.mxu0 %v635
  %v3150 = vpop.f32.mrf.mxu0
  %v3151 = vadd.f32 0.0, %v3150
  %v3152 = vpop.f32.mrf.mxu0
  %3153 = vdwg.mxu0
  %3154 = vmatprep.subr.mxu0 0.0
  %3155 = vmatpush1.msra.mxu0 %v3077
  %3156 = vmatprep.subr.mxu0 0.0
  %3157 = vmatpush1.msra.mxu0 %v3076
  %3158 = vmatprep.subr.mxu0 0.0
  %3159 = vmatpush1.msra.mxu0 %v3075
  %3160 = vmatprep.subr.mxu0 0.0
  %3161 = vmatpush1.msra.mxu0 %v3074
  %3162 = vmatprep.subr.mxu0 0.0
  %3163 = vmatpush1.msra.mxu0 %v3073
  %3164 = vmatprep.subr.mxu0 0.0
  %3165 = vmatpush1.msra.mxu0 %v3072
  %3166 = vmatprep.subr.mxu0 0.0
  %3167 = vmatpush1.msra.mxu0 %v3071
  %3168 = vmatprep.subr.mxu0 0.0
  %3169 = vmatpush1.msra.mxu0 %v3070
  %3170 = vmatprep.subr.mxu0 0.0
  %3171 = vmatpush1.msra.mxu0 %v3069
  %3172 = vmatprep.subr.mxu0 0.0
  %3173 = vmatpush1.msra.mxu0 %v3068
  %3174 = vmatprep.subr.mxu0 0.0
  %3175 = vmatpush1.msra.mxu0 %v3067
  %3176 = vmatprep.subr.mxu0 0.0
  %3177 = vmatpush1.msra.mxu0 %v3066
  %3178 = vmatprep.subr.mxu0 0.0
  %3179 = vmatpush1.msra.mxu0 %v3065
  %3180 = vmatprep.subr.mxu0 0.0
  %3181 = vmatpush1.msra.mxu0 %v3064
  %3182 = vmatprep.subr.mxu0 0.0
  %3183 = vmatpush1.msra.mxu0 %v3063
  %3184 = vmatprep.subr.mxu0 0.0
  %3185 = vmatpush1.msra.mxu0 %v3062
  %3186 = vmatprep.subr.mxu0 0.0
  %3187 = vmatpush2.msra.mxu0 0.0
  %3188 = vmatprep.subr.mxu0 0.0
  %3189 = vmatpush2.msra.mxu0 0.0
  %3190 = vmatprep.subr.mxu0 0.0
  %3191 = vmatpush2.msra.mxu0 0.0
  %3192 = vmatprep.subr.mxu0 0.0
  %3193 = vmatpush2.msra.mxu0 0.0
  %3194 = vmatprep.subr.mxu0 0.0
  %3195 = vmatpush2.msra.mxu0 0.0
  %3196 = vmatprep.subr.mxu0 0.0
  %3197 = vmatpush2.msra.mxu0 0.0
  %3198 = vmatprep.subr.mxu0 0.0
  %3199 = vmatpush2.msra.mxu0 0.0
  %3200 = vmatprep.subr.mxu0 0.0
  %3201 = vmatpush2.msra.mxu0 0.0
  %3202 = vmatprep.subr.mxu0 0.0
  %3203 = vmatpush2.msra.mxu0 0.0
  %3204 = vmatprep.subr.mxu0 0.0
  %3205 = vmatpush2.msra.mxu0 0.0
  %3206 = vmatprep.subr.mxu0 0.0
  %3207 = vmatpush2.msra.mxu0 0.0
  %3208 = vmatprep.subr.mxu0 0.0
  %3209 = vmatpush2.msra.mxu0 0.0
  %3210 = vmatprep.subr.mxu0 0.0
  %3211 = vmatpush2.msra.mxu0 0.0
  %3212 = vmatprep.subr.mxu0 0.0
  %3213 = vmatpush2.msra.mxu0 0.0
  %3214 = vmatprep.subr.mxu0 0.0
  %3215 = vmatpush2.msra.mxu0 0.0
  %3216 = vmatprep.subr.mxu0 0.0
  %3217 = vmatpush2.msra.mxu0 %v3078
  %3218 = vmatprep.mubr.f32.mxu0 %v1541
  %3219 = vmatmul.mubr.f32.gmra.mxu0 %v633
  %v3220 = vpop.f32.mrf.mxu0
  %v3221 = vadd.f32 %v3146, %v3220
  %v3222 = vpop.f32.mrf.mxu0
  %3223 = vmatprep.mubr.f32.mxu0 %v1544
  %3224 = vmatmul.mubr.f32.gmra.mxu0 %v637
  %v3225 = vpop.f32.mrf.mxu0
  %v3226 = vadd.f32 %v3151, %v3225
  %v3227 = vpop.f32.mrf.mxu0
  %3228 = vdwg.mxu0
  %s3229 = scalar_lea.vmem %s9, 80
  %v3230 = vld [vmem:[%s3229] sm:$0xff]
  %v3231 = vld [vmem:[%s3229 + $0x8] sm:$0xff]
  %3233 = vset.pattern.permute.xlu0 0
  %3234 = vperm.xlu0 %3233, %v3230
  %v3235 = vpop.permute.xlu0 %3234
  %3238 = vset.pattern.permute.xlu0 0
  %3239 = vperm.xlu0 %3238, %v3231
  %v3240 = vpop.permute.xlu0 %3239
  %v3242 = vmul.f32 %v3221, %v3235
  %v3243 = vmul.f32 %v3226, %v3240
  %v3244 = vadd.f32 %v2979, %v3242
  %v3245 = vadd.f32 %v2980, %v3243
  %v3246 = vadd.s32 %v790, 2
  %v3247 = vlaneseq
  %v3248 = vshrl.u32 %v3247, 7
  %v3249 = vsub.s32 0, %v3248
  %v3250 = vrot.slane %v3246, %v3249
  %vm3251 = vcmp.eq.s32.totalorder %v995, %v3250
  %vm3252 = vcmp.eq.s32.totalorder %v998, %v3250
  %vm3253 = vcmp.eq.s32.totalorder %v1001, %v3250
  %vm3254 = vcmp.eq.s32.totalorder %v1004, %v3250
  %vm3255 = vcmp.eq.s32.totalorder %v1007, %v3250
  %vm3256 = vcmp.eq.s32.totalorder %v1010, %v3250
  %vm3257 = vcmp.eq.s32.totalorder %v1013, %v3250
  %vm3258 = vcmp.eq.s32.totalorder %v1016, %v3250
  %vm3259 = vcmp.eq.s32.totalorder %v1019, %v3250
  %vm3260 = vcmp.eq.s32.totalorder %v1022, %v3250
  %vm3261 = vcmp.eq.s32.totalorder %v1025, %v3250
  %vm3262 = vcmp.eq.s32.totalorder %v1028, %v3250
  %vm3263 = vcmp.eq.s32.totalorder %v1031, %v3250
  %vm3264 = vcmp.eq.s32.totalorder %v1034, %v3250
  %vm3265 = vcmp.eq.s32.totalorder %v1037, %v3250
  %vm3266 = vcmp.eq.s32.totalorder %v1040, %v3250
  %vm3267 = vcmp.eq.s32.totalorder %v1043, %v3250
  %vm3268 = vcmp.eq.s32.totalorder %v1046, %v3250
  %vm3269 = vcmp.eq.s32.totalorder %v1049, %v3250
  %vm3270 = vcmp.eq.s32.totalorder %v1052, %v3250
  %vm3271 = vcmp.eq.s32.totalorder %v1055, %v3250
  %vm3272 = vcmp.eq.s32.totalorder %v1058, %v3250
  %vm3273 = vcmp.eq.s32.totalorder %v1061, %v3250
  %vm3274 = vcmp.eq.s32.totalorder %v1064, %v3250
  %vm3275 = vcmp.eq.s32.totalorder %v1067, %v3250
  %vm3276 = vcmp.eq.s32.totalorder %v1070, %v3250
  %vm3277 = vcmp.eq.s32.totalorder %v1073, %v3250
  %vm3278 = vcmp.eq.s32.totalorder %v1076, %v3250
  %vm3279 = vcmp.eq.s32.totalorder %v1079, %v3250
  %vm3280 = vcmp.eq.s32.totalorder %v1082, %v3250
  %vm3281 = vcmp.eq.s32.totalorder %v1085, %v3250
  %vm3282 = vcmp.eq.s32.totalorder %v1088, %v3250
  %vm3283 = vcmp.eq.s32.totalorder %v1091, %v3250
  %vm3284 = vcmp.eq.s32.totalorder %v1094, %v3250
  %vm3285 = vcmp.eq.s32.totalorder %v1097, %v3250
  %vm3286 = vcmp.eq.s32.totalorder %v1100, %v3250
  %vm3287 = vcmp.eq.s32.totalorder %v1103, %v3250
  %vm3288 = vcmp.eq.s32.totalorder %v1106, %v3250
  %vm3289 = vcmp.eq.s32.totalorder %v1109, %v3250
  %vm3290 = vcmp.eq.s32.totalorder %v1112, %v3250
  %vm3291 = vcmp.eq.s32.totalorder %v1115, %v3250
  %vm3292 = vcmp.eq.s32.totalorder %v1118, %v3250
  %vm3293 = vcmp.eq.s32.totalorder %v1121, %v3250
  %vm3294 = vcmp.eq.s32.totalorder %v1124, %v3250
  %vm3295 = vcmp.eq.s32.totalorder %v1127, %v3250
  %vm3296 = vcmp.eq.s32.totalorder %v1130, %v3250
  %vm3297 = vcmp.eq.s32.totalorder %v1133, %v3250
  %vm3298 = vcmp.eq.s32.totalorder %v1136, %v3250
  %vm3299 = vcmp.eq.s32.totalorder %v1139, %v3250
  %vm3300 = vmand %vm944, %vm3251
  %vm3301 = vmand %vm945, %vm3252
  %vm3302 = vmand %vm946, %vm3253
  %vm3303 = vmand %vm947, %vm3254
  %vm3304 = vmand %vm948, %vm3255
  %vm3305 = vmand %vm949, %vm3256
  %vm3306 = vmand %vm950, %vm3257
  %vm3307 = vmand %vm951, %vm3258
  %vm3308 = vmand %vm952, %vm3259
  %vm3309 = vmand %vm953, %vm3260
  %vm3310 = vmand %vm954, %vm3261
  %vm3311 = vmand %vm955, %vm3262
  %vm3312 = vmand %vm956, %vm3263
  %vm3313 = vmand %vm957, %vm3264
  %vm3314 = vmand %vm958, %vm3265
  %vm3315 = vmand %vm959, %vm3266
  %vm3316 = vmand %vm960, %vm3267
  %vm3317 = vmand %vm961, %vm3268
  %vm3318 = vmand %vm962, %vm3269
  %vm3319 = vmand %vm963, %vm3270
  %vm3320 = vmand %vm964, %vm3271
  %vm3321 = vmand %vm965, %vm3272
  %vm3322 = vmand %vm966, %vm3273
  %vm3323 = vmand %vm967, %vm3274
  %vm3324 = vmand %vm968, %vm3275
  %vm3325 = vmand %vm969, %vm3276
  %vm3326 = vmand %vm970, %vm3277
  %vm3327 = vmand %vm971, %vm3278
  %vm3328 = vmand %vm972, %vm3279
  %vm3329 = vmand %vm973, %vm3280
  %vm3330 = vmand %vm974, %vm3281
  %vm3331 = vmand %vm975, %vm3282
  %vm3332 = vmand %vm976, %vm3283
  %vm3333 = vmand %vm977, %vm3284
  %vm3334 = vmand %vm978, %vm3285
  %vm3335 = vmand %vm979, %vm3286
  %vm3336 = vmand %vm980, %vm3287
  %vm3337 = vmand %vm981, %vm3288
  %vm3338 = vmand %vm982, %vm3289
  %vm3339 = vmand %vm983, %vm3290
  %vm3340 = vmand %vm984, %vm3291
  %vm3341 = vmand %vm985, %vm3292
  %vm3342 = vmand %vm986, %vm3293
  %vm3343 = vmand %vm987, %vm3294
  %vm3344 = vmand %vm988, %vm3295
  %vm3345 = vmand %vm989, %vm3296
  %vm3346 = vmand %vm990, %vm3297
  %vm3347 = vmand %vm991, %vm3298
  %vm3348 = vmand %vm992, %vm3299
  %vm3349 = vmand %vm3300, %vm1393
  %vm3350 = vmand %vm3301, %vm1394
  %vm3351 = vmand %vm3302, %vm1395
  %vm3352 = vmand %vm3303, %vm1396
  %vm3353 = vmand %vm3304, %vm1397
  %vm3354 = vmand %vm3305, %vm1398
  %vm3355 = vmand %vm3306, %vm1399
  %vm3356 = vmand %vm3307, %vm1400
  %vm3357 = vmand %vm3308, %vm1401
  %vm3358 = vmand %vm3309, %vm1402
  %vm3359 = vmand %vm3310, %vm1403
  %vm3360 = vmand %vm3311, %vm1404
  %vm3361 = vmand %vm3312, %vm1405
  %vm3362 = vmand %vm3313, %vm1406
  %vm3363 = vmand %vm3314, %vm1407
  %vm3364 = vmand %vm3315, %vm1408
  %vm3365 = vmand %vm3316, %vm1409
  %vm3366 = vmand %vm3317, %vm1410
  %vm3367 = vmand %vm3318, %vm1411
  %vm3368 = vmand %vm3319, %vm1412
  %vm3369 = vmand %vm3320, %vm1413
  %vm3370 = vmand %vm3321, %vm1414
  %vm3371 = vmand %vm3322, %vm1415
  %vm3372 = vmand %vm3323, %vm1416
  %vm3373 = vmand %vm3324, %vm1417
  %vm3374 = vmand %vm3325, %vm1418
  %vm3375 = vmand %vm3326, %vm1419
  %vm3376 = vmand %vm3327, %vm1420
  %vm3377 = vmand %vm3328, %vm1421
  %vm3378 = vmand %vm3329, %vm1422
  %vm3379 = vmand %vm3330, %vm1423
  %vm3380 = vmand %vm3331, %vm1424
  %vm3381 = vmand %vm3332, %vm1425
  %vm3382 = vmand %vm3333, %vm1426
  %vm3383 = vmand %vm3334, %vm1427
  %vm3384 = vmand %vm3335, %vm1428
  %vm3385 = vmand %vm3336, %vm1429
  %vm3386 = vmand %vm3337, %vm1430
  %vm3387 = vmand %vm3338, %vm1431
  %vm3388 = vmand %vm3339, %vm1432
  %vm3389 = vmand %vm3340, %vm1433
  %vm3390 = vmand %vm3341, %vm1434
  %vm3391 = vmand %vm3342, %vm1435
  %vm3392 = vmand %vm3343, %vm1436
  %vm3393 = vmand %vm3344, %vm1437
  %vm3394 = vmand %vm3345, %vm1438
  %vm3395 = vmand %vm3346, %vm1439
  %vm3396 = vmand %vm3347, %vm1440
  %vm3397 = vmand %vm3348, %vm1441
  %v3398 = vsel %vm3349, 1.0, 0.0
  %v3399 = vsel %vm3350, 1.0, 0.0
  %v3400 = vsel %vm3351, 1.0, 0.0
  %v3401 = vsel %vm3352, 1.0, 0.0
  %v3402 = vsel %vm3353, 1.0, 0.0
  %v3403 = vsel %vm3354, 1.0, 0.0
  %v3404 = vsel %vm3355, 1.0, 0.0
  %v3405 = vsel %vm3356, 1.0, 0.0
  %v3406 = vsel %vm3357, 1.0, 0.0
  %v3407 = vsel %vm3358, 1.0, 0.0
  %v3408 = vsel %vm3359, 1.0, 0.0
  %v3409 = vsel %vm3360, 1.0, 0.0
  %v3410 = vsel %vm3361, 1.0, 0.0
  %v3411 = vsel %vm3362, 1.0, 0.0
  %v3412 = vsel %vm3363, 1.0, 0.0
  %v3413 = vsel %vm3364, 1.0, 0.0
  %v3414 = vsel %vm3365, 1.0, 0.0
  %v3415 = vsel %vm3366, 1.0, 0.0
  %v3416 = vsel %vm3367, 1.0, 0.0
  %v3417 = vsel %vm3368, 1.0, 0.0
  %v3418 = vsel %vm3369, 1.0, 0.0
  %v3419 = vsel %vm3370, 1.0, 0.0
  %v3420 = vsel %vm3371, 1.0, 0.0
  %v3421 = vsel %vm3372, 1.0, 0.0
  %v3422 = vsel %vm3373, 1.0, 0.0
  %v3423 = vsel %vm3374, 1.0, 0.0
  %v3424 = vsel %vm3375, 1.0, 0.0
  %v3425 = vsel %vm3376, 1.0, 0.0
  %v3426 = vsel %vm3377, 1.0, 0.0
  %v3427 = vsel %vm3378, 1.0, 0.0
  %v3428 = vsel %vm3379, 1.0, 0.0
  %v3429 = vsel %vm3380, 1.0, 0.0
  %v3430 = vsel %vm3381, 1.0, 0.0
  %v3431 = vsel %vm3382, 1.0, 0.0
  %v3432 = vsel %vm3383, 1.0, 0.0
  %v3433 = vsel %vm3384, 1.0, 0.0
  %v3434 = vsel %vm3385, 1.0, 0.0
  %v3435 = vsel %vm3386, 1.0, 0.0
  %v3436 = vsel %vm3387, 1.0, 0.0
  %v3437 = vsel %vm3388, 1.0, 0.0
  %v3438 = vsel %vm3389, 1.0, 0.0
  %v3439 = vsel %vm3390, 1.0, 0.0
  %v3440 = vsel %vm3391, 1.0, 0.0
  %v3441 = vsel %vm3392, 1.0, 0.0
  %v3442 = vsel %vm3393, 1.0, 0.0
  %v3443 = vsel %vm3394, 1.0, 0.0
  %v3444 = vsel %vm3395, 1.0, 0.0
  %v3445 = vsel %vm3396, 1.0, 0.0
  %v3446 = vsel %vm3397, 1.0, 0.0
  %3447 = vmatprep.subr.mxu0 0.0
  %3448 = vmatpush1.msra.mxu0 %v3413
  %3449 = vmatprep.subr.mxu0 0.0
  %3450 = vmatpush1.msra.mxu0 %v3412
  %3451 = vmatprep.subr.mxu0 0.0
  %3452 = vmatpush1.msra.mxu0 %v3411
  %3453 = vmatprep.subr.mxu0 0.0
  %3454 = vmatpush1.msra.mxu0 %v3410
  %3455 = vmatprep.subr.mxu0 0.0
  %3456 = vmatpush1.msra.mxu0 %v3409
  %3457 = vmatprep.subr.mxu0 0.0
  %3458 = vmatpush1.msra.mxu0 %v3408
  %3459 = vmatprep.subr.mxu0 0.0
  %3460 = vmatpush1.msra.mxu0 %v3407
  %3461 = vmatprep.subr.mxu0 0.0
  %3462 = vmatpush1.msra.mxu0 %v3406
  %3463 = vmatprep.subr.mxu0 0.0
  %3464 = vmatpush1.msra.mxu0 %v3405
  %3465 = vmatprep.subr.mxu0 0.0
  %3466 = vmatpush1.msra.mxu0 %v3404
  %3467 = vmatprep.subr.mxu0 0.0
  %3468 = vmatpush1.msra.mxu0 %v3403
  %3469 = vmatprep.subr.mxu0 0.0
  %3470 = vmatpush1.msra.mxu0 %v3402
  %3471 = vmatprep.subr.mxu0 0.0
  %3472 = vmatpush1.msra.mxu0 %v3401
  %3473 = vmatprep.subr.mxu0 0.0
  %3474 = vmatpush1.msra.mxu0 %v3400
  %3475 = vmatprep.subr.mxu0 0.0
  %3476 = vmatpush1.msra.mxu0 %v3399
  %3477 = vmatprep.subr.mxu0 0.0
  %3478 = vmatpush1.msra.mxu0 %v3398
  %3479 = vmatprep.subr.mxu0 0.0
  %3480 = vmatpush2.msra.mxu0 %v3429
  %3481 = vmatprep.subr.mxu0 0.0
  %3482 = vmatpush2.msra.mxu0 %v3428
  %3483 = vmatprep.subr.mxu0 0.0
  %3484 = vmatpush2.msra.mxu0 %v3427
  %3485 = vmatprep.subr.mxu0 0.0
  %3486 = vmatpush2.msra.mxu0 %v3426
  %3487 = vmatprep.subr.mxu0 0.0
  %3488 = vmatpush2.msra.mxu0 %v3425
  %3489 = vmatprep.subr.mxu0 0.0
  %3490 = vmatpush2.msra.mxu0 %v3424
  %3491 = vmatprep.subr.mxu0 0.0
  %3492 = vmatpush2.msra.mxu0 %v3423
  %3493 = vmatprep.subr.mxu0 0.0
  %3494 = vmatpush2.msra.mxu0 %v3422
  %3495 = vmatprep.subr.mxu0 0.0
  %3496 = vmatpush2.msra.mxu0 %v3421
  %3497 = vmatprep.subr.mxu0 0.0
  %3498 = vmatpush2.msra.mxu0 %v3420
  %3499 = vmatprep.subr.mxu0 0.0
  %3500 = vmatpush2.msra.mxu0 %v3419
  %3501 = vmatprep.subr.mxu0 0.0
  %3502 = vmatpush2.msra.mxu0 %v3418
  %3503 = vmatprep.subr.mxu0 0.0
  %3504 = vmatpush2.msra.mxu0 %v3417
  %3505 = vmatprep.subr.mxu0 0.0
  %3506 = vmatpush2.msra.mxu0 %v3416
  %3507 = vmatprep.subr.mxu0 0.0
  %3508 = vmatpush2.msra.mxu0 %v3415
  %3509 = vmatprep.subr.mxu0 0.0
  %3510 = vmatpush2.msra.mxu0 %v3414
  %3511 = vmatprep.mubr.f32.mxu0 %v632
  %3512 = vmatmul.mubr.f32.gmra.mxu0 %v631
  %v3513 = vpop.f32.mrf.mxu0
  %v3514 = vadd.f32 0.0, %v3513
  %v3515 = vpop.f32.mrf.mxu0
  %3516 = vmatprep.mubr.f32.mxu0 %v636
  %3517 = vmatmul.mubr.f32.gmra.mxu0 %v635
  %v3518 = vpop.f32.mrf.mxu0
  %v3519 = vadd.f32 0.0, %v3518
  %v3520 = vpop.f32.mrf.mxu0
  %3521 = vdwg.mxu0
  %3522 = vmatprep.subr.mxu0 0.0
  %3523 = vmatpush1.msra.mxu0 %v3445
  %3524 = vmatprep.subr.mxu0 0.0
  %3525 = vmatpush1.msra.mxu0 %v3444
  %3526 = vmatprep.subr.mxu0 0.0
  %3527 = vmatpush1.msra.mxu0 %v3443
  %3528 = vmatprep.subr.mxu0 0.0
  %3529 = vmatpush1.msra.mxu0 %v3442
  %3530 = vmatprep.subr.mxu0 0.0
  %3531 = vmatpush1.msra.mxu0 %v3441
  %3532 = vmatprep.subr.mxu0 0.0
  %3533 = vmatpush1.msra.mxu0 %v3440
  %3534 = vmatprep.subr.mxu0 0.0
  %3535 = vmatpush1.msra.mxu0 %v3439
  %3536 = vmatprep.subr.mxu0 0.0
  %3537 = vmatpush1.msra.mxu0 %v3438
  %3538 = vmatprep.subr.mxu0 0.0
  %3539 = vmatpush1.msra.mxu0 %v3437
  %3540 = vmatprep.subr.mxu0 0.0
  %3541 = vmatpush1.msra.mxu0 %v3436
  %3542 = vmatprep.subr.mxu0 0.0
  %3543 = vmatpush1.msra.mxu0 %v3435
  %3544 = vmatprep.subr.mxu0 0.0
  %3545 = vmatpush1.msra.mxu0 %v3434
  %3546 = vmatprep.subr.mxu0 0.0
  %3547 = vmatpush1.msra.mxu0 %v3433
  %3548 = vmatprep.subr.mxu0 0.0
  %3549 = vmatpush1.msra.mxu0 %v3432
  %3550 = vmatprep.subr.mxu0 0.0
  %3551 = vmatpush1.msra.mxu0 %v3431
  %3552 = vmatprep.subr.mxu0 0.0
  %3553 = vmatpush1.msra.mxu0 %v3430
  %3554 = vmatprep.subr.mxu0 0.0
  %3555 = vmatpush2.msra.mxu0 0.0
  %3556 = vmatprep.subr.mxu0 0.0
  %3557 = vmatpush2.msra.mxu0 0.0
  %3558 = vmatprep.subr.mxu0 0.0
  %3559 = vmatpush2.msra.mxu0 0.0
  %3560 = vmatprep.subr.mxu0 0.0
  %3561 = vmatpush2.msra.mxu0 0.0
  %3562 = vmatprep.subr.mxu0 0.0
  %3563 = vmatpush2.msra.mxu0 0.0
  %3564 = vmatprep.subr.mxu0 0.0
  %3565 = vmatpush2.msra.mxu0 0.0
  %3566 = vmatprep.subr.mxu0 0.0
  %3567 = vmatpush2.msra.mxu0 0.0
  %3568 = vmatprep.subr.mxu0 0.0
  %3569 = vmatpush2.msra.mxu0 0.0
  %3570 = vmatprep.subr.mxu0 0.0
  %3571 = vmatpush2.msra.mxu0 0.0
  %3572 = vmatprep.subr.mxu0 0.0
  %3573 = vmatpush2.msra.mxu0 0.0
  %3574 = vmatprep.subr.mxu0 0.0
  %3575 = vmatpush2.msra.mxu0 0.0
  %3576 = vmatprep.subr.mxu0 0.0
  %3577 = vmatpush2.msra.mxu0 0.0
  %3578 = vmatprep.subr.mxu0 0.0
  %3579 = vmatpush2.msra.mxu0 0.0
  %3580 = vmatprep.subr.mxu0 0.0
  %3581 = vmatpush2.msra.mxu0 0.0
  %3582 = vmatprep.subr.mxu0 0.0
  %3583 = vmatpush2.msra.mxu0 0.0
  %3584 = vmatprep.subr.mxu0 0.0
  %3585 = vmatpush2.msra.mxu0 %v3446
  %3586 = vmatprep.mubr.f32.mxu0 %v1541
  %3587 = vmatmul.mubr.f32.gmra.mxu0 %v633
  %v3588 = vpop.f32.mrf.mxu0
  %v3589 = vadd.f32 %v3514, %v3588
  %v3590 = vpop.f32.mrf.mxu0
  %3591 = vmatprep.mubr.f32.mxu0 %v1544
  %3592 = vmatmul.mubr.f32.gmra.mxu0 %v637
  %v3593 = vpop.f32.mrf.mxu0
  %v3594 = vadd.f32 %v3519, %v3593
  %v3595 = vpop.f32.mrf.mxu0
  %3596 = vdwg.mxu0
  %s3597 = scalar_lea.vmem %s9, 96
  %v3598 = vld [vmem:[%s3597] sm:$0xff]
  %v3599 = vld [vmem:[%s3597 + $0x8] sm:$0xff]
  %3601 = vset.pattern.permute.xlu0 0
  %3602 = vperm.xlu0 %3601, %v3598
  %v3603 = vpop.permute.xlu0 %3602
  %3606 = vset.pattern.permute.xlu0 0
  %3607 = vperm.xlu0 %3606, %v3599
  %v3608 = vpop.permute.xlu0 %3607
  %v3610 = vmul.f32 %v3589, %v3603
  %v3611 = vmul.f32 %v3594, %v3608
  %v3612 = vadd.f32 %v3244, %v3610
  %v3613 = vadd.f32 %v3245, %v3611
  %vm3614 = vmand %vm3300, %vm1715
  %vm3615 = vmand %vm3301, %vm1716
  %vm3616 = vmand %vm3302, %vm1717
  %vm3617 = vmand %vm3303, %vm1718
  %vm3618 = vmand %vm3304, %vm1719
  %vm3619 = vmand %vm3305, %vm1720
  %vm3620 = vmand %vm3306, %vm1721
  %vm3621 = vmand %vm3307, %vm1722
  %vm3622 = vmand %vm3308, %vm1723
  %vm3623 = vmand %vm3309, %vm1724
  %vm3624 = vmand %vm3310, %vm1725
  %vm3625 = vmand %vm3311, %vm1726
  %vm3626 = vmand %vm3312, %vm1727
  %vm3627 = vmand %vm3313, %vm1728
  %vm3628 = vmand %vm3314, %vm1729
  %vm3629 = vmand %vm3315, %vm1730
  %vm3630 = vmand %vm3316, %vm1731
  %vm3631 = vmand %vm3317, %vm1732
  %vm3632 = vmand %vm3318, %vm1733
  %vm3633 = vmand %vm3319, %vm1734
  %vm3634 = vmand %vm3320, %vm1735
  %vm3635 = vmand %vm3321, %vm1736
  %vm3636 = vmand %vm3322, %vm1737
  %vm3637 = vmand %vm3323, %vm1738
  %vm3638 = vmand %vm3324, %vm1739
  %vm3639 = vmand %vm3325, %vm1740
  %vm3640 = vmand %vm3326, %vm1741
  %vm3641 = vmand %vm3327, %vm1742
  %vm3642 = vmand %vm3328, %vm1743
  %vm3643 = vmand %vm3329, %vm1744
  %vm3644 = vmand %vm3330, %vm1745
  %vm3645 = vmand %vm3331, %vm1746
  %vm3646 = vmand %vm3332, %vm1747
  %vm3647 = vmand %vm3333, %vm1748
  %vm3648 = vmand %vm3334, %vm1749
  %vm3649 = vmand %vm3335, %vm1750
  %vm3650 = vmand %vm3336, %vm1751
  %vm3651 = vmand %vm3337, %vm1752
  %vm3652 = vmand %vm3338, %vm1753
  %vm3653 = vmand %vm3339, %vm1754
  %vm3654 = vmand %vm3340, %vm1755
  %vm3655 = vmand %vm3341, %vm1756
  %vm3656 = vmand %vm3342, %vm1757
  %vm3657 = vmand %vm3343, %vm1758
  %vm3658 = vmand %vm3344, %vm1759
  %vm3659 = vmand %vm3345, %vm1760
  %vm3660 = vmand %vm3346, %vm1761
  %vm3661 = vmand %vm3347, %vm1762
  %vm3662 = vmand %vm3348, %vm1763
  %v3663 = vsel %vm3614, 1.0, 0.0
  %v3664 = vsel %vm3615, 1.0, 0.0
  %v3665 = vsel %vm3616, 1.0, 0.0
  %v3666 = vsel %vm3617, 1.0, 0.0
  %v3667 = vsel %vm3618, 1.0, 0.0
  %v3668 = vsel %vm3619, 1.0, 0.0
  %v3669 = vsel %vm3620, 1.0, 0.0
  %v3670 = vsel %vm3621, 1.0, 0.0
  %v3671 = vsel %vm3622, 1.0, 0.0
  %v3672 = vsel %vm3623, 1.0, 0.0
  %v3673 = vsel %vm3624, 1.0, 0.0
  %v3674 = vsel %vm3625, 1.0, 0.0
  %v3675 = vsel %vm3626, 1.0, 0.0
  %v3676 = vsel %vm3627, 1.0, 0.0
  %v3677 = vsel %vm3628, 1.0, 0.0
  %v3678 = vsel %vm3629, 1.0, 0.0
  %v3679 = vsel %vm3630, 1.0, 0.0
  %v3680 = vsel %vm3631, 1.0, 0.0
  %v3681 = vsel %vm3632, 1.0, 0.0
  %v3682 = vsel %vm3633, 1.0, 0.0
  %v3683 = vsel %vm3634, 1.0, 0.0
  %v3684 = vsel %vm3635, 1.0, 0.0
  %v3685 = vsel %vm3636, 1.0, 0.0
  %v3686 = vsel %vm3637, 1.0, 0.0
  %v3687 = vsel %vm3638, 1.0, 0.0
  %v3688 = vsel %vm3639, 1.0, 0.0
  %v3689 = vsel %vm3640, 1.0, 0.0
  %v3690 = vsel %vm3641, 1.0, 0.0
  %v3691 = vsel %vm3642, 1.0, 0.0
  %v3692 = vsel %vm3643, 1.0, 0.0
  %v3693 = vsel %vm3644, 1.0, 0.0
  %v3694 = vsel %vm3645, 1.0, 0.0
  %v3695 = vsel %vm3646, 1.0, 0.0
  %v3696 = vsel %vm3647, 1.0, 0.0
  %v3697 = vsel %vm3648, 1.0, 0.0
  %v3698 = vsel %vm3649, 1.0, 0.0
  %v3699 = vsel %vm3650, 1.0, 0.0
  %v3700 = vsel %vm3651, 1.0, 0.0
  %v3701 = vsel %vm3652, 1.0, 0.0
  %v3702 = vsel %vm3653, 1.0, 0.0
  %v3703 = vsel %vm3654, 1.0, 0.0
  %v3704 = vsel %vm3655, 1.0, 0.0
  %v3705 = vsel %vm3656, 1.0, 0.0
  %v3706 = vsel %vm3657, 1.0, 0.0
  %v3707 = vsel %vm3658, 1.0, 0.0
  %v3708 = vsel %vm3659, 1.0, 0.0
  %v3709 = vsel %vm3660, 1.0, 0.0
  %v3710 = vsel %vm3661, 1.0, 0.0
  %v3711 = vsel %vm3662, 1.0, 0.0
  %3712 = vmatprep.subr.mxu0 0.0
  %3713 = vmatpush1.msra.mxu0 %v3678
  %3714 = vmatprep.subr.mxu0 0.0
  %3715 = vmatpush1.msra.mxu0 %v3677
  %3716 = vmatprep.subr.mxu0 0.0
  %3717 = vmatpush1.msra.mxu0 %v3676
  %3718 = vmatprep.subr.mxu0 0.0
  %3719 = vmatpush1.msra.mxu0 %v3675
  %3720 = vmatprep.subr.mxu0 0.0
  %3721 = vmatpush1.msra.mxu0 %v3674
  %3722 = vmatprep.subr.mxu0 0.0
  %3723 = vmatpush1.msra.mxu0 %v3673
  %3724 = vmatprep.subr.mxu0 0.0
  %3725 = vmatpush1.msra.mxu0 %v3672
  %3726 = vmatprep.subr.mxu0 0.0
  %3727 = vmatpush1.msra.mxu0 %v3671
  %3728 = vmatprep.subr.mxu0 0.0
  %3729 = vmatpush1.msra.mxu0 %v3670
  %3730 = vmatprep.subr.mxu0 0.0
  %3731 = vmatpush1.msra.mxu0 %v3669
  %3732 = vmatprep.subr.mxu0 0.0
  %3733 = vmatpush1.msra.mxu0 %v3668
  %3734 = vmatprep.subr.mxu0 0.0
  %3735 = vmatpush1.msra.mxu0 %v3667
  %3736 = vmatprep.subr.mxu0 0.0
  %3737 = vmatpush1.msra.mxu0 %v3666
  %3738 = vmatprep.subr.mxu0 0.0
  %3739 = vmatpush1.msra.mxu0 %v3665
  %3740 = vmatprep.subr.mxu0 0.0
  %3741 = vmatpush1.msra.mxu0 %v3664
  %3742 = vmatprep.subr.mxu0 0.0
  %3743 = vmatpush1.msra.mxu0 %v3663
  %3744 = vmatprep.subr.mxu0 0.0
  %3745 = vmatpush2.msra.mxu0 %v3694
  %3746 = vmatprep.subr.mxu0 0.0
  %3747 = vmatpush2.msra.mxu0 %v3693
  %3748 = vmatprep.subr.mxu0 0.0
  %3749 = vmatpush2.msra.mxu0 %v3692
  %3750 = vmatprep.subr.mxu0 0.0
  %3751 = vmatpush2.msra.mxu0 %v3691
  %3752 = vmatprep.subr.mxu0 0.0
  %3753 = vmatpush2.msra.mxu0 %v3690
  %3754 = vmatprep.subr.mxu0 0.0
  %3755 = vmatpush2.msra.mxu0 %v3689
  %3756 = vmatprep.subr.mxu0 0.0
  %3757 = vmatpush2.msra.mxu0 %v3688
  %3758 = vmatprep.subr.mxu0 0.0
  %3759 = vmatpush2.msra.mxu0 %v3687
  %3760 = vmatprep.subr.mxu0 0.0
  %3761 = vmatpush2.msra.mxu0 %v3686
  %3762 = vmatprep.subr.mxu0 0.0
  %3763 = vmatpush2.msra.mxu0 %v3685
  %3764 = vmatprep.subr.mxu0 0.0
  %3765 = vmatpush2.msra.mxu0 %v3684
  %3766 = vmatprep.subr.mxu0 0.0
  %3767 = vmatpush2.msra.mxu0 %v3683
  %3768 = vmatprep.subr.mxu0 0.0
  %3769 = vmatpush2.msra.mxu0 %v3682
  %3770 = vmatprep.subr.mxu0 0.0
  %3771 = vmatpush2.msra.mxu0 %v3681
  %3772 = vmatprep.subr.mxu0 0.0
  %3773 = vmatpush2.msra.mxu0 %v3680
  %3774 = vmatprep.subr.mxu0 0.0
  %3775 = vmatpush2.msra.mxu0 %v3679
  %3776 = vmatprep.mubr.f32.mxu0 %v632
  %3777 = vmatmul.mubr.f32.gmra.mxu0 %v631
  %v3778 = vpop.f32.mrf.mxu0
  %v3779 = vadd.f32 0.0, %v3778
  %v3780 = vpop.f32.mrf.mxu0
  %3781 = vmatprep.mubr.f32.mxu0 %v636
  %3782 = vmatmul.mubr.f32.gmra.mxu0 %v635
  %v3783 = vpop.f32.mrf.mxu0
  %v3784 = vadd.f32 0.0, %v3783
  %v3785 = vpop.f32.mrf.mxu0
  %3786 = vdwg.mxu0
  %3787 = vmatprep.subr.mxu0 0.0
  %3788 = vmatpush1.msra.mxu0 %v3710
  %3789 = vmatprep.subr.mxu0 0.0
  %3790 = vmatpush1.msra.mxu0 %v3709
  %3791 = vmatprep.subr.mxu0 0.0
  %3792 = vmatpush1.msra.mxu0 %v3708
  %3793 = vmatprep.subr.mxu0 0.0
  %3794 = vmatpush1.msra.mxu0 %v3707
  %3795 = vmatprep.subr.mxu0 0.0
  %3796 = vmatpush1.msra.mxu0 %v3706
  %3797 = vmatprep.subr.mxu0 0.0
  %3798 = vmatpush1.msra.mxu0 %v3705
  %3799 = vmatprep.subr.mxu0 0.0
  %3800 = vmatpush1.msra.mxu0 %v3704
  %3801 = vmatprep.subr.mxu0 0.0
  %3802 = vmatpush1.msra.mxu0 %v3703
  %3803 = vmatprep.subr.mxu0 0.0
  %3804 = vmatpush1.msra.mxu0 %v3702
  %3805 = vmatprep.subr.mxu0 0.0
  %3806 = vmatpush1.msra.mxu0 %v3701
  %3807 = vmatprep.subr.mxu0 0.0
  %3808 = vmatpush1.msra.mxu0 %v3700
  %3809 = vmatprep.subr.mxu0 0.0
  %3810 = vmatpush1.msra.mxu0 %v3699
  %3811 = vmatprep.subr.mxu0 0.0
  %3812 = vmatpush1.msra.mxu0 %v3698
  %3813 = vmatprep.subr.mxu0 0.0
  %3814 = vmatpush1.msra.mxu0 %v3697
  %3815 = vmatprep.subr.mxu0 0.0
  %3816 = vmatpush1.msra.mxu0 %v3696
  %3817 = vmatprep.subr.mxu0 0.0
  %3818 = vmatpush1.msra.mxu0 %v3695
  %3819 = vmatprep.subr.mxu0 0.0
  %3820 = vmatpush2.msra.mxu0 0.0
  %3821 = vmatprep.subr.mxu0 0.0
  %3822 = vmatpush2.msra.mxu0 0.0
  %3823 = vmatprep.subr.mxu0 0.0
  %3824 = vmatpush2.msra.mxu0 0.0
  %3825 = vmatprep.subr.mxu0 0.0
  %3826 = vmatpush2.msra.mxu0 0.0
  %3827 = vmatprep.subr.mxu0 0.0
  %3828 = vmatpush2.msra.mxu0 0.0
  %3829 = vmatprep.subr.mxu0 0.0
  %3830 = vmatpush2.msra.mxu0 0.0
  %3831 = vmatprep.subr.mxu0 0.0
  %3832 = vmatpush2.msra.mxu0 0.0
  %3833 = vmatprep.subr.mxu0 0.0
  %3834 = vmatpush2.msra.mxu0 0.0
  %3835 = vmatprep.subr.mxu0 0.0
  %3836 = vmatpush2.msra.mxu0 0.0
  %3837 = vmatprep.subr.mxu0 0.0
  %3838 = vmatpush2.msra.mxu0 0.0
  %3839 = vmatprep.subr.mxu0 0.0
  %3840 = vmatpush2.msra.mxu0 0.0
  %3841 = vmatprep.subr.mxu0 0.0
  %3842 = vmatpush2.msra.mxu0 0.0
  %3843 = vmatprep.subr.mxu0 0.0
  %3844 = vmatpush2.msra.mxu0 0.0
  %3845 = vmatprep.subr.mxu0 0.0
  %3846 = vmatpush2.msra.mxu0 0.0
  %3847 = vmatprep.subr.mxu0 0.0
  %3848 = vmatpush2.msra.mxu0 0.0
  %3849 = vmatprep.subr.mxu0 0.0
  %3850 = vmatpush2.msra.mxu0 %v3711
  %3851 = vmatprep.mubr.f32.mxu0 %v1541
  %3852 = vmatmul.mubr.f32.gmra.mxu0 %v633
  %v3853 = vpop.f32.mrf.mxu0
  %v3854 = vadd.f32 %v3779, %v3853
  %v3855 = vpop.f32.mrf.mxu0
  %3856 = vmatprep.mubr.f32.mxu0 %v1544
  %3857 = vmatmul.mubr.f32.gmra.mxu0 %v637
  %v3858 = vpop.f32.mrf.mxu0
  %v3859 = vadd.f32 %v3784, %v3858
  %v3860 = vpop.f32.mrf.mxu0
  %3861 = vdwg.mxu0
  %s3862 = scalar_lea.vmem %s9, 112
  %v3863 = vld [vmem:[%s3862] sm:$0xff]
  %v3864 = vld [vmem:[%s3862 + $0x8] sm:$0xff]
  %3866 = vset.pattern.permute.xlu0 0
  %3867 = vperm.xlu0 %3866, %v3863
  %v3868 = vpop.permute.xlu0 %3867
  %3871 = vset.pattern.permute.xlu0 0
  %3872 = vperm.xlu0 %3871, %v3864
  %v3873 = vpop.permute.xlu0 %3872
  %v3875 = vmul.f32 %v3854, %v3868
  %v3876 = vmul.f32 %v3859, %v3873
  %v3877 = vadd.f32 %v3612, %v3875
  %v3878 = vadd.f32 %v3613, %v3876
  %vm3879 = vmand %vm3300, %vm2034
  %vm3880 = vmand %vm3301, %vm2035
  %vm3881 = vmand %vm3302, %vm2036
  %vm3882 = vmand %vm3303, %vm2037
  %vm3883 = vmand %vm3304, %vm2038
  %vm3884 = vmand %vm3305, %vm2039
  %vm3885 = vmand %vm3306, %vm2040
  %vm3886 = vmand %vm3307, %vm2041
  %vm3887 = vmand %vm3308, %vm2042
  %vm3888 = vmand %vm3309, %vm2043
  %vm3889 = vmand %vm3310, %vm2044
  %vm3890 = vmand %vm3311, %vm2045
  %vm3891 = vmand %vm3312, %vm2046
  %vm3892 = vmand %vm3313, %vm2047
  %vm3893 = vmand %vm3314, %vm2048
  %vm3894 = vmand %vm3315, %vm2049
  %vm3895 = vmand %vm3316, %vm2050
  %vm3896 = vmand %vm3317, %vm2051
  %vm3897 = vmand %vm3318, %vm2052
  %vm3898 = vmand %vm3319, %vm2053
  %vm3899 = vmand %vm3320, %vm2054
  %vm3900 = vmand %vm3321, %vm2055
  %vm3901 = vmand %vm3322, %vm2056
  %vm3902 = vmand %vm3323, %vm2057
  %vm3903 = vmand %vm3324, %vm2058
  %vm3904 = vmand %vm3325, %vm2059
  %vm3905 = vmand %vm3326, %vm2060
  %vm3906 = vmand %vm3327, %vm2061
  %vm3907 = vmand %vm3328, %vm2062
  %vm3908 = vmand %vm3329, %vm2063
  %vm3909 = vmand %vm3330, %vm2064
  %vm3910 = vmand %vm3331, %vm2065
  %vm3911 = vmand %vm3332, %vm2066
  %vm3912 = vmand %vm3333, %vm2067
  %vm3913 = vmand %vm3334, %vm2068
  %vm3914 = vmand %vm3335, %vm2069
  %vm3915 = vmand %vm3336, %vm2070
  %vm3916 = vmand %vm3337, %vm2071
  %vm3917 = vmand %vm3338, %vm2072
  %vm3918 = vmand %vm3339, %vm2073
  %vm3919 = vmand %vm3340, %vm2074
  %vm3920 = vmand %vm3341, %vm2075
  %vm3921 = vmand %vm3342, %vm2076
  %vm3922 = vmand %vm3343, %vm2077
  %vm3923 = vmand %vm3344, %vm2078
  %vm3924 = vmand %vm3345, %vm2079
  %vm3925 = vmand %vm3346, %vm2080
  %vm3926 = vmand %vm3347, %vm2081
  %vm3927 = vmand %vm3348, %vm2082
  %v3928 = vsel %vm3879, 1.0, 0.0
  %v3929 = vsel %vm3880, 1.0, 0.0
  %v3930 = vsel %vm3881, 1.0, 0.0
  %v3931 = vsel %vm3882, 1.0, 0.0
  %v3932 = vsel %vm3883, 1.0, 0.0
  %v3933 = vsel %vm3884, 1.0, 0.0
  %v3934 = vsel %vm3885, 1.0, 0.0
  %v3935 = vsel %vm3886, 1.0, 0.0
  %v3936 = vsel %vm3887, 1.0, 0.0
  %v3937 = vsel %vm3888, 1.0, 0.0
  %v3938 = vsel %vm3889, 1.0, 0.0
  %v3939 = vsel %vm3890, 1.0, 0.0
  %v3940 = vsel %vm3891, 1.0, 0.0
  %v3941 = vsel %vm3892, 1.0, 0.0
  %v3942 = vsel %vm3893, 1.0, 0.0
  %v3943 = vsel %vm3894, 1.0, 0.0
  %v3944 = vsel %vm3895, 1.0, 0.0
  %v3945 = vsel %vm3896, 1.0, 0.0
  %v3946 = vsel %vm3897, 1.0, 0.0
  %v3947 = vsel %vm3898, 1.0, 0.0
  %v3948 = vsel %vm3899, 1.0, 0.0
  %v3949 = vsel %vm3900, 1.0, 0.0
  %v3950 = vsel %vm3901, 1.0, 0.0
  %v3951 = vsel %vm3902, 1.0, 0.0
  %v3952 = vsel %vm3903, 1.0, 0.0
  %v3953 = vsel %vm3904, 1.0, 0.0
  %v3954 = vsel %vm3905, 1.0, 0.0
  %v3955 = vsel %vm3906, 1.0, 0.0
  %v3956 = vsel %vm3907, 1.0, 0.0
  %v3957 = vsel %vm3908, 1.0, 0.0
  %v3958 = vsel %vm3909, 1.0, 0.0
  %v3959 = vsel %vm3910, 1.0, 0.0
  %v3960 = vsel %vm3911, 1.0, 0.0
  %v3961 = vsel %vm3912, 1.0, 0.0
  %v3962 = vsel %vm3913, 1.0, 0.0
  %v3963 = vsel %vm3914, 1.0, 0.0
  %v3964 = vsel %vm3915, 1.0, 0.0
  %v3965 = vsel %vm3916, 1.0, 0.0
  %v3966 = vsel %vm3917, 1.0, 0.0
  %v3967 = vsel %vm3918, 1.0, 0.0
  %v3968 = vsel %vm3919, 1.0, 0.0
  %v3969 = vsel %vm3920, 1.0, 0.0
  %v3970 = vsel %vm3921, 1.0, 0.0
  %v3971 = vsel %vm3922, 1.0, 0.0
  %v3972 = vsel %vm3923, 1.0, 0.0
  %v3973 = vsel %vm3924, 1.0, 0.0
  %v3974 = vsel %vm3925, 1.0, 0.0
  %v3975 = vsel %vm3926, 1.0, 0.0
  %v3976 = vsel %vm3927, 1.0, 0.0
  %3977 = vmatprep.subr.mxu0 0.0
  %3978 = vmatpush1.msra.mxu0 %v3943
  %3979 = vmatprep.subr.mxu0 0.0
  %3980 = vmatpush1.msra.mxu0 %v3942
  %3981 = vmatprep.subr.mxu0 0.0
  %3982 = vmatpush1.msra.mxu0 %v3941
  %3983 = vmatprep.subr.mxu0 0.0
  %3984 = vmatpush1.msra.mxu0 %v3940
  %3985 = vmatprep.subr.mxu0 0.0
  %3986 = vmatpush1.msra.mxu0 %v3939
  %3987 = vmatprep.subr.mxu0 0.0
  %3988 = vmatpush1.msra.mxu0 %v3938
  %3989 = vmatprep.subr.mxu0 0.0
  %3990 = vmatpush1.msra.mxu0 %v3937
  %3991 = vmatprep.subr.mxu0 0.0
  %3992 = vmatpush1.msra.mxu0 %v3936
  %3993 = vmatprep.subr.mxu0 0.0
  %3994 = vmatpush1.msra.mxu0 %v3935
  %3995 = vmatprep.subr.mxu0 0.0
  %3996 = vmatpush1.msra.mxu0 %v3934
  %3997 = vmatprep.subr.mxu0 0.0
  %3998 = vmatpush1.msra.mxu0 %v3933
  %3999 = vmatprep.subr.mxu0 0.0
  %4000 = vmatpush1.msra.mxu0 %v3932
  %4001 = vmatprep.subr.mxu0 0.0
  %4002 = vmatpush1.msra.mxu0 %v3931
  %4003 = vmatprep.subr.mxu0 0.0
  %4004 = vmatpush1.msra.mxu0 %v3930
  %4005 = vmatprep.subr.mxu0 0.0
  %4006 = vmatpush1.msra.mxu0 %v3929
  %4007 = vmatprep.subr.mxu0 0.0
  %4008 = vmatpush1.msra.mxu0 %v3928
  %4009 = vmatprep.subr.mxu0 0.0
  %4010 = vmatpush2.msra.mxu0 %v3959
  %4011 = vmatprep.subr.mxu0 0.0
  %4012 = vmatpush2.msra.mxu0 %v3958
  %4013 = vmatprep.subr.mxu0 0.0
  %4014 = vmatpush2.msra.mxu0 %v3957
  %4015 = vmatprep.subr.mxu0 0.0
  %4016 = vmatpush2.msra.mxu0 %v3956
  %4017 = vmatprep.subr.mxu0 0.0
  %4018 = vmatpush2.msra.mxu0 %v3955
  %4019 = vmatprep.subr.mxu0 0.0
  %4020 = vmatpush2.msra.mxu0 %v3954
  %4021 = vmatprep.subr.mxu0 0.0
  %4022 = vmatpush2.msra.mxu0 %v3953
  %4023 = vmatprep.subr.mxu0 0.0
  %4024 = vmatpush2.msra.mxu0 %v3952
  %4025 = vmatprep.subr.mxu0 0.0
  %4026 = vmatpush2.msra.mxu0 %v3951
  %4027 = vmatprep.subr.mxu0 0.0
  %4028 = vmatpush2.msra.mxu0 %v3950
  %4029 = vmatprep.subr.mxu0 0.0
  %4030 = vmatpush2.msra.mxu0 %v3949
  %4031 = vmatprep.subr.mxu0 0.0
  %4032 = vmatpush2.msra.mxu0 %v3948
  %4033 = vmatprep.subr.mxu0 0.0
  %4034 = vmatpush2.msra.mxu0 %v3947
  %4035 = vmatprep.subr.mxu0 0.0
  %4036 = vmatpush2.msra.mxu0 %v3946
  %4037 = vmatprep.subr.mxu0 0.0
  %4038 = vmatpush2.msra.mxu0 %v3945
  %4039 = vmatprep.subr.mxu0 0.0
  %4040 = vmatpush2.msra.mxu0 %v3944
  %4041 = vmatprep.mubr.f32.mxu0 %v632
  %4042 = vmatmul.mubr.f32.gmra.mxu0 %v631
  %v4043 = vpop.f32.mrf.mxu0
  %v4044 = vadd.f32 0.0, %v4043
  %v4045 = vpop.f32.mrf.mxu0
  %4046 = vmatprep.mubr.f32.mxu0 %v636
  %4047 = vmatmul.mubr.f32.gmra.mxu0 %v635
  %v4048 = vpop.f32.mrf.mxu0
  %v4049 = vadd.f32 0.0, %v4048
  %v4050 = vpop.f32.mrf.mxu0
  %4051 = vdwg.mxu0
  %4052 = vmatprep.subr.mxu0 0.0
  %4053 = vmatpush1.msra.mxu0 %v3975
  %4054 = vmatprep.subr.mxu0 0.0
  %4055 = vmatpush1.msra.mxu0 %v3974
  %4056 = vmatprep.subr.mxu0 0.0
  %4057 = vmatpush1.msra.mxu0 %v3973
  %4058 = vmatprep.subr.mxu0 0.0
  %4059 = vmatpush1.msra.mxu0 %v3972
  %4060 = vmatprep.subr.mxu0 0.0
  %4061 = vmatpush1.msra.mxu0 %v3971
  %4062 = vmatprep.subr.mxu0 0.0
  %4063 = vmatpush1.msra.mxu0 %v3970
  %4064 = vmatprep.subr.mxu0 0.0
  %4065 = vmatpush1.msra.mxu0 %v3969
  %4066 = vmatprep.subr.mxu0 0.0
  %4067 = vmatpush1.msra.mxu0 %v3968
  %4068 = vmatprep.subr.mxu0 0.0
  %4069 = vmatpush1.msra.mxu0 %v3967
  %4070 = vmatprep.subr.mxu0 0.0
  %4071 = vmatpush1.msra.mxu0 %v3966
  %4072 = vmatprep.subr.mxu0 0.0
  %4073 = vmatpush1.msra.mxu0 %v3965
  %4074 = vmatprep.subr.mxu0 0.0
  %4075 = vmatpush1.msra.mxu0 %v3964
  %4076 = vmatprep.subr.mxu0 0.0
  %4077 = vmatpush1.msra.mxu0 %v3963
  %4078 = vmatprep.subr.mxu0 0.0
  %4079 = vmatpush1.msra.mxu0 %v3962
  %4080 = vmatprep.subr.mxu0 0.0
  %4081 = vmatpush1.msra.mxu0 %v3961
  %4082 = vmatprep.subr.mxu0 0.0
  %4083 = vmatpush1.msra.mxu0 %v3960
  %4084 = vmatprep.subr.mxu0 0.0
  %4085 = vmatpush2.msra.mxu0 0.0
  %4086 = vmatprep.subr.mxu0 0.0
  %4087 = vmatpush2.msra.mxu0 0.0
  %4088 = vmatprep.subr.mxu0 0.0
  %4089 = vmatpush2.msra.mxu0 0.0
  %4090 = vmatprep.subr.mxu0 0.0
  %4091 = vmatpush2.msra.mxu0 0.0
  %4092 = vmatprep.subr.mxu0 0.0
  %4093 = vmatpush2.msra.mxu0 0.0
  %4094 = vmatprep.subr.mxu0 0.0
  %4095 = vmatpush2.msra.mxu0 0.0
  %4096 = vmatprep.subr.mxu0 0.0
  %4097 = vmatpush2.msra.mxu0 0.0
  %4098 = vmatprep.subr.mxu0 0.0
  %4099 = vmatpush2.msra.mxu0 0.0
  %4100 = vmatprep.subr.mxu0 0.0
  %4101 = vmatpush2.msra.mxu0 0.0
  %4102 = vmatprep.subr.mxu0 0.0
  %4103 = vmatpush2.msra.mxu0 0.0
  %4104 = vmatprep.subr.mxu0 0.0
  %4105 = vmatpush2.msra.mxu0 0.0
  %4106 = vmatprep.subr.mxu0 0.0
  %4107 = vmatpush2.msra.mxu0 0.0
  %4108 = vmatprep.subr.mxu0 0.0
  %4109 = vmatpush2.msra.mxu0 0.0
  %4110 = vmatprep.subr.mxu0 0.0
  %4111 = vmatpush2.msra.mxu0 0.0
  %4112 = vmatprep.subr.mxu0 0.0
  %4113 = vmatpush2.msra.mxu0 0.0
  %4114 = vmatprep.subr.mxu0 0.0
  %4115 = vmatpush2.msra.mxu0 %v3976
  %4116 = vmatprep.mubr.f32.mxu0 %v1541
  %4117 = vmatmul.mubr.f32.gmra.mxu0 %v633
  %v4118 = vpop.f32.mrf.mxu0
  %v4119 = vadd.f32 %v4044, %v4118
  %v4120 = vpop.f32.mrf.mxu0
  %4121 = vmatprep.mubr.f32.mxu0 %v1544
  %4122 = vmatmul.mubr.f32.gmra.mxu0 %v637
  %v4123 = vpop.f32.mrf.mxu0
  %v4124 = vadd.f32 %v4049, %v4123
  %v4125 = vpop.f32.mrf.mxu0
  %4126 = vdwg.mxu0
  %s4127 = scalar_lea.vmem %s9, 128
  %v4128 = vld [vmem:[%s4127] sm:$0xff]
  %v4129 = vld [vmem:[%s4127 + $0x8] sm:$0xff]
  %4131 = vset.pattern.permute.xlu0 0
  %4132 = vperm.xlu0 %4131, %v4128
  %v4133 = vpop.permute.xlu0 %4132
  %4136 = vset.pattern.permute.xlu0 0
  %4137 = vperm.xlu0 %4136, %v4129
  %v4138 = vpop.permute.xlu0 %4137
  %v4140 = vmul.f32 %v4119, %v4133
  %v4141 = vmul.f32 %v4124, %v4138
  %v4142 = vadd.f32 %v3877, %v4140
  %v4143 = vadd.f32 %v3878, %v4141
  %v4144 = vld [vmem:[%s10] sm:$0xff]
  %v4145 = vld [vmem:[%s10 + $0x8] sm:$0xff]
  %4147 = vset.pattern.permute.xlu0 0
  %4148 = vperm.xlu0 %4147, %v4144
  %v4149 = vpop.permute.xlu0 %4148
  %4152 = vset.pattern.permute.xlu0 0
  %4153 = vperm.xlu0 %4152, %v4145
  %v4154 = vpop.permute.xlu0 %4153
  %v4156 = vadd.f32 %v4142, %v4149
  %v4157 = vadd.f32 %v4143, %v4154
  %vm4158 = vcmask 801792
  %v4159 = vsel %vm4158, %v4156, 0.0
  %4160 = vadd.xlane.f32.xlu0 %v4159
  %v4161 = vpop.xlane.xlu0 %4160
  %v4162 = vsel %vm4158, %v4157, 0.0
  %4163 = vadd.xlane.f32.xlu0 %v4162
  %v4164 = vpop.xlane.xlu0 %4163
  %v4165 = vrcp.pop 98.0
  %v4166 = vmul.f32 %v4161, %v4165
  %v4167 = vmul.f32 %v4164, %v4165
  %v4168 = vsub.f32 %v4156, %v4166
  %v4169 = vsub.f32 %v4157, %v4167
  %v4170 = vmul.f32 %v4168, %v4168
  %v4171 = vmul.f32 %v4169, %v4169
  %v4172 = vsel %vm4158, %v4170, 0.0
  %4173 = vadd.xlane.f32.xlu0 %v4172
  %v4174 = vpop.xlane.xlu0 %4173
  %v4175 = vsel %vm4158, %v4171, 0.0
  %4176 = vadd.xlane.f32.xlu0 %v4175
  %v4177 = vpop.xlane.xlu0 %4176
  %v4178 = vmul.f32 %v4174, %v4165
  %v4179 = vmul.f32 %v4177, %v4165
  %v4180 = vld [vmem:[%s11] sm:$0xff]
  %v4181 = vld [vmem:[%s11 + $0x8] sm:$0xff]
  %v4182 = vadd.f32 %v4178, 1e-05
  %v4183 = vadd.f32 %v4179, 1e-05
  %v4184 = vrsqrt.pop %v4182
  %v4185 = vrsqrt.pop %v4183
  %v4186 = vmul.f32 %v4180, %v4184
  %v4187 = vmul.f32 %v4181, %v4185
  %v4188 = vld [vmem:[%s12] sm:$0xff]
  %v4189 = vld [vmem:[%s12 + $0x8] sm:$0xff]
  %v4190 = vmul.f32 %v4186, %v4166
  %v4191 = vmul.f32 %v4187, %v4167
  %v4192 = vsub.f32 %v4188, %v4190
  %v4193 = vsub.f32 %v4189, %v4191
  %4195 = vset.pattern.permute.xlu0 0
  %4196 = vperm.xlu0 %4195, %v4186
  %v4197 = vpop.permute.xlu0 %4196
  %4200 = vset.pattern.permute.xlu0 0
  %4201 = vperm.xlu0 %4200, %v4187
  %v4202 = vpop.permute.xlu0 %4201
  %v4204 = vmul.f32 %v4156, %v4197
  %v4205 = vmul.f32 %v4157, %v4202
  %4207 = vset.pattern.permute.xlu0 0
  %4208 = vperm.xlu0 %4207, %v4192
  %v4209 = vpop.permute.xlu0 %4208
  %4212 = vset.pattern.permute.xlu0 0
  %4213 = vperm.xlu0 %4212, %v4193
  %v4214 = vpop.permute.xlu0 %4213
  %v4216 = vadd.f32 %v4204, %v4209
  %v4217 = vadd.f32 %v4205, %v4214
  %v4218 = vld [vmem:[%s3] sm:$0xff]
  %v4219 = vld [vmem:[%s3 + $0x8] sm:$0xff]
  %v4220 = vld [vmem:[%s3 + $0x10] sm:$0xff]
  %v4221 = vld [vmem:[%s3 + $0x18] sm:$0xff]
  %v4222 = vld [vmem:[%s3 + $0x20] sm:$0xff]
  %v4223 = vld [vmem:[%s3 + $0x28] sm:$0xff]
  %v4224 = vld [vmem:[%s3 + $0x30] sm:$0xff]
  %v4225 = vld [vmem:[%s3 + $0x38] sm:$0xff]
  %v4226 = vld [vmem:[%s3 + $0x40] sm:$0xff]
  %v4227 = vld [vmem:[%s3 + $0x48] sm:$0xff]
  %v4228 = vld [vmem:[%s3 + $0x50] sm:$0xff]
  %v4229 = vld [vmem:[%s3 + $0x58] sm:$0xff]
  %v4230 = vld [vmem:[%s3 + $0x60] sm:$0x3]
  %s4231 = scalar_lea.vmem %s3, 104
  %v4232 = vld [vmem:[%s4231] sm:$0xff]
  %v4233 = vld [vmem:[%s4231 + $0x8] sm:$0xff]
  %v4234 = vld [vmem:[%s4231 + $0x10] sm:$0xff]
  %v4235 = vld [vmem:[%s4231 + $0x18] sm:$0xff]
  %v4236 = vld [vmem:[%s4231 + $0x20] sm:$0xff]
  %v4237 = vld [vmem:[%s4231 + $0x28] sm:$0xff]
  %v4238 = vld [vmem:[%s4231 + $0x30] sm:$0xff]
  %v4239 = vld [vmem:[%s4231 + $0x38] sm:$0xff]
  %v4240 = vld [vmem:[%s4231 + $0x40] sm:$0xff]
  %v4241 = vld [vmem:[%s4231 + $0x48] sm:$0xff]
  %v4242 = vld [vmem:[%s4231 + $0x50] sm:$0xff]
  %v4243 = vld [vmem:[%s4231 + $0x58] sm:$0xff]
  %v4244 = vld [vmem:[%s4231 + $0x60] sm:$0x3]
  %s4245 = scalar_lea.vmem %s3, 208
  %v4246 = vld [vmem:[%s4245] sm:$0xff]
  %v4247 = vld [vmem:[%s4245 + $0x8] sm:$0xff]
  %v4248 = vld [vmem:[%s4245 + $0x10] sm:$0xff]
  %v4249 = vld [vmem:[%s4245 + $0x18] sm:$0xff]
  %v4250 = vld [vmem:[%s4245 + $0x20] sm:$0xff]
  %v4251 = vld [vmem:[%s4245 + $0x28] sm:$0xff]
  %v4252 = vld [vmem:[%s4245 + $0x30] sm:$0xff]
  %v4253 = vld [vmem:[%s4245 + $0x38] sm:$0xff]
  %v4254 = vld [vmem:[%s4245 + $0x40] sm:$0xff]
  %v4255 = vld [vmem:[%s4245 + $0x48] sm:$0xff]
  %v4256 = vld [vmem:[%s4245 + $0x50] sm:$0xff]
  %v4257 = vld [vmem:[%s4245 + $0x58] sm:$0xff]
  %v4258 = vld [vmem:[%s4245 + $0x60] sm:$0x3]
  %v4259 = vld [vmem:[%s4] sm:$0x1]
  %s4260 = scalar_lea.vmem %s4, 1
  %v4261 = vld [vmem:[%s4260] sm:$0x1]
  %s4262 = scalar_lea.vmem %s4, 2
  %v4263 = vld [vmem:[%s4262] sm:$0x1]
  %4264 = vset.pattern.permute.xlu0 0
  %4265 = vperm.xlu0 %4264, %v4218
  %v4266 = vpop.permute.xlu0 %4265
  %4267 = vset.pattern.permute.xlu0 0
  %4268 = vperm.xlu0 %4267, %v4219
  %v4269 = vpop.permute.xlu0 %4268
  %4270 = vset.pattern.permute.xlu0 0
  %4271 = vperm.xlu0 %4270, %v4220
  %v4272 = vpop.permute.xlu0 %4271
  %4273 = vset.pattern.permute.xlu0 0
  %4274 = vperm.xlu0 %4273, %v4221
  %v4275 = vpop.permute.xlu0 %4274
  %4276 = vset.pattern.permute.xlu0 0
  %4277 = vperm.xlu0 %4276, %v4222
  %v4278 = vpop.permute.xlu0 %4277
  %4279 = vset.pattern.permute.xlu0 0
  %4280 = vperm.xlu0 %4279, %v4223
  %v4281 = vpop.permute.xlu0 %4280
  %4282 = vset.pattern.permute.xlu0 0
  %4283 = vperm.xlu0 %4282, %v4224
  %v4284 = vpop.permute.xlu0 %4283
  %4285 = vset.pattern.permute.xlu0 0
  %4286 = vperm.xlu0 %4285, %v4225
  %v4287 = vpop.permute.xlu0 %4286
  %4288 = vset.pattern.permute.xlu0 0
  %4289 = vperm.xlu0 %4288, %v4226
  %v4290 = vpop.permute.xlu0 %4289
  %4291 = vset.pattern.permute.xlu0 0
  %4292 = vperm.xlu0 %4291, %v4227
  %v4293 = vpop.permute.xlu0 %4292
  %4294 = vset.pattern.permute.xlu0 0
  %4295 = vperm.xlu0 %4294, %v4228
  %v4296 = vpop.permute.xlu0 %4295
  %4297 = vset.pattern.permute.xlu0 0
  %4298 = vperm.xlu0 %4297, %v4229
  %v4299 = vpop.permute.xlu0 %4298
  %4300 = vset.pattern.permute.xlu0 0
  %4301 = vperm.xlu0 %4300, %v4230
  %v4302 = vpop.permute.xlu0 %4301
  %v4303 = vlaneseq
  %v4304 = vshrl.u32 %v4303, 7
  %v4305 = vsub.s32 0, %v4304
  %v4306 = vrot.slane %v4259, %v4305
  %vm4307 = vcmp.eq.s32.totalorder %v4266, %v4306
  %vm4308 = vcmp.eq.s32.totalorder %v4269, %v4306
  %vm4309 = vcmp.eq.s32.totalorder %v4272, %v4306
  %vm4310 = vcmp.eq.s32.totalorder %v4275, %v4306
  %vm4311 = vcmp.eq.s32.totalorder %v4278, %v4306
  %vm4312 = vcmp.eq.s32.totalorder %v4281, %v4306
  %vm4313 = vcmp.eq.s32.totalorder %v4284, %v4306
  %vm4314 = vcmp.eq.s32.totalorder %v4287, %v4306
  %vm4315 = vcmp.eq.s32.totalorder %v4290, %v4306
  %vm4316 = vcmp.eq.s32.totalorder %v4293, %v4306
  %vm4317 = vcmp.eq.s32.totalorder %v4296, %v4306
  %vm4318 = vcmp.eq.s32.totalorder %v4299, %v4306
  %vm4319 = vcmp.eq.s32.totalorder %v4302, %v4306
  %4320 = vset.pattern.permute.xlu0 0
  %4321 = vperm.xlu0 %4320, %v4232
  %v4322 = vpop.permute.xlu0 %4321
  %4323 = vset.pattern.permute.xlu0 0
  %4324 = vperm.xlu0 %4323, %v4233
  %v4325 = vpop.permute.xlu0 %4324
  %4326 = vset.pattern.permute.xlu0 0
  %4327 = vperm.xlu0 %4326, %v4234
  %v4328 = vpop.permute.xlu0 %4327
  %4329 = vset.pattern.permute.xlu0 0
  %4330 = vperm.xlu0 %4329, %v4235
  %v4331 = vpop.permute.xlu0 %4330
  %4332 = vset.pattern.permute.xlu0 0
  %4333 = vperm.xlu0 %4332, %v4236
  %v4334 = vpop.permute.xlu0 %4333
  %4335 = vset.pattern.permute.xlu0 0
  %4336 = vperm.xlu0 %4335, %v4237
  %v4337 = vpop.permute.xlu0 %4336
  %4338 = vset.pattern.permute.xlu0 0
  %4339 = vperm.xlu0 %4338, %v4238
  %v4340 = vpop.permute.xlu0 %4339
  %4341 = vset.pattern.permute.xlu0 0
  %4342 = vperm.xlu0 %4341, %v4239
  %v4343 = vpop.permute.xlu0 %4342
  %4344 = vset.pattern.permute.xlu0 0
  %4345 = vperm.xlu0 %4344, %v4240
  %v4346 = vpop.permute.xlu0 %4345
  %4347 = vset.pattern.permute.xlu0 0
  %4348 = vperm.xlu0 %4347, %v4241
  %v4349 = vpop.permute.xlu0 %4348
  %4350 = vset.pattern.permute.xlu0 0
  %4351 = vperm.xlu0 %4350, %v4242
  %v4352 = vpop.permute.xlu0 %4351
  %4353 = vset.pattern.permute.xlu0 0
  %4354 = vperm.xlu0 %4353, %v4243
  %v4355 = vpop.permute.xlu0 %4354
  %4356 = vset.pattern.permute.xlu0 0
  %4357 = vperm.xlu0 %4356, %v4244
  %v4358 = vpop.permute.xlu0 %4357
  %v4359 = vlaneseq
  %v4360 = vshrl.u32 %v4359, 7
  %v4361 = vsub.s32 0, %v4360
  %v4362 = vrot.slane %v4261, %v4361
  %vm4363 = vcmp.eq.s32.totalorder %v4322, %v4362
  %vm4364 = vcmp.eq.s32.totalorder %v4325, %v4362
  %vm4365 = vcmp.eq.s32.totalorder %v4328, %v4362
  %vm4366 = vcmp.eq.s32.totalorder %v4331, %v4362
  %vm4367 = vcmp.eq.s32.totalorder %v4334, %v4362
  %vm4368 = vcmp.eq.s32.totalorder %v4337, %v4362
  %vm4369 = vcmp.eq.s32.totalorder %v4340, %v4362
  %vm4370 = vcmp.eq.s32.totalorder %v4343, %v4362
  %vm4371 = vcmp.eq.s32.totalorder %v4346, %v4362
  %vm4372 = vcmp.eq.s32.totalorder %v4349, %v4362
  %vm4373 = vcmp.eq.s32.totalorder %v4352, %v4362
  %vm4374 = vcmp.eq.s32.totalorder %v4355, %v4362
  %vm4375 = vcmp.eq.s32.totalorder %v4358, %v4362
  %vm4376 = vmand %vm4307, %vm4363
  %vm4377 = vmand %vm4308, %vm4364
  %vm4378 = vmand %vm4309, %vm4365
  %vm4379 = vmand %vm4310, %vm4366
  %vm4380 = vmand %vm4311, %vm4367
  %vm4381 = vmand %vm4312, %vm4368
  %vm4382 = vmand %vm4313, %vm4369
  %vm4383 = vmand %vm4314, %vm4370
  %vm4384 = vmand %vm4315, %vm4371
  %vm4385 = vmand %vm4316, %vm4372
  %vm4386 = vmand %vm4317, %vm4373
  %vm4387 = vmand %vm4318, %vm4374
  %vm4388 = vmand %vm4319, %vm4375
  %4389 = vset.pattern.permute.xlu0 0
  %4390 = vperm.xlu0 %4389, %v4246
  %v4391 = vpop.permute.xlu0 %4390
  %4392 = vset.pattern.permute.xlu0 0
  %4393 = vperm.xlu0 %4392, %v4247
  %v4394 = vpop.permute.xlu0 %4393
  %4395 = vset.pattern.permute.xlu0 0
  %4396 = vperm.xlu0 %4395, %v4248
  %v4397 = vpop.permute.xlu0 %4396
  %4398 = vset.pattern.permute.xlu0 0
  %4399 = vperm.xlu0 %4398, %v4249
  %v4400 = vpop.permute.xlu0 %4399
  %4401 = vset.pattern.permute.xlu0 0
  %4402 = vperm.xlu0 %4401, %v4250
  %v4403 = vpop.permute.xlu0 %4402
  %4404 = vset.pattern.permute.xlu0 0
  %4405 = vperm.xlu0 %4404, %v4251
  %v4406 = vpop.permute.xlu0 %4405
  %4407 = vset.pattern.permute.xlu0 0
  %4408 = vperm.xlu0 %4407, %v4252
  %v4409 = vpop.permute.xlu0 %4408
  %4410 = vset.pattern.permute.xlu0 0
  %4411 = vperm.xlu0 %4410, %v4253
  %v4412 = vpop.permute.xlu0 %4411
  %4413 = vset.pattern.permute.xlu0 0
  %4414 = vperm.xlu0 %4413, %v4254
  %v4415 = vpop.permute.xlu0 %4414
  %4416 = vset.pattern.permute.xlu0 0
  %4417 = vperm.xlu0 %4416, %v4255
  %v4418 = vpop.permute.xlu0 %4417
  %4419 = vset.pattern.permute.xlu0 0
  %4420 = vperm.xlu0 %4419, %v4256
  %v4421 = vpop.permute.xlu0 %4420
  %4422 = vset.pattern.permute.xlu0 0
  %4423 = vperm.xlu0 %4422, %v4257
  %v4424 = vpop.permute.xlu0 %4423
  %4425 = vset.pattern.permute.xlu0 0
  %4426 = vperm.xlu0 %4425, %v4258
  %v4427 = vpop.permute.xlu0 %4426
  %v4428 = vlaneseq
  %v4429 = vshrl.u32 %v4428, 7
  %v4430 = vsub.s32 0, %v4429
  %v4431 = vrot.slane %v4263, %v4430
  %vm4432 = vcmp.eq.s32.totalorder %v4391, %v4431
  %vm4433 = vcmp.eq.s32.totalorder %v4394, %v4431
  %vm4434 = vcmp.eq.s32.totalorder %v4397, %v4431
  %vm4435 = vcmp.eq.s32.totalorder %v4400, %v4431
  %vm4436 = vcmp.eq.s32.totalorder %v4403, %v4431
  %vm4437 = vcmp.eq.s32.totalorder %v4406, %v4431
  %vm4438 = vcmp.eq.s32.totalorder %v4409, %v4431
  %vm4439 = vcmp.eq.s32.totalorder %v4412, %v4431
  %vm4440 = vcmp.eq.s32.totalorder %v4415, %v4431
  %vm4441 = vcmp.eq.s32.totalorder %v4418, %v4431
  %vm4442 = vcmp.eq.s32.totalorder %v4421, %v4431
  %vm4443 = vcmp.eq.s32.totalorder %v4424, %v4431
  %vm4444 = vcmp.eq.s32.totalorder %v4427, %v4431
  %vm4445 = vmand %vm4376, %vm4432
  %vm4446 = vmand %vm4377, %vm4433
  %vm4447 = vmand %vm4378, %vm4434
  %vm4448 = vmand %vm4379, %vm4435
  %vm4449 = vmand %vm4380, %vm4436
  %vm4450 = vmand %vm4381, %vm4437
  %vm4451 = vmand %vm4382, %vm4438
  %vm4452 = vmand %vm4383, %vm4439
  %vm4453 = vmand %vm4384, %vm4440
  %vm4454 = vmand %vm4385, %vm4441
  %vm4455 = vmand %vm4386, %vm4442
  %vm4456 = vmand %vm4387, %vm4443
  %vm4457 = vmand %vm4388, %vm4444
  %v4458 = vsel %vm4445, 1.0, 0.0
  %v4459 = vsel %vm4446, 1.0, 0.0
  %v4460 = vsel %vm4447, 1.0, 0.0
  %v4461 = vsel %vm4448, 1.0, 0.0
  %v4462 = vsel %vm4449, 1.0, 0.0
  %v4463 = vsel %vm4450, 1.0, 0.0
  %v4464 = vsel %vm4451, 1.0, 0.0
  %v4465 = vsel %vm4452, 1.0, 0.0
  %v4466 = vsel %vm4453, 1.0, 0.0
  %v4467 = vsel %vm4454, 1.0, 0.0
  %v4468 = vsel %vm4455, 1.0, 0.0
  %v4469 = vsel %vm4456, 1.0, 0.0
  %v4470 = vsel %vm4457, 1.0, 0.0
  %v4472 = vsel %vm4158, %v4216, 0
  %v4475 = vsel %vm4158, %v4217, 0
  %vm4477 = vcmask 1041408
  %v4479 = vsel %vm4477, %v4470, 0
  %4481 = vmatprep.subr.mxu0 0.0
  %4482 = vmatpush1.msra.mxu0 0.0
  %4483 = vmatprep.subr.mxu0 0.0
  %4484 = vmatpush1.msra.mxu0 0.0
  %4485 = vmatprep.subr.mxu0 0.0
  %4486 = vmatpush1.msra.mxu0 0.0
  %4487 = vmatprep.subr.mxu0 0.0
  %4488 = vmatpush1.msra.mxu0 %v4479
  %4489 = vmatprep.subr.mxu0 0.0
  %4490 = vmatpush1.msra.mxu0 %v4469
  %4491 = vmatprep.subr.mxu0 0.0
  %4492 = vmatpush1.msra.mxu0 %v4468
  %4493 = vmatprep.subr.mxu0 0.0
  %4494 = vmatpush1.msra.mxu0 %v4467
  %4495 = vmatprep.subr.mxu0 0.0
  %4496 = vmatpush1.msra.mxu0 %v4466
  %4497 = vmatprep.subr.mxu0 0.0
  %4498 = vmatpush1.msra.mxu0 %v4465
  %4499 = vmatprep.subr.mxu0 0.0
  %4500 = vmatpush1.msra.mxu0 %v4464
  %4501 = vmatprep.subr.mxu0 0.0
  %4502 = vmatpush1.msra.mxu0 %v4463
  %4503 = vmatprep.subr.mxu0 0.0
  %4504 = vmatpush1.msra.mxu0 %v4462
  %4505 = vmatprep.subr.mxu0 0.0
  %4506 = vmatpush1.msra.mxu0 %v4461
  %4507 = vmatprep.subr.mxu0 0.0
  %4508 = vmatpush1.msra.mxu0 %v4460
  %4509 = vmatprep.subr.mxu0 0.0
  %4510 = vmatpush1.msra.mxu0 %v4459
  %4511 = vmatprep.subr.mxu0 0.0
  %4512 = vmatpush1.msra.mxu0 %v4458
  %4513 = vmatprep.subr.mxu0 0.0
  %4514 = vmatpush2.msra.mxu0 0.0
  %4515 = vmatprep.subr.mxu0 0.0
  %4516 = vmatpush2.msra.mxu0 0.0
  %4517 = vmatprep.subr.mxu0 0.0
  %4518 = vmatpush2.msra.mxu0 0.0
  %4519 = vmatprep.subr.mxu0 0.0
  %4520 = vmatpush2.msra.mxu0 0.0
  %4521 = vmatprep.subr.mxu0 0.0
  %4522 = vmatpush2.msra.mxu0 0.0
  %4523 = vmatprep.subr.mxu0 0.0
  %4524 = vmatpush2.msra.mxu0 0.0
  %4525 = vmatprep.subr.mxu0 0.0
  %4526 = vmatpush2.msra.mxu0 0.0
  %4527 = vmatprep.subr.mxu0 0.0
  %4528 = vmatpush2.msra.mxu0 0.0
  %4529 = vmatprep.subr.mxu0 0.0
  %4530 = vmatpush2.msra.mxu0 0.0
  %4531 = vmatprep.subr.mxu0 0.0
  %4532 = vmatpush2.msra.mxu0 0.0
  %4533 = vmatprep.subr.mxu0 0.0
  %4534 = vmatpush2.msra.mxu0 0.0
  %4535 = vmatprep.subr.mxu0 0.0
  %4536 = vmatpush2.msra.mxu0 0.0
  %4537 = vmatprep.subr.mxu0 0.0
  %4538 = vmatpush2.msra.mxu0 0.0
  %4539 = vmatprep.subr.mxu0 0.0
  %4540 = vmatpush2.msra.mxu0 0.0
  %4541 = vmatprep.subr.mxu0 0.0
  %4542 = vmatpush2.msra.mxu0 0.0
  %4543 = vmatprep.subr.mxu0 0.0
  %4544 = vmatpush2.msra.mxu0 0.0
  %4545 = vmatprep.mubr.f32.mxu0 0.0
  %4546 = vmatmul.mubr.f32.gmra.mxu0 %v4472
  %v4547 = vpop.f32.mrf.mxu0
  %v4548 = vadd.f32 0.0, %v4547
  %v4549 = vpop.f32.mrf.mxu0
  %4550 = vmatprep.mubr.f32.mxu0 0.0
  %4551 = vmatmul.mubr.f32.gmra.mxu0 %v4475
  %v4552 = vpop.f32.mrf.mxu0
  %v4553 = vadd.f32 0.0, %v4552
  %v4554 = vpop.f32.mrf.mxu0
  %4555 = vdwg.mxu0
  %v4556 = vld [vmem:[%s13] sm:$0xff]
  %v4557 = vld [vmem:[%s13 + $0x8] sm:$0xff]
  %4559 = vset.pattern.permute.xlu0 0
  %4560 = vperm.xlu0 %4559, %v4556
  %v4561 = vpop.permute.xlu0 %4560
  %4564 = vset.pattern.permute.xlu0 0
  %4565 = vperm.xlu0 %4564, %v4557
  %v4566 = vpop.permute.xlu0 %4565
  %v4568 = vmul.f32 %v4548, %v4561
  %v4569 = vmul.f32 %v4553, %v4566
  %v4570 = vadd.s32 %v4263, 1
  %v4571 = vlaneseq
  %v4572 = vshrl.u32 %v4571, 7
  %v4573 = vsub.s32 0, %v4572
  %v4574 = vrot.slane %v4570, %v4573
  %vm4575 = vcmp.eq.s32.totalorder %v4391, %v4574
  %vm4576 = vcmp.eq.s32.totalorder %v4394, %v4574
  %vm4577 = vcmp.eq.s32.totalorder %v4397, %v4574
  %vm4578 = vcmp.eq.s32.totalorder %v4400, %v4574
  %vm4579 = vcmp.eq.s32.totalorder %v4403, %v4574
  %vm4580 = vcmp.eq.s32.totalorder %v4406, %v4574
  %vm4581 = vcmp.eq.s32.totalorder %v4409, %v4574
  %vm4582 = vcmp.eq.s32.totalorder %v4412, %v4574
  %vm4583 = vcmp.eq.s32.totalorder %v4415, %v4574
  %vm4584 = vcmp.eq.s32.totalorder %v4418, %v4574
  %vm4585 = vcmp.eq.s32.totalorder %v4421, %v4574
  %vm4586 = vcmp.eq.s32.totalorder %v4424, %v4574
  %vm4587 = vcmp.eq.s32.totalorder %v4427, %v4574
  %vm4588 = vmand %vm4376, %vm4575
  %vm4589 = vmand %vm4377, %vm4576
  %vm4590 = vmand %vm4378, %vm4577
  %vm4591 = vmand %vm4379, %vm4578
  %vm4592 = vmand %vm4380, %vm4579
  %vm4593 = vmand %vm4381, %vm4580
  %vm4594 = vmand %vm4382, %vm4581
  %vm4595 = vmand %vm4383, %vm4582
  %vm4596 = vmand %vm4384, %vm4583
  %vm4597 = vmand %vm4385, %vm4584
  %vm4598 = vmand %vm4386, %vm4585
  %vm4599 = vmand %vm4387, %vm4586
  %vm4600 = vmand %vm4388, %vm4587
  %v4601 = vsel %vm4588, 1.0, 0.0
  %v4602 = vsel %vm4589, 1.0, 0.0
  %v4603 = vsel %vm4590, 1.0, 0.0
  %v4604 = vsel %vm4591, 1.0, 0.0
  %v4605 = vsel %vm4592, 1.0, 0.0
  %v4606 = vsel %vm4593, 1.0, 0.0
  %v4607 = vsel %vm4594, 1.0, 0.0
  %v4608 = vsel %vm4595, 1.0, 0.0
  %v4609 = vsel %vm4596, 1.0, 0.0
  %v4610 = vsel %vm4597, 1.0, 0.0
  %v4611 = vsel %vm4598, 1.0, 0.0
  %v4612 = vsel %vm4599, 1.0, 0.0
  %v4613 = vsel %vm4600, 1.0, 0.0
  %v4615 = vsel %vm4477, %v4613, 0
  %4617 = vmatprep.subr.mxu0 0.0
  %4618 = vmatpush1.msra.mxu0 0.0
  %4619 = vmatprep.subr.mxu0 0.0
  %4620 = vmatpush1.msra.mxu0 0.0
  %4621 = vmatprep.subr.mxu0 0.0
  %4622 = vmatpush1.msra.mxu0 0.0
  %4623 = vmatprep.subr.mxu0 0.0
  %4624 = vmatpush1.msra.mxu0 %v4615
  %4625 = vmatprep.subr.mxu0 0.0
  %4626 = vmatpush1.msra.mxu0 %v4612
  %4627 = vmatprep.subr.mxu0 0.0
  %4628 = vmatpush1.msra.mxu0 %v4611
  %4629 = vmatprep.subr.mxu0 0.0
  %4630 = vmatpush1.msra.mxu0 %v4610
  %4631 = vmatprep.subr.mxu0 0.0
  %4632 = vmatpush1.msra.mxu0 %v4609
  %4633 = vmatprep.subr.mxu0 0.0
  %4634 = vmatpush1.msra.mxu0 %v4608
  %4635 = vmatprep.subr.mxu0 0.0
  %4636 = vmatpush1.msra.mxu0 %v4607
  %4637 = vmatprep.subr.mxu0 0.0
  %4638 = vmatpush1.msra.mxu0 %v4606
  %4639 = vmatprep.subr.mxu0 0.0
  %4640 = vmatpush1.msra.mxu0 %v4605
  %4641 = vmatprep.subr.mxu0 0.0
  %4642 = vmatpush1.msra.mxu0 %v4604
  %4643 = vmatprep.subr.mxu0 0.0
  %4644 = vmatpush1.msra.mxu0 %v4603
  %4645 = vmatprep.subr.mxu0 0.0
  %4646 = vmatpush1.msra.mxu0 %v4602
  %4647 = vmatprep.subr.mxu0 0.0
  %4648 = vmatpush1.msra.mxu0 %v4601
  %4649 = vmatprep.subr.mxu0 0.0
  %4650 = vmatpush2.msra.mxu0 0.0
  %4651 = vmatprep.subr.mxu0 0.0
  %4652 = vmatpush2.msra.mxu0 0.0
  %4653 = vmatprep.subr.mxu0 0.0
  %4654 = vmatpush2.msra.mxu0 0.0
  %4655 = vmatprep.subr.mxu0 0.0
  %4656 = vmatpush2.msra.mxu0 0.0
  %4657 = vmatprep.subr.mxu0 0.0
  %4658 = vmatpush2.msra.mxu0 0.0
  %4659 = vmatprep.subr.mxu0 0.0
  %4660 = vmatpush2.msra.mxu0 0.0
  %4661 = vmatprep.subr.mxu0 0.0
  %4662 = vmatpush2.msra.mxu0 0.0
  %4663 = vmatprep.subr.mxu0 0.0
  %4664 = vmatpush2.msra.mxu0 0.0
  %4665 = vmatprep.subr.mxu0 0.0
  %4666 = vmatpush2.msra.mxu0 0.0
  %4667 = vmatprep.subr.mxu0 0.0
  %4668 = vmatpush2.msra.mxu0 0.0
  %4669 = vmatprep.subr.mxu0 0.0
  %4670 = vmatpush2.msra.mxu0 0.0
  %4671 = vmatprep.subr.mxu0 0.0
  %4672 = vmatpush2.msra.mxu0 0.0
  %4673 = vmatprep.subr.mxu0 0.0
  %4674 = vmatpush2.msra.mxu0 0.0
  %4675 = vmatprep.subr.mxu0 0.0
  %4676 = vmatpush2.msra.mxu0 0.0
  %4677 = vmatprep.subr.mxu0 0.0
  %4678 = vmatpush2.msra.mxu0 0.0
  %4679 = vmatprep.subr.mxu0 0.0
  %4680 = vmatpush2.msra.mxu0 0.0
  %4681 = vmatprep.mubr.f32.mxu0 0.0
  %4682 = vmatmul.mubr.f32.gmra.mxu0 %v4472
  %v4683 = vpop.f32.mrf.mxu0
  %v4684 = vadd.f32 0.0, %v4683
  %v4685 = vpop.f32.mrf.mxu0
  %4686 = vmatprep.mubr.f32.mxu0 0.0
  %4687 = vmatmul.mubr.f32.gmra.mxu0 %v4475
  %v4688 = vpop.f32.mrf.mxu0
  %v4689 = vadd.f32 0.0, %v4688
  %v4690 = vpop.f32.mrf.mxu0
  %4691 = vdwg.mxu0
  %s4692 = scalar_lea.vmem %s13, 16
  %v4693 = vld [vmem:[%s4692] sm:$0xff]
  %v4694 = vld [vmem:[%s4692 + $0x8] sm:$0xff]
  %4696 = vset.pattern.permute.xlu0 0
  %4697 = vperm.xlu0 %4696, %v4693
  %v4698 = vpop.permute.xlu0 %4697
  %4701 = vset.pattern.permute.xlu0 0
  %4702 = vperm.xlu0 %4701, %v4694
  %v4703 = vpop.permute.xlu0 %4702
  %v4705 = vmul.f32 %v4684, %v4698
  %v4706 = vmul.f32 %v4689, %v4703
  %v4707 = vadd.f32 %v4568, %v4705
  %v4708 = vadd.f32 %v4569, %v4706
  %v4709 = vadd.s32 %v4263, 2
  %v4710 = vlaneseq
  %v4711 = vshrl.u32 %v4710, 7
  %v4712 = vsub.s32 0, %v4711
  %v4713 = vrot.slane %v4709, %v4712
  %vm4714 = vcmp.eq.s32.totalorder %v4391, %v4713
  %vm4715 = vcmp.eq.s32.totalorder %v4394, %v4713
  %vm4716 = vcmp.eq.s32.totalorder %v4397, %v4713
  %vm4717 = vcmp.eq.s32.totalorder %v4400, %v4713
  %vm4718 = vcmp.eq.s32.totalorder %v4403, %v4713
  %vm4719 = vcmp.eq.s32.totalorder %v4406, %v4713
  %vm4720 = vcmp.eq.s32.totalorder %v4409, %v4713
  %vm4721 = vcmp.eq.s32.totalorder %v4412, %v4713
  %vm4722 = vcmp.eq.s32.totalorder %v4415, %v4713
  %vm4723 = vcmp.eq.s32.totalorder %v4418, %v4713
  %vm4724 = vcmp.eq.s32.totalorder %v4421, %v4713
  %vm4725 = vcmp.eq.s32.totalorder %v4424, %v4713
  %vm4726 = vcmp.eq.s32.totalorder %v4427, %v4713
  %vm4727 = vmand %vm4376, %vm4714
  %vm4728 = vmand %vm4377, %vm4715
  %vm4729 = vmand %vm4378, %vm4716
  %vm4730 = vmand %vm4379, %vm4717
  %vm4731 = vmand %vm4380, %vm4718
  %vm4732 = vmand %vm4381, %vm4719
  %vm4733 = vmand %vm4382, %vm4720
  %vm4734 = vmand %vm4383, %vm4721
  %vm4735 = vmand %vm4384, %vm4722
  %vm4736 = vmand %vm4385, %vm4723
  %vm4737 = vmand %vm4386, %vm4724
  %vm4738 = vmand %vm4387, %vm4725
  %vm4739 = vmand %vm4388, %vm4726
  %v4740 = vsel %vm4727, 1.0, 0.0
  %v4741 = vsel %vm4728, 1.0, 0.0
  %v4742 = vsel %vm4729, 1.0, 0.0
  %v4743 = vsel %vm4730, 1.0, 0.0
  %v4744 = vsel %vm4731, 1.0, 0.0
  %v4745 = vsel %vm4732, 1.0, 0.0
  %v4746 = vsel %vm4733, 1.0, 0.0
  %v4747 = vsel %vm4734, 1.0, 0.0
  %v4748 = vsel %vm4735, 1.0, 0.0
  %v4749 = vsel %vm4736, 1.0, 0.0
  %v4750 = vsel %vm4737, 1.0, 0.0
  %v4751 = vsel %vm4738, 1.0, 0.0
  %v4752 = vsel %vm4739, 1.0, 0.0
  %v4754 = vsel %vm4477, %v4752, 0
  %4756 = vmatprep.subr.mxu0 0.0
  %4757 = vmatpush1.msra.mxu0 0.0
  %4758 = vmatprep.subr.mxu0 0.0
  %4759 = vmatpush1.msra.mxu0 0.0
  %4760 = vmatprep.subr.mxu0 0.0
  %4761 = vmatpush1.msra.mxu0 0.0
  %4762 = vmatprep.subr.mxu0 0.0
  %4763 = vmatpush1.msra.mxu0 %v4754
  %4764 = vmatprep.subr.mxu0 0.0
  %4765 = vmatpush1.msra.mxu0 %v4751
  %4766 = vmatprep.subr.mxu0 0.0
  %4767 = vmatpush1.msra.mxu0 %v4750
  %4768 = vmatprep.subr.mxu0 0.0
  %4769 = vmatpush1.msra.mxu0 %v4749
  %4770 = vmatprep.subr.mxu0 0.0
  %4771 = vmatpush1.msra.mxu0 %v4748
  %4772 = vmatprep.subr.mxu0 0.0
  %4773 = vmatpush1.msra.mxu0 %v4747
  %4774 = vmatprep.subr.mxu0 0.0
  %4775 = vmatpush1.msra.mxu0 %v4746
  %4776 = vmatprep.subr.mxu0 0.0
  %4777 = vmatpush1.msra.mxu0 %v4745
  %4778 = vmatprep.subr.mxu0 0.0
  %4779 = vmatpush1.msra.mxu0 %v4744
  %4780 = vmatprep.subr.mxu0 0.0
  %4781 = vmatpush1.msra.mxu0 %v4743
  %4782 = vmatprep.subr.mxu0 0.0
  %4783 = vmatpush1.msra.mxu0 %v4742
  %4784 = vmatprep.subr.mxu0 0.0
  %4785 = vmatpush1.msra.mxu0 %v4741
  %4786 = vmatprep.subr.mxu0 0.0
  %4787 = vmatpush1.msra.mxu0 %v4740
  %4788 = vmatprep.subr.mxu0 0.0
  %4789 = vmatpush2.msra.mxu0 0.0
  %4790 = vmatprep.subr.mxu0 0.0
  %4791 = vmatpush2.msra.mxu0 0.0
  %4792 = vmatprep.subr.mxu0 0.0
  %4793 = vmatpush2.msra.mxu0 0.0
  %4794 = vmatprep.subr.mxu0 0.0
  %4795 = vmatpush2.msra.mxu0 0.0
  %4796 = vmatprep.subr.mxu0 0.0
  %4797 = vmatpush2.msra.mxu0 0.0
  %4798 = vmatprep.subr.mxu0 0.0
  %4799 = vmatpush2.msra.mxu0 0.0
  %4800 = vmatprep.subr.mxu0 0.0
  %4801 = vmatpush2.msra.mxu0 0.0
  %4802 = vmatprep.subr.mxu0 0.0
  %4803 = vmatpush2.msra.mxu0 0.0
  %4804 = vmatprep.subr.mxu0 0.0
  %4805 = vmatpush2.msra.mxu0 0.0
  %4806 = vmatprep.subr.mxu0 0.0
  %4807 = vmatpush2.msra.mxu0 0.0
  %4808 = vmatprep.subr.mxu0 0.0
  %4809 = vmatpush2.msra.mxu0 0.0
  %4810 = vmatprep.subr.mxu0 0.0
  %4811 = vmatpush2.msra.mxu0 0.0
  %4812 = vmatprep.subr.mxu0 0.0
  %4813 = vmatpush2.msra.mxu0 0.0
  %4814 = vmatprep.subr.mxu0 0.0
  %4815 = vmatpush2.msra.mxu0 0.0
  %4816 = vmatprep.subr.mxu0 0.0
  %4817 = vmatpush2.msra.mxu0 0.0
  %4818 = vmatprep.subr.mxu0 0.0
  %4819 = vmatpush2.msra.mxu0 0.0
  %4820 = vmatprep.mubr.f32.mxu0 0.0
  %4821 = vmatmul.mubr.f32.gmra.mxu0 %v4472
  %v4822 = vpop.f32.mrf.mxu0
  %v4823 = vadd.f32 0.0, %v4822
  %v4824 = vpop.f32.mrf.mxu0
  %4825 = vmatprep.mubr.f32.mxu0 0.0
  %4826 = vmatmul.mubr.f32.gmra.mxu0 %v4475
  %v4827 = vpop.f32.mrf.mxu0
  %v4828 = vadd.f32 0.0, %v4827
  %v4829 = vpop.f32.mrf.mxu0
  %4830 = vdwg.mxu0
  %s4831 = scalar_lea.vmem %s13, 32
  %v4832 = vld [vmem:[%s4831] sm:$0xff]
  %v4833 = vld [vmem:[%s4831 + $0x8] sm:$0xff]
  %4835 = vset.pattern.permute.xlu0 0
  %4836 = vperm.xlu0 %4835, %v4832
  %v4837 = vpop.permute.xlu0 %4836
  %4840 = vset.pattern.permute.xlu0 0
  %4841 = vperm.xlu0 %4840, %v4833
  %v4842 = vpop.permute.xlu0 %4841
  %v4844 = vmul.f32 %v4823, %v4837
  %v4845 = vmul.f32 %v4828, %v4842
  %v4846 = vadd.f32 %v4707, %v4844
  %v4847 = vadd.f32 %v4708, %v4845
  %v4848 = vadd.s32 %v4261, 1
  %v4849 = vlaneseq
  %v4850 = vshrl.u32 %v4849, 7
  %v4851 = vsub.s32 0, %v4850
  %v4852 = vrot.slane %v4848, %v4851
  %vm4853 = vcmp.eq.s32.totalorder %v4322, %v4852
  %vm4854 = vcmp.eq.s32.totalorder %v4325, %v4852
  %vm4855 = vcmp.eq.s32.totalorder %v4328, %v4852
  %vm4856 = vcmp.eq.s32.totalorder %v4331, %v4852
  %vm4857 = vcmp.eq.s32.totalorder %v4334, %v4852
  %vm4858 = vcmp.eq.s32.totalorder %v4337, %v4852
  %vm4859 = vcmp.eq.s32.totalorder %v4340, %v4852
  %vm4860 = vcmp.eq.s32.totalorder %v4343, %v4852
  %vm4861 = vcmp.eq.s32.totalorder %v4346, %v4852
  %vm4862 = vcmp.eq.s32.totalorder %v4349, %v4852
  %vm4863 = vcmp.eq.s32.totalorder %v4352, %v4852
  %vm4864 = vcmp.eq.s32.totalorder %v4355, %v4852
  %vm4865 = vcmp.eq.s32.totalorder %v4358, %v4852
  %vm4866 = vmand %vm4307, %vm4853
  %vm4867 = vmand %vm4308, %vm4854
  %vm4868 = vmand %vm4309, %vm4855
  %vm4869 = vmand %vm4310, %vm4856
  %vm4870 = vmand %vm4311, %vm4857
  %vm4871 = vmand %vm4312, %vm4858
  %vm4872 = vmand %vm4313, %vm4859
  %vm4873 = vmand %vm4314, %vm4860
  %vm4874 = vmand %vm4315, %vm4861
  %vm4875 = vmand %vm4316, %vm4862
  %vm4876 = vmand %vm4317, %vm4863
  %vm4877 = vmand %vm4318, %vm4864
  %vm4878 = vmand %vm4319, %vm4865
  %vm4879 = vmand %vm4866, %vm4432
  %vm4880 = vmand %vm4867, %vm4433
  %vm4881 = vmand %vm4868, %vm4434
  %vm4882 = vmand %vm4869, %vm4435
  %vm4883 = vmand %vm4870, %vm4436
  %vm4884 = vmand %vm4871, %vm4437
  %vm4885 = vmand %vm4872, %vm4438
  %vm4886 = vmand %vm4873, %vm4439
  %vm4887 = vmand %vm4874, %vm4440
  %vm4888 = vmand %vm4875, %vm4441
  %vm4889 = vmand %vm4876, %vm4442
  %vm4890 = vmand %vm4877, %vm4443
  %vm4891 = vmand %vm4878, %vm4444
  %v4892 = vsel %vm4879, 1.0, 0.0
  %v4893 = vsel %vm4880, 1.0, 0.0
  %v4894 = vsel %vm4881, 1.0, 0.0
  %v4895 = vsel %vm4882, 1.0, 0.0
  %v4896 = vsel %vm4883, 1.0, 0.0
  %v4897 = vsel %vm4884, 1.0, 0.0
  %v4898 = vsel %vm4885, 1.0, 0.0
  %v4899 = vsel %vm4886, 1.0, 0.0
  %v4900 = vsel %vm4887, 1.0, 0.0
  %v4901 = vsel %vm4888, 1.0, 0.0
  %v4902 = vsel %vm4889, 1.0, 0.0
  %v4903 = vsel %vm4890, 1.0, 0.0
  %v4904 = vsel %vm4891, 1.0, 0.0
  %v4906 = vsel %vm4477, %v4904, 0
  %4908 = vmatprep.subr.mxu0 0.0
  %4909 = vmatpush1.msra.mxu0 0.0
  %4910 = vmatprep.subr.mxu0 0.0
  %4911 = vmatpush1.msra.mxu0 0.0
  %4912 = vmatprep.subr.mxu0 0.0
  %4913 = vmatpush1.msra.mxu0 0.0
  %4914 = vmatprep.subr.mxu0 0.0
  %4915 = vmatpush1.msra.mxu0 %v4906
  %4916 = vmatprep.subr.mxu0 0.0
  %4917 = vmatpush1.msra.mxu0 %v4903
  %4918 = vmatprep.subr.mxu0 0.0
  %4919 = vmatpush1.msra.mxu0 %v4902
  %4920 = vmatprep.subr.mxu0 0.0
  %4921 = vmatpush1.msra.mxu0 %v4901
  %4922 = vmatprep.subr.mxu0 0.0
  %4923 = vmatpush1.msra.mxu0 %v4900
  %4924 = vmatprep.subr.mxu0 0.0
  %4925 = vmatpush1.msra.mxu0 %v4899
  %4926 = vmatprep.subr.mxu0 0.0
  %4927 = vmatpush1.msra.mxu0 %v4898
  %4928 = vmatprep.subr.mxu0 0.0
  %4929 = vmatpush1.msra.mxu0 %v4897
  %4930 = vmatprep.subr.mxu0 0.0
  %4931 = vmatpush1.msra.mxu0 %v4896
  %4932 = vmatprep.subr.mxu0 0.0
  %4933 = vmatpush1.msra.mxu0 %v4895
  %4934 = vmatprep.subr.mxu0 0.0
  %4935 = vmatpush1.msra.mxu0 %v4894
  %4936 = vmatprep.subr.mxu0 0.0
  %4937 = vmatpush1.msra.mxu0 %v4893
  %4938 = vmatprep.subr.mxu0 0.0
  %4939 = vmatpush1.msra.mxu0 %v4892
  %4940 = vmatprep.subr.mxu0 0.0
  %4941 = vmatpush2.msra.mxu0 0.0
  %4942 = vmatprep.subr.mxu0 0.0
  %4943 = vmatpush2.msra.mxu0 0.0
  %4944 = vmatprep.subr.mxu0 0.0
  %4945 = vmatpush2.msra.mxu0 0.0
  %4946 = vmatprep.subr.mxu0 0.0
  %4947 = vmatpush2.msra.mxu0 0.0
  %4948 = vmatprep.subr.mxu0 0.0
  %4949 = vmatpush2.msra.mxu0 0.0
  %4950 = vmatprep.subr.mxu0 0.0
  %4951 = vmatpush2.msra.mxu0 0.0
  %4952 = vmatprep.subr.mxu0 0.0
  %4953 = vmatpush2.msra.mxu0 0.0
  %4954 = vmatprep.subr.mxu0 0.0
  %4955 = vmatpush2.msra.mxu0 0.0
  %4956 = vmatprep.subr.mxu0 0.0
  %4957 = vmatpush2.msra.mxu0 0.0
  %4958 = vmatprep.subr.mxu0 0.0
  %4959 = vmatpush2.msra.mxu0 0.0
  %4960 = vmatprep.subr.mxu0 0.0
  %4961 = vmatpush2.msra.mxu0 0.0
  %4962 = vmatprep.subr.mxu0 0.0
  %4963 = vmatpush2.msra.mxu0 0.0
  %4964 = vmatprep.subr.mxu0 0.0
  %4965 = vmatpush2.msra.mxu0 0.0
  %4966 = vmatprep.subr.mxu0 0.0
  %4967 = vmatpush2.msra.mxu0 0.0
  %4968 = vmatprep.subr.mxu0 0.0
  %4969 = vmatpush2.msra.mxu0 0.0
  %4970 = vmatprep.subr.mxu0 0.0
  %4971 = vmatpush2.msra.mxu0 0.0
  %4972 = vmatprep.mubr.f32.mxu0 0.0
  %4973 = vmatmul.mubr.f32.gmra.mxu0 %v4472
  %v4974 = vpop.f32.mrf.mxu0
  %v4975 = vadd.f32 0.0, %v4974
  %v4976 = vpop.f32.mrf.mxu0
  %4977 = vmatprep.mubr.f32.mxu0 0.0
  %4978 = vmatmul.mubr.f32.gmra.mxu0 %v4475
  %v4979 = vpop.f32.mrf.mxu0
  %v4980 = vadd.f32 0.0, %v4979
  %v4981 = vpop.f32.mrf.mxu0
  %4982 = vdwg.mxu0
  %s4983 = scalar_lea.vmem %s13, 48
  %v4984 = vld [vmem:[%s4983] sm:$0xff]
  %v4985 = vld [vmem:[%s4983 + $0x8] sm:$0xff]
  %4987 = vset.pattern.permute.xlu0 0
  %4988 = vperm.xlu0 %4987, %v4984
  %v4989 = vpop.permute.xlu0 %4988
  %4992 = vset.pattern.permute.xlu0 0
  %4993 = vperm.xlu0 %4992, %v4985
  %v4994 = vpop.permute.xlu0 %4993
  %v4996 = vmul.f32 %v4975, %v4989
  %v4997 = vmul.f32 %v4980, %v4994
  %v4998 = vadd.f32 %v4846, %v4996
  %v4999 = vadd.f32 %v4847, %v4997
  %vm5000 = vmand %vm4866, %vm4575
  %vm5001 = vmand %vm4867, %vm4576
  %vm5002 = vmand %vm4868, %vm4577
  %vm5003 = vmand %vm4869, %vm4578
  %vm5004 = vmand %vm4870, %vm4579
  %vm5005 = vmand %vm4871, %vm4580
  %vm5006 = vmand %vm4872, %vm4581
  %vm5007 = vmand %vm4873, %vm4582
  %vm5008 = vmand %vm4874, %vm4583
  %vm5009 = vmand %vm4875, %vm4584
  %vm5010 = vmand %vm4876, %vm4585
  %vm5011 = vmand %vm4877, %vm4586
  %vm5012 = vmand %vm4878, %vm4587
  %v5013 = vsel %vm5000, 1.0, 0.0
  %v5014 = vsel %vm5001, 1.0, 0.0
  %v5015 = vsel %vm5002, 1.0, 0.0
  %v5016 = vsel %vm5003, 1.0, 0.0
  %v5017 = vsel %vm5004, 1.0, 0.0
  %v5018 = vsel %vm5005, 1.0, 0.0
  %v5019 = vsel %vm5006, 1.0, 0.0
  %v5020 = vsel %vm5007, 1.0, 0.0
  %v5021 = vsel %vm5008, 1.0, 0.0
  %v5022 = vsel %vm5009, 1.0, 0.0
  %v5023 = vsel %vm5010, 1.0, 0.0
  %v5024 = vsel %vm5011, 1.0, 0.0
  %v5025 = vsel %vm5012, 1.0, 0.0
  %v5027 = vsel %vm4477, %v5025, 0
  %5029 = vmatprep.subr.mxu0 0.0
  %5030 = vmatpush1.msra.mxu0 0.0
  %5031 = vmatprep.subr.mxu0 0.0
  %5032 = vmatpush1.msra.mxu0 0.0
  %5033 = vmatprep.subr.mxu0 0.0
  %5034 = vmatpush1.msra.mxu0 0.0
  %5035 = vmatprep.subr.mxu0 0.0
  %5036 = vmatpush1.msra.mxu0 %v5027
  %5037 = vmatprep.subr.mxu0 0.0
  %5038 = vmatpush1.msra.mxu0 %v5024
  %5039 = vmatprep.subr.mxu0 0.0
  %5040 = vmatpush1.msra.mxu0 %v5023
  %5041 = vmatprep.subr.mxu0 0.0
  %5042 = vmatpush1.msra.mxu0 %v5022
  %5043 = vmatprep.subr.mxu0 0.0
  %5044 = vmatpush1.msra.mxu0 %v5021
  %5045 = vmatprep.subr.mxu0 0.0
  %5046 = vmatpush1.msra.mxu0 %v5020
  %5047 = vmatprep.subr.mxu0 0.0
  %5048 = vmatpush1.msra.mxu0 %v5019
  %5049 = vmatprep.subr.mxu0 0.0
  %5050 = vmatpush1.msra.mxu0 %v5018
  %5051 = vmatprep.subr.mxu0 0.0
  %5052 = vmatpush1.msra.mxu0 %v5017
  %5053 = vmatprep.subr.mxu0 0.0
  %5054 = vmatpush1.msra.mxu0 %v5016
  %5055 = vmatprep.subr.mxu0 0.0
  %5056 = vmatpush1.msra.mxu0 %v5015
  %5057 = vmatprep.subr.mxu0 0.0
  %5058 = vmatpush1.msra.mxu0 %v5014
  %5059 = vmatprep.subr.mxu0 0.0
  %5060 = vmatpush1.msra.mxu0 %v5013
  %5061 = vmatprep.subr.mxu0 0.0
  %5062 = vmatpush2.msra.mxu0 0.0
  %5063 = vmatprep.subr.mxu0 0.0
  %5064 = vmatpush2.msra.mxu0 0.0
  %5065 = vmatprep.subr.mxu0 0.0
  %5066 = vmatpush2.msra.mxu0 0.0
  %5067 = vmatprep.subr.mxu0 0.0
  %5068 = vmatpush2.msra.mxu0 0.0
  %5069 = vmatprep.subr.mxu0 0.0
  %5070 = vmatpush2.msra.mxu0 0.0
  %5071 = vmatprep.subr.mxu0 0.0
  %5072 = vmatpush2.msra.mxu0 0.0
  %5073 = vmatprep.subr.mxu0 0.0
  %5074 = vmatpush2.msra.mxu0 0.0
  %5075 = vmatprep.subr.mxu0 0.0
  %5076 = vmatpush2.msra.mxu0 0.0
  %5077 = vmatprep.subr.mxu0 0.0
  %5078 = vmatpush2.msra.mxu0 0.0
  %5079 = vmatprep.subr.mxu0 0.0
  %5080 = vmatpush2.msra.mxu0 0.0
  %5081 = vmatprep.subr.mxu0 0.0
  %5082 = vmatpush2.msra.mxu0 0.0
  %5083 = vmatprep.subr.mxu0 0.0
  %5084 = vmatpush2.msra.mxu0 0.0
  %5085 = vmatprep.subr.mxu0 0.0
  %5086 = vmatpush2.msra.mxu0 0.0
  %5087 = vmatprep.subr.mxu0 0.0
  %5088 = vmatpush2.msra.mxu0 0.0
  %5089 = vmatprep.subr.mxu0 0.0
  %5090 = vmatpush2.msra.mxu0 0.0
  %5091 = vmatprep.subr.mxu0 0.0
  %5092 = vmatpush2.msra.mxu0 0.0
  %5093 = vmatprep.mubr.f32.mxu0 0.0
  %5094 = vmatmul.mubr.f32.gmra.mxu0 %v4472
  %v5095 = vpop.f32.mrf.mxu0
  %v5096 = vadd.f32 0.0, %v5095
  %v5097 = vpop.f32.mrf.mxu0
  %5098 = vmatprep.mubr.f32.mxu0 0.0
  %5099 = vmatmul.mubr.f32.gmra.mxu0 %v4475
  %v5100 = vpop.f32.mrf.mxu0
  %v5101 = vadd.f32 0.0, %v5100
  %v5102 = vpop.f32.mrf.mxu0
  %5103 = vdwg.mxu0
  %s5104 = scalar_lea.vmem %s13, 64
  %v5105 = vld [vmem:[%s5104] sm:$0xff]
  %v5106 = vld [vmem:[%s5104 + $0x8] sm:$0xff]
  %5108 = vset.pattern.permute.xlu0 0
  %5109 = vperm.xlu0 %5108, %v5105
  %v5110 = vpop.permute.xlu0 %5109
  %5113 = vset.pattern.permute.xlu0 0
  %5114 = vperm.xlu0 %5113, %v5106
  %v5115 = vpop.permute.xlu0 %5114
  %v5117 = vmul.f32 %v5096, %v5110
  %v5118 = vmul.f32 %v5101, %v5115
  %v5119 = vadd.f32 %v4998, %v5117
  %v5120 = vadd.f32 %v4999, %v5118
  %vm5121 = vmand %vm4866, %vm4714
  %vm5122 = vmand %vm4867, %vm4715
  %vm5123 = vmand %vm4868, %vm4716
  %vm5124 = vmand %vm4869, %vm4717
  %vm5125 = vmand %vm4870, %vm4718
  %vm5126 = vmand %vm4871, %vm4719
  %vm5127 = vmand %vm4872, %vm4720
  %vm5128 = vmand %vm4873, %vm4721
  %vm5129 = vmand %vm4874, %vm4722
  %vm5130 = vmand %vm4875, %vm4723
  %vm5131 = vmand %vm4876, %vm4724
  %vm5132 = vmand %vm4877, %vm4725
  %vm5133 = vmand %vm4878, %vm4726
  %v5134 = vsel %vm5121, 1.0, 0.0
  %v5135 = vsel %vm5122, 1.0, 0.0
  %v5136 = vsel %vm5123, 1.0, 0.0
  %v5137 = vsel %vm5124, 1.0, 0.0
  %v5138 = vsel %vm5125, 1.0, 0.0
  %v5139 = vsel %vm5126, 1.0, 0.0
  %v5140 = vsel %vm5127, 1.0, 0.0
  %v5141 = vsel %vm5128, 1.0, 0.0
  %v5142 = vsel %vm5129, 1.0, 0.0
  %v5143 = vsel %vm5130, 1.0, 0.0
  %v5144 = vsel %vm5131, 1.0, 0.0
  %v5145 = vsel %vm5132, 1.0, 0.0
  %v5146 = vsel %vm5133, 1.0, 0.0
  %v5148 = vsel %vm4477, %v5146, 0
  %5150 = vmatprep.subr.mxu0 0.0
  %5151 = vmatpush1.msra.mxu0 0.0
  %5152 = vmatprep.subr.mxu0 0.0
  %5153 = vmatpush1.msra.mxu0 0.0
  %5154 = vmatprep.subr.mxu0 0.0
  %5155 = vmatpush1.msra.mxu0 0.0
  %5156 = vmatprep.subr.mxu0 0.0
  %5157 = vmatpush1.msra.mxu0 %v5148
  %5158 = vmatprep.subr.mxu0 0.0
  %5159 = vmatpush1.msra.mxu0 %v5145
  %5160 = vmatprep.subr.mxu0 0.0
  %5161 = vmatpush1.msra.mxu0 %v5144
  %5162 = vmatprep.subr.mxu0 0.0
  %5163 = vmatpush1.msra.mxu0 %v5143
  %5164 = vmatprep.subr.mxu0 0.0
  %5165 = vmatpush1.msra.mxu0 %v5142
  %5166 = vmatprep.subr.mxu0 0.0
  %5167 = vmatpush1.msra.mxu0 %v5141
  %5168 = vmatprep.subr.mxu0 0.0
  %5169 = vmatpush1.msra.mxu0 %v5140
  %5170 = vmatprep.subr.mxu0 0.0
  %5171 = vmatpush1.msra.mxu0 %v5139
  %5172 = vmatprep.subr.mxu0 0.0
  %5173 = vmatpush1.msra.mxu0 %v5138
  %5174 = vmatprep.subr.mxu0 0.0
  %5175 = vmatpush1.msra.mxu0 %v5137
  %5176 = vmatprep.subr.mxu0 0.0
  %5177 = vmatpush1.msra.mxu0 %v5136
  %5178 = vmatprep.subr.mxu0 0.0
  %5179 = vmatpush1.msra.mxu0 %v5135
  %5180 = vmatprep.subr.mxu0 0.0
  %5181 = vmatpush1.msra.mxu0 %v5134
  %5182 = vmatprep.subr.mxu0 0.0
  %5183 = vmatpush2.msra.mxu0 0.0
  %5184 = vmatprep.subr.mxu0 0.0
  %5185 = vmatpush2.msra.mxu0 0.0
  %5186 = vmatprep.subr.mxu0 0.0
  %5187 = vmatpush2.msra.mxu0 0.0
  %5188 = vmatprep.subr.mxu0 0.0
  %5189 = vmatpush2.msra.mxu0 0.0
  %5190 = vmatprep.subr.mxu0 0.0
  %5191 = vmatpush2.msra.mxu0 0.0
  %5192 = vmatprep.subr.mxu0 0.0
  %5193 = vmatpush2.msra.mxu0 0.0
  %5194 = vmatprep.subr.mxu0 0.0
  %5195 = vmatpush2.msra.mxu0 0.0
  %5196 = vmatprep.subr.mxu0 0.0
  %5197 = vmatpush2.msra.mxu0 0.0
  %5198 = vmatprep.subr.mxu0 0.0
  %5199 = vmatpush2.msra.mxu0 0.0
  %5200 = vmatprep.subr.mxu0 0.0
  %5201 = vmatpush2.msra.mxu0 0.0
  %5202 = vmatprep.subr.mxu0 0.0
  %5203 = vmatpush2.msra.mxu0 0.0
  %5204 = vmatprep.subr.mxu0 0.0
  %5205 = vmatpush2.msra.mxu0 0.0
  %5206 = vmatprep.subr.mxu0 0.0
  %5207 = vmatpush2.msra.mxu0 0.0
  %5208 = vmatprep.subr.mxu0 0.0
  %5209 = vmatpush2.msra.mxu0 0.0
  %5210 = vmatprep.subr.mxu0 0.0
  %5211 = vmatpush2.msra.mxu0 0.0
  %5212 = vmatprep.subr.mxu0 0.0
  %5213 = vmatpush2.msra.mxu0 0.0
  %5214 = vmatprep.mubr.f32.mxu0 0.0
  %5215 = vmatmul.mubr.f32.gmra.mxu0 %v4472
  %v5216 = vpop.f32.mrf.mxu0
  %v5217 = vadd.f32 0.0, %v5216
  %v5218 = vpop.f32.mrf.mxu0
  %5219 = vmatprep.mubr.f32.mxu0 0.0
  %5220 = vmatmul.mubr.f32.gmra.mxu0 %v4475
  %v5221 = vpop.f32.mrf.mxu0
  %v5222 = vadd.f32 0.0, %v5221
  %v5223 = vpop.f32.mrf.mxu0
  %5224 = vdwg.mxu0
  %s5225 = scalar_lea.vmem %s13, 80
  %v5226 = vld [vmem:[%s5225] sm:$0xff]
  %v5227 = vld [vmem:[%s5225 + $0x8] sm:$0xff]
  %5229 = vset.pattern.permute.xlu0 0
  %5230 = vperm.xlu0 %5229, %v5226
  %v5231 = vpop.permute.xlu0 %5230
  %5234 = vset.pattern.permute.xlu0 0
  %5235 = vperm.xlu0 %5234, %v5227
  %v5236 = vpop.permute.xlu0 %5235
  %v5238 = vmul.f32 %v5217, %v5231
  %v5239 = vmul.f32 %v5222, %v5236
  %v5240 = vadd.f32 %v5119, %v5238
  %v5241 = vadd.f32 %v5120, %v5239
  %v5242 = vadd.s32 %v4261, 2
  %v5243 = vlaneseq
  %v5244 = vshrl.u32 %v5243, 7
  %v5245 = vsub.s32 0, %v5244
  %v5246 = vrot.slane %v5242, %v5245
  %vm5247 = vcmp.eq.s32.totalorder %v4322, %v5246
  %vm5248 = vcmp.eq.s32.totalorder %v4325, %v5246
  %vm5249 = vcmp.eq.s32.totalorder %v4328, %v5246
  %vm5250 = vcmp.eq.s32.totalorder %v4331, %v5246
  %vm5251 = vcmp.eq.s32.totalorder %v4334, %v5246
  %vm5252 = vcmp.eq.s32.totalorder %v4337, %v5246
  %vm5253 = vcmp.eq.s32.totalorder %v4340, %v5246
  %vm5254 = vcmp.eq.s32.totalorder %v4343, %v5246
  %vm5255 = vcmp.eq.s32.totalorder %v4346, %v5246
  %vm5256 = vcmp.eq.s32.totalorder %v4349, %v5246
  %vm5257 = vcmp.eq.s32.totalorder %v4352, %v5246
  %vm5258 = vcmp.eq.s32.totalorder %v4355, %v5246
  %vm5259 = vcmp.eq.s32.totalorder %v4358, %v5246
  %vm5260 = vmand %vm4307, %vm5247
  %vm5261 = vmand %vm4308, %vm5248
  %vm5262 = vmand %vm4309, %vm5249
  %vm5263 = vmand %vm4310, %vm5250
  %vm5264 = vmand %vm4311, %vm5251
  %vm5265 = vmand %vm4312, %vm5252
  %vm5266 = vmand %vm4313, %vm5253
  %vm5267 = vmand %vm4314, %vm5254
  %vm5268 = vmand %vm4315, %vm5255
  %vm5269 = vmand %vm4316, %vm5256
  %vm5270 = vmand %vm4317, %vm5257
  %vm5271 = vmand %vm4318, %vm5258
  %vm5272 = vmand %vm4319, %vm5259
  %vm5273 = vmand %vm5260, %vm4432
  %vm5274 = vmand %vm5261, %vm4433
  %vm5275 = vmand %vm5262, %vm4434
  %vm5276 = vmand %vm5263, %vm4435
  %vm5277 = vmand %vm5264, %vm4436
  %vm5278 = vmand %vm5265, %vm4437
  %vm5279 = vmand %vm5266, %vm4438
  %vm5280 = vmand %vm5267, %vm4439
  %vm5281 = vmand %vm5268, %vm4440
  %vm5282 = vmand %vm5269, %vm4441
  %vm5283 = vmand %vm5270, %vm4442
  %vm5284 = vmand %vm5271, %vm4443
  %vm5285 = vmand %vm5272, %vm4444
  %v5286 = vsel %vm5273, 1.0, 0.0
  %v5287 = vsel %vm5274, 1.0, 0.0
  %v5288 = vsel %vm5275, 1.0, 0.0
  %v5289 = vsel %vm5276, 1.0, 0.0
  %v5290 = vsel %vm5277, 1.0, 0.0
  %v5291 = vsel %vm5278, 1.0, 0.0
  %v5292 = vsel %vm5279, 1.0, 0.0
  %v5293 = vsel %vm5280, 1.0, 0.0
  %v5294 = vsel %vm5281, 1.0, 0.0
  %v5295 = vsel %vm5282, 1.0, 0.0
  %v5296 = vsel %vm5283, 1.0, 0.0
  %v5297 = vsel %vm5284, 1.0, 0.0
  %v5298 = vsel %vm5285, 1.0, 0.0
  %v5300 = vsel %vm4477, %v5298, 0
  %5302 = vmatprep.subr.mxu0 0.0
  %5303 = vmatpush1.msra.mxu0 0.0
  %5304 = vmatprep.subr.mxu0 0.0
  %5305 = vmatpush1.msra.mxu0 0.0
  %5306 = vmatprep.subr.mxu0 0.0
  %5307 = vmatpush1.msra.mxu0 0.0
  %5308 = vmatprep.subr.mxu0 0.0
  %5309 = vmatpush1.msra.mxu0 %v5300
  %5310 = vmatprep.subr.mxu0 0.0
  %5311 = vmatpush1.msra.mxu0 %v5297
  %5312 = vmatprep.subr.mxu0 0.0
  %5313 = vmatpush1.msra.mxu0 %v5296
  %5314 = vmatprep.subr.mxu0 0.0
  %5315 = vmatpush1.msra.mxu0 %v5295
  %5316 = vmatprep.subr.mxu0 0.0
  %5317 = vmatpush1.msra.mxu0 %v5294
  %5318 = vmatprep.subr.mxu0 0.0
  %5319 = vmatpush1.msra.mxu0 %v5293
  %5320 = vmatprep.subr.mxu0 0.0
  %5321 = vmatpush1.msra.mxu0 %v5292
  %5322 = vmatprep.subr.mxu0 0.0
  %5323 = vmatpush1.msra.mxu0 %v5291
  %5324 = vmatprep.subr.mxu0 0.0
  %5325 = vmatpush1.msra.mxu0 %v5290
  %5326 = vmatprep.subr.mxu0 0.0
  %5327 = vmatpush1.msra.mxu0 %v5289
  %5328 = vmatprep.subr.mxu0 0.0
  %5329 = vmatpush1.msra.mxu0 %v5288
  %5330 = vmatprep.subr.mxu0 0.0
  %5331 = vmatpush1.msra.mxu0 %v5287
  %5332 = vmatprep.subr.mxu0 0.0
  %5333 = vmatpush1.msra.mxu0 %v5286
  %5334 = vmatprep.subr.mxu0 0.0
  %5335 = vmatpush2.msra.mxu0 0.0
  %5336 = vmatprep.subr.mxu0 0.0
  %5337 = vmatpush2.msra.mxu0 0.0
  %5338 = vmatprep.subr.mxu0 0.0
  %5339 = vmatpush2.msra.mxu0 0.0
  %5340 = vmatprep.subr.mxu0 0.0
  %5341 = vmatpush2.msra.mxu0 0.0
  %5342 = vmatprep.subr.mxu0 0.0
  %5343 = vmatpush2.msra.mxu0 0.0
  %5344 = vmatprep.subr.mxu0 0.0
  %5345 = vmatpush2.msra.mxu0 0.0
  %5346 = vmatprep.subr.mxu0 0.0
  %5347 = vmatpush2.msra.mxu0 0.0
  %5348 = vmatprep.subr.mxu0 0.0
  %5349 = vmatpush2.msra.mxu0 0.0
  %5350 = vmatprep.subr.mxu0 0.0
  %5351 = vmatpush2.msra.mxu0 0.0
  %5352 = vmatprep.subr.mxu0 0.0
  %5353 = vmatpush2.msra.mxu0 0.0
  %5354 = vmatprep.subr.mxu0 0.0
  %5355 = vmatpush2.msra.mxu0 0.0
  %5356 = vmatprep.subr.mxu0 0.0
  %5357 = vmatpush2.msra.mxu0 0.0
  %5358 = vmatprep.subr.mxu0 0.0
  %5359 = vmatpush2.msra.mxu0 0.0
  %5360 = vmatprep.subr.mxu0 0.0
  %5361 = vmatpush2.msra.mxu0 0.0
  %5362 = vmatprep.subr.mxu0 0.0
  %5363 = vmatpush2.msra.mxu0 0.0
  %5364 = vmatprep.subr.mxu0 0.0
  %5365 = vmatpush2.msra.mxu0 0.0
  %5366 = vmatprep.mubr.f32.mxu0 0.0
  %5367 = vmatmul.mubr.f32.gmra.mxu0 %v4472
  %v5368 = vpop.f32.mrf.mxu0
  %v5369 = vadd.f32 0.0, %v5368
  %v5370 = vpop.f32.mrf.mxu0
  %5371 = vmatprep.mubr.f32.mxu0 0.0
  %5372 = vmatmul.mubr.f32.gmra.mxu0 %v4475
  %v5373 = vpop.f32.mrf.mxu0
  %v5374 = vadd.f32 0.0, %v5373
  %v5375 = vpop.f32.mrf.mxu0
  %5376 = vdwg.mxu0
  %s5377 = scalar_lea.vmem %s13, 96
  %v5378 = vld [vmem:[%s5377] sm:$0xff]
  %v5379 = vld [vmem:[%s5377 + $0x8] sm:$0xff]
  %5381 = vset.pattern.permute.xlu0 0
  %5382 = vperm.xlu0 %5381, %v5378
  %v5383 = vpop.permute.xlu0 %5382
  %5386 = vset.pattern.permute.xlu0 0
  %5387 = vperm.xlu0 %5386, %v5379
  %v5388 = vpop.permute.xlu0 %5387
  %v5390 = vmul.f32 %v5369, %v5383
  %v5391 = vmul.f32 %v5374, %v5388
  %v5392 = vadd.f32 %v5240, %v5390
  %v5393 = vadd.f32 %v5241, %v5391
  %vm5394 = vmand %vm5260, %vm4575
  %vm5395 = vmand %vm5261, %vm4576
  %vm5396 = vmand %vm5262, %vm4577
  %vm5397 = vmand %vm5263, %vm4578
  %vm5398 = vmand %vm5264, %vm4579
  %vm5399 = vmand %vm5265, %vm4580
  %vm5400 = vmand %vm5266, %vm4581
  %vm5401 = vmand %vm5267, %vm4582
  %vm5402 = vmand %vm5268, %vm4583
  %vm5403 = vmand %vm5269, %vm4584
  %vm5404 = vmand %vm5270, %vm4585
  %vm5405 = vmand %vm5271, %vm4586
  %vm5406 = vmand %vm5272, %vm4587
  %v5407 = vsel %vm5394, 1.0, 0.0
  %v5408 = vsel %vm5395, 1.0, 0.0
  %v5409 = vsel %vm5396, 1.0, 0.0
  %v5410 = vsel %vm5397, 1.0, 0.0
  %v5411 = vsel %vm5398, 1.0, 0.0
  %v5412 = vsel %vm5399, 1.0, 0.0
  %v5413 = vsel %vm5400, 1.0, 0.0
  %v5414 = vsel %vm5401, 1.0, 0.0
  %v5415 = vsel %vm5402, 1.0, 0.0
  %v5416 = vsel %vm5403, 1.0, 0.0
  %v5417 = vsel %vm5404, 1.0, 0.0
  %v5418 = vsel %vm5405, 1.0, 0.0
  %v5419 = vsel %vm5406, 1.0, 0.0
  %v5421 = vsel %vm4477, %v5419, 0
  %5423 = vmatprep.subr.mxu0 0.0
  %5424 = vmatpush1.msra.mxu0 0.0
  %5425 = vmatprep.subr.mxu0 0.0
  %5426 = vmatpush1.msra.mxu0 0.0
  %5427 = vmatprep.subr.mxu0 0.0
  %5428 = vmatpush1.msra.mxu0 0.0
  %5429 = vmatprep.subr.mxu0 0.0
  %5430 = vmatpush1.msra.mxu0 %v5421
  %5431 = vmatprep.subr.mxu0 0.0
  %5432 = vmatpush1.msra.mxu0 %v5418
  %5433 = vmatprep.subr.mxu0 0.0
  %5434 = vmatpush1.msra.mxu0 %v5417
  %5435 = vmatprep.subr.mxu0 0.0
  %5436 = vmatpush1.msra.mxu0 %v5416
  %5437 = vmatprep.subr.mxu0 0.0
  %5438 = vmatpush1.msra.mxu0 %v5415
  %5439 = vmatprep.subr.mxu0 0.0
  %5440 = vmatpush1.msra.mxu0 %v5414
  %5441 = vmatprep.subr.mxu0 0.0
  %5442 = vmatpush1.msra.mxu0 %v5413
  %5443 = vmatprep.subr.mxu0 0.0
  %5444 = vmatpush1.msra.mxu0 %v5412
  %5445 = vmatprep.subr.mxu0 0.0
  %5446 = vmatpush1.msra.mxu0 %v5411
  %5447 = vmatprep.subr.mxu0 0.0
  %5448 = vmatpush1.msra.mxu0 %v5410
  %5449 = vmatprep.subr.mxu0 0.0
  %5450 = vmatpush1.msra.mxu0 %v5409
  %5451 = vmatprep.subr.mxu0 0.0
  %5452 = vmatpush1.msra.mxu0 %v5408
  %5453 = vmatprep.subr.mxu0 0.0
  %5454 = vmatpush1.msra.mxu0 %v5407
  %5455 = vmatprep.subr.mxu0 0.0
  %5456 = vmatpush2.msra.mxu0 0.0
  %5457 = vmatprep.subr.mxu0 0.0
  %5458 = vmatpush2.msra.mxu0 0.0
  %5459 = vmatprep.subr.mxu0 0.0
  %5460 = vmatpush2.msra.mxu0 0.0
  %5461 = vmatprep.subr.mxu0 0.0
  %5462 = vmatpush2.msra.mxu0 0.0
  %5463 = vmatprep.subr.mxu0 0.0
  %5464 = vmatpush2.msra.mxu0 0.0
  %5465 = vmatprep.subr.mxu0 0.0
  %5466 = vmatpush2.msra.mxu0 0.0
  %5467 = vmatprep.subr.mxu0 0.0
  %5468 = vmatpush2.msra.mxu0 0.0
  %5469 = vmatprep.subr.mxu0 0.0
  %5470 = vmatpush2.msra.mxu0 0.0
  %5471 = vmatprep.subr.mxu0 0.0
  %5472 = vmatpush2.msra.mxu0 0.0
  %5473 = vmatprep.subr.mxu0 0.0
  %5474 = vmatpush2.msra.mxu0 0.0
  %5475 = vmatprep.subr.mxu0 0.0
  %5476 = vmatpush2.msra.mxu0 0.0
  %5477 = vmatprep.subr.mxu0 0.0
  %5478 = vmatpush2.msra.mxu0 0.0
  %5479 = vmatprep.subr.mxu0 0.0
  %5480 = vmatpush2.msra.mxu0 0.0
  %5481 = vmatprep.subr.mxu0 0.0
  %5482 = vmatpush2.msra.mxu0 0.0
  %5483 = vmatprep.subr.mxu0 0.0
  %5484 = vmatpush2.msra.mxu0 0.0
  %5485 = vmatprep.subr.mxu0 0.0
  %5486 = vmatpush2.msra.mxu0 0.0
  %5487 = vmatprep.mubr.f32.mxu0 0.0
  %5488 = vmatmul.mubr.f32.gmra.mxu0 %v4472
  %v5489 = vpop.f32.mrf.mxu0
  %v5490 = vadd.f32 0.0, %v5489
  %v5491 = vpop.f32.mrf.mxu0
  %5492 = vmatprep.mubr.f32.mxu0 0.0
  %5493 = vmatmul.mubr.f32.gmra.mxu0 %v4475
  %v5494 = vpop.f32.mrf.mxu0
  %v5495 = vadd.f32 0.0, %v5494
  %v5496 = vpop.f32.mrf.mxu0
  %5497 = vdwg.mxu0
  %s5498 = scalar_lea.vmem %s13, 112
  %v5499 = vld [vmem:[%s5498] sm:$0xff]
  %v5500 = vld [vmem:[%s5498 + $0x8] sm:$0xff]
  %5502 = vset.pattern.permute.xlu0 0
  %5503 = vperm.xlu0 %5502, %v5499
  %v5504 = vpop.permute.xlu0 %5503
  %5507 = vset.pattern.permute.xlu0 0
  %5508 = vperm.xlu0 %5507, %v5500
  %v5509 = vpop.permute.xlu0 %5508
  %v5511 = vmul.f32 %v5490, %v5504
  %v5512 = vmul.f32 %v5495, %v5509
  %v5513 = vadd.f32 %v5392, %v5511
  %v5514 = vadd.f32 %v5393, %v5512
  %vm5515 = vmand %vm5260, %vm4714
  %vm5516 = vmand %vm5261, %vm4715
  %vm5517 = vmand %vm5262, %vm4716
  %vm5518 = vmand %vm5263, %vm4717
  %vm5519 = vmand %vm5264, %vm4718
  %vm5520 = vmand %vm5265, %vm4719
  %vm5521 = vmand %vm5266, %vm4720
  %vm5522 = vmand %vm5267, %vm4721
  %vm5523 = vmand %vm5268, %vm4722
  %vm5524 = vmand %vm5269, %vm4723
  %vm5525 = vmand %vm5270, %vm4724
  %vm5526 = vmand %vm5271, %vm4725
  %vm5527 = vmand %vm5272, %vm4726
  %v5528 = vsel %vm5515, 1.0, 0.0
  %v5529 = vsel %vm5516, 1.0, 0.0
  %v5530 = vsel %vm5517, 1.0, 0.0
  %v5531 = vsel %vm5518, 1.0, 0.0
  %v5532 = vsel %vm5519, 1.0, 0.0
  %v5533 = vsel %vm5520, 1.0, 0.0
  %v5534 = vsel %vm5521, 1.0, 0.0
  %v5535 = vsel %vm5522, 1.0, 0.0
  %v5536 = vsel %vm5523, 1.0, 0.0
  %v5537 = vsel %vm5524, 1.0, 0.0
  %v5538 = vsel %vm5525, 1.0, 0.0
  %v5539 = vsel %vm5526, 1.0, 0.0
  %v5540 = vsel %vm5527, 1.0, 0.0
  %v5542 = vsel %vm4477, %v5540, 0
  %5544 = vmatprep.subr.mxu0 0.0
  %5545 = vmatpush1.msra.mxu0 0.0
  %5546 = vmatprep.subr.mxu0 0.0
  %5547 = vmatpush1.msra.mxu0 0.0
  %5548 = vmatprep.subr.mxu0 0.0
  %5549 = vmatpush1.msra.mxu0 0.0
  %5550 = vmatprep.subr.mxu0 0.0
  %5551 = vmatpush1.msra.mxu0 %v5542
  %5552 = vmatprep.subr.mxu0 0.0
  %5553 = vmatpush1.msra.mxu0 %v5539
  %5554 = vmatprep.subr.mxu0 0.0
  %5555 = vmatpush1.msra.mxu0 %v5538
  %5556 = vmatprep.subr.mxu0 0.0
  %5557 = vmatpush1.msra.mxu0 %v5537
  %5558 = vmatprep.subr.mxu0 0.0
  %5559 = vmatpush1.msra.mxu0 %v5536
  %5560 = vmatprep.subr.mxu0 0.0
  %5561 = vmatpush1.msra.mxu0 %v5535
  %5562 = vmatprep.subr.mxu0 0.0
  %5563 = vmatpush1.msra.mxu0 %v5534
  %5564 = vmatprep.subr.mxu0 0.0
  %5565 = vmatpush1.msra.mxu0 %v5533
  %5566 = vmatprep.subr.mxu0 0.0
  %5567 = vmatpush1.msra.mxu0 %v5532
  %5568 = vmatprep.subr.mxu0 0.0
  %5569 = vmatpush1.msra.mxu0 %v5531
  %5570 = vmatprep.subr.mxu0 0.0
  %5571 = vmatpush1.msra.mxu0 %v5530
  %5572 = vmatprep.subr.mxu0 0.0
  %5573 = vmatpush1.msra.mxu0 %v5529
  %5574 = vmatprep.subr.mxu0 0.0
  %5575 = vmatpush1.msra.mxu0 %v5528
  %5576 = vmatprep.subr.mxu0 0.0
  %5577 = vmatpush2.msra.mxu0 0.0
  %5578 = vmatprep.subr.mxu0 0.0
  %5579 = vmatpush2.msra.mxu0 0.0
  %5580 = vmatprep.subr.mxu0 0.0
  %5581 = vmatpush2.msra.mxu0 0.0
  %5582 = vmatprep.subr.mxu0 0.0
  %5583 = vmatpush2.msra.mxu0 0.0
  %5584 = vmatprep.subr.mxu0 0.0
  %5585 = vmatpush2.msra.mxu0 0.0
  %5586 = vmatprep.subr.mxu0 0.0
  %5587 = vmatpush2.msra.mxu0 0.0
  %5588 = vmatprep.subr.mxu0 0.0
  %5589 = vmatpush2.msra.mxu0 0.0
  %5590 = vmatprep.subr.mxu0 0.0
  %5591 = vmatpush2.msra.mxu0 0.0
  %5592 = vmatprep.subr.mxu0 0.0
  %5593 = vmatpush2.msra.mxu0 0.0
  %5594 = vmatprep.subr.mxu0 0.0
  %5595 = vmatpush2.msra.mxu0 0.0
  %5596 = vmatprep.subr.mxu0 0.0
  %5597 = vmatpush2.msra.mxu0 0.0
  %5598 = vmatprep.subr.mxu0 0.0
  %5599 = vmatpush2.msra.mxu0 0.0
  %5600 = vmatprep.subr.mxu0 0.0
  %5601 = vmatpush2.msra.mxu0 0.0
  %5602 = vmatprep.subr.mxu0 0.0
  %5603 = vmatpush2.msra.mxu0 0.0
  %5604 = vmatprep.subr.mxu0 0.0
  %5605 = vmatpush2.msra.mxu0 0.0
  %5606 = vmatprep.subr.mxu0 0.0
  %5607 = vmatpush2.msra.mxu0 0.0
  %5608 = vmatprep.mubr.f32.mxu0 0.0
  %5609 = vmatmul.mubr.f32.gmra.mxu0 %v4472
  %v5610 = vpop.f32.mrf.mxu0
  %v5611 = vadd.f32 0.0, %v5610
  %v5612 = vpop.f32.mrf.mxu0
  %5613 = vmatprep.mubr.f32.mxu0 0.0
  %5614 = vmatmul.mubr.f32.gmra.mxu0 %v4475
  %v5615 = vpop.f32.mrf.mxu0
  %v5616 = vadd.f32 0.0, %v5615
  %v5617 = vpop.f32.mrf.mxu0
  %5618 = vdwg.mxu0
  %s5619 = scalar_lea.vmem %s13, 128
  %v5620 = vld [vmem:[%s5619] sm:$0xff]
  %v5621 = vld [vmem:[%s5619 + $0x8] sm:$0xff]
  %5623 = vset.pattern.permute.xlu0 0
  %5624 = vperm.xlu0 %5623, %v5620
  %v5625 = vpop.permute.xlu0 %5624
  %5628 = vset.pattern.permute.xlu0 0
  %5629 = vperm.xlu0 %5628, %v5621
  %v5630 = vpop.permute.xlu0 %5629
  %v5632 = vmul.f32 %v5611, %v5625
  %v5633 = vmul.f32 %v5616, %v5630
  %v5634 = vadd.f32 %v5513, %v5632
  %v5635 = vadd.f32 %v5514, %v5633
  %v5636 = vld [vmem:[%s14] sm:$0xff]
  %v5637 = vld [vmem:[%s14 + $0x8] sm:$0xff]
  %5639 = vset.pattern.permute.xlu0 0
  %5640 = vperm.xlu0 %5639, %v5636
  %v5641 = vpop.permute.xlu0 %5640
  %5644 = vset.pattern.permute.xlu0 0
  %5645 = vperm.xlu0 %5644, %v5637
  %v5646 = vpop.permute.xlu0 %5645
  %v5648 = vadd.f32 %v5634, %v5641
  %v5649 = vadd.f32 %v5635, %v5646
  %vm5650 = vcmask 261120
  %v5651 = vsel %vm5650, %v5648, 0.0
  %5652 = vadd.xlane.f32.xlu0 %v5651
  %v5653 = vpop.xlane.xlu0 %5652
  %v5654 = vsel %vm5650, %v5649, 0.0
  %5655 = vadd.xlane.f32.xlu0 %v5654
  %v5656 = vpop.xlane.xlu0 %5655
  %v5657 = vrcp.pop 32.0
  %v5658 = vmul.f32 %v5653, %v5657
  %v5659 = vmul.f32 %v5656, %v5657
  %v5660 = vsub.f32 %v5648, %v5658
  %v5661 = vsub.f32 %v5649, %v5659
  %v5662 = vmul.f32 %v5660, %v5660
  %v5663 = vmul.f32 %v5661, %v5661
  %v5664 = vsel %vm5650, %v5662, 0.0
  %5665 = vadd.xlane.f32.xlu0 %v5664
  %v5666 = vpop.xlane.xlu0 %5665
  %v5667 = vsel %vm5650, %v5663, 0.0
  %5668 = vadd.xlane.f32.xlu0 %v5667
  %v5669 = vpop.xlane.xlu0 %5668
  %v5670 = vmul.f32 %v5666, %v5657
  %v5671 = vmul.f32 %v5669, %v5657
  %v5672 = vld [vmem:[%s15] sm:$0xff]
  %v5673 = vld [vmem:[%s15 + $0x8] sm:$0xff]
  %v5674 = vadd.f32 %v5670, 1e-05
  %v5675 = vadd.f32 %v5671, 1e-05
  %v5676 = vrsqrt.pop %v5674
  %v5677 = vrsqrt.pop %v5675
  %v5678 = vmul.f32 %v5672, %v5676
  %v5679 = vmul.f32 %v5673, %v5677
  %v5680 = vld [vmem:[%s16] sm:$0xff]
  %v5681 = vld [vmem:[%s16 + $0x8] sm:$0xff]
  %v5682 = vmul.f32 %v5678, %v5658
  %v5683 = vmul.f32 %v5679, %v5659
  %v5684 = vsub.f32 %v5680, %v5682
  %v5685 = vsub.f32 %v5681, %v5683
  %5687 = vset.pattern.permute.xlu0 0
  %5688 = vperm.xlu0 %5687, %v5678
  %v5689 = vpop.permute.xlu0 %5688
  %5692 = vset.pattern.permute.xlu0 0
  %5693 = vperm.xlu0 %5692, %v5679
  %v5694 = vpop.permute.xlu0 %5693
  %v5696 = vmul.f32 %v5648, %v5689
  %v5697 = vmul.f32 %v5649, %v5694
  %5699 = vset.pattern.permute.xlu0 0
  %5700 = vperm.xlu0 %5699, %v5684
  %v5701 = vpop.permute.xlu0 %5700
  %5704 = vset.pattern.permute.xlu0 0
  %5705 = vperm.xlu0 %5704, %v5685
  %v5706 = vpop.permute.xlu0 %5705
  %v5708 = vadd.f32 %v5696, %v5701
  %v5709 = vadd.f32 %v5697, %v5706
  %v5710 = vmax.f32 %v5708, 0.0
  %v5711 = vmax.f32 %v5709, 0.0
  %5712 = vst.msk [vmem:[#allocation2] sm:$0xff] %vm5650, %v5710
  %5713 = vst.msk [vmem:[#allocation2 + $0x8] sm:$0xff] %vm5650, %v5711
  %v5714 = vld [vmem:[%s17] sm:$0xff]
  %v5715 = vld [vmem:[%s17 + $0x8] sm:$0x3]
  %v5716 = vld [vmem:[#allocation2] sm:$0x1]
  %v5717 = vlaneseq
  %v5718 = vshrl.u32 %v5717, 7
  %v5719 = vsub.s32 0, %v5718
  %v5720 = vrot.slane %v5716, %v5719
  %v5721 = vmul.f32 %v5714, %v5720
  %v5722 = vmul.f32 %v5715, %v5720
  %s5723 = scalar_lea.vmem %s17, 16
  %v5724 = vld [vmem:[%s5723] sm:$0xff]
  %v5725 = vld [vmem:[%s5723 + $0x8] sm:$0x3]
  %v5726 = vld [vmem:[#allocation2 + $0x1] sm:$0x1]
  %v5727 = vlaneseq
  %v5728 = vshrl.u32 %v5727, 7
  %v5729 = vsub.s32 0, %v5728
  %v5730 = vrot.slane %v5726, %v5729
  %v5731 = vmul.f32 %v5724, %v5730
  %v5732 = vmul.f32 %v5725, %v5730
  %v5733 = vadd.f32 %v5721, %v5731
  %v5734 = vadd.f32 %v5722, %v5732
  %s5735 = scalar_lea.vmem %s17, 32
  %v5736 = vld [vmem:[%s5735] sm:$0xff]
  %v5737 = vld [vmem:[%s5735 + $0x8] sm:$0x3]
  %v5738 = vld [vmem:[#allocation2 + $0x2] sm:$0x1]
  %v5739 = vlaneseq
  %v5740 = vshrl.u32 %v5739, 7
  %v5741 = vsub.s32 0, %v5740
  %v5742 = vrot.slane %v5738, %v5741
  %v5743 = vmul.f32 %v5736, %v5742
  %v5744 = vmul.f32 %v5737, %v5742
  %v5745 = vadd.f32 %v5733, %v5743
  %v5746 = vadd.f32 %v5734, %v5744
  %s5747 = scalar_lea.vmem %s17, 48
  %v5748 = vld [vmem:[%s5747] sm:$0xff]
  %v5749 = vld [vmem:[%s5747 + $0x8] sm:$0x3]
  %v5750 = vld [vmem:[#allocation2 + $0x3] sm:$0x1]
  %v5751 = vlaneseq
  %v5752 = vshrl.u32 %v5751, 7
  %v5753 = vsub.s32 0, %v5752
  %v5754 = vrot.slane %v5750, %v5753
  %v5755 = vmul.f32 %v5748, %v5754
  %v5756 = vmul.f32 %v5749, %v5754
  %v5757 = vadd.f32 %v5745, %v5755
  %v5758 = vadd.f32 %v5746, %v5756
  %s5759 = scalar_lea.vmem %s17, 64
  %v5760 = vld [vmem:[%s5759] sm:$0xff]
  %v5761 = vld [vmem:[%s5759 + $0x8] sm:$0x3]
  %v5762 = vld [vmem:[#allocation2 + $0x4] sm:$0x1]
  %v5763 = vlaneseq
  %v5764 = vshrl.u32 %v5763, 7
  %v5765 = vsub.s32 0, %v5764
  %v5766 = vrot.slane %v5762, %v5765
  %v5767 = vmul.f32 %v5760, %v5766
  %v5768 = vmul.f32 %v5761, %v5766
  %v5769 = vadd.f32 %v5757, %v5767
  %v5770 = vadd.f32 %v5758, %v5768
  %s5771 = scalar_lea.vmem %s17, 80
  %v5772 = vld [vmem:[%s5771] sm:$0xff]
  %v5773 = vld [vmem:[%s5771 + $0x8] sm:$0x3]
  %v5774 = vld [vmem:[#allocation2 + $0x5] sm:$0x1]
  %v5775 = vlaneseq
  %v5776 = vshrl.u32 %v5775, 7
  %v5777 = vsub.s32 0, %v5776
  %v5778 = vrot.slane %v5774, %v5777
  %v5779 = vmul.f32 %v5772, %v5778
  %v5780 = vmul.f32 %v5773, %v5778
  %v5781 = vadd.f32 %v5769, %v5779
  %v5782 = vadd.f32 %v5770, %v5780
  %s5783 = scalar_lea.vmem %s17, 96
  %v5784 = vld [vmem:[%s5783] sm:$0xff]
  %v5785 = vld [vmem:[%s5783 + $0x8] sm:$0x3]
  %v5786 = vld [vmem:[#allocation2 + $0x6] sm:$0x1]
  %v5787 = vlaneseq
  %v5788 = vshrl.u32 %v5787, 7
  %v5789 = vsub.s32 0, %v5788
  %v5790 = vrot.slane %v5786, %v5789
  %v5791 = vmul.f32 %v5784, %v5790
  %v5792 = vmul.f32 %v5785, %v5790
  %v5793 = vadd.f32 %v5781, %v5791
  %v5794 = vadd.f32 %v5782, %v5792
  %s5795 = scalar_lea.vmem %s17, 112
  %v5796 = vld [vmem:[%s5795] sm:$0xff]
  %v5797 = vld [vmem:[%s5795 + $0x8] sm:$0x3]
  %v5798 = vld [vmem:[#allocation2 + $0x7] sm:$0x1]
  %v5799 = vlaneseq
  %v5800 = vshrl.u32 %v5799, 7
  %v5801 = vsub.s32 0, %v5800
  %v5802 = vrot.slane %v5798, %v5801
  %v5803 = vmul.f32 %v5796, %v5802
  %v5804 = vmul.f32 %v5797, %v5802
  %v5805 = vadd.f32 %v5793, %v5803
  %v5806 = vadd.f32 %v5794, %v5804
  %s5807 = scalar_lea.vmem %s17, 128
  %v5808 = vld [vmem:[%s5807] sm:$0xff]
  %v5809 = vld [vmem:[%s5807 + $0x8] sm:$0x3]
  %v5810 = vld [vmem:[#allocation2 + $0x8] sm:$0x1]
  %v5811 = vlaneseq
  %v5812 = vshrl.u32 %v5811, 7
  %v5813 = vsub.s32 0, %v5812
  %v5814 = vrot.slane %v5810, %v5813
  %v5815 = vmul.f32 %v5808, %v5814
  %v5816 = vmul.f32 %v5809, %v5814
  %v5817 = vadd.f32 %v5805, %v5815
  %v5818 = vadd.f32 %v5806, %v5816
  %s5819 = scalar_lea.vmem %s17, 144
  %v5820 = vld [vmem:[%s5819] sm:$0xff]
  %v5821 = vld [vmem:[%s5819 + $0x8] sm:$0x3]
  %v5822 = vld [vmem:[#allocation2 + $0x9] sm:$0x1]
  %v5823 = vlaneseq
  %v5824 = vshrl.u32 %v5823, 7
  %v5825 = vsub.s32 0, %v5824
  %v5826 = vrot.slane %v5822, %v5825
  %v5827 = vmul.f32 %v5820, %v5826
  %v5828 = vmul.f32 %v5821, %v5826
  %v5829 = vadd.f32 %v5817, %v5827
  %v5830 = vadd.f32 %v5818, %v5828
  %s5831 = scalar_lea.vmem %s17, 160
  %v5832 = vld [vmem:[%s5831] sm:$0xff]
  %v5833 = vld [vmem:[%s5831 + $0x8] sm:$0x3]
  %v5834 = vld [vmem:[#allocation2 + $0xa] sm:$0x1]
  %v5835 = vlaneseq
  %v5836 = vshrl.u32 %v5835, 7
  %v5837 = vsub.s32 0, %v5836
  %v5838 = vrot.slane %v5834, %v5837
  %v5839 = vmul.f32 %v5832, %v5838
  %v5840 = vmul.f32 %v5833, %v5838
  %v5841 = vadd.f32 %v5829, %v5839
  %v5842 = vadd.f32 %v5830, %v5840
  %s5843 = scalar_lea.vmem %s17, 176
  %v5844 = vld [vmem:[%s5843] sm:$0xff]
  %v5845 = vld [vmem:[%s5843 + $0x8] sm:$0x3]
  %v5846 = vld [vmem:[#allocation2 + $0xb] sm:$0x1]
  %v5847 = vlaneseq
  %v5848 = vshrl.u32 %v5847, 7
  %v5849 = vsub.s32 0, %v5848
  %v5850 = vrot.slane %v5846, %v5849
  %v5851 = vmul.f32 %v5844, %v5850
  %v5852 = vmul.f32 %v5845, %v5850
  %v5853 = vadd.f32 %v5841, %v5851
  %v5854 = vadd.f32 %v5842, %v5852
  %s5855 = scalar_lea.vmem %s17, 192
  %v5856 = vld [vmem:[%s5855] sm:$0xff]
  %v5857 = vld [vmem:[%s5855 + $0x8] sm:$0x3]
  %v5858 = vld [vmem:[#allocation2 + $0xc] sm:$0x1]
  %v5859 = vlaneseq
  %v5860 = vshrl.u32 %v5859, 7
  %v5861 = vsub.s32 0, %v5860
  %v5862 = vrot.slane %v5858, %v5861
  %v5863 = vmul.f32 %v5856, %v5862
  %v5864 = vmul.f32 %v5857, %v5862
  %v5865 = vadd.f32 %v5853, %v5863
  %v5866 = vadd.f32 %v5854, %v5864
  %s5867 = scalar_lea.vmem %s17, 208
  %v5868 = vld [vmem:[%s5867] sm:$0xff]
  %v5869 = vld [vmem:[%s5867 + $0x8] sm:$0x3]
  %v5870 = vld [vmem:[#allocation2 + $0xd] sm:$0x1]
  %v5871 = vlaneseq
  %v5872 = vshrl.u32 %v5871, 7
  %v5873 = vsub.s32 0, %v5872
  %v5874 = vrot.slane %v5870, %v5873
  %v5875 = vmul.f32 %v5868, %v5874
  %v5876 = vmul.f32 %v5869, %v5874
  %v5877 = vadd.f32 %v5865, %v5875
  %v5878 = vadd.f32 %v5866, %v5876
  %s5879 = scalar_lea.vmem %s17, 224
  %v5880 = vld [vmem:[%s5879] sm:$0xff]
  %v5881 = vld [vmem:[%s5879 + $0x8] sm:$0x3]
  %v5882 = vld [vmem:[#allocation2 + $0xe] sm:$0x1]
  %v5883 = vlaneseq
  %v5884 = vshrl.u32 %v5883, 7
  %v5885 = vsub.s32 0, %v5884
  %v5886 = vrot.slane %v5882, %v5885
  %v5887 = vmul.f32 %v5880, %v5886
  %v5888 = vmul.f32 %v5881, %v5886
  %v5889 = vadd.f32 %v5877, %v5887
  %v5890 = vadd.f32 %v5878, %v5888
  %s5891 = scalar_lea.vmem %s17, 240
  %v5892 = vld [vmem:[%s5891] sm:$0xff]
  %v5893 = vld [vmem:[%s5891 + $0x8] sm:$0x3]
  %v5894 = vld [vmem:[#allocation2 + $0xf] sm:$0x1]
  %v5895 = vlaneseq
  %v5896 = vshrl.u32 %v5895, 7
  %v5897 = vsub.s32 0, %v5896
  %v5898 = vrot.slane %v5894, %v5897
  %v5899 = vmul.f32 %v5892, %v5898
  %v5900 = vmul.f32 %v5893, %v5898
  %v5901 = vadd.f32 %v5889, %v5899
  %v5902 = vadd.f32 %v5890, %v5900
  %v5903 = vld [vmem:[%s18] sm:$0xff]
  %v5904 = vld [vmem:[%s18 + $0x8] sm:$0xff]
  %v5905 = vld [vmem:[%s18 + $0x10] sm:$0xff]
  %v5906 = vld [vmem:[%s18 + $0x18] sm:$0xff]
  %v5907 = vld [vmem:[%s19] sm:$0xff]
  %v5908 = vld [vmem:[%s19 + $0x8] sm:$0x3]
  %5910 = vset.pattern.permute.xlu0 0
  %5911 = vperm.xlu0 %5910, %v5907
  %v5912 = vpop.permute.xlu0 %5911
  %5915 = vset.pattern.permute.xlu0 0
  %5916 = vperm.xlu0 %5915, %v5908
  %v5917 = vpop.permute.xlu0 %5916
  %v5920 = vsel %vm5650, %v5901, 0
  %v5923 = vsel %vm5650, %v5902, 0
  %5925 = vmatprep.subr.mxu0 0.0
  %5926 = vmatpush1.msra.mxu0 0.0
  %5927 = vmatprep.subr.mxu0 0.0
  %5928 = vmatpush1.msra.mxu0 0.0
  %5929 = vmatprep.subr.mxu0 0.0
  %5930 = vmatpush1.msra.mxu0 0.0
  %5931 = vmatprep.subr.mxu0 0.0
  %5932 = vmatpush1.msra.mxu0 0.0
  %5933 = vmatprep.subr.mxu0 0.0
  %5934 = vmatpush1.msra.mxu0 0.0
  %5935 = vmatprep.subr.mxu0 0.0
  %5936 = vmatpush1.msra.mxu0 0.0
  %5937 = vmatprep.subr.mxu0 0.0
  %5938 = vmatpush1.msra.mxu0 0.0
  %5939 = vmatprep.subr.mxu0 0.0
  %5940 = vmatpush1.msra.mxu0 0.0
  %5941 = vmatprep.subr.mxu0 0.0
  %5942 = vmatpush1.msra.mxu0 0.0
  %5943 = vmatprep.subr.mxu0 0.0
  %5944 = vmatpush1.msra.mxu0 0.0
  %5945 = vmatprep.subr.mxu0 0.0
  %5946 = vmatpush1.msra.mxu0 0.0
  %5947 = vmatprep.subr.mxu0 0.0
  %5948 = vmatpush1.msra.mxu0 0.0
  %5949 = vmatprep.subr.mxu0 0.0
  %5950 = vmatpush1.msra.mxu0 %v5906
  %5951 = vmatprep.subr.mxu0 0.0
  %5952 = vmatpush1.msra.mxu0 %v5905
  %5953 = vmatprep.subr.mxu0 0.0
  %5954 = vmatpush1.msra.mxu0 %v5904
  %5955 = vmatprep.subr.mxu0 0.0
  %5956 = vmatpush1.msra.mxu0 %v5903
  %5957 = vmatprep.subr.mxu0 0.0
  %5958 = vmatpush2.msra.mxu0 0.0
  %5959 = vmatprep.subr.mxu0 0.0
  %5960 = vmatpush2.msra.mxu0 0.0
  %5961 = vmatprep.subr.mxu0 0.0
  %5962 = vmatpush2.msra.mxu0 0.0
  %5963 = vmatprep.subr.mxu0 0.0
  %5964 = vmatpush2.msra.mxu0 0.0
  %5965 = vmatprep.subr.mxu0 0.0
  %5966 = vmatpush2.msra.mxu0 0.0
  %5967 = vmatprep.subr.mxu0 0.0
  %5968 = vmatpush2.msra.mxu0 0.0
  %5969 = vmatprep.subr.mxu0 0.0
  %5970 = vmatpush2.msra.mxu0 0.0
  %5971 = vmatprep.subr.mxu0 0.0
  %5972 = vmatpush2.msra.mxu0 0.0
  %5973 = vmatprep.subr.mxu0 0.0
  %5974 = vmatpush2.msra.mxu0 0.0
  %5975 = vmatprep.subr.mxu0 0.0
  %5976 = vmatpush2.msra.mxu0 0.0
  %5977 = vmatprep.subr.mxu0 0.0
  %5978 = vmatpush2.msra.mxu0 0.0
  %5979 = vmatprep.subr.mxu0 0.0
  %5980 = vmatpush2.msra.mxu0 0.0
  %5981 = vmatprep.subr.mxu0 0.0
  %5982 = vmatpush2.msra.mxu0 0.0
  %5983 = vmatprep.subr.mxu0 0.0
  %5984 = vmatpush2.msra.mxu0 0.0
  %5985 = vmatprep.subr.mxu0 0.0
  %5986 = vmatpush2.msra.mxu0 0.0
  %5987 = vmatprep.subr.mxu0 0.0
  %5988 = vmatpush2.msra.mxu0 0.0
  %5989 = vmatprep.mubr.f32.mxu0 0.0
  %5990 = vmatmul.mubr.f32.gmra.mxu0 %v5920
  %v5991 = vpop.f32.mrf.mxu0
  %v5992 = vadd.f32 %v5912, %v5991
  %v5993 = vpop.f32.mrf.mxu0
  %5994 = vmatprep.mubr.f32.mxu0 0.0
  %5995 = vmatmul.mubr.f32.gmra.mxu0 %v5923
  %v5996 = vpop.f32.mrf.mxu0
  %v5997 = vadd.f32 %v5917, %v5996
  %v5998 = vpop.f32.mrf.mxu0
  %5999 = vdwg.mxu0
  %vm6000 = vcmask 15360
  %6001 = vst.msk [vmem:[%s20] sm:$0xff] %vm6000, %v5992
  %vm6002 = vcmask 9216
  %6003 = vst.msk [vmem:[%s20 + $0x8] sm:$0x3] %vm6002, %v5997
  // Predicated region
  $region82: #{compact_net_forward.1} parent=0 // pred_check
    _
  $region83: #{compact_net_forward.1} parent=0 // pred_check_branch
    %6005 = sbr.rel (0) target = $region85
  $region84: #{compact_net_forward.1} parent=0 // pred_region
    _
  $region85: #{compact_net_forward.1} parent=0 // pred_fallthru
    _
  // Predicated region
  $region86: #{compact_net_forward.1} parent=0 // pred_check
    _
  $region87: #{compact_net_forward.1} parent=0 // pred_check_branch
    %6007 = sbr.rel (0) target = $region89
  $region88: #{compact_net_forward.1} parent=0 // pred_region
    _
  $region89: #{compact_net_forward.1} parent=0 // pred_fallthru
    _

</llo_original>
